<compile_context>
chip_gen: v7x
topology: tpu7x:2x2x1
jax: 0.10.0
libtpu: 0.0.40
codegen_flags: <defaults>
</compile_context>

<pallas_src>
import jax
import jax.numpy as jnp
from jax.experimental import pallas as pl
from jax.experimental.pallas import tpu as pltpu

N_LETTER = 175        # input / output vocabulary size
EMBED_ROWS = 176
EMBED_DIM = 100
HIDDEN = 328

# padded (lane-aligned) sizes
HPAD = 384            # 328 -> 384 (128-aligned; shrunk from 512 per review)
OPAD = 256            # 175 -> 256
NOUT = HPAD + OPAD    # 640: layer-1 fused [hidden|output] width == o2o contraction
CHUNK = 8             # timesteps per grid step (amortizes ~0.35us/step overhead)
NEG_BIG = -1e30       # baked into padded b_oo lanes (replaces per-step lane mask)


def pack_params(p, weight_dtype=jnp.float32):
    """Fuse + zero-pad raw (torch-layout, W stored as (in, out)) params."""
    f32 = jnp.float32
    # embedding stays un-padded: gather + emb contribution run outside the kernel
    embed = p["embed"].astype(f32)

    # emb-rows of layer 1 (used by the parallel pre-pass, kept f32/exact)
    w_emb = jnp.zeros((EMBED_DIM, NOUT), f32)
    w_emb = w_emb.at[:, :HIDDEN].set(p["w_i2h"][:EMBED_DIM])
    w_emb = w_emb.at[:, HPAD:HPAD + N_LETTER].set(p["w_i2o"][:EMBED_DIM])

    b_in = jnp.zeros((1, NOUT), f32)
    b_in = b_in.at[:, :HIDDEN].set(p["b_i2h"])
    b_in = b_in.at[:, HPAD:HPAD + N_LETTER].set(p["b_i2o"])

    # hidden-rows of layer 1 (VMEM-resident, streamed through MXU every step)
    w_h = jnp.zeros((HPAD, NOUT), f32)
    w_h = w_h.at[:HIDDEN, :HIDDEN].set(p["w_i2h"][EMBED_DIM:])
    w_h = w_h.at[:HIDDEN, HPAD:HPAD + N_LETTER].set(p["w_i2o"][EMBED_DIM:])

    # o2o with rows laid out for the padded [hidden(384)|output(256)] input
    w_oo = jnp.zeros((NOUT, OPAD), f32)
    w_oo = w_oo.at[:HIDDEN, :N_LETTER].set(p["w_o2o"][:HIDDEN])
    w_oo = w_oo.at[HPAD:HPAD + N_LETTER, :N_LETTER].set(p["w_o2o"][HIDDEN:])

    # padded W_oo columns are zero, so a large negative bias alone pins the
    # padded output lanes below the real max -> no in-kernel masking needed.
    b_oo = jnp.full((1, OPAD), NEG_BIG, f32)
    b_oo = b_oo.at[:, :N_LETTER].set(p["b_o2o"])

    return dict(embed=embed, w_emb=w_emb, b_in=b_in,
                w_h=w_h.astype(weight_dtype),
                w_oo=w_oo.astype(weight_dtype),
                b_oo=b_oo)


def rnn_forward_seq(packed, ids, hidden0):
    """Run a whole sequence with the time loop inside one pallas_call.

    ids: (T,) int32 token indices; hidden0: (1, HIDDEN) float32.
    Returns (log-probs (T, N_LETTER), final hidden (1, HIDDEN)).
    """
    T = int(ids.shape[0])
    C = CHUNK
    num_chunks = -(-T // C)
    T_pad = num_chunks * C
    needs_mask = (T_pad != T)

    # ---- parallel pre-pass (plain XLA): gather + emb-part of layer 1 (M=T) ----
    emb_seq = packed["embed"][ids.astype(jnp.int32)]          # (T, 100)
    pre = emb_seq @ packed["w_emb"] + packed["b_in"]          # (T, NOUT) f32
    if needs_mask:
        pre = jnp.zeros((T_pad, NOUT), jnp.float32).at[:T].set(pre)

    h0_pad = jnp.zeros((1, HPAD), jnp.float32).at[:, :HIDDEN].set(
        hidden0.astype(jnp.float32))

    def kernel(pre_ref,                  # VMEM (C, NOUT)   per-chunk emb contribution
               h0_ref,                   # VMEM (1, HPAD)   initial hidden
               w_h_ref,                  # VMEM (HPAD, NOUT) resident
               w_oo_ref,                 # VMEM (NOUT, OPAD) resident
               b_oo_ref,                 # VMEM (1, OPAD)
               out_ref,                  # VMEM (C, OPAD)   per-chunk log-probs
               h_ref):                   # VMEM (1, HPAD)   resident hidden carry
        @pl.when(pl.program_id(0) == 0)
        def _():
            h_ref[...] = h0_ref[...]

        wdt = w_h_ref.dtype
        base = pl.program_id(0) * C

        # fully unrolled chunk loop (static trip count C); hidden carried in VMEM.
        for i in range(C):
            h = h_ref[...]                                         # (1, HPAD) f32
            # [hidden | output] = pre[t] + h @ [W_i2h_h | W_i2o_h]   (biases in pre)
            ho = pre_ref[i:i + 1, :] + jnp.dot(
                h.astype(wdt), w_h_ref[...],
                preferred_element_type=jnp.float32)                # (1, NOUT) f32
            # output = o2o([hidden | output]); ho already has the o2o input layout
            o2 = jnp.dot(ho.astype(wdt), w_oo_ref[...],
                         preferred_element_type=jnp.float32) + b_oo_ref[...]
            # dropout(0.1) -> identity (eval mode); padded lanes sit near -1e30
            m = jnp.max(o2, axis=1, keepdims=True)
            lse = m + jnp.log(jnp.sum(jnp.exp(o2 - m), axis=1, keepdims=True))
            out_ref[i:i + 1, :] = o2 - lse

            h_new = ho[:, :HPAD]
            if needs_mask:                       # only emitted when T % C != 0
                h_new = jnp.where(base + i < T, h_new, h)
            h_ref[...] = h_new

    grid_spec = pltpu.PrefetchScalarGridSpec(
        num_scalar_prefetch=0,
        grid=(num_chunks,),
        in_specs=[
            pl.BlockSpec((C, NOUT), lambda c: (c, 0)),        # pre chunk
            pl.BlockSpec((1, HPAD), lambda c: (0, 0)),        # h0
            pl.BlockSpec((HPAD, NOUT), lambda c: (0, 0)),     # W_h   (resident)
            pl.BlockSpec((NOUT, OPAD), lambda c: (0, 0)),     # W_o2o (resident)
            pl.BlockSpec((1, OPAD), lambda c: (0, 0)),        # b_o2o (+mask)
        ],
        out_specs=(
            pl.BlockSpec((C, OPAD), lambda c: (c, 0)),        # chunked output DMA
            pl.BlockSpec((1, HPAD), lambda c: (0, 0)),        # hidden carry (resident)
        ),
    )

    out_pad, h_pad = pl.pallas_call(
        kernel,
        grid_spec=grid_spec,
        out_shape=(jax.ShapeDtypeStruct((T_pad, OPAD), jnp.float32),
                   jax.ShapeDtypeStruct((1, HPAD), jnp.float32)),
        compiler_params=pltpu.CompilerParams(
            dimension_semantics=("arbitrary",)),   # time chunks are sequential
    )(pre, h0_pad, packed["w_h"], packed["w_oo"], packed["b_oo"])

    return out_pad[:T, :N_LETTER], h_pad[:, :HIDDEN]


def rnn_forward(packed, inp_onehot, hidden):
    """Single-step forward matching RNN.forward(input, hidden) (batch = 1)."""
    idx = jnp.argmax(inp_onehot).astype(jnp.int32).reshape(1)
    out, h_new = rnn_forward_seq(packed, idx, hidden)
    return out, h_new


def init_params(key):
    ks = jax.random.split(key, 7)

    def linear(kw, kb, fan_in, fan_out):
        bound = 1.0 / jnp.sqrt(fan_in)
        w = jax.random.uniform(kw, (fan_in, fan_out), jnp.float32, -bound, bound)
        b = jax.random.uniform(kb, (1, fan_out), jnp.float32, -bound, bound)
        return w, b

    embed = jax.random.normal(ks[0], (EMBED_ROWS, EMBED_DIM), jnp.float32)
    w_i2h, b_i2h = linear(ks[1], ks[2], EMBED_DIM + HIDDEN, HIDDEN)
    w_i2o, b_i2o = linear(ks[3], ks[4], EMBED_DIM + HIDDEN, N_LETTER)
    w_o2o, b_o2o = linear(ks[5], ks[6], HIDDEN + N_LETTER, N_LETTER)
    return dict(embed=embed, w_i2h=w_i2h, b_i2h=b_i2h,
                w_i2o=w_i2o, b_i2o=b_i2o, w_o2o=w_o2o, b_o2o=b_o2o)


def rnn_step_ref(raw, idx, hidden):
    """Pure-JAX reference matching the torch forward (one step)."""
    emb = raw["embed"][idx].reshape(1, -1)
    ic = jnp.concatenate([emb, hidden], axis=1)
    h_new = ic @ raw["w_i2h"] + raw["b_i2h"]
    out = ic @ raw["w_i2o"] + raw["b_i2o"]
    oc = jnp.concatenate([h_new, out], axis=1)
    out = oc @ raw["w_o2o"] + raw["b_o2o"]
    out = jax.nn.log_softmax(out, axis=1)
    return out, h_new


if __name__ == "__main__":
    key = jax.random.PRNGKey(0)
    kp, kx, ks = jax.random.split(key, 3)
    raw = init_params(kp)
    packed_f32 = pack_params(raw)                          # exact-ish path
    packed_bf16 = pack_params(raw, jnp.bfloat16)           # fast weight-stream path

    # ---- single-step forward (matches RNN.forward semantics), f32 weights ----
    hot = jax.random.randint(kx, (), 0, N_LETTER)
    inp = jax.nn.one_hot(hot, N_LETTER, dtype=jnp.float32).reshape(1, N_LETTER)
    h0 = jnp.zeros((1, HIDDEN), jnp.float32)

    out, h1 = rnn_forward(packed_f32, inp, h0)
    out = jax.block_until_ready(out)
    h1 = jax.block_until_ready(h1)

    out_r, h1_r = rnn_step_ref(raw, jnp.argmax(inp), h0)
    assert out.shape == (1, N_LETTER) and h1.shape == (1, HIDDEN)
    assert jnp.allclose(out, out_r, atol=1e-4, rtol=1e-4)
    assert jnp.allclose(h1, h1_r, atol=1e-4, rtol=1e-4)

    # ---- fused multi-step sequence (time loop inside one pallas_call) ----
    T = 8
    ids = jax.random.randint(ks, (T,), 0, N_LETTER, dtype=jnp.int32)

    h = h0
    outs_ref = []
    for t in range(T):
        o, h = rnn_step_ref(raw, ids[t], h)
        outs_ref.append(o)
    outs_ref = jnp.concatenate(outs_ref, axis=0)

    # f32 weights: tight tolerances
    outs, h_final = rnn_forward_seq(packed_f32, ids, h0)
    outs = jax.block_until_ready(outs)
    h_final = jax.block_until_ready(h_final)
    assert outs.shape == (T, N_LETTER) and h_final.shape == (1, HIDDEN)
    assert jnp.allclose(outs, outs_ref, atol=1e-3, rtol=1e-3)
    assert jnp.allclose(h_final, h, atol=1e-3, rtol=1e-3)

    # bf16 resident weights (f32 accumulation / carry): relaxed tolerances
    outs_b, h_final_b = rnn_forward_seq(packed_bf16, ids, h0)
    outs_b = jax.block_until_ready(outs_b)
    h_final_b = jax.block_until_ready(h_final_b)
    assert jnp.allclose(outs_b, outs_ref, atol=2e-2, rtol=2e-2)
    assert jnp.allclose(h_final_b, h, atol=2e-2, rtol=2e-2)

    print("KERNEL_OK")
</pallas_src>

<mosaic_0001>
module attributes {stable_mosaic.version = 11 : i64} {
  func.func @kernel(%arg0: i32, %arg1: memref<8x640xf32, #tpu.memory_space<vmem>>, %arg2: memref<1x384xf32, #tpu.memory_space<vmem>>, %arg3: memref<384x640xf32, #tpu.memory_space<vmem>>, %arg4: memref<640x256xf32, #tpu.memory_space<vmem>>, %arg5: memref<1x256xf32, #tpu.memory_space<vmem>>, %arg6: memref<8x256xf32, #tpu.memory_space<vmem>>, %arg7: memref<1x384xf32, #tpu.memory_space<vmem>>) attributes {dimension_semantics = [#tpu.dimension_semantics<arbitrary>], iteration_bounds = array<i64: 1>, scalar_prefetch = 0 : i64, scratch_operands = 0 : i64, tpu.core_type = #tpu.core_type<tc>, window_params = [{transform_indices = @transform_0, window_bounds = array<i64: 8, 640>}, {pipeline_mode = #tpu.pipeline_mode<synchronous>, transform_indices = @transform_1, window_bounds = array<i64: 1, 384>}, {pipeline_mode = #tpu.pipeline_mode<synchronous>, transform_indices = @transform_2, window_bounds = array<i64: 384, 640>}, {pipeline_mode = #tpu.pipeline_mode<synchronous>, transform_indices = @transform_3, window_bounds = array<i64: 640, 256>}, {pipeline_mode = #tpu.pipeline_mode<synchronous>, transform_indices = @transform_4, window_bounds = array<i64: 1, 256>}, {transform_indices = @transform_5, window_bounds = array<i64: 8, 256>}, {pipeline_mode = #tpu.pipeline_mode<synchronous>, transform_indices = @transform_6, window_bounds = array<i64: 1, 384>}]} {
    %c0_i32 = arith.constant 0 : i32
    %0 = arith.cmpi eq, %arg0, %c0_i32 : i32
    %1 = arith.extui %0 : i1 to i32
    %c0_i32_0 = arith.constant 0 : i32
    %2 = arith.cmpi ne, %1, %c0_i32_0 : i32
    scf.if %2 {
      %c0_145 = arith.constant 0 : index
      %c0_146 = arith.constant 0 : index
      %212 = vector.load %arg2[%c0_145, %c0_146] : memref<1x384xf32, #tpu.memory_space<vmem>>, vector<1x384xf32>
      %c0_147 = arith.constant 0 : index
      %c0_148 = arith.constant 0 : index
      %213 = vector.load %arg7[%c0_147, %c0_148] : memref<1x384xf32, #tpu.memory_space<vmem>>, vector<1x384xf32>
      tpu.vector_store %arg7[%c0_147, %c0_148], %212 {strides = array<i32>} : memref<1x384xf32, #tpu.memory_space<vmem>>, vector<1x384xf32>,
    } else {
    }
    %c8_i32 = arith.constant 8 : i32
    %3 = arith.muli %arg0, %c8_i32 : i32
    %c0 = arith.constant 0 : index
    %c0_1 = arith.constant 0 : index
    %4 = vector.load %arg7[%c0, %c0_1] : memref<1x384xf32, #tpu.memory_space<vmem>>, vector<1x384xf32>
    %c0_2 = arith.constant 0 : index
    %c0_3 = arith.constant 0 : index
    %5 = vector.load %arg1[%c0_2, %c0_3] : memref<8x640xf32, #tpu.memory_space<vmem>>, vector<1x640xf32>
    %c0_4 = arith.constant 0 : index
    %c0_5 = arith.constant 0 : index
    %6 = vector.load %arg3[%c0_4, %c0_5] : memref<384x640xf32, #tpu.memory_space<vmem>>, vector<384x640xf32>
    %cst = arith.constant dense<0.000000e+00> : vector<1x640xf32>
    %7 = tpu.matmul %4, %6, %cst {dimension_numbers = #tpu.dot_dimension_numbers<[1], [0], [0], [1], [0, 0, 1, 1], [], []>} : vector<1x384xf32>, vector<384x640xf32>, vector<1x640xf32> -> vector<1x640xf32>
    %8 = arith.addf %5, %7 : vector<1x640xf32>
    %c0_6 = arith.constant 0 : index
    %c0_7 = arith.constant 0 : index
    %9 = vector.load %arg4[%c0_6, %c0_7] : memref<640x256xf32, #tpu.memory_space<vmem>>, vector<640x256xf32>
    %cst_8 = arith.constant dense<0.000000e+00> : vector<1x256xf32>
    %10 = tpu.matmul %8, %9, %cst_8 {dimension_numbers = #tpu.dot_dimension_numbers<[1], [0], [0], [1], [0, 0, 1, 1], [], []>} : vector<1x640xf32>, vector<640x256xf32>, vector<1x256xf32> -> vector<1x256xf32>
    %c0_9 = arith.constant 0 : index
    %c0_10 = arith.constant 0 : index
    %11 = vector.load %arg5[%c0_9, %c0_10] : memref<1x256xf32, #tpu.memory_space<vmem>>, vector<1x256xf32>
    %12 = arith.addf %10, %11 : vector<1x256xf32>
    %cst_11 = arith.constant dense<0xFF800000> : vector<1xf32>
    %13 = vector.multi_reduction <maximumf>, %12, %cst_11 [1] : vector<1x256xf32> to vector<1xf32>
    %14 = vector.shape_cast %13 : vector<1xf32> to vector<1x1xf32>
    %15 = vector.broadcast %14 : vector<1x1xf32> to vector<1x256xf32>
    %16 = arith.subf %12, %15 : vector<1x256xf32>
    %17 = math.exp %16 : vector<1x256xf32>
    %cst_12 = arith.constant dense<0.000000e+00> : vector<1xf32>
    %18 = vector.multi_reduction <add>, %17, %cst_12 [1] : vector<1x256xf32> to vector<1xf32>
    %19 = vector.shape_cast %18 : vector<1xf32> to vector<1x1xf32>
    %20 = math.log %19 : vector<1x1xf32>
    %21 = arith.addf %14, %20 : vector<1x1xf32>
    %22 = vector.broadcast %21 : vector<1x1xf32> to vector<1x256xf32>
    %23 = arith.subf %12, %22 : vector<1x256xf32>
    %c0_13 = arith.constant 0 : index
    %c0_14 = arith.constant 0 : index
    %24 = vector.load %arg6[%c0_13, %c0_14] : memref<8x256xf32, #tpu.memory_space<vmem>>, vector<1x256xf32>
    tpu.vector_store %arg6[%c0_13, %c0_14], %23 {strides = array<i32>} : memref<8x256xf32, #tpu.memory_space<vmem>>, vector<1x256xf32>,
    %25 = vector.extract_strided_slice %8 {offsets = [0, 0], sizes = [1, 384], strides = [1, 1]} : vector<1x640xf32> to vector<1x384xf32>
    %c0_i32_15 = arith.constant 0 : i32
    %26 = arith.addi %3, %c0_i32_15 : i32
    %c1_i32 = arith.constant 1 : i32
    %27 = arith.cmpi slt, %26, %c1_i32 : i32
    %28 = arith.select %27, %25, %4 : vector<1x384xf32>
    %c0_16 = arith.constant 0 : index
    %c0_17 = arith.constant 0 : index
    %29 = vector.load %arg7[%c0_16, %c0_17] : memref<1x384xf32, #tpu.memory_space<vmem>>, vector<1x384xf32>
    tpu.vector_store %arg7[%c0_16, %c0_17], %28 {strides = array<i32>} : memref<1x384xf32, #tpu.memory_space<vmem>>, vector<1x384xf32>,
    %c0_18 = arith.constant 0 : index
    %c0_19 = arith.constant 0 : index
    %30 = vector.load %arg7[%c0_18, %c0_19] : memref<1x384xf32, #tpu.memory_space<vmem>>, vector<1x384xf32>
    %c1 = arith.constant 1 : index
    %c0_20 = arith.constant 0 : index
    %31 = vector.load %arg1[%c1, %c0_20] : memref<8x640xf32, #tpu.memory_space<vmem>>, vector<1x640xf32>
    %c0_21 = arith.constant 0 : index
    %c0_22 = arith.constant 0 : index
    %32 = vector.load %arg3[%c0_21, %c0_22] : memref<384x640xf32, #tpu.memory_space<vmem>>, vector<384x640xf32>
    %cst_23 = arith.constant dense<0.000000e+00> : vector<1x640xf32>
    %33 = tpu.matmul %30, %32, %cst_23 {dimension_numbers = #tpu.dot_dimension_numbers<[1], [0], [0], [1], [0, 0, 1, 1], [], []>} : vector<1x384xf32>, vector<384x640xf32>, vector<1x640xf32> -> vector<1x640xf32>
    %34 = arith.addf %31, %33 : vector<1x640xf32>
    %c0_24 = arith.constant 0 : index
    %c0_25 = arith.constant 0 : index
    %35 = vector.load %arg4[%c0_24, %c0_25] : memref<640x256xf32, #tpu.memory_space<vmem>>, vector<640x256xf32>
    %cst_26 = arith.constant dense<0.000000e+00> : vector<1x256xf32>
    %36 = tpu.matmul %34, %35, %cst_26 {dimension_numbers = #tpu.dot_dimension_numbers<[1], [0], [0], [1], [0, 0, 1, 1], [], []>} : vector<1x640xf32>, vector<640x256xf32>, vector<1x256xf32> -> vector<1x256xf32>
    %c0_27 = arith.constant 0 : index
    %c0_28 = arith.constant 0 : index
    %37 = vector.load %arg5[%c0_27, %c0_28] : memref<1x256xf32, #tpu.memory_space<vmem>>, vector<1x256xf32>
    %38 = arith.addf %36, %37 : vector<1x256xf32>
    %cst_29 = arith.constant dense<0xFF800000> : vector<1xf32>
    %39 = vector.multi_reduction <maximumf>, %38, %cst_29 [1] : vector<1x256xf32> to vector<1xf32>
    %40 = vector.shape_cast %39 : vector<1xf32> to vector<1x1xf32>
    %41 = vector.broadcast %40 : vector<1x1xf32> to vector<1x256xf32>
    %42 = arith.subf %38, %41 : vector<1x256xf32>
    %43 = math.exp %42 : vector<1x256xf32>
    %cst_30 = arith.constant dense<0.000000e+00> : vector<1xf32>
    %44 = vector.multi_reduction <add>, %43, %cst_30 [1] : vector<1x256xf32> to vector<1xf32>
    %45 = vector.shape_cast %44 : vector<1xf32> to vector<1x1xf32>
    %46 = math.log %45 : vector<1x1xf32>
    %47 = arith.addf %40, %46 : vector<1x1xf32>
    %48 = vector.broadcast %47 : vector<1x1xf32> to vector<1x256xf32>
    %49 = arith.subf %38, %48 : vector<1x256xf32>
    %c1_31 = arith.constant 1 : index
    %c0_32 = arith.constant 0 : index
    %50 = vector.load %arg6[%c1_31, %c0_32] : memref<8x256xf32, #tpu.memory_space<vmem>>, vector<1x256xf32>
    tpu.vector_store %arg6[%c1_31, %c0_32], %49 {strides = array<i32>} : memref<8x256xf32, #tpu.memory_space<vmem>>, vector<1x256xf32>,
    %51 = vector.extract_strided_slice %34 {offsets = [0, 0], sizes = [1, 384], strides = [1, 1]} : vector<1x640xf32> to vector<1x384xf32>
    %c1_i32_33 = arith.constant 1 : i32
    %52 = arith.addi %3, %c1_i32_33 : i32
    %c1_i32_34 = arith.constant 1 : i32
    %53 = arith.cmpi slt, %52, %c1_i32_34 : i32
    %54 = arith.select %53, %51, %30 : vector<1x384xf32>
    %c0_35 = arith.constant 0 : index
    %c0_36 = arith.constant 0 : index
    %55 = vector.load %arg7[%c0_35, %c0_36] : memref<1x384xf32, #tpu.memory_space<vmem>>, vector<1x384xf32>
    tpu.vector_store %arg7[%c0_35, %c0_36], %54 {strides = array<i32>} : memref<1x384xf32, #tpu.memory_space<vmem>>, vector<1x384xf32>,
    %c0_37 = arith.constant 0 : index
    %c0_38 = arith.constant 0 : index
    %56 = vector.load %arg7[%c0_37, %c0_38] : memref<1x384xf32, #tpu.memory_space<vmem>>, vector<1x384xf32>
    %c2 = arith.constant 2 : index
    %c0_39 = arith.constant 0 : index
    %57 = vector.load %arg1[%c2, %c0_39] : memref<8x640xf32, #tpu.memory_space<vmem>>, vector<1x640xf32>
    %c0_40 = arith.constant 0 : index
    %c0_41 = arith.constant 0 : index
    %58 = vector.load %arg3[%c0_40, %c0_41] : memref<384x640xf32, #tpu.memory_space<vmem>>, vector<384x640xf32>
    %cst_42 = arith.constant dense<0.000000e+00> : vector<1x640xf32>
    %59 = tpu.matmul %56, %58, %cst_42 {dimension_numbers = #tpu.dot_dimension_numbers<[1], [0], [0], [1], [0, 0, 1, 1], [], []>} : vector<1x384xf32>, vector<384x640xf32>, vector<1x640xf32> -> vector<1x640xf32>
    %60 = arith.addf %57, %59 : vector<1x640xf32>
    %c0_43 = arith.constant 0 : index
    %c0_44 = arith.constant 0 : index
    %61 = vector.load %arg4[%c0_43, %c0_44] : memref<640x256xf32, #tpu.memory_space<vmem>>, vector<640x256xf32>
    %cst_45 = arith.constant dense<0.000000e+00> : vector<1x256xf32>
    %62 = tpu.matmul %60, %61, %cst_45 {dimension_numbers = #tpu.dot_dimension_numbers<[1], [0], [0], [1], [0, 0, 1, 1], [], []>} : vector<1x640xf32>, vector<640x256xf32>, vector<1x256xf32> -> vector<1x256xf32>
    %c0_46 = arith.constant 0 : index
    %c0_47 = arith.constant 0 : index
    %63 = vector.load %arg5[%c0_46, %c0_47] : memref<1x256xf32, #tpu.memory_space<vmem>>, vector<1x256xf32>
    %64 = arith.addf %62, %63 : vector<1x256xf32>
    %cst_48 = arith.constant dense<0xFF800000> : vector<1xf32>
    %65 = vector.multi_reduction <maximumf>, %64, %cst_48 [1] : vector<1x256xf32> to vector<1xf32>
    %66 = vector.shape_cast %65 : vector<1xf32> to vector<1x1xf32>
    %67 = vector.broadcast %66 : vector<1x1xf32> to vector<1x256xf32>
    %68 = arith.subf %64, %67 : vector<1x256xf32>
    %69 = math.exp %68 : vector<1x256xf32>
    %cst_49 = arith.constant dense<0.000000e+00> : vector<1xf32>
    %70 = vector.multi_reduction <add>, %69, %cst_49 [1] : vector<1x256xf32> to vector<1xf32>
    %71 = vector.shape_cast %70 : vector<1xf32> to vector<1x1xf32>
    %72 = math.log %71 : vector<1x1xf32>
    %73 = arith.addf %66, %72 : vector<1x1xf32>
    %74 = vector.broadcast %73 : vector<1x1xf32> to vector<1x256xf32>
    %75 = arith.subf %64, %74 : vector<1x256xf32>
    %c2_50 = arith.constant 2 : index
    %c0_51 = arith.constant 0 : index
    %76 = vector.load %arg6[%c2_50, %c0_51] : memref<8x256xf32, #tpu.memory_space<vmem>>, vector<1x256xf32>
    tpu.vector_store %arg6[%c2_50, %c0_51], %75 {strides = array<i32>} : memref<8x256xf32, #tpu.memory_space<vmem>>, vector<1x256xf32>,
    %77 = vector.extract_strided_slice %60 {offsets = [0, 0], sizes = [1, 384], strides = [1, 1]} : vector<1x640xf32> to vector<1x384xf32>
    %c2_i32 = arith.constant 2 : i32
    %78 = arith.addi %3, %c2_i32 : i32
    %c1_i32_52 = arith.constant 1 : i32
    %79 = arith.cmpi slt, %78, %c1_i32_52 : i32
    %80 = arith.select %79, %77, %56 : vector<1x384xf32>
    %c0_53 = arith.constant 0 : index
    %c0_54 = arith.constant 0 : index
    %81 = vector.load %arg7[%c0_53, %c0_54] : memref<1x384xf32, #tpu.memory_space<vmem>>, vector<1x384xf32>
    tpu.vector_store %arg7[%c0_53, %c0_54], %80 {strides = array<i32>} : memref<1x384xf32, #tpu.memory_space<vmem>>, vector<1x384xf32>,
    %c0_55 = arith.constant 0 : index
    %c0_56 = arith.constant 0 : index
    %82 = vector.load %arg7[%c0_55, %c0_56] : memref<1x384xf32, #tpu.memory_space<vmem>>, vector<1x384xf32>
    %c3 = arith.constant 3 : index
    %c0_57 = arith.constant 0 : index
    %83 = vector.load %arg1[%c3, %c0_57] : memref<8x640xf32, #tpu.memory_space<vmem>>, vector<1x640xf32>
    %c0_58 = arith.constant 0 : index
    %c0_59 = arith.constant 0 : index
    %84 = vector.load %arg3[%c0_58, %c0_59] : memref<384x640xf32, #tpu.memory_space<vmem>>, vector<384x640xf32>
    %cst_60 = arith.constant dense<0.000000e+00> : vector<1x640xf32>
    %85 = tpu.matmul %82, %84, %cst_60 {dimension_numbers = #tpu.dot_dimension_numbers<[1], [0], [0], [1], [0, 0, 1, 1], [], []>} : vector<1x384xf32>, vector<384x640xf32>, vector<1x640xf32> -> vector<1x640xf32>
    %86 = arith.addf %83, %85 : vector<1x640xf32>
    %c0_61 = arith.constant 0 : index
    %c0_62 = arith.constant 0 : index
    %87 = vector.load %arg4[%c0_61, %c0_62] : memref<640x256xf32, #tpu.memory_space<vmem>>, vector<640x256xf32>
    %cst_63 = arith.constant dense<0.000000e+00> : vector<1x256xf32>
    %88 = tpu.matmul %86, %87, %cst_63 {dimension_numbers = #tpu.dot_dimension_numbers<[1], [0], [0], [1], [0, 0, 1, 1], [], []>} : vector<1x640xf32>, vector<640x256xf32>, vector<1x256xf32> -> vector<1x256xf32>
    %c0_64 = arith.constant 0 : index
    %c0_65 = arith.constant 0 : index
    %89 = vector.load %arg5[%c0_64, %c0_65] : memref<1x256xf32, #tpu.memory_space<vmem>>, vector<1x256xf32>
    %90 = arith.addf %88, %89 : vector<1x256xf32>
    %cst_66 = arith.constant dense<0xFF800000> : vector<1xf32>
    %91 = vector.multi_reduction <maximumf>, %90, %cst_66 [1] : vector<1x256xf32> to vector<1xf32>
    %92 = vector.shape_cast %91 : vector<1xf32> to vector<1x1xf32>
    %93 = vector.broadcast %92 : vector<1x1xf32> to vector<1x256xf32>
    %94 = arith.subf %90, %93 : vector<1x256xf32>
    %95 = math.exp %94 : vector<1x256xf32>
    %cst_67 = arith.constant dense<0.000000e+00> : vector<1xf32>
    %96 = vector.multi_reduction <add>, %95, %cst_67 [1] : vector<1x256xf32> to vector<1xf32>
    %97 = vector.shape_cast %96 : vector<1xf32> to vector<1x1xf32>
    %98 = math.log %97 : vector<1x1xf32>
    %99 = arith.addf %92, %98 : vector<1x1xf32>
    %100 = vector.broadcast %99 : vector<1x1xf32> to vector<1x256xf32>
    %101 = arith.subf %90, %100 : vector<1x256xf32>
    %c3_68 = arith.constant 3 : index
    %c0_69 = arith.constant 0 : index
    %102 = vector.load %arg6[%c3_68, %c0_69] : memref<8x256xf32, #tpu.memory_space<vmem>>, vector<1x256xf32>
    tpu.vector_store %arg6[%c3_68, %c0_69], %101 {strides = array<i32>} : memref<8x256xf32, #tpu.memory_space<vmem>>, vector<1x256xf32>,
    %103 = vector.extract_strided_slice %86 {offsets = [0, 0], sizes = [1, 384], strides = [1, 1]} : vector<1x640xf32> to vector<1x384xf32>
    %c3_i32 = arith.constant 3 : i32
    %104 = arith.addi %3, %c3_i32 : i32
    %c1_i32_70 = arith.constant 1 : i32
    %105 = arith.cmpi slt, %104, %c1_i32_70 : i32
    %106 = arith.select %105, %103, %82 : vector<1x384xf32>
    %c0_71 = arith.constant 0 : index
    %c0_72 = arith.constant 0 : index
    %107 = vector.load %arg7[%c0_71, %c0_72] : memref<1x384xf32, #tpu.memory_space<vmem>>, vector<1x384xf32>
    tpu.vector_store %arg7[%c0_71, %c0_72], %106 {strides = array<i32>} : memref<1x384xf32, #tpu.memory_space<vmem>>, vector<1x384xf32>,
    %c0_73 = arith.constant 0 : index
    %c0_74 = arith.constant 0 : index
    %108 = vector.load %arg7[%c0_73, %c0_74] : memref<1x384xf32, #tpu.memory_space<vmem>>, vector<1x384xf32>
    %c4 = arith.constant 4 : index
    %c0_75 = arith.constant 0 : index
    %109 = vector.load %arg1[%c4, %c0_75] : memref<8x640xf32, #tpu.memory_space<vmem>>, vector<1x640xf32>
    %c0_76 = arith.constant 0 : index
    %c0_77 = arith.constant 0 : index
    %110 = vector.load %arg3[%c0_76, %c0_77] : memref<384x640xf32, #tpu.memory_space<vmem>>, vector<384x640xf32>
    %cst_78 = arith.constant dense<0.000000e+00> : vector<1x640xf32>
    %111 = tpu.matmul %108, %110, %cst_78 {dimension_numbers = #tpu.dot_dimension_numbers<[1], [0], [0], [1], [0, 0, 1, 1], [], []>} : vector<1x384xf32>, vector<384x640xf32>, vector<1x640xf32> -> vector<1x640xf32>
    %112 = arith.addf %109, %111 : vector<1x640xf32>
    %c0_79 = arith.constant 0 : index
    %c0_80 = arith.constant 0 : index
    %113 = vector.load %arg4[%c0_79, %c0_80] : memref<640x256xf32, #tpu.memory_space<vmem>>, vector<640x256xf32>
    %cst_81 = arith.constant dense<0.000000e+00> : vector<1x256xf32>
    %114 = tpu.matmul %112, %113, %cst_81 {dimension_numbers = #tpu.dot_dimension_numbers<[1], [0], [0], [1], [0, 0, 1, 1], [], []>} : vector<1x640xf32>, vector<640x256xf32>, vector<1x256xf32> -> vector<1x256xf32>
    %c0_82 = arith.constant 0 : index
    %c0_83 = arith.constant 0 : index
    %115 = vector.load %arg5[%c0_82, %c0_83] : memref<1x256xf32, #tpu.memory_space<vmem>>, vector<1x256xf32>
    %116 = arith.addf %114, %115 : vector<1x256xf32>
    %cst_84 = arith.constant dense<0xFF800000> : vector<1xf32>
    %117 = vector.multi_reduction <maximumf>, %116, %cst_84 [1] : vector<1x256xf32> to vector<1xf32>
    %118 = vector.shape_cast %117 : vector<1xf32> to vector<1x1xf32>
    %119 = vector.broadcast %118 : vector<1x1xf32> to vector<1x256xf32>
    %120 = arith.subf %116, %119 : vector<1x256xf32>
    %121 = math.exp %120 : vector<1x256xf32>
    %cst_85 = arith.constant dense<0.000000e+00> : vector<1xf32>
    %122 = vector.multi_reduction <add>, %121, %cst_85 [1] : vector<1x256xf32> to vector<1xf32>
    %123 = vector.shape_cast %122 : vector<1xf32> to vector<1x1xf32>
    %124 = math.log %123 : vector<1x1xf32>
    %125 = arith.addf %118, %124 : vector<1x1xf32>
    %126 = vector.broadcast %125 : vector<1x1xf32> to vector<1x256xf32>
    %127 = arith.subf %116, %126 : vector<1x256xf32>
    %c4_86 = arith.constant 4 : index
    %c0_87 = arith.constant 0 : index
    %128 = vector.load %arg6[%c4_86, %c0_87] : memref<8x256xf32, #tpu.memory_space<vmem>>, vector<1x256xf32>
    tpu.vector_store %arg6[%c4_86, %c0_87], %127 {strides = array<i32>} : memref<8x256xf32, #tpu.memory_space<vmem>>, vector<1x256xf32>,
    %129 = vector.extract_strided_slice %112 {offsets = [0, 0], sizes = [1, 384], strides = [1, 1]} : vector<1x640xf32> to vector<1x384xf32>
    %c4_i32 = arith.constant 4 : i32
    %130 = arith.addi %3, %c4_i32 : i32
    %c1_i32_88 = arith.constant 1 : i32
    %131 = arith.cmpi slt, %130, %c1_i32_88 : i32
    %132 = arith.select %131, %129, %108 : vector<1x384xf32>
    %c0_89 = arith.constant 0 : index
    %c0_90 = arith.constant 0 : index
    %133 = vector.load %arg7[%c0_89, %c0_90] : memref<1x384xf32, #tpu.memory_space<vmem>>, vector<1x384xf32>
    tpu.vector_store %arg7[%c0_89, %c0_90], %132 {strides = array<i32>} : memref<1x384xf32, #tpu.memory_space<vmem>>, vector<1x384xf32>,
    %c0_91 = arith.constant 0 : index
    %c0_92 = arith.constant 0 : index
    %134 = vector.load %arg7[%c0_91, %c0_92] : memref<1x384xf32, #tpu.memory_space<vmem>>, vector<1x384xf32>
    %c5 = arith.constant 5 : index
    %c0_93 = arith.constant 0 : index
    %135 = vector.load %arg1[%c5, %c0_93] : memref<8x640xf32, #tpu.memory_space<vmem>>, vector<1x640xf32>
    %c0_94 = arith.constant 0 : index
    %c0_95 = arith.constant 0 : index
    %136 = vector.load %arg3[%c0_94, %c0_95] : memref<384x640xf32, #tpu.memory_space<vmem>>, vector<384x640xf32>
    %cst_96 = arith.constant dense<0.000000e+00> : vector<1x640xf32>
    %137 = tpu.matmul %134, %136, %cst_96 {dimension_numbers = #tpu.dot_dimension_numbers<[1], [0], [0], [1], [0, 0, 1, 1], [], []>} : vector<1x384xf32>, vector<384x640xf32>, vector<1x640xf32> -> vector<1x640xf32>
    %138 = arith.addf %135, %137 : vector<1x640xf32>
    %c0_97 = arith.constant 0 : index
    %c0_98 = arith.constant 0 : index
    %139 = vector.load %arg4[%c0_97, %c0_98] : memref<640x256xf32, #tpu.memory_space<vmem>>, vector<640x256xf32>
    %cst_99 = arith.constant dense<0.000000e+00> : vector<1x256xf32>
    %140 = tpu.matmul %138, %139, %cst_99 {dimension_numbers = #tpu.dot_dimension_numbers<[1], [0], [0], [1], [0, 0, 1, 1], [], []>} : vector<1x640xf32>, vector<640x256xf32>, vector<1x256xf32> -> vector<1x256xf32>
    %c0_100 = arith.constant 0 : index
    %c0_101 = arith.constant 0 : index
    %141 = vector.load %arg5[%c0_100, %c0_101] : memref<1x256xf32, #tpu.memory_space<vmem>>, vector<1x256xf32>
    %142 = arith.addf %140, %141 : vector<1x256xf32>
    %cst_102 = arith.constant dense<0xFF800000> : vector<1xf32>
    %143 = vector.multi_reduction <maximumf>, %142, %cst_102 [1] : vector<1x256xf32> to vector<1xf32>
    %144 = vector.shape_cast %143 : vector<1xf32> to vector<1x1xf32>
    %145 = vector.broadcast %144 : vector<1x1xf32> to vector<1x256xf32>
    %146 = arith.subf %142, %145 : vector<1x256xf32>
    %147 = math.exp %146 : vector<1x256xf32>
    %cst_103 = arith.constant dense<0.000000e+00> : vector<1xf32>
    %148 = vector.multi_reduction <add>, %147, %cst_103 [1] : vector<1x256xf32> to vector<1xf32>
    %149 = vector.shape_cast %148 : vector<1xf32> to vector<1x1xf32>
    %150 = math.log %149 : vector<1x1xf32>
    %151 = arith.addf %144, %150 : vector<1x1xf32>
    %152 = vector.broadcast %151 : vector<1x1xf32> to vector<1x256xf32>
    %153 = arith.subf %142, %152 : vector<1x256xf32>
    %c5_104 = arith.constant 5 : index
    %c0_105 = arith.constant 0 : index
    %154 = vector.load %arg6[%c5_104, %c0_105] : memref<8x256xf32, #tpu.memory_space<vmem>>, vector<1x256xf32>
    tpu.vector_store %arg6[%c5_104, %c0_105], %153 {strides = array<i32>} : memref<8x256xf32, #tpu.memory_space<vmem>>, vector<1x256xf32>,
    %155 = vector.extract_strided_slice %138 {offsets = [0, 0], sizes = [1, 384], strides = [1, 1]} : vector<1x640xf32> to vector<1x384xf32>
    %c5_i32 = arith.constant 5 : i32
    %156 = arith.addi %3, %c5_i32 : i32
    %c1_i32_106 = arith.constant 1 : i32
    %157 = arith.cmpi slt, %156, %c1_i32_106 : i32
    %158 = arith.select %157, %155, %134 : vector<1x384xf32>
    %c0_107 = arith.constant 0 : index
    %c0_108 = arith.constant 0 : index
    %159 = vector.load %arg7[%c0_107, %c0_108] : memref<1x384xf32, #tpu.memory_space<vmem>>, vector<1x384xf32>
    tpu.vector_store %arg7[%c0_107, %c0_108], %158 {strides = array<i32>} : memref<1x384xf32, #tpu.memory_space<vmem>>, vector<1x384xf32>,
    %c0_109 = arith.constant 0 : index
    %c0_110 = arith.constant 0 : index
    %160 = vector.load %arg7[%c0_109, %c0_110] : memref<1x384xf32, #tpu.memory_space<vmem>>, vector<1x384xf32>
    %c6 = arith.constant 6 : index
    %c0_111 = arith.constant 0 : index
    %161 = vector.load %arg1[%c6, %c0_111] : memref<8x640xf32, #tpu.memory_space<vmem>>, vector<1x640xf32>
    %c0_112 = arith.constant 0 : index
    %c0_113 = arith.constant 0 : index
    %162 = vector.load %arg3[%c0_112, %c0_113] : memref<384x640xf32, #tpu.memory_space<vmem>>, vector<384x640xf32>
    %cst_114 = arith.constant dense<0.000000e+00> : vector<1x640xf32>
    %163 = tpu.matmul %160, %162, %cst_114 {dimension_numbers = #tpu.dot_dimension_numbers<[1], [0], [0], [1], [0, 0, 1, 1], [], []>} : vector<1x384xf32>, vector<384x640xf32>, vector<1x640xf32> -> vector<1x640xf32>
    %164 = arith.addf %161, %163 : vector<1x640xf32>
    %c0_115 = arith.constant 0 : index
    %c0_116 = arith.constant 0 : index
    %165 = vector.load %arg4[%c0_115, %c0_116] : memref<640x256xf32, #tpu.memory_space<vmem>>, vector<640x256xf32>
    %cst_117 = arith.constant dense<0.000000e+00> : vector<1x256xf32>
    %166 = tpu.matmul %164, %165, %cst_117 {dimension_numbers = #tpu.dot_dimension_numbers<[1], [0], [0], [1], [0, 0, 1, 1], [], []>} : vector<1x640xf32>, vector<640x256xf32>, vector<1x256xf32> -> vector<1x256xf32>
    %c0_118 = arith.constant 0 : index
    %c0_119 = arith.constant 0 : index
    %167 = vector.load %arg5[%c0_118, %c0_119] : memref<1x256xf32, #tpu.memory_space<vmem>>, vector<1x256xf32>
    %168 = arith.addf %166, %167 : vector<1x256xf32>
    %cst_120 = arith.constant dense<0xFF800000> : vector<1xf32>
    %169 = vector.multi_reduction <maximumf>, %168, %cst_120 [1] : vector<1x256xf32> to vector<1xf32>
    %170 = vector.shape_cast %169 : vector<1xf32> to vector<1x1xf32>
    %171 = vector.broadcast %170 : vector<1x1xf32> to vector<1x256xf32>
    %172 = arith.subf %168, %171 : vector<1x256xf32>
    %173 = math.exp %172 : vector<1x256xf32>
    %cst_121 = arith.constant dense<0.000000e+00> : vector<1xf32>
    %174 = vector.multi_reduction <add>, %173, %cst_121 [1] : vector<1x256xf32> to vector<1xf32>
    %175 = vector.shape_cast %174 : vector<1xf32> to vector<1x1xf32>
    %176 = math.log %175 : vector<1x1xf32>
    %177 = arith.addf %170, %176 : vector<1x1xf32>
    %178 = vector.broadcast %177 : vector<1x1xf32> to vector<1x256xf32>
    %179 = arith.subf %168, %178 : vector<1x256xf32>
    %c6_122 = arith.constant 6 : index
    %c0_123 = arith.constant 0 : index
    %180 = vector.load %arg6[%c6_122, %c0_123] : memref<8x256xf32, #tpu.memory_space<vmem>>, vector<1x256xf32>
    tpu.vector_store %arg6[%c6_122, %c0_123], %179 {strides = array<i32>} : memref<8x256xf32, #tpu.memory_space<vmem>>, vector<1x256xf32>,
    %181 = vector.extract_strided_slice %164 {offsets = [0, 0], sizes = [1, 384], strides = [1, 1]} : vector<1x640xf32> to vector<1x384xf32>
    %c6_i32 = arith.constant 6 : i32
    %182 = arith.addi %3, %c6_i32 : i32
    %c1_i32_124 = arith.constant 1 : i32
    %183 = arith.cmpi slt, %182, %c1_i32_124 : i32
    %184 = arith.select %183, %181, %160 : vector<1x384xf32>
    %c0_125 = arith.constant 0 : index
    %c0_126 = arith.constant 0 : index
    %185 = vector.load %arg7[%c0_125, %c0_126] : memref<1x384xf32, #tpu.memory_space<vmem>>, vector<1x384xf32>
    tpu.vector_store %arg7[%c0_125, %c0_126], %184 {strides = array<i32>} : memref<1x384xf32, #tpu.memory_space<vmem>>, vector<1x384xf32>,
    %c0_127 = arith.constant 0 : index
    %c0_128 = arith.constant 0 : index
    %186 = vector.load %arg7[%c0_127, %c0_128] : memref<1x384xf32, #tpu.memory_space<vmem>>, vector<1x384xf32>
    %c7 = arith.constant 7 : index
    %c0_129 = arith.constant 0 : index
    %187 = vector.load %arg1[%c7, %c0_129] : memref<8x640xf32, #tpu.memory_space<vmem>>, vector<1x640xf32>
    %c0_130 = arith.constant 0 : index
    %c0_131 = arith.constant 0 : index
    %188 = vector.load %arg3[%c0_130, %c0_131] : memref<384x640xf32, #tpu.memory_space<vmem>>, vector<384x640xf32>
    %cst_132 = arith.constant dense<0.000000e+00> : vector<1x640xf32>
    %189 = tpu.matmul %186, %188, %cst_132 {dimension_numbers = #tpu.dot_dimension_numbers<[1], [0], [0], [1], [0, 0, 1, 1], [], []>} : vector<1x384xf32>, vector<384x640xf32>, vector<1x640xf32> -> vector<1x640xf32>
    %190 = arith.addf %187, %189 : vector<1x640xf32>
    %c0_133 = arith.constant 0 : index
    %c0_134 = arith.constant 0 : index
    %191 = vector.load %arg4[%c0_133, %c0_134] : memref<640x256xf32, #tpu.memory_space<vmem>>, vector<640x256xf32>
    %cst_135 = arith.constant dense<0.000000e+00> : vector<1x256xf32>
    %192 = tpu.matmul %190, %191, %cst_135 {dimension_numbers = #tpu.dot_dimension_numbers<[1], [0], [0], [1], [0, 0, 1, 1], [], []>} : vector<1x640xf32>, vector<640x256xf32>, vector<1x256xf32> -> vector<1x256xf32>
    %c0_136 = arith.constant 0 : index
    %c0_137 = arith.constant 0 : index
    %193 = vector.load %arg5[%c0_136, %c0_137] : memref<1x256xf32, #tpu.memory_space<vmem>>, vector<1x256xf32>
    %194 = arith.addf %192, %193 : vector<1x256xf32>
    %cst_138 = arith.constant dense<0xFF800000> : vector<1xf32>
    %195 = vector.multi_reduction <maximumf>, %194, %cst_138 [1] : vector<1x256xf32> to vector<1xf32>
    %196 = vector.shape_cast %195 : vector<1xf32> to vector<1x1xf32>
    %197 = vector.broadcast %196 : vector<1x1xf32> to vector<1x256xf32>
    %198 = arith.subf %194, %197 : vector<1x256xf32>
    %199 = math.exp %198 : vector<1x256xf32>
    %cst_139 = arith.constant dense<0.000000e+00> : vector<1xf32>
    %200 = vector.multi_reduction <add>, %199, %cst_139 [1] : vector<1x256xf32> to vector<1xf32>
    %201 = vector.shape_cast %200 : vector<1xf32> to vector<1x1xf32>
    %202 = math.log %201 : vector<1x1xf32>
    %203 = arith.addf %196, %202 : vector<1x1xf32>
    %204 = vector.broadcast %203 : vector<1x1xf32> to vector<1x256xf32>
    %205 = arith.subf %194, %204 : vector<1x256xf32>
    %c7_140 = arith.constant 7 : index
    %c0_141 = arith.constant 0 : index
    %206 = vector.load %arg6[%c7_140, %c0_141] : memref<8x256xf32, #tpu.memory_space<vmem>>, vector<1x256xf32>
    tpu.vector_store %arg6[%c7_140, %c0_141], %205 {strides = array<i32>} : memref<8x256xf32, #tpu.memory_space<vmem>>, vector<1x256xf32>,
    %207 = vector.extract_strided_slice %190 {offsets = [0, 0], sizes = [1, 384], strides = [1, 1]} : vector<1x640xf32> to vector<1x384xf32>
    %c7_i32 = arith.constant 7 : i32
    %208 = arith.addi %3, %c7_i32 : i32
    %c1_i32_142 = arith.constant 1 : i32
    %209 = arith.cmpi slt, %208, %c1_i32_142 : i32
    %210 = arith.select %209, %207, %186 : vector<1x384xf32>
    %c0_143 = arith.constant 0 : index
    %c0_144 = arith.constant 0 : index
    %211 = vector.load %arg7[%c0_143, %c0_144] : memref<1x384xf32, #tpu.memory_space<vmem>>, vector<1x384xf32>
    tpu.vector_store %arg7[%c0_143, %c0_144], %210 {strides = array<i32>} : memref<1x384xf32, #tpu.memory_space<vmem>>, vector<1x384xf32>,
    return
  }
  func.func @transform_0(%arg0: i32) -> (i32, i32) {
    %c0_i32 = arith.constant 0 : i32
    %c0_i32_0 = arith.constant 0 : i32
    return %arg0, %c0_i32 : i32, i32
  }
  func.func @transform_1(%arg0: i32) -> (i32, i32) {
    %c0_i32 = arith.constant 0 : i32
    %c0_i32_0 = arith.constant 0 : i32
    %c0_i32_1 = arith.constant 0 : i32
    return %c0_i32, %c0_i32_0 : i32, i32
  }
  func.func @transform_2(%arg0: i32) -> (i32, i32) {
    %c0_i32 = arith.constant 0 : i32
    %c0_i32_0 = arith.constant 0 : i32
    %c0_i32_1 = arith.constant 0 : i32
    return %c0_i32, %c0_i32_0 : i32, i32
  }
  func.func @transform_3(%arg0: i32) -> (i32, i32) {
    %c0_i32 = arith.constant 0 : i32
    %c0_i32_0 = arith.constant 0 : i32
    %c0_i32_1 = arith.constant 0 : i32
    return %c0_i32, %c0_i32_0 : i32, i32
  }
  func.func @transform_4(%arg0: i32) -> (i32, i32) {
    %c0_i32 = arith.constant 0 : i32
    %c0_i32_0 = arith.constant 0 : i32
    %c0_i32_1 = arith.constant 0 : i32
    return %c0_i32, %c0_i32_0 : i32, i32
  }
  func.func @transform_5(%arg0: i32) -> (i32, i32) {
    %c0_i32 = arith.constant 0 : i32
    %c0_i32_0 = arith.constant 0 : i32
    return %arg0, %c0_i32 : i32, i32
  }
  func.func @transform_6(%arg0: i32) -> (i32, i32) {
    %c0_i32 = arith.constant 0 : i32
    %c0_i32_0 = arith.constant 0 : i32
    %c0_i32_1 = arith.constant 0 : i32
    return %c0_i32, %c0_i32_0 : i32, i32
  }
}

</mosaic_0001>

<llo_original>
// kernel: tpu_custom_call.1
$region0: #{tpu_custom_call.1}
  #allocation0 [shape = 'u32[]', space=smem, size = 0x4, offset = 0x4, fixed_abs, tag = 'smem constant byte address 0x4 - core index']
  #allocation1 [shape = 'u32[144,128]{1,0:T(1,128)}', space=vmem, size = 0x12000, scoped, tag = 'internal scratch']
  %s0 = inlined_call_operand.hbm [shape: f32[8,640], index: 0, kind: input, shape index: {}]
  %s1 = inlined_call_operand.vmem [shape: f32[1,384], index: 1, kind: input, shape index: {}]
  %s2 = inlined_call_operand.hbm [shape: f32[384,640], index: 2, kind: input, shape index: {}]
  %s3 = inlined_call_operand.hbm [shape: f32[640,256], index: 3, kind: input, shape index: {}]
  %s4 = inlined_call_operand.vmem [shape: f32[1,256], index: 4, kind: input, shape index: {}]
  %s5 = inlined_call_operand.hbm [shape: f32[8,256], index: 5, kind: output, shape index: {0}]
  %s6 = inlined_call_operand.hbm [shape: f32[1,384], index: 6, kind: output, shape index: {1}]
  %7 = xla_tuple %s5, %s6
  %s8 = sld [smem:[#allocation0]]
  $region54: #{tpu_custom_call.1} parent=0
    _
  %s10 = ssub.s32 1, %s8
  %s11 = scalar_select 0, %s10, %s8
  $region1: #{tpu_custom_call.1} parent=0
    #allocation2 [shape = 'u8[20480]{0}', space=vmem, size = 0x5000, scoped, tag = 'input window, operand 0, single buffered']
    #allocation3 [shape = 's32[1]{0}', space=sflag, size = 0x4, scoped, tag = 'scoped memory for tpu_custom_call.1']
    #allocation4 [shape = 's32[1]{0}', space=sflag, size = 0x4, scoped, tag = 'scoped memory for tpu_custom_call.1']
    #allocation5 [shape = 'u8[983040]{0}', space=vmem, size = 0xf0000, scoped, tag = 'input window, operand 2, single buffered']
    #allocation6 [shape = 's32[1]{0}', space=sflag, size = 0x4, scoped, tag = 'scoped memory for tpu_custom_call.1']
    #allocation7 [shape = 'u8[655360]{0}', space=vmem, size = 0xa0000, scoped, tag = 'input window, operand 3, single buffered']
    #allocation8 [shape = 'u8[8192]{0}', space=vmem, size = 0x2000, scoped, tag = 'output window, operand 0, single buffered']
    #allocation9 [shape = 'u8[1536]{0}', space=vmem, size = 0x800, scoped, tag = 'output window, operand 1, single buffered']
    #allocation10 [shape = 's32[1]{0}', space=sflag, size = 0x4, scoped, tag = 'scoped memory for tpu_custom_call.1']
    %12 = vsyncpa [#allocation3], 0
    %13 = vsyncpa [#allocation6], 0
    %14 = vsyncpa [#allocation4], 0
    %15 = vsyncpa [#allocation10], 0
    // Predicated region
    $region2: #{tpu_custom_call.1} parent=1 // pred_check
      _
    $region3: #{tpu_custom_call.1} parent=1 // pred_check_branch
      %17 = sbr.rel (0) target = $region5
    $region4: #{tpu_custom_call.1} parent=1 // pred_region
      %s19 = ssub.s32 640, 640
      %20 = vsyncadd [#allocation3], %s19
      %s22 = sshll.u32 [#allocation2], 4
      %s23 = int_to_ptr.vmem [resolvable:$true] %s22
      %25 = dma.hbm_to_vmem [thread:$0]  %s0, 640, %s23, [#allocation3]
    $region5: #{tpu_custom_call.1} parent=1 // pred_fallthru
      _
    // Predicated region
    $region6: #{tpu_custom_call.1} parent=1 // pred_check
      _
    $region7: #{tpu_custom_call.1} parent=1 // pred_check_branch
      %27 = sbr.rel (0) target = $region9
    $region8: #{tpu_custom_call.1} parent=1 // pred_region
      _
    $region9: #{tpu_custom_call.1} parent=1 // pred_fallthru
      _
    // Predicated region
    $region10: #{tpu_custom_call.1} parent=1 // pred_check
      _
    $region11: #{tpu_custom_call.1} parent=1 // pred_check_branch
      %29 = sbr.rel (0) target = $region13
    $region12: #{tpu_custom_call.1} parent=1 // pred_region
      %s31 = ssub.s32 30720, 30720
      %32 = vsyncadd [#allocation6], %s31
      %s33 = sshll.u32 [#allocation5], 4
      %s34 = int_to_ptr.vmem [resolvable:$true] %s33
      %39 = dma.hbm_to_vmem [thread:$0]  %s2, 30720, %s34, [#allocation6], 640, 640, 40
    $region13: #{tpu_custom_call.1} parent=1 // pred_fallthru
      _
    // Predicated region
    $region14: #{tpu_custom_call.1} parent=1 // pred_check
      _
    $region15: #{tpu_custom_call.1} parent=1 // pred_check_branch
      %41 = sbr.rel (0) target = $region17
    $region16: #{tpu_custom_call.1} parent=1 // pred_region
      %s43 = ssub.s32 20480, 20480
      %44 = vsyncadd [#allocation6], %s43
      %s45 = sshll.u32 [#allocation7], 4
      %s46 = int_to_ptr.vmem [resolvable:$true] %s45
      %51 = dma.hbm_to_vmem [thread:$0]  %s3, 20480, %s46, [#allocation6], 256, 256, 16
    $region17: #{tpu_custom_call.1} parent=1 // pred_fallthru
      _
    // Predicated region
    $region18: #{tpu_custom_call.1} parent=1 // pred_check
      _
    $region19: #{tpu_custom_call.1} parent=1 // pred_check_branch
      %53 = sbr.rel (0) target = $region21
    $region20: #{tpu_custom_call.1} parent=1 // pred_region
      _
    $region21: #{tpu_custom_call.1} parent=1 // pred_fallthru
      _
    // Predicated region
    $region22: #{tpu_custom_call.1} parent=1 // pred_check
      _
    $region23: #{tpu_custom_call.1} parent=1 // pred_check_branch
      %55 = sbr.rel (0) target = $region25
    $region24: #{tpu_custom_call.1} parent=1 // pred_region
      %56 = dma.done [#allocation3], 640
    $region25: #{tpu_custom_call.1} parent=1 // pred_fallthru
      _
    // Predicated region
    $region26: #{tpu_custom_call.1} parent=1 // pred_check
      _
    $region27: #{tpu_custom_call.1} parent=1 // pred_check_branch
      %58 = sbr.rel (0) target = $region29
    $region28: #{tpu_custom_call.1} parent=1 // pred_region
      %59 = dma.done [#allocation6], 30720
    $region29: #{tpu_custom_call.1} parent=1 // pred_fallthru
      _
    // Predicated region
    $region30: #{tpu_custom_call.1} parent=1 // pred_check
      _
    $region31: #{tpu_custom_call.1} parent=1 // pred_check_branch
      %61 = sbr.rel (0) target = $region33
    $region32: #{tpu_custom_call.1} parent=1 // pred_region
      %62 = dma.done [#allocation6], 20480
    $region33: #{tpu_custom_call.1} parent=1 // pred_fallthru
      _
    %p63 = scmp.eq.s32.totalorder 0, 0
    // Predicated region
    $region34: #{tpu_custom_call.1} parent=1 // pred_check
      %p64 = pneg %p63
    $region35: #{tpu_custom_call.1} parent=1 // pred_check_branch
      %66 = sbr.rel (%p64) target = $region37
    $region36: #{tpu_custom_call.1} parent=1 // pred_region
      %v67 = vld [vmem:[%s1] sm:$0x7]
      %v68 = vlaneseq
      %vm69 = vcmp.ge.s32.totalorder %v68, 0
      %vm70 = vcmp.lt.s32.totalorder %v68, 384
      %vm71 = vmand %vm69, %vm70
      %72 = vst.msk [vmem:[#allocation9] sm:$0x7] %vm71, %v67
    $region37: #{tpu_custom_call.1} parent=1 // pred_fallthru
      _
    %s73 = smul.u32 0, 8
    %v74 = vld [vmem:[#allocation9] sm:$0x7]
    %v75 = vld [vmem:[#allocation2] ss:$8 sm:$0xf]
    %v76 = vld [vmem:[#allocation2] ss:$8 sm:$0x10]
    %v77 = vor.u32 %v75, %v76
    %v78 = vld [vmem:[#allocation5] sm:$0xff]
    %v79 = vld [vmem:[#allocation5 + $0x8] sm:$0xff]
    %v80 = vld [vmem:[#allocation5 + $0x10] sm:$0xff]
    %v81 = vld [vmem:[#allocation5 + $0x18] sm:$0xff]
    %v82 = vld [vmem:[#allocation5 + $0x20] sm:$0xff]
    %v83 = vld [vmem:[#allocation5 + $0x28] sm:$0xff]
    %v84 = vld [vmem:[#allocation5 + $0x30] sm:$0xff]
    %v85 = vld [vmem:[#allocation5 + $0x38] sm:$0xff]
    %v86 = vld [vmem:[#allocation5 + $0x40] sm:$0xff]
    %v87 = vld [vmem:[#allocation5 + $0x48] sm:$0xff]
    %v88 = vld [vmem:[#allocation5 + $0x50] sm:$0xff]
    %v89 = vld [vmem:[#allocation5 + $0x58] sm:$0xff]
    %v90 = vld [vmem:[#allocation5 + $0x60] sm:$0xff]
    %v91 = vld [vmem:[#allocation5 + $0x68] sm:$0xff]
    %v92 = vld [vmem:[#allocation5 + $0x70] sm:$0xff]
    %v93 = vld [vmem:[#allocation5 + $0x78] sm:$0xff]
    %v94 = vld [vmem:[#allocation5 + $0x80] sm:$0xff]
    %v95 = vld [vmem:[#allocation5 + $0x88] sm:$0xff]
    %v96 = vld [vmem:[#allocation5 + $0x90] sm:$0xff]
    %v97 = vld [vmem:[#allocation5 + $0x98] sm:$0xff]
    %v98 = vld [vmem:[#allocation5 + $0xa0] sm:$0xff]
    %v99 = vld [vmem:[#allocation5 + $0xa8] sm:$0xff]
    %v100 = vld [vmem:[#allocation5 + $0xb0] sm:$0xff]
    %v101 = vld [vmem:[#allocation5 + $0xb8] sm:$0xff]
    %v102 = vld [vmem:[#allocation5 + $0xc0] sm:$0xff]
    %v103 = vld [vmem:[#allocation5 + $0xc8] sm:$0xff]
    %v104 = vld [vmem:[#allocation5 + $0xd0] sm:$0xff]
    %v105 = vld [vmem:[#allocation5 + $0xd8] sm:$0xff]
    %v106 = vld [vmem:[#allocation5 + $0xe0] sm:$0xff]
    %v107 = vld [vmem:[#allocation5 + $0xe8] sm:$0xff]
    %v108 = vld [vmem:[#allocation5 + $0xf0] sm:$0xff]
    %v109 = vld [vmem:[#allocation5 + $0xf8] sm:$0xff]
    %v110 = vld [vmem:[#allocation5 + $0x100] sm:$0xff]
    %v111 = vld [vmem:[#allocation5 + $0x108] sm:$0xff]
    %v112 = vld [vmem:[#allocation5 + $0x110] sm:$0xff]
    %v113 = vld [vmem:[#allocation5 + $0x118] sm:$0xff]
    %v114 = vld [vmem:[#allocation5 + $0x120] sm:$0xff]
    %v115 = vld [vmem:[#allocation5 + $0x128] sm:$0xff]
    %v116 = vld [vmem:[#allocation5 + $0x130] sm:$0xff]
    %v117 = vld [vmem:[#allocation5 + $0x138] sm:$0xff]
    %v118 = vld [vmem:[#allocation5 + $0x140] sm:$0xff]
    %v119 = vld [vmem:[#allocation5 + $0x148] sm:$0xff]
    %v120 = vld [vmem:[#allocation5 + $0x150] sm:$0xff]
    %v121 = vld [vmem:[#allocation5 + $0x158] sm:$0xff]
    %v122 = vld [vmem:[#allocation5 + $0x160] sm:$0xff]
    %v123 = vld [vmem:[#allocation5 + $0x168] sm:$0xff]
    %v124 = vld [vmem:[#allocation5 + $0x170] sm:$0xff]
    %v125 = vld [vmem:[#allocation5 + $0x178] sm:$0xff]
    %v126 = vld [vmem:[#allocation5 + $0x180] sm:$0xff]
    %v127 = vld [vmem:[#allocation5 + $0x188] sm:$0xff]
    %v128 = vld [vmem:[#allocation5 + $0x190] sm:$0xff]
    %v129 = vld [vmem:[#allocation5 + $0x198] sm:$0xff]
    %v130 = vld [vmem:[#allocation5 + $0x1a0] sm:$0xff]
    %v131 = vld [vmem:[#allocation5 + $0x1a8] sm:$0xff]
    %v132 = vld [vmem:[#allocation5 + $0x1b0] sm:$0xff]
    %v133 = vld [vmem:[#allocation5 + $0x1b8] sm:$0xff]
    %v134 = vld [vmem:[#allocation5 + $0x1c0] sm:$0xff]
    %v135 = vld [vmem:[#allocation5 + $0x1c8] sm:$0xff]
    %v136 = vld [vmem:[#allocation5 + $0x1d0] sm:$0xff]
    %v137 = vld [vmem:[#allocation5 + $0x1d8] sm:$0xff]
    %v138 = vld [vmem:[#allocation5 + $0x1e0] sm:$0xff]
    %v139 = vld [vmem:[#allocation5 + $0x1e8] sm:$0xff]
    %v140 = vld [vmem:[#allocation5 + $0x1f0] sm:$0xff]
    %v141 = vld [vmem:[#allocation5 + $0x1f8] sm:$0xff]
    %v142 = vld [vmem:[#allocation5 + $0x200] sm:$0xff]
    %v143 = vld [vmem:[#allocation5 + $0x208] sm:$0xff]
    %v144 = vld [vmem:[#allocation5 + $0x210] sm:$0xff]
    %v145 = vld [vmem:[#allocation5 + $0x218] sm:$0xff]
    %v146 = vld [vmem:[#allocation5 + $0x220] sm:$0xff]
    %v147 = vld [vmem:[#allocation5 + $0x228] sm:$0xff]
    %v148 = vld [vmem:[#allocation5 + $0x230] sm:$0xff]
    %v149 = vld [vmem:[#allocation5 + $0x238] sm:$0xff]
    %v150 = vld [vmem:[#allocation5 + $0x240] sm:$0xff]
    %v151 = vld [vmem:[#allocation5 + $0x248] sm:$0xff]
    %v152 = vld [vmem:[#allocation5 + $0x250] sm:$0xff]
    %v153 = vld [vmem:[#allocation5 + $0x258] sm:$0xff]
    %v154 = vld [vmem:[#allocation5 + $0x260] sm:$0xff]
    %v155 = vld [vmem:[#allocation5 + $0x268] sm:$0xff]
    %v156 = vld [vmem:[#allocation5 + $0x270] sm:$0xff]
    %v157 = vld [vmem:[#allocation5 + $0x278] sm:$0xff]
    %v158 = vld [vmem:[#allocation5 + $0x280] sm:$0xff]
    %v159 = vld [vmem:[#allocation5 + $0x288] sm:$0xff]
    %v160 = vld [vmem:[#allocation5 + $0x290] sm:$0xff]
    %v161 = vld [vmem:[#allocation5 + $0x298] sm:$0xff]
    %v162 = vld [vmem:[#allocation5 + $0x2a0] sm:$0xff]
    %v163 = vld [vmem:[#allocation5 + $0x2a8] sm:$0xff]
    %v164 = vld [vmem:[#allocation5 + $0x2b0] sm:$0xff]
    %v165 = vld [vmem:[#allocation5 + $0x2b8] sm:$0xff]
    %v166 = vld [vmem:[#allocation5 + $0x2c0] sm:$0xff]
    %v167 = vld [vmem:[#allocation5 + $0x2c8] sm:$0xff]
    %v168 = vld [vmem:[#allocation5 + $0x2d0] sm:$0xff]
    %v169 = vld [vmem:[#allocation5 + $0x2d8] sm:$0xff]
    %v170 = vld [vmem:[#allocation5 + $0x2e0] sm:$0xff]
    %v171 = vld [vmem:[#allocation5 + $0x2e8] sm:$0xff]
    %v172 = vld [vmem:[#allocation5 + $0x2f0] sm:$0xff]
    %v173 = vld [vmem:[#allocation5 + $0x2f8] sm:$0xff]
    %v174 = vld [vmem:[#allocation5 + $0x300] sm:$0xff]
    %v175 = vld [vmem:[#allocation5 + $0x308] sm:$0xff]
    %v176 = vld [vmem:[#allocation5 + $0x310] sm:$0xff]
    %v177 = vld [vmem:[#allocation5 + $0x318] sm:$0xff]
    %v178 = vld [vmem:[#allocation5 + $0x320] sm:$0xff]
    %v179 = vld [vmem:[#allocation5 + $0x328] sm:$0xff]
    %v180 = vld [vmem:[#allocation5 + $0x330] sm:$0xff]
    %v181 = vld [vmem:[#allocation5 + $0x338] sm:$0xff]
    %v182 = vld [vmem:[#allocation5 + $0x340] sm:$0xff]
    %v183 = vld [vmem:[#allocation5 + $0x348] sm:$0xff]
    %v184 = vld [vmem:[#allocation5 + $0x350] sm:$0xff]
    %v185 = vld [vmem:[#allocation5 + $0x358] sm:$0xff]
    %v186 = vld [vmem:[#allocation5 + $0x360] sm:$0xff]
    %v187 = vld [vmem:[#allocation5 + $0x368] sm:$0xff]
    %v188 = vld [vmem:[#allocation5 + $0x370] sm:$0xff]
    %v189 = vld [vmem:[#allocation5 + $0x378] sm:$0xff]
    %v190 = vld [vmem:[#allocation5 + $0x380] sm:$0xff]
    %v191 = vld [vmem:[#allocation5 + $0x388] sm:$0xff]
    %v192 = vld [vmem:[#allocation5 + $0x390] sm:$0xff]
    %v193 = vld [vmem:[#allocation5 + $0x398] sm:$0xff]
    %v194 = vld [vmem:[#allocation5 + $0x3a0] sm:$0xff]
    %v195 = vld [vmem:[#allocation5 + $0x3a8] sm:$0xff]
    %v196 = vld [vmem:[#allocation5 + $0x3b0] sm:$0xff]
    %v197 = vld [vmem:[#allocation5 + $0x3b8] sm:$0xff]
    %v198 = vld [vmem:[#allocation5 + $0x3c0] sm:$0xff]
    %v199 = vld [vmem:[#allocation5 + $0x3c8] sm:$0xff]
    %v200 = vld [vmem:[#allocation5 + $0x3d0] sm:$0xff]
    %v201 = vld [vmem:[#allocation5 + $0x3d8] sm:$0xff]
    %v202 = vld [vmem:[#allocation5 + $0x3e0] sm:$0xff]
    %v203 = vld [vmem:[#allocation5 + $0x3e8] sm:$0xff]
    %v204 = vld [vmem:[#allocation5 + $0x3f0] sm:$0xff]
    %v205 = vld [vmem:[#allocation5 + $0x3f8] sm:$0xff]
    %v206 = vld [vmem:[#allocation5 + $0x400] sm:$0xff]
    %v207 = vld [vmem:[#allocation5 + $0x408] sm:$0xff]
    %v208 = vld [vmem:[#allocation5 + $0x410] sm:$0xff]
    %v209 = vld [vmem:[#allocation5 + $0x418] sm:$0xff]
    %v210 = vld [vmem:[#allocation5 + $0x420] sm:$0xff]
    %v211 = vld [vmem:[#allocation5 + $0x428] sm:$0xff]
    %v212 = vld [vmem:[#allocation5 + $0x430] sm:$0xff]
    %v213 = vld [vmem:[#allocation5 + $0x438] sm:$0xff]
    %v214 = vld [vmem:[#allocation5 + $0x440] sm:$0xff]
    %v215 = vld [vmem:[#allocation5 + $0x448] sm:$0xff]
    %v216 = vld [vmem:[#allocation5 + $0x450] sm:$0xff]
    %v217 = vld [vmem:[#allocation5 + $0x458] sm:$0xff]
    %v218 = vld [vmem:[#allocation5 + $0x460] sm:$0xff]
    %v219 = vld [vmem:[#allocation5 + $0x468] sm:$0xff]
    %v220 = vld [vmem:[#allocation5 + $0x470] sm:$0xff]
    %v221 = vld [vmem:[#allocation5 + $0x478] sm:$0xff]
    %v222 = vld [vmem:[#allocation5 + $0x480] sm:$0xff]
    %v223 = vld [vmem:[#allocation5 + $0x488] sm:$0xff]
    %v224 = vld [vmem:[#allocation5 + $0x490] sm:$0xff]
    %v225 = vld [vmem:[#allocation5 + $0x498] sm:$0xff]
    %v226 = vld [vmem:[#allocation5 + $0x4a0] sm:$0xff]
    %v227 = vld [vmem:[#allocation5 + $0x4a8] sm:$0xff]
    %v228 = vld [vmem:[#allocation5 + $0x4b0] sm:$0xff]
    %v229 = vld [vmem:[#allocation5 + $0x4b8] sm:$0xff]
    %v230 = vld [vmem:[#allocation5 + $0x4c0] sm:$0xff]
    %v231 = vld [vmem:[#allocation5 + $0x4c8] sm:$0xff]
    %v232 = vld [vmem:[#allocation5 + $0x4d0] sm:$0xff]
    %v233 = vld [vmem:[#allocation5 + $0x4d8] sm:$0xff]
    %v234 = vld [vmem:[#allocation5 + $0x4e0] sm:$0xff]
    %v235 = vld [vmem:[#allocation5 + $0x4e8] sm:$0xff]
    %v236 = vld [vmem:[#allocation5 + $0x4f0] sm:$0xff]
    %v237 = vld [vmem:[#allocation5 + $0x4f8] sm:$0xff]
    %v238 = vld [vmem:[#allocation5 + $0x500] sm:$0xff]
    %v239 = vld [vmem:[#allocation5 + $0x508] sm:$0xff]
    %v240 = vld [vmem:[#allocation5 + $0x510] sm:$0xff]
    %v241 = vld [vmem:[#allocation5 + $0x518] sm:$0xff]
    %v242 = vld [vmem:[#allocation5 + $0x520] sm:$0xff]
    %v243 = vld [vmem:[#allocation5 + $0x528] sm:$0xff]
    %v244 = vld [vmem:[#allocation5 + $0x530] sm:$0xff]
    %v245 = vld [vmem:[#allocation5 + $0x538] sm:$0xff]
    %v246 = vld [vmem:[#allocation5 + $0x540] sm:$0xff]
    %v247 = vld [vmem:[#allocation5 + $0x548] sm:$0xff]
    %v248 = vld [vmem:[#allocation5 + $0x550] sm:$0xff]
    %v249 = vld [vmem:[#allocation5 + $0x558] sm:$0xff]
    %v250 = vld [vmem:[#allocation5 + $0x560] sm:$0xff]
    %v251 = vld [vmem:[#allocation5 + $0x568] sm:$0xff]
    %v252 = vld [vmem:[#allocation5 + $0x570] sm:$0xff]
    %v253 = vld [vmem:[#allocation5 + $0x578] sm:$0xff]
    %v254 = vld [vmem:[#allocation5 + $0x580] sm:$0xff]
    %v255 = vld [vmem:[#allocation5 + $0x588] sm:$0xff]
    %v256 = vld [vmem:[#allocation5 + $0x590] sm:$0xff]
    %v257 = vld [vmem:[#allocation5 + $0x598] sm:$0xff]
    %v258 = vld [vmem:[#allocation5 + $0x5a0] sm:$0xff]
    %v259 = vld [vmem:[#allocation5 + $0x5a8] sm:$0xff]
    %v260 = vld [vmem:[#allocation5 + $0x5b0] sm:$0xff]
    %v261 = vld [vmem:[#allocation5 + $0x5b8] sm:$0xff]
    %v262 = vld [vmem:[#allocation5 + $0x5c0] sm:$0xff]
    %v263 = vld [vmem:[#allocation5 + $0x5c8] sm:$0xff]
    %v264 = vld [vmem:[#allocation5 + $0x5d0] sm:$0xff]
    %v265 = vld [vmem:[#allocation5 + $0x5d8] sm:$0xff]
    %v266 = vld [vmem:[#allocation5 + $0x5e0] sm:$0xff]
    %v267 = vld [vmem:[#allocation5 + $0x5e8] sm:$0xff]
    %v268 = vld [vmem:[#allocation5 + $0x5f0] sm:$0xff]
    %v269 = vld [vmem:[#allocation5 + $0x5f8] sm:$0xff]
    %v270 = vld [vmem:[#allocation5 + $0x600] sm:$0xff]
    %v271 = vld [vmem:[#allocation5 + $0x608] sm:$0xff]
    %v272 = vld [vmem:[#allocation5 + $0x610] sm:$0xff]
    %v273 = vld [vmem:[#allocation5 + $0x618] sm:$0xff]
    %v274 = vld [vmem:[#allocation5 + $0x620] sm:$0xff]
    %v275 = vld [vmem:[#allocation5 + $0x628] sm:$0xff]
    %v276 = vld [vmem:[#allocation5 + $0x630] sm:$0xff]
    %v277 = vld [vmem:[#allocation5 + $0x638] sm:$0xff]
    %v278 = vld [vmem:[#allocation5 + $0x640] sm:$0xff]
    %v279 = vld [vmem:[#allocation5 + $0x648] sm:$0xff]
    %v280 = vld [vmem:[#allocation5 + $0x650] sm:$0xff]
    %v281 = vld [vmem:[#allocation5 + $0x658] sm:$0xff]
    %v282 = vld [vmem:[#allocation5 + $0x660] sm:$0xff]
    %v283 = vld [vmem:[#allocation5 + $0x668] sm:$0xff]
    %v284 = vld [vmem:[#allocation5 + $0x670] sm:$0xff]
    %v285 = vld [vmem:[#allocation5 + $0x678] sm:$0xff]
    %v286 = vld [vmem:[#allocation5 + $0x680] sm:$0xff]
    %v287 = vld [vmem:[#allocation5 + $0x688] sm:$0xff]
    %v288 = vld [vmem:[#allocation5 + $0x690] sm:$0xff]
    %v289 = vld [vmem:[#allocation5 + $0x698] sm:$0xff]
    %v290 = vld [vmem:[#allocation5 + $0x6a0] sm:$0xff]
    %v291 = vld [vmem:[#allocation5 + $0x6a8] sm:$0xff]
    %v292 = vld [vmem:[#allocation5 + $0x6b0] sm:$0xff]
    %v293 = vld [vmem:[#allocation5 + $0x6b8] sm:$0xff]
    %v294 = vld [vmem:[#allocation5 + $0x6c0] sm:$0xff]
    %v295 = vld [vmem:[#allocation5 + $0x6c8] sm:$0xff]
    %v296 = vld [vmem:[#allocation5 + $0x6d0] sm:$0xff]
    %v297 = vld [vmem:[#allocation5 + $0x6d8] sm:$0xff]
    %v298 = vld [vmem:[#allocation5 + $0x6e0] sm:$0xff]
    %v299 = vld [vmem:[#allocation5 + $0x6e8] sm:$0xff]
    %v300 = vld [vmem:[#allocation5 + $0x6f0] sm:$0xff]
    %v301 = vld [vmem:[#allocation5 + $0x6f8] sm:$0xff]
    %v302 = vld [vmem:[#allocation5 + $0x700] sm:$0xff]
    %v303 = vld [vmem:[#allocation5 + $0x708] sm:$0xff]
    %v304 = vld [vmem:[#allocation5 + $0x710] sm:$0xff]
    %v305 = vld [vmem:[#allocation5 + $0x718] sm:$0xff]
    %v306 = vld [vmem:[#allocation5 + $0x720] sm:$0xff]
    %v307 = vld [vmem:[#allocation5 + $0x728] sm:$0xff]
    %v308 = vld [vmem:[#allocation5 + $0x730] sm:$0xff]
    %v309 = vld [vmem:[#allocation5 + $0x738] sm:$0xff]
    %v310 = vld [vmem:[#allocation5 + $0x740] sm:$0xff]
    %v311 = vld [vmem:[#allocation5 + $0x748] sm:$0xff]
    %v312 = vld [vmem:[#allocation5 + $0x750] sm:$0xff]
    %v313 = vld [vmem:[#allocation5 + $0x758] sm:$0xff]
    %v314 = vld [vmem:[#allocation5 + $0x760] sm:$0xff]
    %v315 = vld [vmem:[#allocation5 + $0x768] sm:$0xff]
    %v316 = vld [vmem:[#allocation5 + $0x770] sm:$0xff]
    %v317 = vld [vmem:[#allocation5 + $0x778] sm:$0xff]
    %v319 = vlaneseq
    %v320 = vshrl.u32 %v319, 7
    %v321 = vsub.s32 0, %v320
    %v322 = vrot.slane %v74, %v321
    %v323 = vlaneseq
    %v324 = vshrl.u32 %v323, 7
    %v325 = vsub.s32 1, %v324
    %v326 = vrot.slane %v74, %v325
    %v327 = vlaneseq
    %v328 = vshrl.u32 %v327, 7
    %v329 = vsub.s32 2, %v328
    %v330 = vrot.slane %v74, %v329
    %334 = vmatprep.subr.mxu0 %v79
    %335 = vmatpush1.msra.mxu0 %v78
    %336 = vmatprep.subr.mxu0 %v84
    %337 = vmatpush1.msra.mxu0 %v83
    %338 = vmatprep.subr.mxu0 %v89
    %339 = vmatpush1.msra.mxu0 %v88
    %340 = vmatprep.subr.mxu0 %v94
    %341 = vmatpush1.msra.mxu0 %v93
    %342 = vmatprep.subr.mxu0 %v99
    %343 = vmatpush1.msra.mxu0 %v98
    %344 = vmatprep.subr.mxu0 %v104
    %345 = vmatpush1.msra.mxu0 %v103
    %346 = vmatprep.subr.mxu0 %v109
    %347 = vmatpush1.msra.mxu0 %v108
    %348 = vmatprep.subr.mxu0 %v114
    %349 = vmatpush1.msra.mxu0 %v113
    %350 = vmatprep.subr.mxu0 %v119
    %351 = vmatpush1.msra.mxu0 %v118
    %352 = vmatprep.subr.mxu0 %v124
    %353 = vmatpush1.msra.mxu0 %v123
    %354 = vmatprep.subr.mxu0 %v129
    %355 = vmatpush1.msra.mxu0 %v128
    %356 = vmatprep.subr.mxu0 %v134
    %357 = vmatpush1.msra.mxu0 %v133
    %358 = vmatprep.subr.mxu0 %v139
    %359 = vmatpush1.msra.mxu0 %v138
    %360 = vmatprep.subr.mxu0 %v144
    %361 = vmatpush1.msra.mxu0 %v143
    %362 = vmatprep.subr.mxu0 %v149
    %363 = vmatpush1.msra.mxu0 %v148
    %364 = vmatprep.subr.mxu0 %v154
    %365 = vmatpush1.msra.mxu0 %v153
    %366 = vmatprep.subr.mxu0 %v159
    %367 = vmatpush1.msra.mxu0 %v158
    %368 = vmatprep.subr.mxu0 %v164
    %369 = vmatpush1.msra.mxu0 %v163
    %370 = vmatprep.subr.mxu0 %v169
    %371 = vmatpush1.msra.mxu0 %v168
    %372 = vmatprep.subr.mxu0 %v174
    %373 = vmatpush1.msra.mxu0 %v173
    %374 = vmatprep.subr.mxu0 %v179
    %375 = vmatpush1.msra.mxu0 %v178
    %376 = vmatprep.subr.mxu0 %v184
    %377 = vmatpush1.msra.mxu0 %v183
    %378 = vmatprep.subr.mxu0 %v189
    %379 = vmatpush1.msra.mxu0 %v188
    %380 = vmatprep.subr.mxu0 %v194
    %381 = vmatpush1.msra.mxu0 %v193
    %382 = vmatprep.subr.mxu0 %v199
    %383 = vmatpush1.msra.mxu0 %v198
    %384 = vmatprep.subr.mxu0 %v204
    %385 = vmatpush1.msra.mxu0 %v203
    %386 = vmatprep.subr.mxu0 %v209
    %387 = vmatpush1.msra.mxu0 %v208
    %388 = vmatprep.subr.mxu0 %v214
    %389 = vmatpush1.msra.mxu0 %v213
    %390 = vmatprep.subr.mxu0 %v219
    %391 = vmatpush1.msra.mxu0 %v218
    %392 = vmatprep.subr.mxu0 %v224
    %393 = vmatpush1.msra.mxu0 %v223
    %394 = vmatprep.subr.mxu0 %v229
    %395 = vmatpush1.msra.mxu0 %v228
    %396 = vmatprep.subr.mxu0 %v234
    %397 = vmatpush1.msra.mxu0 %v233
    %398 = vmatprep.mubr.f32.mxu0 %v326
    %399 = vmatmul.mubr.f32.gmra.mrb[0].mxu0 %v322
    %v400 = vpop.f32.mrb[0].mxu0
    %v401 = vadd.f32 0.0, %v400
    %v402 = vpop.f32.mrb[0].mxu0
    %v403 = vadd.f32 0.0, %v402
    %404 = vdwg.mxu0
    %405 = vmatprep.subr.mxu0 %v239
    %406 = vmatpush1.msra.mxu0 %v238
    %407 = vmatprep.subr.mxu0 %v244
    %408 = vmatpush1.msra.mxu0 %v243
    %409 = vmatprep.subr.mxu0 %v249
    %410 = vmatpush1.msra.mxu0 %v248
    %411 = vmatprep.subr.mxu0 %v254
    %412 = vmatpush1.msra.mxu0 %v253
    %413 = vmatprep.subr.mxu0 %v259
    %414 = vmatpush1.msra.mxu0 %v258
    %415 = vmatprep.subr.mxu0 %v264
    %416 = vmatpush1.msra.mxu0 %v263
    %417 = vmatprep.subr.mxu0 %v269
    %418 = vmatpush1.msra.mxu0 %v268
    %419 = vmatprep.subr.mxu0 %v274
    %420 = vmatpush1.msra.mxu0 %v273
    %421 = vmatprep.subr.mxu0 %v279
    %422 = vmatpush1.msra.mxu0 %v278
    %423 = vmatprep.subr.mxu0 %v284
    %424 = vmatpush1.msra.mxu0 %v283
    %425 = vmatprep.subr.mxu0 %v289
    %426 = vmatpush1.msra.mxu0 %v288
    %427 = vmatprep.subr.mxu0 %v294
    %428 = vmatpush1.msra.mxu0 %v293
    %429 = vmatprep.subr.mxu0 %v299
    %430 = vmatpush1.msra.mxu0 %v298
    %431 = vmatprep.subr.mxu0 %v304
    %432 = vmatpush1.msra.mxu0 %v303
    %433 = vmatprep.subr.mxu0 %v309
    %434 = vmatpush1.msra.mxu0 %v308
    %435 = vmatprep.subr.mxu0 %v314
    %436 = vmatpush1.msra.mxu0 %v313
    %437 = vmatprep.subr.mxu0 0.0
    %438 = vmatpush1.msra.mxu0 0.0
    %439 = vmatprep.subr.mxu0 0.0
    %440 = vmatpush1.msra.mxu0 0.0
    %441 = vmatprep.subr.mxu0 0.0
    %442 = vmatpush1.msra.mxu0 0.0
    %443 = vmatprep.subr.mxu0 0.0
    %444 = vmatpush1.msra.mxu0 0.0
    %445 = vmatprep.subr.mxu0 0.0
    %446 = vmatpush1.msra.mxu0 0.0
    %447 = vmatprep.subr.mxu0 0.0
    %448 = vmatpush1.msra.mxu0 0.0
    %449 = vmatprep.subr.mxu0 0.0
    %450 = vmatpush1.msra.mxu0 0.0
    %451 = vmatprep.subr.mxu0 0.0
    %452 = vmatpush1.msra.mxu0 0.0
    %453 = vmatprep.subr.mxu0 0.0
    %454 = vmatpush1.msra.mxu0 0.0
    %455 = vmatprep.subr.mxu0 0.0
    %456 = vmatpush1.msra.mxu0 0.0
    %457 = vmatprep.subr.mxu0 0.0
    %458 = vmatpush1.msra.mxu0 0.0
    %459 = vmatprep.subr.mxu0 0.0
    %460 = vmatpush1.msra.mxu0 0.0
    %461 = vmatprep.subr.mxu0 0.0
    %462 = vmatpush1.msra.mxu0 0.0
    %463 = vmatprep.subr.mxu0 0.0
    %464 = vmatpush1.msra.mxu0 0.0
    %465 = vmatprep.subr.mxu0 0.0
    %466 = vmatpush1.msra.mxu0 0.0
    %467 = vmatprep.subr.mxu0 0.0
    %468 = vmatpush1.msra.mxu0 0.0
    %469 = vmatprep.mubr.f32.mxu0 0.0
    %470 = vmatmul.mubr.f32.gmra.mrb[0].mxu0 %v330
    %v471 = vpop.f32.mrb[0].mxu0
    %v472 = vadd.f32 %v401, %v471
    %v473 = vpop.f32.mrb[0].mxu0
    %v474 = vadd.f32 %v403, %v473
    %475 = vdwg.mxu0
    %476 = vmatprep.subr.mxu0 %v81
    %477 = vmatpush1.msra.mxu0 %v80
    %478 = vmatprep.subr.mxu0 %v86
    %479 = vmatpush1.msra.mxu0 %v85
    %480 = vmatprep.subr.mxu0 %v91
    %481 = vmatpush1.msra.mxu0 %v90
    %482 = vmatprep.subr.mxu0 %v96
    %483 = vmatpush1.msra.mxu0 %v95
    %484 = vmatprep.subr.mxu0 %v101
    %485 = vmatpush1.msra.mxu0 %v100
    %486 = vmatprep.subr.mxu0 %v106
    %487 = vmatpush1.msra.mxu0 %v105
    %488 = vmatprep.subr.mxu0 %v111
    %489 = vmatpush1.msra.mxu0 %v110
    %490 = vmatprep.subr.mxu0 %v116
    %491 = vmatpush1.msra.mxu0 %v115
    %492 = vmatprep.subr.mxu0 %v121
    %493 = vmatpush1.msra.mxu0 %v120
    %494 = vmatprep.subr.mxu0 %v126
    %495 = vmatpush1.msra.mxu0 %v125
    %496 = vmatprep.subr.mxu0 %v131
    %497 = vmatpush1.msra.mxu0 %v130
    %498 = vmatprep.subr.mxu0 %v136
    %499 = vmatpush1.msra.mxu0 %v135
    %500 = vmatprep.subr.mxu0 %v141
    %501 = vmatpush1.msra.mxu0 %v140
    %502 = vmatprep.subr.mxu0 %v146
    %503 = vmatpush1.msra.mxu0 %v145
    %504 = vmatprep.subr.mxu0 %v151
    %505 = vmatpush1.msra.mxu0 %v150
    %506 = vmatprep.subr.mxu0 %v156
    %507 = vmatpush1.msra.mxu0 %v155
    %508 = vmatprep.subr.mxu0 %v161
    %509 = vmatpush1.msra.mxu0 %v160
    %510 = vmatprep.subr.mxu0 %v166
    %511 = vmatpush1.msra.mxu0 %v165
    %512 = vmatprep.subr.mxu0 %v171
    %513 = vmatpush1.msra.mxu0 %v170
    %514 = vmatprep.subr.mxu0 %v176
    %515 = vmatpush1.msra.mxu0 %v175
    %516 = vmatprep.subr.mxu0 %v181
    %517 = vmatpush1.msra.mxu0 %v180
    %518 = vmatprep.subr.mxu0 %v186
    %519 = vmatpush1.msra.mxu0 %v185
    %520 = vmatprep.subr.mxu0 %v191
    %521 = vmatpush1.msra.mxu0 %v190
    %522 = vmatprep.subr.mxu0 %v196
    %523 = vmatpush1.msra.mxu0 %v195
    %524 = vmatprep.subr.mxu0 %v201
    %525 = vmatpush1.msra.mxu0 %v200
    %526 = vmatprep.subr.mxu0 %v206
    %527 = vmatpush1.msra.mxu0 %v205
    %528 = vmatprep.subr.mxu0 %v211
    %529 = vmatpush1.msra.mxu0 %v210
    %530 = vmatprep.subr.mxu0 %v216
    %531 = vmatpush1.msra.mxu0 %v215
    %532 = vmatprep.subr.mxu0 %v221
    %533 = vmatpush1.msra.mxu0 %v220
    %534 = vmatprep.subr.mxu0 %v226
    %535 = vmatpush1.msra.mxu0 %v225
    %536 = vmatprep.subr.mxu0 %v231
    %537 = vmatpush1.msra.mxu0 %v230
    %538 = vmatprep.subr.mxu0 %v236
    %539 = vmatpush1.msra.mxu0 %v235
    %540 = vmatprep.mubr.f32.mxu0 %v326
    %541 = vmatmul.mubr.f32.gmra.mrb[0].mxu0 %v322
    %v542 = vpop.f32.mrb[0].mxu0
    %v543 = vadd.f32 0.0, %v542
    %v544 = vpop.f32.mrb[0].mxu0
    %v545 = vadd.f32 0.0, %v544
    %546 = vdwg.mxu0
    %547 = vmatprep.subr.mxu0 %v241
    %548 = vmatpush1.msra.mxu0 %v240
    %549 = vmatprep.subr.mxu0 %v246
    %550 = vmatpush1.msra.mxu0 %v245
    %551 = vmatprep.subr.mxu0 %v251
    %552 = vmatpush1.msra.mxu0 %v250
    %553 = vmatprep.subr.mxu0 %v256
    %554 = vmatpush1.msra.mxu0 %v255
    %555 = vmatprep.subr.mxu0 %v261
    %556 = vmatpush1.msra.mxu0 %v260
    %557 = vmatprep.subr.mxu0 %v266
    %558 = vmatpush1.msra.mxu0 %v265
    %559 = vmatprep.subr.mxu0 %v271
    %560 = vmatpush1.msra.mxu0 %v270
    %561 = vmatprep.subr.mxu0 %v276
    %562 = vmatpush1.msra.mxu0 %v275
    %563 = vmatprep.subr.mxu0 %v281
    %564 = vmatpush1.msra.mxu0 %v280
    %565 = vmatprep.subr.mxu0 %v286
    %566 = vmatpush1.msra.mxu0 %v285
    %567 = vmatprep.subr.mxu0 %v291
    %568 = vmatpush1.msra.mxu0 %v290
    %569 = vmatprep.subr.mxu0 %v296
    %570 = vmatpush1.msra.mxu0 %v295
    %571 = vmatprep.subr.mxu0 %v301
    %572 = vmatpush1.msra.mxu0 %v300
    %573 = vmatprep.subr.mxu0 %v306
    %574 = vmatpush1.msra.mxu0 %v305
    %575 = vmatprep.subr.mxu0 %v311
    %576 = vmatpush1.msra.mxu0 %v310
    %577 = vmatprep.subr.mxu0 %v316
    %578 = vmatpush1.msra.mxu0 %v315
    %579 = vmatprep.subr.mxu0 0.0
    %580 = vmatpush1.msra.mxu0 0.0
    %581 = vmatprep.subr.mxu0 0.0
    %582 = vmatpush1.msra.mxu0 0.0
    %583 = vmatprep.subr.mxu0 0.0
    %584 = vmatpush1.msra.mxu0 0.0
    %585 = vmatprep.subr.mxu0 0.0
    %586 = vmatpush1.msra.mxu0 0.0
    %587 = vmatprep.subr.mxu0 0.0
    %588 = vmatpush1.msra.mxu0 0.0
    %589 = vmatprep.subr.mxu0 0.0
    %590 = vmatpush1.msra.mxu0 0.0
    %591 = vmatprep.subr.mxu0 0.0
    %592 = vmatpush1.msra.mxu0 0.0
    %593 = vmatprep.subr.mxu0 0.0
    %594 = vmatpush1.msra.mxu0 0.0
    %595 = vmatprep.subr.mxu0 0.0
    %596 = vmatpush1.msra.mxu0 0.0
    %597 = vmatprep.subr.mxu0 0.0
    %598 = vmatpush1.msra.mxu0 0.0
    %599 = vmatprep.subr.mxu0 0.0
    %600 = vmatpush1.msra.mxu0 0.0
    %601 = vmatprep.subr.mxu0 0.0
    %602 = vmatpush1.msra.mxu0 0.0
    %603 = vmatprep.subr.mxu0 0.0
    %604 = vmatpush1.msra.mxu0 0.0
    %605 = vmatprep.subr.mxu0 0.0
    %606 = vmatpush1.msra.mxu0 0.0
    %607 = vmatprep.subr.mxu0 0.0
    %608 = vmatpush1.msra.mxu0 0.0
    %609 = vmatprep.subr.mxu0 0.0
    %610 = vmatpush1.msra.mxu0 0.0
    %611 = vmatprep.mubr.f32.mxu0 0.0
    %612 = vmatmul.mubr.f32.gmra.mrb[0].mxu0 %v330
    %v613 = vpop.f32.mrb[0].mxu0
    %v614 = vadd.f32 %v543, %v613
    %v615 = vpop.f32.mrb[0].mxu0
    %v616 = vadd.f32 %v545, %v615
    %617 = vdwg.mxu0
    %618 = vmatprep.subr.mxu0 0.0
    %619 = vmatpush1.msra.mxu0 %v82
    %620 = vmatprep.subr.mxu0 0.0
    %621 = vmatpush1.msra.mxu0 %v87
    %622 = vmatprep.subr.mxu0 0.0
    %623 = vmatpush1.msra.mxu0 %v92
    %624 = vmatprep.subr.mxu0 0.0
    %625 = vmatpush1.msra.mxu0 %v97
    %626 = vmatprep.subr.mxu0 0.0
    %627 = vmatpush1.msra.mxu0 %v102
    %628 = vmatprep.subr.mxu0 0.0
    %629 = vmatpush1.msra.mxu0 %v107
    %630 = vmatprep.subr.mxu0 0.0
    %631 = vmatpush1.msra.mxu0 %v112
    %632 = vmatprep.subr.mxu0 0.0
    %633 = vmatpush1.msra.mxu0 %v117
    %634 = vmatprep.subr.mxu0 0.0
    %635 = vmatpush1.msra.mxu0 %v122
    %636 = vmatprep.subr.mxu0 0.0
    %637 = vmatpush1.msra.mxu0 %v127
    %638 = vmatprep.subr.mxu0 0.0
    %639 = vmatpush1.msra.mxu0 %v132
    %640 = vmatprep.subr.mxu0 0.0
    %641 = vmatpush1.msra.mxu0 %v137
    %642 = vmatprep.subr.mxu0 0.0
    %643 = vmatpush1.msra.mxu0 %v142
    %644 = vmatprep.subr.mxu0 0.0
    %645 = vmatpush1.msra.mxu0 %v147
    %646 = vmatprep.subr.mxu0 0.0
    %647 = vmatpush1.msra.mxu0 %v152
    %648 = vmatprep.subr.mxu0 0.0
    %649 = vmatpush1.msra.mxu0 %v157
    %650 = vmatprep.subr.mxu0 0.0
    %651 = vmatpush1.msra.mxu0 %v162
    %652 = vmatprep.subr.mxu0 0.0
    %653 = vmatpush1.msra.mxu0 %v167
    %654 = vmatprep.subr.mxu0 0.0
    %655 = vmatpush1.msra.mxu0 %v172
    %656 = vmatprep.subr.mxu0 0.0
    %657 = vmatpush1.msra.mxu0 %v177
    %658 = vmatprep.subr.mxu0 0.0
    %659 = vmatpush1.msra.mxu0 %v182
    %660 = vmatprep.subr.mxu0 0.0
    %661 = vmatpush1.msra.mxu0 %v187
    %662 = vmatprep.subr.mxu0 0.0
    %663 = vmatpush1.msra.mxu0 %v192
    %664 = vmatprep.subr.mxu0 0.0
    %665 = vmatpush1.msra.mxu0 %v197
    %666 = vmatprep.subr.mxu0 0.0
    %667 = vmatpush1.msra.mxu0 %v202
    %668 = vmatprep.subr.mxu0 0.0
    %669 = vmatpush1.msra.mxu0 %v207
    %670 = vmatprep.subr.mxu0 0.0
    %671 = vmatpush1.msra.mxu0 %v212
    %672 = vmatprep.subr.mxu0 0.0
    %673 = vmatpush1.msra.mxu0 %v217
    %674 = vmatprep.subr.mxu0 0.0
    %675 = vmatpush1.msra.mxu0 %v222
    %676 = vmatprep.subr.mxu0 0.0
    %677 = vmatpush1.msra.mxu0 %v227
    %678 = vmatprep.subr.mxu0 0.0
    %679 = vmatpush1.msra.mxu0 %v232
    %680 = vmatprep.subr.mxu0 0.0
    %681 = vmatpush1.msra.mxu0 %v237
    %682 = vmatprep.mubr.f32.mxu0 %v326
    %683 = vmatmul.mubr.f32.gmra.mrb[0].mxu0 %v322
    %v684 = vpop.f32.mrb[0].mxu0
    %v685 = vadd.f32 0.0, %v684
    %v686 = vpop.f32.mrb[0].mxu0
    %687 = vdwg.mxu0
    %688 = vmatprep.subr.mxu0 0.0
    %689 = vmatpush1.msra.mxu0 %v242
    %690 = vmatprep.subr.mxu0 0.0
    %691 = vmatpush1.msra.mxu0 %v247
    %692 = vmatprep.subr.mxu0 0.0
    %693 = vmatpush1.msra.mxu0 %v252
    %694 = vmatprep.subr.mxu0 0.0
    %695 = vmatpush1.msra.mxu0 %v257
    %696 = vmatprep.subr.mxu0 0.0
    %697 = vmatpush1.msra.mxu0 %v262
    %698 = vmatprep.subr.mxu0 0.0
    %699 = vmatpush1.msra.mxu0 %v267
    %700 = vmatprep.subr.mxu0 0.0
    %701 = vmatpush1.msra.mxu0 %v272
    %702 = vmatprep.subr.mxu0 0.0
    %703 = vmatpush1.msra.mxu0 %v277
    %704 = vmatprep.subr.mxu0 0.0
    %705 = vmatpush1.msra.mxu0 %v282
    %706 = vmatprep.subr.mxu0 0.0
    %707 = vmatpush1.msra.mxu0 %v287
    %708 = vmatprep.subr.mxu0 0.0
    %709 = vmatpush1.msra.mxu0 %v292
    %710 = vmatprep.subr.mxu0 0.0
    %711 = vmatpush1.msra.mxu0 %v297
    %712 = vmatprep.subr.mxu0 0.0
    %713 = vmatpush1.msra.mxu0 %v302
    %714 = vmatprep.subr.mxu0 0.0
    %715 = vmatpush1.msra.mxu0 %v307
    %716 = vmatprep.subr.mxu0 0.0
    %717 = vmatpush1.msra.mxu0 %v312
    %718 = vmatprep.subr.mxu0 0.0
    %719 = vmatpush1.msra.mxu0 %v317
    %720 = vmatprep.subr.mxu0 0.0
    %721 = vmatpush1.msra.mxu0 0.0
    %722 = vmatprep.subr.mxu0 0.0
    %723 = vmatpush1.msra.mxu0 0.0
    %724 = vmatprep.subr.mxu0 0.0
    %725 = vmatpush1.msra.mxu0 0.0
    %726 = vmatprep.subr.mxu0 0.0
    %727 = vmatpush1.msra.mxu0 0.0
    %728 = vmatprep.subr.mxu0 0.0
    %729 = vmatpush1.msra.mxu0 0.0
    %730 = vmatprep.subr.mxu0 0.0
    %731 = vmatpush1.msra.mxu0 0.0
    %732 = vmatprep.subr.mxu0 0.0
    %733 = vmatpush1.msra.mxu0 0.0
    %734 = vmatprep.subr.mxu0 0.0
    %735 = vmatpush1.msra.mxu0 0.0
    %736 = vmatprep.subr.mxu0 0.0
    %737 = vmatpush1.msra.mxu0 0.0
    %738 = vmatprep.subr.mxu0 0.0
    %739 = vmatpush1.msra.mxu0 0.0
    %740 = vmatprep.subr.mxu0 0.0
    %741 = vmatpush1.msra.mxu0 0.0
    %742 = vmatprep.subr.mxu0 0.0
    %743 = vmatpush1.msra.mxu0 0.0
    %744 = vmatprep.subr.mxu0 0.0
    %745 = vmatpush1.msra.mxu0 0.0
    %746 = vmatprep.subr.mxu0 0.0
    %747 = vmatpush1.msra.mxu0 0.0
    %748 = vmatprep.subr.mxu0 0.0
    %749 = vmatpush1.msra.mxu0 0.0
    %750 = vmatprep.subr.mxu0 0.0
    %751 = vmatpush1.msra.mxu0 0.0
    %752 = vmatprep.mubr.f32.mxu0 0.0
    %753 = vmatmul.mubr.f32.gmra.mrb[0].mxu0 %v330
    %v754 = vpop.f32.mrb[0].mxu0
    %v755 = vadd.f32 %v685, %v754
    %v756 = vpop.f32.mrb[0].mxu0
    %757 = vdwg.mxu0
    %v763 = vcombine.low %v472, %v474
    %v764 = vcombine.low %v614, %v616
    %v766 = vunpack.c.l.s4 1966171168
    %v767 = vunpack.c.0.s8 %v766
    %v768 = vlaneseq
    %v769 = vshrl.u32 %v768, 7
    %v770 = vsub.s32 %v767, %v769
    %v771 = vrot.slane %v763, %v770
    %v773 = vunpack.c.l.s4 1966171168
    %v774 = vunpack.c.0.s8 %v773
    %v775 = vlaneseq
    %v776 = vshrl.u32 %v775, 7
    %v777 = vsub.s32 %v774, %v776
    %v778 = vrot.slane %v764, %v777
    %v780 = vunpack.c.l.s4 1966171168
    %v781 = vunpack.c.0.s8 %v780
    %v782 = vlaneseq
    %v783 = vshrl.u32 %v782, 7
    %v784 = vsub.s32 %v781, %v783
    %v785 = vrot.slane %v755, %v784
    %v786 = vcombine.low %v771, %v778
    %v788 = vunpack.c.l.s4 1966171168
    %v789 = vunpack.c.0.s8 %v788
    %v790 = vlaneseq
    %v791 = vshrl.u32 %v790, 7
    %v792 = vsub.s32 %v789, %v791
    %v793 = vrot.slane %v786, %v792
    %v795 = vunpack.c.l.s4 1966171168
    %v796 = vunpack.c.0.s8 %v795
    %v797 = vlaneseq
    %v798 = vshrl.u32 %v797, 7
    %v799 = vsub.s32 %v796, %v798
    %v800 = vrot.slane %v785, %v799
    %v801 = vcombine.low %v793, %v800
    %v803 = vadd.f32 %v77, %v801
    %v804 = vld [vmem:[#allocation7] sm:$0xff]
    %v805 = vld [vmem:[#allocation7 + $0x8] sm:$0xff]
    %v806 = vld [vmem:[#allocation7 + $0x10] sm:$0xff]
    %v807 = vld [vmem:[#allocation7 + $0x18] sm:$0xff]
    %v808 = vld [vmem:[#allocation7 + $0x20] sm:$0xff]
    %v809 = vld [vmem:[#allocation7 + $0x28] sm:$0xff]
    %v810 = vld [vmem:[#allocation7 + $0x30] sm:$0xff]
    %v811 = vld [vmem:[#allocation7 + $0x38] sm:$0xff]
    %v812 = vld [vmem:[#allocation7 + $0x40] sm:$0xff]
    %v813 = vld [vmem:[#allocation7 + $0x48] sm:$0xff]
    %v814 = vld [vmem:[#allocation7 + $0x50] sm:$0xff]
    %v815 = vld [vmem:[#allocation7 + $0x58] sm:$0xff]
    %v816 = vld [vmem:[#allocation7 + $0x60] sm:$0xff]
    %v817 = vld [vmem:[#allocation7 + $0x68] sm:$0xff]
    %v818 = vld [vmem:[#allocation7 + $0x70] sm:$0xff]
    %v819 = vld [vmem:[#allocation7 + $0x78] sm:$0xff]
    %v820 = vld [vmem:[#allocation7 + $0x80] sm:$0xff]
    %v821 = vld [vmem:[#allocation7 + $0x88] sm:$0xff]
    %v822 = vld [vmem:[#allocation7 + $0x90] sm:$0xff]
    %v823 = vld [vmem:[#allocation7 + $0x98] sm:$0xff]
    %v824 = vld [vmem:[#allocation7 + $0xa0] sm:$0xff]
    %v825 = vld [vmem:[#allocation7 + $0xa8] sm:$0xff]
    %v826 = vld [vmem:[#allocation7 + $0xb0] sm:$0xff]
    %v827 = vld [vmem:[#allocation7 + $0xb8] sm:$0xff]
    %v828 = vld [vmem:[#allocation7 + $0xc0] sm:$0xff]
    %v829 = vld [vmem:[#allocation7 + $0xc8] sm:$0xff]
    %v830 = vld [vmem:[#allocation7 + $0xd0] sm:$0xff]
    %v831 = vld [vmem:[#allocation7 + $0xd8] sm:$0xff]
    %v832 = vld [vmem:[#allocation7 + $0xe0] sm:$0xff]
    %v833 = vld [vmem:[#allocation7 + $0xe8] sm:$0xff]
    %v834 = vld [vmem:[#allocation7 + $0xf0] sm:$0xff]
    %v835 = vld [vmem:[#allocation7 + $0xf8] sm:$0xff]
    %v836 = vld [vmem:[#allocation7 + $0x100] sm:$0xff]
    %v837 = vld [vmem:[#allocation7 + $0x108] sm:$0xff]
    %v838 = vld [vmem:[#allocation7 + $0x110] sm:$0xff]
    %v839 = vld [vmem:[#allocation7 + $0x118] sm:$0xff]
    %v840 = vld [vmem:[#allocation7 + $0x120] sm:$0xff]
    %v841 = vld [vmem:[#allocation7 + $0x128] sm:$0xff]
    %v842 = vld [vmem:[#allocation7 + $0x130] sm:$0xff]
    %v843 = vld [vmem:[#allocation7 + $0x138] sm:$0xff]
    %v844 = vld [vmem:[#allocation7 + $0x140] sm:$0xff]
    %v845 = vld [vmem:[#allocation7 + $0x148] sm:$0xff]
    %v846 = vld [vmem:[#allocation7 + $0x150] sm:$0xff]
    %v847 = vld [vmem:[#allocation7 + $0x158] sm:$0xff]
    %v848 = vld [vmem:[#allocation7 + $0x160] sm:$0xff]
    %v849 = vld [vmem:[#allocation7 + $0x168] sm:$0xff]
    %v850 = vld [vmem:[#allocation7 + $0x170] sm:$0xff]
    %v851 = vld [vmem:[#allocation7 + $0x178] sm:$0xff]
    %v852 = vld [vmem:[#allocation7 + $0x180] sm:$0xff]
    %v853 = vld [vmem:[#allocation7 + $0x188] sm:$0xff]
    %v854 = vld [vmem:[#allocation7 + $0x190] sm:$0xff]
    %v855 = vld [vmem:[#allocation7 + $0x198] sm:$0xff]
    %v856 = vld [vmem:[#allocation7 + $0x1a0] sm:$0xff]
    %v857 = vld [vmem:[#allocation7 + $0x1a8] sm:$0xff]
    %v858 = vld [vmem:[#allocation7 + $0x1b0] sm:$0xff]
    %v859 = vld [vmem:[#allocation7 + $0x1b8] sm:$0xff]
    %v860 = vld [vmem:[#allocation7 + $0x1c0] sm:$0xff]
    %v861 = vld [vmem:[#allocation7 + $0x1c8] sm:$0xff]
    %v862 = vld [vmem:[#allocation7 + $0x1d0] sm:$0xff]
    %v863 = vld [vmem:[#allocation7 + $0x1d8] sm:$0xff]
    %v864 = vld [vmem:[#allocation7 + $0x1e0] sm:$0xff]
    %v865 = vld [vmem:[#allocation7 + $0x1e8] sm:$0xff]
    %v866 = vld [vmem:[#allocation7 + $0x1f0] sm:$0xff]
    %v867 = vld [vmem:[#allocation7 + $0x1f8] sm:$0xff]
    %v868 = vld [vmem:[#allocation7 + $0x200] sm:$0xff]
    %v869 = vld [vmem:[#allocation7 + $0x208] sm:$0xff]
    %v870 = vld [vmem:[#allocation7 + $0x210] sm:$0xff]
    %v871 = vld [vmem:[#allocation7 + $0x218] sm:$0xff]
    %v872 = vld [vmem:[#allocation7 + $0x220] sm:$0xff]
    %v873 = vld [vmem:[#allocation7 + $0x228] sm:$0xff]
    %v874 = vld [vmem:[#allocation7 + $0x230] sm:$0xff]
    %v875 = vld [vmem:[#allocation7 + $0x238] sm:$0xff]
    %v876 = vld [vmem:[#allocation7 + $0x240] sm:$0xff]
    %v877 = vld [vmem:[#allocation7 + $0x248] sm:$0xff]
    %v878 = vld [vmem:[#allocation7 + $0x250] sm:$0xff]
    %v879 = vld [vmem:[#allocation7 + $0x258] sm:$0xff]
    %v880 = vld [vmem:[#allocation7 + $0x260] sm:$0xff]
    %v881 = vld [vmem:[#allocation7 + $0x268] sm:$0xff]
    %v882 = vld [vmem:[#allocation7 + $0x270] sm:$0xff]
    %v883 = vld [vmem:[#allocation7 + $0x278] sm:$0xff]
    %v884 = vld [vmem:[#allocation7 + $0x280] sm:$0xff]
    %v885 = vld [vmem:[#allocation7 + $0x288] sm:$0xff]
    %v886 = vld [vmem:[#allocation7 + $0x290] sm:$0xff]
    %v887 = vld [vmem:[#allocation7 + $0x298] sm:$0xff]
    %v888 = vld [vmem:[#allocation7 + $0x2a0] sm:$0xff]
    %v889 = vld [vmem:[#allocation7 + $0x2a8] sm:$0xff]
    %v890 = vld [vmem:[#allocation7 + $0x2b0] sm:$0xff]
    %v891 = vld [vmem:[#allocation7 + $0x2b8] sm:$0xff]
    %v892 = vld [vmem:[#allocation7 + $0x2c0] sm:$0xff]
    %v893 = vld [vmem:[#allocation7 + $0x2c8] sm:$0xff]
    %v894 = vld [vmem:[#allocation7 + $0x2d0] sm:$0xff]
    %v895 = vld [vmem:[#allocation7 + $0x2d8] sm:$0xff]
    %v896 = vld [vmem:[#allocation7 + $0x2e0] sm:$0xff]
    %v897 = vld [vmem:[#allocation7 + $0x2e8] sm:$0xff]
    %v898 = vld [vmem:[#allocation7 + $0x2f0] sm:$0xff]
    %v899 = vld [vmem:[#allocation7 + $0x2f8] sm:$0xff]
    %v900 = vld [vmem:[#allocation7 + $0x300] sm:$0xff]
    %v901 = vld [vmem:[#allocation7 + $0x308] sm:$0xff]
    %v902 = vld [vmem:[#allocation7 + $0x310] sm:$0xff]
    %v903 = vld [vmem:[#allocation7 + $0x318] sm:$0xff]
    %v904 = vld [vmem:[#allocation7 + $0x320] sm:$0xff]
    %v905 = vld [vmem:[#allocation7 + $0x328] sm:$0xff]
    %v906 = vld [vmem:[#allocation7 + $0x330] sm:$0xff]
    %v907 = vld [vmem:[#allocation7 + $0x338] sm:$0xff]
    %v908 = vld [vmem:[#allocation7 + $0x340] sm:$0xff]
    %v909 = vld [vmem:[#allocation7 + $0x348] sm:$0xff]
    %v910 = vld [vmem:[#allocation7 + $0x350] sm:$0xff]
    %v911 = vld [vmem:[#allocation7 + $0x358] sm:$0xff]
    %v912 = vld [vmem:[#allocation7 + $0x360] sm:$0xff]
    %v913 = vld [vmem:[#allocation7 + $0x368] sm:$0xff]
    %v914 = vld [vmem:[#allocation7 + $0x370] sm:$0xff]
    %v915 = vld [vmem:[#allocation7 + $0x378] sm:$0xff]
    %v916 = vld [vmem:[#allocation7 + $0x380] sm:$0xff]
    %v917 = vld [vmem:[#allocation7 + $0x388] sm:$0xff]
    %v918 = vld [vmem:[#allocation7 + $0x390] sm:$0xff]
    %v919 = vld [vmem:[#allocation7 + $0x398] sm:$0xff]
    %v920 = vld [vmem:[#allocation7 + $0x3a0] sm:$0xff]
    %v921 = vld [vmem:[#allocation7 + $0x3a8] sm:$0xff]
    %v922 = vld [vmem:[#allocation7 + $0x3b0] sm:$0xff]
    %v923 = vld [vmem:[#allocation7 + $0x3b8] sm:$0xff]
    %v924 = vld [vmem:[#allocation7 + $0x3c0] sm:$0xff]
    %v925 = vld [vmem:[#allocation7 + $0x3c8] sm:$0xff]
    %v926 = vld [vmem:[#allocation7 + $0x3d0] sm:$0xff]
    %v927 = vld [vmem:[#allocation7 + $0x3d8] sm:$0xff]
    %v928 = vld [vmem:[#allocation7 + $0x3e0] sm:$0xff]
    %v929 = vld [vmem:[#allocation7 + $0x3e8] sm:$0xff]
    %v930 = vld [vmem:[#allocation7 + $0x3f0] sm:$0xff]
    %v931 = vld [vmem:[#allocation7 + $0x3f8] sm:$0xff]
    %v932 = vld [vmem:[#allocation7 + $0x400] sm:$0xff]
    %v933 = vld [vmem:[#allocation7 + $0x408] sm:$0xff]
    %v934 = vld [vmem:[#allocation7 + $0x410] sm:$0xff]
    %v935 = vld [vmem:[#allocation7 + $0x418] sm:$0xff]
    %v936 = vld [vmem:[#allocation7 + $0x420] sm:$0xff]
    %v937 = vld [vmem:[#allocation7 + $0x428] sm:$0xff]
    %v938 = vld [vmem:[#allocation7 + $0x430] sm:$0xff]
    %v939 = vld [vmem:[#allocation7 + $0x438] sm:$0xff]
    %v940 = vld [vmem:[#allocation7 + $0x440] sm:$0xff]
    %v941 = vld [vmem:[#allocation7 + $0x448] sm:$0xff]
    %v942 = vld [vmem:[#allocation7 + $0x450] sm:$0xff]
    %v943 = vld [vmem:[#allocation7 + $0x458] sm:$0xff]
    %v944 = vld [vmem:[#allocation7 + $0x460] sm:$0xff]
    %v945 = vld [vmem:[#allocation7 + $0x468] sm:$0xff]
    %v946 = vld [vmem:[#allocation7 + $0x470] sm:$0xff]
    %v947 = vld [vmem:[#allocation7 + $0x478] sm:$0xff]
    %v948 = vld [vmem:[#allocation7 + $0x480] sm:$0xff]
    %v949 = vld [vmem:[#allocation7 + $0x488] sm:$0xff]
    %v950 = vld [vmem:[#allocation7 + $0x490] sm:$0xff]
    %v951 = vld [vmem:[#allocation7 + $0x498] sm:$0xff]
    %v952 = vld [vmem:[#allocation7 + $0x4a0] sm:$0xff]
    %v953 = vld [vmem:[#allocation7 + $0x4a8] sm:$0xff]
    %v954 = vld [vmem:[#allocation7 + $0x4b0] sm:$0xff]
    %v955 = vld [vmem:[#allocation7 + $0x4b8] sm:$0xff]
    %v956 = vld [vmem:[#allocation7 + $0x4c0] sm:$0xff]
    %v957 = vld [vmem:[#allocation7 + $0x4c8] sm:$0xff]
    %v958 = vld [vmem:[#allocation7 + $0x4d0] sm:$0xff]
    %v959 = vld [vmem:[#allocation7 + $0x4d8] sm:$0xff]
    %v960 = vld [vmem:[#allocation7 + $0x4e0] sm:$0xff]
    %v961 = vld [vmem:[#allocation7 + $0x4e8] sm:$0xff]
    %v962 = vld [vmem:[#allocation7 + $0x4f0] sm:$0xff]
    %v963 = vld [vmem:[#allocation7 + $0x4f8] sm:$0xff]
    %v964 = vld [vmem:[%s4] sm:$0x3]
    %v966 = vlaneseq
    %v967 = vshrl.u32 %v966, 7
    %v968 = vsub.s32 0, %v967
    %v969 = vrot.slane %v803, %v968
    %v970 = vlaneseq
    %v971 = vshrl.u32 %v970, 7
    %v972 = vsub.s32 1, %v971
    %v973 = vrot.slane %v803, %v972
    %v974 = vlaneseq
    %v975 = vshrl.u32 %v974, 7
    %v976 = vsub.s32 2, %v975
    %v977 = vrot.slane %v803, %v976
    %v978 = vlaneseq
    %v979 = vshrl.u32 %v978, 7
    %v980 = vsub.s32 3, %v979
    %v981 = vrot.slane %v803, %v980
    %v982 = vlaneseq
    %v983 = vshrl.u32 %v982, 7
    %v984 = vsub.s32 4, %v983
    %v985 = vrot.slane %v803, %v984
    %v992 = vlaneseq
    %v993 = vshrl.u32 %v992, 7
    %v994 = vsub.s32 0, %v993
    %v995 = vrot.slane %v964, %v994
    %v996 = vlaneseq
    %v997 = vshrl.u32 %v996, 7
    %v998 = vsub.s32 1, %v997
    %v999 = vrot.slane %v964, %v998
    %1002 = vmatprep.subr.mxu0 %v805
    %1003 = vmatpush1.msra.mxu0 %v804
    %1004 = vmatprep.subr.mxu0 %v807
    %1005 = vmatpush1.msra.mxu0 %v806
    %1006 = vmatprep.subr.mxu0 %v809
    %1007 = vmatpush1.msra.mxu0 %v808
    %1008 = vmatprep.subr.mxu0 %v811
    %1009 = vmatpush1.msra.mxu0 %v810
    %1010 = vmatprep.subr.mxu0 %v813
    %1011 = vmatpush1.msra.mxu0 %v812
    %1012 = vmatprep.subr.mxu0 %v815
    %1013 = vmatpush1.msra.mxu0 %v814
    %1014 = vmatprep.subr.mxu0 %v817
    %1015 = vmatpush1.msra.mxu0 %v816
    %1016 = vmatprep.subr.mxu0 %v819
    %1017 = vmatpush1.msra.mxu0 %v818
    %1018 = vmatprep.subr.mxu0 %v821
    %1019 = vmatpush1.msra.mxu0 %v820
    %1020 = vmatprep.subr.mxu0 %v823
    %1021 = vmatpush1.msra.mxu0 %v822
    %1022 = vmatprep.subr.mxu0 %v825
    %1023 = vmatpush1.msra.mxu0 %v824
    %1024 = vmatprep.subr.mxu0 %v827
    %1025 = vmatpush1.msra.mxu0 %v826
    %1026 = vmatprep.subr.mxu0 %v829
    %1027 = vmatpush1.msra.mxu0 %v828
    %1028 = vmatprep.subr.mxu0 %v831
    %1029 = vmatpush1.msra.mxu0 %v830
    %1030 = vmatprep.subr.mxu0 %v833
    %1031 = vmatpush1.msra.mxu0 %v832
    %1032 = vmatprep.subr.mxu0 %v835
    %1033 = vmatpush1.msra.mxu0 %v834
    %1034 = vmatprep.subr.mxu0 %v837
    %1035 = vmatpush1.msra.mxu0 %v836
    %1036 = vmatprep.subr.mxu0 %v839
    %1037 = vmatpush1.msra.mxu0 %v838
    %1038 = vmatprep.subr.mxu0 %v841
    %1039 = vmatpush1.msra.mxu0 %v840
    %1040 = vmatprep.subr.mxu0 %v843
    %1041 = vmatpush1.msra.mxu0 %v842
    %1042 = vmatprep.subr.mxu0 %v845
    %1043 = vmatpush1.msra.mxu0 %v844
    %1044 = vmatprep.subr.mxu0 %v847
    %1045 = vmatpush1.msra.mxu0 %v846
    %1046 = vmatprep.subr.mxu0 %v849
    %1047 = vmatpush1.msra.mxu0 %v848
    %1048 = vmatprep.subr.mxu0 %v851
    %1049 = vmatpush1.msra.mxu0 %v850
    %1050 = vmatprep.subr.mxu0 %v853
    %1051 = vmatpush1.msra.mxu0 %v852
    %1052 = vmatprep.subr.mxu0 %v855
    %1053 = vmatpush1.msra.mxu0 %v854
    %1054 = vmatprep.subr.mxu0 %v857
    %1055 = vmatpush1.msra.mxu0 %v856
    %1056 = vmatprep.subr.mxu0 %v859
    %1057 = vmatpush1.msra.mxu0 %v858
    %1058 = vmatprep.subr.mxu0 %v861
    %1059 = vmatpush1.msra.mxu0 %v860
    %1060 = vmatprep.subr.mxu0 %v863
    %1061 = vmatpush1.msra.mxu0 %v862
    %1062 = vmatprep.subr.mxu0 %v865
    %1063 = vmatpush1.msra.mxu0 %v864
    %1064 = vmatprep.subr.mxu0 %v867
    %1065 = vmatpush1.msra.mxu0 %v866
    %1066 = vmatprep.mubr.f32.mxu0 %v973
    %1067 = vmatmul.mubr.f32.gmra.mrb[0].mxu0 %v969
    %v1068 = vpop.f32.mrb[0].mxu0
    %v1069 = vadd.f32 %v995, %v1068
    %v1070 = vpop.f32.mrb[0].mxu0
    %v1071 = vadd.f32 %v999, %v1070
    %1072 = vdwg.mxu0
    %1073 = vmatprep.subr.mxu0 %v869
    %1074 = vmatpush1.msra.mxu0 %v868
    %1075 = vmatprep.subr.mxu0 %v871
    %1076 = vmatpush1.msra.mxu0 %v870
    %1077 = vmatprep.subr.mxu0 %v873
    %1078 = vmatpush1.msra.mxu0 %v872
    %1079 = vmatprep.subr.mxu0 %v875
    %1080 = vmatpush1.msra.mxu0 %v874
    %1081 = vmatprep.subr.mxu0 %v877
    %1082 = vmatpush1.msra.mxu0 %v876
    %1083 = vmatprep.subr.mxu0 %v879
    %1084 = vmatpush1.msra.mxu0 %v878
    %1085 = vmatprep.subr.mxu0 %v881
    %1086 = vmatpush1.msra.mxu0 %v880
    %1087 = vmatprep.subr.mxu0 %v883
    %1088 = vmatpush1.msra.mxu0 %v882
    %1089 = vmatprep.subr.mxu0 %v885
    %1090 = vmatpush1.msra.mxu0 %v884
    %1091 = vmatprep.subr.mxu0 %v887
    %1092 = vmatpush1.msra.mxu0 %v886
    %1093 = vmatprep.subr.mxu0 %v889
    %1094 = vmatpush1.msra.mxu0 %v888
    %1095 = vmatprep.subr.mxu0 %v891
    %1096 = vmatpush1.msra.mxu0 %v890
    %1097 = vmatprep.subr.mxu0 %v893
    %1098 = vmatpush1.msra.mxu0 %v892
    %1099 = vmatprep.subr.mxu0 %v895
    %1100 = vmatpush1.msra.mxu0 %v894
    %1101 = vmatprep.subr.mxu0 %v897
    %1102 = vmatpush1.msra.mxu0 %v896
    %1103 = vmatprep.subr.mxu0 %v899
    %1104 = vmatpush1.msra.mxu0 %v898
    %1105 = vmatprep.subr.mxu0 %v901
    %1106 = vmatpush1.msra.mxu0 %v900
    %1107 = vmatprep.subr.mxu0 %v903
    %1108 = vmatpush1.msra.mxu0 %v902
    %1109 = vmatprep.subr.mxu0 %v905
    %1110 = vmatpush1.msra.mxu0 %v904
    %1111 = vmatprep.subr.mxu0 %v907
    %1112 = vmatpush1.msra.mxu0 %v906
    %1113 = vmatprep.subr.mxu0 %v909
    %1114 = vmatpush1.msra.mxu0 %v908
    %1115 = vmatprep.subr.mxu0 %v911
    %1116 = vmatpush1.msra.mxu0 %v910
    %1117 = vmatprep.subr.mxu0 %v913
    %1118 = vmatpush1.msra.mxu0 %v912
    %1119 = vmatprep.subr.mxu0 %v915
    %1120 = vmatpush1.msra.mxu0 %v914
    %1121 = vmatprep.subr.mxu0 %v917
    %1122 = vmatpush1.msra.mxu0 %v916
    %1123 = vmatprep.subr.mxu0 %v919
    %1124 = vmatpush1.msra.mxu0 %v918
    %1125 = vmatprep.subr.mxu0 %v921
    %1126 = vmatpush1.msra.mxu0 %v920
    %1127 = vmatprep.subr.mxu0 %v923
    %1128 = vmatpush1.msra.mxu0 %v922
    %1129 = vmatprep.subr.mxu0 %v925
    %1130 = vmatpush1.msra.mxu0 %v924
    %1131 = vmatprep.subr.mxu0 %v927
    %1132 = vmatpush1.msra.mxu0 %v926
    %1133 = vmatprep.subr.mxu0 %v929
    %1134 = vmatpush1.msra.mxu0 %v928
    %1135 = vmatprep.subr.mxu0 %v931
    %1136 = vmatpush1.msra.mxu0 %v930
    %1137 = vmatprep.mubr.f32.mxu0 %v981
    %1138 = vmatmul.mubr.f32.gmra.mrb[0].mxu0 %v977
    %v1139 = vpop.f32.mrb[0].mxu0
    %v1140 = vadd.f32 %v1069, %v1139
    %v1141 = vpop.f32.mrb[0].mxu0
    %v1142 = vadd.f32 %v1071, %v1141
    %1143 = vdwg.mxu0
    %1144 = vmatprep.subr.mxu0 %v933
    %1145 = vmatpush1.msra.mxu0 %v932
    %1146 = vmatprep.subr.mxu0 %v935
    %1147 = vmatpush1.msra.mxu0 %v934
    %1148 = vmatprep.subr.mxu0 %v937
    %1149 = vmatpush1.msra.mxu0 %v936
    %1150 = vmatprep.subr.mxu0 %v939
    %1151 = vmatpush1.msra.mxu0 %v938
    %1152 = vmatprep.subr.mxu0 %v941
    %1153 = vmatpush1.msra.mxu0 %v940
    %1154 = vmatprep.subr.mxu0 %v943
    %1155 = vmatpush1.msra.mxu0 %v942
    %1156 = vmatprep.subr.mxu0 %v945
    %1157 = vmatpush1.msra.mxu0 %v944
    %1158 = vmatprep.subr.mxu0 %v947
    %1159 = vmatpush1.msra.mxu0 %v946
    %1160 = vmatprep.subr.mxu0 %v949
    %1161 = vmatpush1.msra.mxu0 %v948
    %1162 = vmatprep.subr.mxu0 %v951
    %1163 = vmatpush1.msra.mxu0 %v950
    %1164 = vmatprep.subr.mxu0 %v953
    %1165 = vmatpush1.msra.mxu0 %v952
    %1166 = vmatprep.subr.mxu0 %v955
    %1167 = vmatpush1.msra.mxu0 %v954
    %1168 = vmatprep.subr.mxu0 %v957
    %1169 = vmatpush1.msra.mxu0 %v956
    %1170 = vmatprep.subr.mxu0 %v959
    %1171 = vmatpush1.msra.mxu0 %v958
    %1172 = vmatprep.subr.mxu0 %v961
    %1173 = vmatpush1.msra.mxu0 %v960
    %1174 = vmatprep.subr.mxu0 %v963
    %1175 = vmatpush1.msra.mxu0 %v962
    %1176 = vmatprep.subr.mxu0 0.0
    %1177 = vmatpush1.msra.mxu0 0.0
    %1178 = vmatprep.subr.mxu0 0.0
    %1179 = vmatpush1.msra.mxu0 0.0
    %1180 = vmatprep.subr.mxu0 0.0
    %1181 = vmatpush1.msra.mxu0 0.0
    %1182 = vmatprep.subr.mxu0 0.0
    %1183 = vmatpush1.msra.mxu0 0.0
    %1184 = vmatprep.subr.mxu0 0.0
    %1185 = vmatpush1.msra.mxu0 0.0
    %1186 = vmatprep.subr.mxu0 0.0
    %1187 = vmatpush1.msra.mxu0 0.0
    %1188 = vmatprep.subr.mxu0 0.0
    %1189 = vmatpush1.msra.mxu0 0.0
    %1190 = vmatprep.subr.mxu0 0.0
    %1191 = vmatpush1.msra.mxu0 0.0
    %1192 = vmatprep.subr.mxu0 0.0
    %1193 = vmatpush1.msra.mxu0 0.0
    %1194 = vmatprep.subr.mxu0 0.0
    %1195 = vmatpush1.msra.mxu0 0.0
    %1196 = vmatprep.subr.mxu0 0.0
    %1197 = vmatpush1.msra.mxu0 0.0
    %1198 = vmatprep.subr.mxu0 0.0
    %1199 = vmatpush1.msra.mxu0 0.0
    %1200 = vmatprep.subr.mxu0 0.0
    %1201 = vmatpush1.msra.mxu0 0.0
    %1202 = vmatprep.subr.mxu0 0.0
    %1203 = vmatpush1.msra.mxu0 0.0
    %1204 = vmatprep.subr.mxu0 0.0
    %1205 = vmatpush1.msra.mxu0 0.0
    %1206 = vmatprep.subr.mxu0 0.0
    %1207 = vmatpush1.msra.mxu0 0.0
    %1208 = vmatprep.mubr.f32.mxu0 0.0
    %1209 = vmatmul.mubr.f32.gmra.mrb[0].mxu0 %v985
    %v1210 = vpop.f32.mrb[0].mxu0
    %v1211 = vadd.f32 %v1140, %v1210
    %v1212 = vpop.f32.mrb[0].mxu0
    %v1213 = vadd.f32 %v1142, %v1212
    %1214 = vdwg.mxu0
    %vm1215 = vcmask 1040384
    %v1216 = vsel %vm1215, %v1211, -inf
    %v1217 = vsel %vm1215, %v1213, -inf
    %v1218 = vmax.f32 %v1216, %v1217
    %1219 = vmax.xlane.f32.xlu0 %v1218
    %v1220 = vpop.xlane.xlu0 %1219
    %v1221 = vsub.f32 %v1211, %v1220
    %v1222 = vsub.f32 %v1213, %v1220
    %v1223 = vmul.f32 %v1221, 1.442695
    %v1224 = vpow.pop %v1223
    %v1225 = vmul.f32 %v1222, 1.442695
    %v1226 = vpow.pop %v1225
    %v1227 = vsel %vm1215, %v1224, 0.0
    %v1228 = vsel %vm1215, %v1226, 0.0
    %v1229 = vadd.f32 %v1227, %v1228
    %1230 = vadd.xlane.f32.xlu0 %v1229
    %v1231 = vpop.xlane.xlu0 %1230
    %v1232 = vlog2.pop %v1231
    %v1233 = vmul.f32 %v1232, 0.6931472
    %v1234 = vadd.f32 %v1220, %v1233
    %v1235 = vsub.f32 %v1211, %v1234
    %v1236 = vsub.f32 %v1213, %v1234
    %v1239 = vcombine.low %v1235, %v1236
    %v1241 = vunpack.c.l.s4 1966171168
    %v1242 = vunpack.c.0.s8 %v1241
    %v1243 = vlaneseq
    %v1244 = vshrl.u32 %v1243, 7
    %v1245 = vsub.s32 %v1242, %v1244
    %v1246 = vrot.slane %v1239, %v1245
    %v1248 = vunpack.c.l.s4 1966171168
    %v1249 = vunpack.c.0.s8 %v1248
    %v1250 = vlaneseq
    %v1251 = vshrl.u32 %v1250, 7
    %v1252 = vsub.s32 %v1249, %v1251
    %v1253 = vrot.slane %v1246, %v1252
    %v1255 = vlaneseq
    %vm1256 = vcmp.ge.s32.totalorder %v1255, 0
    %vm1257 = vcmp.lt.s32.totalorder %v1255, 256
    %vm1258 = vmand %vm1256, %vm1257
    %1259 = vst.msk [vmem:[#allocation8] ss:$8 sm:$0x3] %vm1258, %v1253
    %1260 = vst.msk [vmem:[#allocation8] ss:$8 sm:$0x0] %vm1258, %v1253
    %p1261 = scmp.lt.s32.totalorder %s73, 1
    %s1262 = scalar_select %p1261, 1, 0
    %v1263 = vstv %s1262
    %vm1264 = vcmp.eq.s32.totalorder %v1263, 1
    %v1265 = vsel %vm1264, %v803, %v74
    %vm1266 = vcmp.lt.s32.totalorder %v1255, 384
    %vm1267 = vmand %vm1256, %vm1266
    %1268 = vst.msk [vmem:[#allocation9] sm:$0x7] %vm1267, %v1265
    %v1269 = vld [vmem:[#allocation9] sm:$0x7]
    %s1270 = scalar_lea.vmem [#allocation2], 1
    %v1271 = vld [vmem:[%s1270] ss:$8 sm:$0xf]
    %v1272 = vld [vmem:[%s1270] ss:$8 sm:$0x10]
    %v1273 = vor.u32 %v1271, %v1272
    %v1274 = vld [vmem:[#allocation5] sm:$0xff]
    %v1275 = vld [vmem:[#allocation5 + $0x8] sm:$0xff]
    %v1276 = vld [vmem:[#allocation5 + $0x10] sm:$0xff]
    %v1277 = vld [vmem:[#allocation5 + $0x18] sm:$0xff]
    %v1278 = vld [vmem:[#allocation5 + $0x20] sm:$0xff]
    %v1279 = vld [vmem:[#allocation5 + $0x28] sm:$0xff]
    %v1280 = vld [vmem:[#allocation5 + $0x30] sm:$0xff]
    %v1281 = vld [vmem:[#allocation5 + $0x38] sm:$0xff]
    %v1282 = vld [vmem:[#allocation5 + $0x40] sm:$0xff]
    %v1283 = vld [vmem:[#allocation5 + $0x48] sm:$0xff]
    %v1284 = vld [vmem:[#allocation5 + $0x50] sm:$0xff]
    %v1285 = vld [vmem:[#allocation5 + $0x58] sm:$0xff]
    %v1286 = vld [vmem:[#allocation5 + $0x60] sm:$0xff]
    %v1287 = vld [vmem:[#allocation5 + $0x68] sm:$0xff]
    %v1288 = vld [vmem:[#allocation5 + $0x70] sm:$0xff]
    %v1289 = vld [vmem:[#allocation5 + $0x78] sm:$0xff]
    %v1290 = vld [vmem:[#allocation5 + $0x80] sm:$0xff]
    %v1291 = vld [vmem:[#allocation5 + $0x88] sm:$0xff]
    %v1292 = vld [vmem:[#allocation5 + $0x90] sm:$0xff]
    %v1293 = vld [vmem:[#allocation5 + $0x98] sm:$0xff]
    %v1294 = vld [vmem:[#allocation5 + $0xa0] sm:$0xff]
    %v1295 = vld [vmem:[#allocation5 + $0xa8] sm:$0xff]
    %v1296 = vld [vmem:[#allocation5 + $0xb0] sm:$0xff]
    %v1297 = vld [vmem:[#allocation5 + $0xb8] sm:$0xff]
    %v1298 = vld [vmem:[#allocation5 + $0xc0] sm:$0xff]
    %v1299 = vld [vmem:[#allocation5 + $0xc8] sm:$0xff]
    %v1300 = vld [vmem:[#allocation5 + $0xd0] sm:$0xff]
    %v1301 = vld [vmem:[#allocation5 + $0xd8] sm:$0xff]
    %v1302 = vld [vmem:[#allocation5 + $0xe0] sm:$0xff]
    %v1303 = vld [vmem:[#allocation5 + $0xe8] sm:$0xff]
    %v1304 = vld [vmem:[#allocation5 + $0xf0] sm:$0xff]
    %v1305 = vld [vmem:[#allocation5 + $0xf8] sm:$0xff]
    %v1306 = vld [vmem:[#allocation5 + $0x100] sm:$0xff]
    %v1307 = vld [vmem:[#allocation5 + $0x108] sm:$0xff]
    %v1308 = vld [vmem:[#allocation5 + $0x110] sm:$0xff]
    %v1309 = vld [vmem:[#allocation5 + $0x118] sm:$0xff]
    %v1310 = vld [vmem:[#allocation5 + $0x120] sm:$0xff]
    %v1311 = vld [vmem:[#allocation5 + $0x128] sm:$0xff]
    %v1312 = vld [vmem:[#allocation5 + $0x130] sm:$0xff]
    %v1313 = vld [vmem:[#allocation5 + $0x138] sm:$0xff]
    %v1314 = vld [vmem:[#allocation5 + $0x140] sm:$0xff]
    %v1315 = vld [vmem:[#allocation5 + $0x148] sm:$0xff]
    %v1316 = vld [vmem:[#allocation5 + $0x150] sm:$0xff]
    %v1317 = vld [vmem:[#allocation5 + $0x158] sm:$0xff]
    %v1318 = vld [vmem:[#allocation5 + $0x160] sm:$0xff]
    %v1319 = vld [vmem:[#allocation5 + $0x168] sm:$0xff]
    %v1320 = vld [vmem:[#allocation5 + $0x170] sm:$0xff]
    %v1321 = vld [vmem:[#allocation5 + $0x178] sm:$0xff]
    %v1322 = vld [vmem:[#allocation5 + $0x180] sm:$0xff]
    %v1323 = vld [vmem:[#allocation5 + $0x188] sm:$0xff]
    %v1324 = vld [vmem:[#allocation5 + $0x190] sm:$0xff]
    %v1325 = vld [vmem:[#allocation5 + $0x198] sm:$0xff]
    %v1326 = vld [vmem:[#allocation5 + $0x1a0] sm:$0xff]
    %v1327 = vld [vmem:[#allocation5 + $0x1a8] sm:$0xff]
    %v1328 = vld [vmem:[#allocation5 + $0x1b0] sm:$0xff]
    %v1329 = vld [vmem:[#allocation5 + $0x1b8] sm:$0xff]
    %v1330 = vld [vmem:[#allocation5 + $0x1c0] sm:$0xff]
    %v1331 = vld [vmem:[#allocation5 + $0x1c8] sm:$0xff]
    %v1332 = vld [vmem:[#allocation5 + $0x1d0] sm:$0xff]
    %v1333 = vld [vmem:[#allocation5 + $0x1d8] sm:$0xff]
    %v1334 = vld [vmem:[#allocation5 + $0x1e0] sm:$0xff]
    %v1335 = vld [vmem:[#allocation5 + $0x1e8] sm:$0xff]
    %v1336 = vld [vmem:[#allocation5 + $0x1f0] sm:$0xff]
    %v1337 = vld [vmem:[#allocation5 + $0x1f8] sm:$0xff]
    %v1338 = vld [vmem:[#allocation5 + $0x200] sm:$0xff]
    %v1339 = vld [vmem:[#allocation5 + $0x208] sm:$0xff]
    %v1340 = vld [vmem:[#allocation5 + $0x210] sm:$0xff]
    %v1341 = vld [vmem:[#allocation5 + $0x218] sm:$0xff]
    %v1342 = vld [vmem:[#allocation5 + $0x220] sm:$0xff]
    %v1343 = vld [vmem:[#allocation5 + $0x228] sm:$0xff]
    %v1344 = vld [vmem:[#allocation5 + $0x230] sm:$0xff]
    %v1345 = vld [vmem:[#allocation5 + $0x238] sm:$0xff]
    %v1346 = vld [vmem:[#allocation5 + $0x240] sm:$0xff]
    %v1347 = vld [vmem:[#allocation5 + $0x248] sm:$0xff]
    %v1348 = vld [vmem:[#allocation5 + $0x250] sm:$0xff]
    %v1349 = vld [vmem:[#allocation5 + $0x258] sm:$0xff]
    %v1350 = vld [vmem:[#allocation5 + $0x260] sm:$0xff]
    %v1351 = vld [vmem:[#allocation5 + $0x268] sm:$0xff]
    %v1352 = vld [vmem:[#allocation5 + $0x270] sm:$0xff]
    %v1353 = vld [vmem:[#allocation5 + $0x278] sm:$0xff]
    %v1354 = vld [vmem:[#allocation5 + $0x280] sm:$0xff]
    %v1355 = vld [vmem:[#allocation5 + $0x288] sm:$0xff]
    %v1356 = vld [vmem:[#allocation5 + $0x290] sm:$0xff]
    %v1357 = vld [vmem:[#allocation5 + $0x298] sm:$0xff]
    %v1358 = vld [vmem:[#allocation5 + $0x2a0] sm:$0xff]
    %v1359 = vld [vmem:[#allocation5 + $0x2a8] sm:$0xff]
    %v1360 = vld [vmem:[#allocation5 + $0x2b0] sm:$0xff]
    %v1361 = vld [vmem:[#allocation5 + $0x2b8] sm:$0xff]
    %v1362 = vld [vmem:[#allocation5 + $0x2c0] sm:$0xff]
    %v1363 = vld [vmem:[#allocation5 + $0x2c8] sm:$0xff]
    %v1364 = vld [vmem:[#allocation5 + $0x2d0] sm:$0xff]
    %v1365 = vld [vmem:[#allocation5 + $0x2d8] sm:$0xff]
    %v1366 = vld [vmem:[#allocation5 + $0x2e0] sm:$0xff]
    %v1367 = vld [vmem:[#allocation5 + $0x2e8] sm:$0xff]
    %v1368 = vld [vmem:[#allocation5 + $0x2f0] sm:$0xff]
    %v1369 = vld [vmem:[#allocation5 + $0x2f8] sm:$0xff]
    %v1370 = vld [vmem:[#allocation5 + $0x300] sm:$0xff]
    %v1371 = vld [vmem:[#allocation5 + $0x308] sm:$0xff]
    %v1372 = vld [vmem:[#allocation5 + $0x310] sm:$0xff]
    %v1373 = vld [vmem:[#allocation5 + $0x318] sm:$0xff]
    %v1374 = vld [vmem:[#allocation5 + $0x320] sm:$0xff]
    %v1375 = vld [vmem:[#allocation5 + $0x328] sm:$0xff]
    %v1376 = vld [vmem:[#allocation5 + $0x330] sm:$0xff]
    %v1377 = vld [vmem:[#allocation5 + $0x338] sm:$0xff]
    %v1378 = vld [vmem:[#allocation5 + $0x340] sm:$0xff]
    %v1379 = vld [vmem:[#allocation5 + $0x348] sm:$0xff]
    %v1380 = vld [vmem:[#allocation5 + $0x350] sm:$0xff]
    %v1381 = vld [vmem:[#allocation5 + $0x358] sm:$0xff]
    %v1382 = vld [vmem:[#allocation5 + $0x360] sm:$0xff]
    %v1383 = vld [vmem:[#allocation5 + $0x368] sm:$0xff]
    %v1384 = vld [vmem:[#allocation5 + $0x370] sm:$0xff]
    %v1385 = vld [vmem:[#allocation5 + $0x378] sm:$0xff]
    %v1386 = vld [vmem:[#allocation5 + $0x380] sm:$0xff]
    %v1387 = vld [vmem:[#allocation5 + $0x388] sm:$0xff]
    %v1388 = vld [vmem:[#allocation5 + $0x390] sm:$0xff]
    %v1389 = vld [vmem:[#allocation5 + $0x398] sm:$0xff]
    %v1390 = vld [vmem:[#allocation5 + $0x3a0] sm:$0xff]
    %v1391 = vld [vmem:[#allocation5 + $0x3a8] sm:$0xff]
    %v1392 = vld [vmem:[#allocation5 + $0x3b0] sm:$0xff]
    %v1393 = vld [vmem:[#allocation5 + $0x3b8] sm:$0xff]
    %v1394 = vld [vmem:[#allocation5 + $0x3c0] sm:$0xff]
    %v1395 = vld [vmem:[#allocation5 + $0x3c8] sm:$0xff]
    %v1396 = vld [vmem:[#allocation5 + $0x3d0] sm:$0xff]
    %v1397 = vld [vmem:[#allocation5 + $0x3d8] sm:$0xff]
    %v1398 = vld [vmem:[#allocation5 + $0x3e0] sm:$0xff]
    %v1399 = vld [vmem:[#allocation5 + $0x3e8] sm:$0xff]
    %v1400 = vld [vmem:[#allocation5 + $0x3f0] sm:$0xff]
    %v1401 = vld [vmem:[#allocation5 + $0x3f8] sm:$0xff]
    %v1402 = vld [vmem:[#allocation5 + $0x400] sm:$0xff]
    %v1403 = vld [vmem:[#allocation5 + $0x408] sm:$0xff]
    %v1404 = vld [vmem:[#allocation5 + $0x410] sm:$0xff]
    %v1405 = vld [vmem:[#allocation5 + $0x418] sm:$0xff]
    %v1406 = vld [vmem:[#allocation5 + $0x420] sm:$0xff]
    %v1407 = vld [vmem:[#allocation5 + $0x428] sm:$0xff]
    %v1408 = vld [vmem:[#allocation5 + $0x430] sm:$0xff]
    %v1409 = vld [vmem:[#allocation5 + $0x438] sm:$0xff]
    %v1410 = vld [vmem:[#allocation5 + $0x440] sm:$0xff]
    %v1411 = vld [vmem:[#allocation5 + $0x448] sm:$0xff]
    %v1412 = vld [vmem:[#allocation5 + $0x450] sm:$0xff]
    %v1413 = vld [vmem:[#allocation5 + $0x458] sm:$0xff]
    %v1414 = vld [vmem:[#allocation5 + $0x460] sm:$0xff]
    %v1415 = vld [vmem:[#allocation5 + $0x468] sm:$0xff]
    %v1416 = vld [vmem:[#allocation5 + $0x470] sm:$0xff]
    %v1417 = vld [vmem:[#allocation5 + $0x478] sm:$0xff]
    %v1418 = vld [vmem:[#allocation5 + $0x480] sm:$0xff]
    %v1419 = vld [vmem:[#allocation5 + $0x488] sm:$0xff]
    %v1420 = vld [vmem:[#allocation5 + $0x490] sm:$0xff]
    %v1421 = vld [vmem:[#allocation5 + $0x498] sm:$0xff]
    %v1422 = vld [vmem:[#allocation5 + $0x4a0] sm:$0xff]
    %v1423 = vld [vmem:[#allocation5 + $0x4a8] sm:$0xff]
    %v1424 = vld [vmem:[#allocation5 + $0x4b0] sm:$0xff]
    %v1425 = vld [vmem:[#allocation5 + $0x4b8] sm:$0xff]
    %v1426 = vld [vmem:[#allocation5 + $0x4c0] sm:$0xff]
    %v1427 = vld [vmem:[#allocation5 + $0x4c8] sm:$0xff]
    %v1428 = vld [vmem:[#allocation5 + $0x4d0] sm:$0xff]
    %v1429 = vld [vmem:[#allocation5 + $0x4d8] sm:$0xff]
    %v1430 = vld [vmem:[#allocation5 + $0x4e0] sm:$0xff]
    %v1431 = vld [vmem:[#allocation5 + $0x4e8] sm:$0xff]
    %v1432 = vld [vmem:[#allocation5 + $0x4f0] sm:$0xff]
    %v1433 = vld [vmem:[#allocation5 + $0x4f8] sm:$0xff]
    %v1434 = vld [vmem:[#allocation5 + $0x500] sm:$0xff]
    %v1435 = vld [vmem:[#allocation5 + $0x508] sm:$0xff]
    %v1436 = vld [vmem:[#allocation5 + $0x510] sm:$0xff]
    %v1437 = vld [vmem:[#allocation5 + $0x518] sm:$0xff]
    %v1438 = vld [vmem:[#allocation5 + $0x520] sm:$0xff]
    %v1439 = vld [vmem:[#allocation5 + $0x528] sm:$0xff]
    %v1440 = vld [vmem:[#allocation5 + $0x530] sm:$0xff]
    %v1441 = vld [vmem:[#allocation5 + $0x538] sm:$0xff]
    %v1442 = vld [vmem:[#allocation5 + $0x540] sm:$0xff]
    %v1443 = vld [vmem:[#allocation5 + $0x548] sm:$0xff]
    %v1444 = vld [vmem:[#allocation5 + $0x550] sm:$0xff]
    %v1445 = vld [vmem:[#allocation5 + $0x558] sm:$0xff]
    %v1446 = vld [vmem:[#allocation5 + $0x560] sm:$0xff]
    %v1447 = vld [vmem:[#allocation5 + $0x568] sm:$0xff]
    %v1448 = vld [vmem:[#allocation5 + $0x570] sm:$0xff]
    %v1449 = vld [vmem:[#allocation5 + $0x578] sm:$0xff]
    %v1450 = vld [vmem:[#allocation5 + $0x580] sm:$0xff]
    %v1451 = vld [vmem:[#allocation5 + $0x588] sm:$0xff]
    %v1452 = vld [vmem:[#allocation5 + $0x590] sm:$0xff]
    %v1453 = vld [vmem:[#allocation5 + $0x598] sm:$0xff]
    %v1454 = vld [vmem:[#allocation5 + $0x5a0] sm:$0xff]
    %v1455 = vld [vmem:[#allocation5 + $0x5a8] sm:$0xff]
    %v1456 = vld [vmem:[#allocation5 + $0x5b0] sm:$0xff]
    %v1457 = vld [vmem:[#allocation5 + $0x5b8] sm:$0xff]
    %v1458 = vld [vmem:[#allocation5 + $0x5c0] sm:$0xff]
    %v1459 = vld [vmem:[#allocation5 + $0x5c8] sm:$0xff]
    %v1460 = vld [vmem:[#allocation5 + $0x5d0] sm:$0xff]
    %v1461 = vld [vmem:[#allocation5 + $0x5d8] sm:$0xff]
    %v1462 = vld [vmem:[#allocation5 + $0x5e0] sm:$0xff]
    %v1463 = vld [vmem:[#allocation5 + $0x5e8] sm:$0xff]
    %v1464 = vld [vmem:[#allocation5 + $0x5f0] sm:$0xff]
    %v1465 = vld [vmem:[#allocation5 + $0x5f8] sm:$0xff]
    %v1466 = vld [vmem:[#allocation5 + $0x600] sm:$0xff]
    %v1467 = vld [vmem:[#allocation5 + $0x608] sm:$0xff]
    %v1468 = vld [vmem:[#allocation5 + $0x610] sm:$0xff]
    %v1469 = vld [vmem:[#allocation5 + $0x618] sm:$0xff]
    %v1470 = vld [vmem:[#allocation5 + $0x620] sm:$0xff]
    %v1471 = vld [vmem:[#allocation5 + $0x628] sm:$0xff]
    %v1472 = vld [vmem:[#allocation5 + $0x630] sm:$0xff]
    %v1473 = vld [vmem:[#allocation5 + $0x638] sm:$0xff]
    %v1474 = vld [vmem:[#allocation5 + $0x640] sm:$0xff]
    %v1475 = vld [vmem:[#allocation5 + $0x648] sm:$0xff]
    %v1476 = vld [vmem:[#allocation5 + $0x650] sm:$0xff]
    %v1477 = vld [vmem:[#allocation5 + $0x658] sm:$0xff]
    %v1478 = vld [vmem:[#allocation5 + $0x660] sm:$0xff]
    %v1479 = vld [vmem:[#allocation5 + $0x668] sm:$0xff]
    %v1480 = vld [vmem:[#allocation5 + $0x670] sm:$0xff]
    %v1481 = vld [vmem:[#allocation5 + $0x678] sm:$0xff]
    %v1482 = vld [vmem:[#allocation5 + $0x680] sm:$0xff]
    %v1483 = vld [vmem:[#allocation5 + $0x688] sm:$0xff]
    %v1484 = vld [vmem:[#allocation5 + $0x690] sm:$0xff]
    %v1485 = vld [vmem:[#allocation5 + $0x698] sm:$0xff]
    %v1486 = vld [vmem:[#allocation5 + $0x6a0] sm:$0xff]
    %v1487 = vld [vmem:[#allocation5 + $0x6a8] sm:$0xff]
    %v1488 = vld [vmem:[#allocation5 + $0x6b0] sm:$0xff]
    %v1489 = vld [vmem:[#allocation5 + $0x6b8] sm:$0xff]
    %v1490 = vld [vmem:[#allocation5 + $0x6c0] sm:$0xff]
    %v1491 = vld [vmem:[#allocation5 + $0x6c8] sm:$0xff]
    %v1492 = vld [vmem:[#allocation5 + $0x6d0] sm:$0xff]
    %v1493 = vld [vmem:[#allocation5 + $0x6d8] sm:$0xff]
    %v1494 = vld [vmem:[#allocation5 + $0x6e0] sm:$0xff]
    %v1495 = vld [vmem:[#allocation5 + $0x6e8] sm:$0xff]
    %v1496 = vld [vmem:[#allocation5 + $0x6f0] sm:$0xff]
    %v1497 = vld [vmem:[#allocation5 + $0x6f8] sm:$0xff]
    %v1498 = vld [vmem:[#allocation5 + $0x700] sm:$0xff]
    %v1499 = vld [vmem:[#allocation5 + $0x708] sm:$0xff]
    %v1500 = vld [vmem:[#allocation5 + $0x710] sm:$0xff]
    %v1501 = vld [vmem:[#allocation5 + $0x718] sm:$0xff]
    %v1502 = vld [vmem:[#allocation5 + $0x720] sm:$0xff]
    %v1503 = vld [vmem:[#allocation5 + $0x728] sm:$0xff]
    %v1504 = vld [vmem:[#allocation5 + $0x730] sm:$0xff]
    %v1505 = vld [vmem:[#allocation5 + $0x738] sm:$0xff]
    %v1506 = vld [vmem:[#allocation5 + $0x740] sm:$0xff]
    %v1507 = vld [vmem:[#allocation5 + $0x748] sm:$0xff]
    %v1508 = vld [vmem:[#allocation5 + $0x750] sm:$0xff]
    %v1509 = vld [vmem:[#allocation5 + $0x758] sm:$0xff]
    %v1510 = vld [vmem:[#allocation5 + $0x760] sm:$0xff]
    %v1511 = vld [vmem:[#allocation5 + $0x768] sm:$0xff]
    %v1512 = vld [vmem:[#allocation5 + $0x770] sm:$0xff]
    %v1513 = vld [vmem:[#allocation5 + $0x778] sm:$0xff]
    %v1515 = vlaneseq
    %v1516 = vshrl.u32 %v1515, 7
    %v1517 = vsub.s32 0, %v1516
    %v1518 = vrot.slane %v1269, %v1517
    %v1519 = vlaneseq
    %v1520 = vshrl.u32 %v1519, 7
    %v1521 = vsub.s32 1, %v1520
    %v1522 = vrot.slane %v1269, %v1521
    %v1523 = vlaneseq
    %v1524 = vshrl.u32 %v1523, 7
    %v1525 = vsub.s32 2, %v1524
    %v1526 = vrot.slane %v1269, %v1525
    %1530 = vmatprep.subr.mxu0 %v1275
    %1531 = vmatpush1.msra.mxu0 %v1274
    %1532 = vmatprep.subr.mxu0 %v1280
    %1533 = vmatpush1.msra.mxu0 %v1279
    %1534 = vmatprep.subr.mxu0 %v1285
    %1535 = vmatpush1.msra.mxu0 %v1284
    %1536 = vmatprep.subr.mxu0 %v1290
    %1537 = vmatpush1.msra.mxu0 %v1289
    %1538 = vmatprep.subr.mxu0 %v1295
    %1539 = vmatpush1.msra.mxu0 %v1294
    %1540 = vmatprep.subr.mxu0 %v1300
    %1541 = vmatpush1.msra.mxu0 %v1299
    %1542 = vmatprep.subr.mxu0 %v1305
    %1543 = vmatpush1.msra.mxu0 %v1304
    %1544 = vmatprep.subr.mxu0 %v1310
    %1545 = vmatpush1.msra.mxu0 %v1309
    %1546 = vmatprep.subr.mxu0 %v1315
    %1547 = vmatpush1.msra.mxu0 %v1314
    %1548 = vmatprep.subr.mxu0 %v1320
    %1549 = vmatpush1.msra.mxu0 %v1319
    %1550 = vmatprep.subr.mxu0 %v1325
    %1551 = vmatpush1.msra.mxu0 %v1324
    %1552 = vmatprep.subr.mxu0 %v1330
    %1553 = vmatpush1.msra.mxu0 %v1329
    %1554 = vmatprep.subr.mxu0 %v1335
    %1555 = vmatpush1.msra.mxu0 %v1334
    %1556 = vmatprep.subr.mxu0 %v1340
    %1557 = vmatpush1.msra.mxu0 %v1339
    %1558 = vmatprep.subr.mxu0 %v1345
    %1559 = vmatpush1.msra.mxu0 %v1344
    %1560 = vmatprep.subr.mxu0 %v1350
    %1561 = vmatpush1.msra.mxu0 %v1349
    %1562 = vmatprep.subr.mxu0 %v1355
    %1563 = vmatpush1.msra.mxu0 %v1354
    %1564 = vmatprep.subr.mxu0 %v1360
    %1565 = vmatpush1.msra.mxu0 %v1359
    %1566 = vmatprep.subr.mxu0 %v1365
    %1567 = vmatpush1.msra.mxu0 %v1364
    %1568 = vmatprep.subr.mxu0 %v1370
    %1569 = vmatpush1.msra.mxu0 %v1369
    %1570 = vmatprep.subr.mxu0 %v1375
    %1571 = vmatpush1.msra.mxu0 %v1374
    %1572 = vmatprep.subr.mxu0 %v1380
    %1573 = vmatpush1.msra.mxu0 %v1379
    %1574 = vmatprep.subr.mxu0 %v1385
    %1575 = vmatpush1.msra.mxu0 %v1384
    %1576 = vmatprep.subr.mxu0 %v1390
    %1577 = vmatpush1.msra.mxu0 %v1389
    %1578 = vmatprep.subr.mxu0 %v1395
    %1579 = vmatpush1.msra.mxu0 %v1394
    %1580 = vmatprep.subr.mxu0 %v1400
    %1581 = vmatpush1.msra.mxu0 %v1399
    %1582 = vmatprep.subr.mxu0 %v1405
    %1583 = vmatpush1.msra.mxu0 %v1404
    %1584 = vmatprep.subr.mxu0 %v1410
    %1585 = vmatpush1.msra.mxu0 %v1409
    %1586 = vmatprep.subr.mxu0 %v1415
    %1587 = vmatpush1.msra.mxu0 %v1414
    %1588 = vmatprep.subr.mxu0 %v1420
    %1589 = vmatpush1.msra.mxu0 %v1419
    %1590 = vmatprep.subr.mxu0 %v1425
    %1591 = vmatpush1.msra.mxu0 %v1424
    %1592 = vmatprep.subr.mxu0 %v1430
    %1593 = vmatpush1.msra.mxu0 %v1429
    %1594 = vmatprep.mubr.f32.mxu0 %v1522
    %1595 = vmatmul.mubr.f32.gmra.mrb[0].mxu0 %v1518
    %v1596 = vpop.f32.mrb[0].mxu0
    %v1597 = vadd.f32 0.0, %v1596
    %v1598 = vpop.f32.mrb[0].mxu0
    %v1599 = vadd.f32 0.0, %v1598
    %1600 = vdwg.mxu0
    %1601 = vmatprep.subr.mxu0 %v1435
    %1602 = vmatpush1.msra.mxu0 %v1434
    %1603 = vmatprep.subr.mxu0 %v1440
    %1604 = vmatpush1.msra.mxu0 %v1439
    %1605 = vmatprep.subr.mxu0 %v1445
    %1606 = vmatpush1.msra.mxu0 %v1444
    %1607 = vmatprep.subr.mxu0 %v1450
    %1608 = vmatpush1.msra.mxu0 %v1449
    %1609 = vmatprep.subr.mxu0 %v1455
    %1610 = vmatpush1.msra.mxu0 %v1454
    %1611 = vmatprep.subr.mxu0 %v1460
    %1612 = vmatpush1.msra.mxu0 %v1459
    %1613 = vmatprep.subr.mxu0 %v1465
    %1614 = vmatpush1.msra.mxu0 %v1464
    %1615 = vmatprep.subr.mxu0 %v1470
    %1616 = vmatpush1.msra.mxu0 %v1469
    %1617 = vmatprep.subr.mxu0 %v1475
    %1618 = vmatpush1.msra.mxu0 %v1474
    %1619 = vmatprep.subr.mxu0 %v1480
    %1620 = vmatpush1.msra.mxu0 %v1479
    %1621 = vmatprep.subr.mxu0 %v1485
    %1622 = vmatpush1.msra.mxu0 %v1484
    %1623 = vmatprep.subr.mxu0 %v1490
    %1624 = vmatpush1.msra.mxu0 %v1489
    %1625 = vmatprep.subr.mxu0 %v1495
    %1626 = vmatpush1.msra.mxu0 %v1494
    %1627 = vmatprep.subr.mxu0 %v1500
    %1628 = vmatpush1.msra.mxu0 %v1499
    %1629 = vmatprep.subr.mxu0 %v1505
    %1630 = vmatpush1.msra.mxu0 %v1504
    %1631 = vmatprep.subr.mxu0 %v1510
    %1632 = vmatpush1.msra.mxu0 %v1509
    %1633 = vmatprep.subr.mxu0 0.0
    %1634 = vmatpush1.msra.mxu0 0.0
    %1635 = vmatprep.subr.mxu0 0.0
    %1636 = vmatpush1.msra.mxu0 0.0
    %1637 = vmatprep.subr.mxu0 0.0
    %1638 = vmatpush1.msra.mxu0 0.0
    %1639 = vmatprep.subr.mxu0 0.0
    %1640 = vmatpush1.msra.mxu0 0.0
    %1641 = vmatprep.subr.mxu0 0.0
    %1642 = vmatpush1.msra.mxu0 0.0
    %1643 = vmatprep.subr.mxu0 0.0
    %1644 = vmatpush1.msra.mxu0 0.0
    %1645 = vmatprep.subr.mxu0 0.0
    %1646 = vmatpush1.msra.mxu0 0.0
    %1647 = vmatprep.subr.mxu0 0.0
    %1648 = vmatpush1.msra.mxu0 0.0
    %1649 = vmatprep.subr.mxu0 0.0
    %1650 = vmatpush1.msra.mxu0 0.0
    %1651 = vmatprep.subr.mxu0 0.0
    %1652 = vmatpush1.msra.mxu0 0.0
    %1653 = vmatprep.subr.mxu0 0.0
    %1654 = vmatpush1.msra.mxu0 0.0
    %1655 = vmatprep.subr.mxu0 0.0
    %1656 = vmatpush1.msra.mxu0 0.0
    %1657 = vmatprep.subr.mxu0 0.0
    %1658 = vmatpush1.msra.mxu0 0.0
    %1659 = vmatprep.subr.mxu0 0.0
    %1660 = vmatpush1.msra.mxu0 0.0
    %1661 = vmatprep.subr.mxu0 0.0
    %1662 = vmatpush1.msra.mxu0 0.0
    %1663 = vmatprep.subr.mxu0 0.0
    %1664 = vmatpush1.msra.mxu0 0.0
    %1665 = vmatprep.mubr.f32.mxu0 0.0
    %1666 = vmatmul.mubr.f32.gmra.mrb[0].mxu0 %v1526
    %v1667 = vpop.f32.mrb[0].mxu0
    %v1668 = vadd.f32 %v1597, %v1667
    %v1669 = vpop.f32.mrb[0].mxu0
    %v1670 = vadd.f32 %v1599, %v1669
    %1671 = vdwg.mxu0
    %1672 = vmatprep.subr.mxu0 %v1277
    %1673 = vmatpush1.msra.mxu0 %v1276
    %1674 = vmatprep.subr.mxu0 %v1282
    %1675 = vmatpush1.msra.mxu0 %v1281
    %1676 = vmatprep.subr.mxu0 %v1287
    %1677 = vmatpush1.msra.mxu0 %v1286
    %1678 = vmatprep.subr.mxu0 %v1292
    %1679 = vmatpush1.msra.mxu0 %v1291
    %1680 = vmatprep.subr.mxu0 %v1297
    %1681 = vmatpush1.msra.mxu0 %v1296
    %1682 = vmatprep.subr.mxu0 %v1302
    %1683 = vmatpush1.msra.mxu0 %v1301
    %1684 = vmatprep.subr.mxu0 %v1307
    %1685 = vmatpush1.msra.mxu0 %v1306
    %1686 = vmatprep.subr.mxu0 %v1312
    %1687 = vmatpush1.msra.mxu0 %v1311
    %1688 = vmatprep.subr.mxu0 %v1317
    %1689 = vmatpush1.msra.mxu0 %v1316
    %1690 = vmatprep.subr.mxu0 %v1322
    %1691 = vmatpush1.msra.mxu0 %v1321
    %1692 = vmatprep.subr.mxu0 %v1327
    %1693 = vmatpush1.msra.mxu0 %v1326
    %1694 = vmatprep.subr.mxu0 %v1332
    %1695 = vmatpush1.msra.mxu0 %v1331
    %1696 = vmatprep.subr.mxu0 %v1337
    %1697 = vmatpush1.msra.mxu0 %v1336
    %1698 = vmatprep.subr.mxu0 %v1342
    %1699 = vmatpush1.msra.mxu0 %v1341
    %1700 = vmatprep.subr.mxu0 %v1347
    %1701 = vmatpush1.msra.mxu0 %v1346
    %1702 = vmatprep.subr.mxu0 %v1352
    %1703 = vmatpush1.msra.mxu0 %v1351
    %1704 = vmatprep.subr.mxu0 %v1357
    %1705 = vmatpush1.msra.mxu0 %v1356
    %1706 = vmatprep.subr.mxu0 %v1362
    %1707 = vmatpush1.msra.mxu0 %v1361
    %1708 = vmatprep.subr.mxu0 %v1367
    %1709 = vmatpush1.msra.mxu0 %v1366
    %1710 = vmatprep.subr.mxu0 %v1372
    %1711 = vmatpush1.msra.mxu0 %v1371
    %1712 = vmatprep.subr.mxu0 %v1377
    %1713 = vmatpush1.msra.mxu0 %v1376
    %1714 = vmatprep.subr.mxu0 %v1382
    %1715 = vmatpush1.msra.mxu0 %v1381
    %1716 = vmatprep.subr.mxu0 %v1387
    %1717 = vmatpush1.msra.mxu0 %v1386
    %1718 = vmatprep.subr.mxu0 %v1392
    %1719 = vmatpush1.msra.mxu0 %v1391
    %1720 = vmatprep.subr.mxu0 %v1397
    %1721 = vmatpush1.msra.mxu0 %v1396
    %1722 = vmatprep.subr.mxu0 %v1402
    %1723 = vmatpush1.msra.mxu0 %v1401
    %1724 = vmatprep.subr.mxu0 %v1407
    %1725 = vmatpush1.msra.mxu0 %v1406
    %1726 = vmatprep.subr.mxu0 %v1412
    %1727 = vmatpush1.msra.mxu0 %v1411
    %1728 = vmatprep.subr.mxu0 %v1417
    %1729 = vmatpush1.msra.mxu0 %v1416
    %1730 = vmatprep.subr.mxu0 %v1422
    %1731 = vmatpush1.msra.mxu0 %v1421
    %1732 = vmatprep.subr.mxu0 %v1427
    %1733 = vmatpush1.msra.mxu0 %v1426
    %1734 = vmatprep.subr.mxu0 %v1432
    %1735 = vmatpush1.msra.mxu0 %v1431
    %1736 = vmatprep.mubr.f32.mxu0 %v1522
    %1737 = vmatmul.mubr.f32.gmra.mrb[0].mxu0 %v1518
    %v1738 = vpop.f32.mrb[0].mxu0
    %v1739 = vadd.f32 0.0, %v1738
    %v1740 = vpop.f32.mrb[0].mxu0
    %v1741 = vadd.f32 0.0, %v1740
    %1742 = vdwg.mxu0
    %1743 = vmatprep.subr.mxu0 %v1437
    %1744 = vmatpush1.msra.mxu0 %v1436
    %1745 = vmatprep.subr.mxu0 %v1442
    %1746 = vmatpush1.msra.mxu0 %v1441
    %1747 = vmatprep.subr.mxu0 %v1447
    %1748 = vmatpush1.msra.mxu0 %v1446
    %1749 = vmatprep.subr.mxu0 %v1452
    %1750 = vmatpush1.msra.mxu0 %v1451
    %1751 = vmatprep.subr.mxu0 %v1457
    %1752 = vmatpush1.msra.mxu0 %v1456
    %1753 = vmatprep.subr.mxu0 %v1462
    %1754 = vmatpush1.msra.mxu0 %v1461
    %1755 = vmatprep.subr.mxu0 %v1467
    %1756 = vmatpush1.msra.mxu0 %v1466
    %1757 = vmatprep.subr.mxu0 %v1472
    %1758 = vmatpush1.msra.mxu0 %v1471
    %1759 = vmatprep.subr.mxu0 %v1477
    %1760 = vmatpush1.msra.mxu0 %v1476
    %1761 = vmatprep.subr.mxu0 %v1482
    %1762 = vmatpush1.msra.mxu0 %v1481
    %1763 = vmatprep.subr.mxu0 %v1487
    %1764 = vmatpush1.msra.mxu0 %v1486
    %1765 = vmatprep.subr.mxu0 %v1492
    %1766 = vmatpush1.msra.mxu0 %v1491
    %1767 = vmatprep.subr.mxu0 %v1497
    %1768 = vmatpush1.msra.mxu0 %v1496
    %1769 = vmatprep.subr.mxu0 %v1502
    %1770 = vmatpush1.msra.mxu0 %v1501
    %1771 = vmatprep.subr.mxu0 %v1507
    %1772 = vmatpush1.msra.mxu0 %v1506
    %1773 = vmatprep.subr.mxu0 %v1512
    %1774 = vmatpush1.msra.mxu0 %v1511
    %1775 = vmatprep.subr.mxu0 0.0
    %1776 = vmatpush1.msra.mxu0 0.0
    %1777 = vmatprep.subr.mxu0 0.0
    %1778 = vmatpush1.msra.mxu0 0.0
    %1779 = vmatprep.subr.mxu0 0.0
    %1780 = vmatpush1.msra.mxu0 0.0
    %1781 = vmatprep.subr.mxu0 0.0
    %1782 = vmatpush1.msra.mxu0 0.0
    %1783 = vmatprep.subr.mxu0 0.0
    %1784 = vmatpush1.msra.mxu0 0.0
    %1785 = vmatprep.subr.mxu0 0.0
    %1786 = vmatpush1.msra.mxu0 0.0
    %1787 = vmatprep.subr.mxu0 0.0
    %1788 = vmatpush1.msra.mxu0 0.0
    %1789 = vmatprep.subr.mxu0 0.0
    %1790 = vmatpush1.msra.mxu0 0.0
    %1791 = vmatprep.subr.mxu0 0.0
    %1792 = vmatpush1.msra.mxu0 0.0
    %1793 = vmatprep.subr.mxu0 0.0
    %1794 = vmatpush1.msra.mxu0 0.0
    %1795 = vmatprep.subr.mxu0 0.0
    %1796 = vmatpush1.msra.mxu0 0.0
    %1797 = vmatprep.subr.mxu0 0.0
    %1798 = vmatpush1.msra.mxu0 0.0
    %1799 = vmatprep.subr.mxu0 0.0
    %1800 = vmatpush1.msra.mxu0 0.0
    %1801 = vmatprep.subr.mxu0 0.0
    %1802 = vmatpush1.msra.mxu0 0.0
    %1803 = vmatprep.subr.mxu0 0.0
    %1804 = vmatpush1.msra.mxu0 0.0
    %1805 = vmatprep.subr.mxu0 0.0
    %1806 = vmatpush1.msra.mxu0 0.0
    %1807 = vmatprep.mubr.f32.mxu0 0.0
    %1808 = vmatmul.mubr.f32.gmra.mrb[0].mxu0 %v1526
    %v1809 = vpop.f32.mrb[0].mxu0
    %v1810 = vadd.f32 %v1739, %v1809
    %v1811 = vpop.f32.mrb[0].mxu0
    %v1812 = vadd.f32 %v1741, %v1811
    %1813 = vdwg.mxu0
    %1814 = vmatprep.subr.mxu0 0.0
    %1815 = vmatpush1.msra.mxu0 %v1278
    %1816 = vmatprep.subr.mxu0 0.0
    %1817 = vmatpush1.msra.mxu0 %v1283
    %1818 = vmatprep.subr.mxu0 0.0
    %1819 = vmatpush1.msra.mxu0 %v1288
    %1820 = vmatprep.subr.mxu0 0.0
    %1821 = vmatpush1.msra.mxu0 %v1293
    %1822 = vmatprep.subr.mxu0 0.0
    %1823 = vmatpush1.msra.mxu0 %v1298
    %1824 = vmatprep.subr.mxu0 0.0
    %1825 = vmatpush1.msra.mxu0 %v1303
    %1826 = vmatprep.subr.mxu0 0.0
    %1827 = vmatpush1.msra.mxu0 %v1308
    %1828 = vmatprep.subr.mxu0 0.0
    %1829 = vmatpush1.msra.mxu0 %v1313
    %1830 = vmatprep.subr.mxu0 0.0
    %1831 = vmatpush1.msra.mxu0 %v1318
    %1832 = vmatprep.subr.mxu0 0.0
    %1833 = vmatpush1.msra.mxu0 %v1323
    %1834 = vmatprep.subr.mxu0 0.0
    %1835 = vmatpush1.msra.mxu0 %v1328
    %1836 = vmatprep.subr.mxu0 0.0
    %1837 = vmatpush1.msra.mxu0 %v1333
    %1838 = vmatprep.subr.mxu0 0.0
    %1839 = vmatpush1.msra.mxu0 %v1338
    %1840 = vmatprep.subr.mxu0 0.0
    %1841 = vmatpush1.msra.mxu0 %v1343
    %1842 = vmatprep.subr.mxu0 0.0
    %1843 = vmatpush1.msra.mxu0 %v1348
    %1844 = vmatprep.subr.mxu0 0.0
    %1845 = vmatpush1.msra.mxu0 %v1353
    %1846 = vmatprep.subr.mxu0 0.0
    %1847 = vmatpush1.msra.mxu0 %v1358
    %1848 = vmatprep.subr.mxu0 0.0
    %1849 = vmatpush1.msra.mxu0 %v1363
    %1850 = vmatprep.subr.mxu0 0.0
    %1851 = vmatpush1.msra.mxu0 %v1368
    %1852 = vmatprep.subr.mxu0 0.0
    %1853 = vmatpush1.msra.mxu0 %v1373
    %1854 = vmatprep.subr.mxu0 0.0
    %1855 = vmatpush1.msra.mxu0 %v1378
    %1856 = vmatprep.subr.mxu0 0.0
    %1857 = vmatpush1.msra.mxu0 %v1383
    %1858 = vmatprep.subr.mxu0 0.0
    %1859 = vmatpush1.msra.mxu0 %v1388
    %1860 = vmatprep.subr.mxu0 0.0
    %1861 = vmatpush1.msra.mxu0 %v1393
    %1862 = vmatprep.subr.mxu0 0.0
    %1863 = vmatpush1.msra.mxu0 %v1398
    %1864 = vmatprep.subr.mxu0 0.0
    %1865 = vmatpush1.msra.mxu0 %v1403
    %1866 = vmatprep.subr.mxu0 0.0
    %1867 = vmatpush1.msra.mxu0 %v1408
    %1868 = vmatprep.subr.mxu0 0.0
    %1869 = vmatpush1.msra.mxu0 %v1413
    %1870 = vmatprep.subr.mxu0 0.0
    %1871 = vmatpush1.msra.mxu0 %v1418
    %1872 = vmatprep.subr.mxu0 0.0
    %1873 = vmatpush1.msra.mxu0 %v1423
    %1874 = vmatprep.subr.mxu0 0.0
    %1875 = vmatpush1.msra.mxu0 %v1428
    %1876 = vmatprep.subr.mxu0 0.0
    %1877 = vmatpush1.msra.mxu0 %v1433
    %1878 = vmatprep.mubr.f32.mxu0 %v1522
    %1879 = vmatmul.mubr.f32.gmra.mrb[0].mxu0 %v1518
    %v1880 = vpop.f32.mrb[0].mxu0
    %v1881 = vadd.f32 0.0, %v1880
    %v1882 = vpop.f32.mrb[0].mxu0
    %1883 = vdwg.mxu0
    %1884 = vmatprep.subr.mxu0 0.0
    %1885 = vmatpush1.msra.mxu0 %v1438
    %1886 = vmatprep.subr.mxu0 0.0
    %1887 = vmatpush1.msra.mxu0 %v1443
    %1888 = vmatprep.subr.mxu0 0.0
    %1889 = vmatpush1.msra.mxu0 %v1448
    %1890 = vmatprep.subr.mxu0 0.0
    %1891 = vmatpush1.msra.mxu0 %v1453
    %1892 = vmatprep.subr.mxu0 0.0
    %1893 = vmatpush1.msra.mxu0 %v1458
    %1894 = vmatprep.subr.mxu0 0.0
    %1895 = vmatpush1.msra.mxu0 %v1463
    %1896 = vmatprep.subr.mxu0 0.0
    %1897 = vmatpush1.msra.mxu0 %v1468
    %1898 = vmatprep.subr.mxu0 0.0
    %1899 = vmatpush1.msra.mxu0 %v1473
    %1900 = vmatprep.subr.mxu0 0.0
    %1901 = vmatpush1.msra.mxu0 %v1478
    %1902 = vmatprep.subr.mxu0 0.0
    %1903 = vmatpush1.msra.mxu0 %v1483
    %1904 = vmatprep.subr.mxu0 0.0
    %1905 = vmatpush1.msra.mxu0 %v1488
    %1906 = vmatprep.subr.mxu0 0.0
    %1907 = vmatpush1.msra.mxu0 %v1493
    %1908 = vmatprep.subr.mxu0 0.0
    %1909 = vmatpush1.msra.mxu0 %v1498
    %1910 = vmatprep.subr.mxu0 0.0
    %1911 = vmatpush1.msra.mxu0 %v1503
    %1912 = vmatprep.subr.mxu0 0.0
    %1913 = vmatpush1.msra.mxu0 %v1508
    %1914 = vmatprep.subr.mxu0 0.0
    %1915 = vmatpush1.msra.mxu0 %v1513
    %1916 = vmatprep.subr.mxu0 0.0
    %1917 = vmatpush1.msra.mxu0 0.0
    %1918 = vmatprep.subr.mxu0 0.0
    %1919 = vmatpush1.msra.mxu0 0.0
    %1920 = vmatprep.subr.mxu0 0.0
    %1921 = vmatpush1.msra.mxu0 0.0
    %1922 = vmatprep.subr.mxu0 0.0
    %1923 = vmatpush1.msra.mxu0 0.0
    %1924 = vmatprep.subr.mxu0 0.0
    %1925 = vmatpush1.msra.mxu0 0.0
    %1926 = vmatprep.subr.mxu0 0.0
    %1927 = vmatpush1.msra.mxu0 0.0
    %1928 = vmatprep.subr.mxu0 0.0
    %1929 = vmatpush1.msra.mxu0 0.0
    %1930 = vmatprep.subr.mxu0 0.0
    %1931 = vmatpush1.msra.mxu0 0.0
    %1932 = vmatprep.subr.mxu0 0.0
    %1933 = vmatpush1.msra.mxu0 0.0
    %1934 = vmatprep.subr.mxu0 0.0
    %1935 = vmatpush1.msra.mxu0 0.0
    %1936 = vmatprep.subr.mxu0 0.0
    %1937 = vmatpush1.msra.mxu0 0.0
    %1938 = vmatprep.subr.mxu0 0.0
    %1939 = vmatpush1.msra.mxu0 0.0
    %1940 = vmatprep.subr.mxu0 0.0
    %1941 = vmatpush1.msra.mxu0 0.0
    %1942 = vmatprep.subr.mxu0 0.0
    %1943 = vmatpush1.msra.mxu0 0.0
    %1944 = vmatprep.subr.mxu0 0.0
    %1945 = vmatpush1.msra.mxu0 0.0
    %1946 = vmatprep.subr.mxu0 0.0
    %1947 = vmatpush1.msra.mxu0 0.0
    %1948 = vmatprep.mubr.f32.mxu0 0.0
    %1949 = vmatmul.mubr.f32.gmra.mrb[0].mxu0 %v1526
    %v1950 = vpop.f32.mrb[0].mxu0
    %v1951 = vadd.f32 %v1881, %v1950
    %v1952 = vpop.f32.mrb[0].mxu0
    %1953 = vdwg.mxu0
    %v1959 = vcombine.low %v1668, %v1670
    %v1960 = vcombine.low %v1810, %v1812
    %v1962 = vunpack.c.l.s4 1966171168
    %v1963 = vunpack.c.0.s8 %v1962
    %v1964 = vlaneseq
    %v1965 = vshrl.u32 %v1964, 7
    %v1966 = vsub.s32 %v1963, %v1965
    %v1967 = vrot.slane %v1959, %v1966
    %v1969 = vunpack.c.l.s4 1966171168
    %v1970 = vunpack.c.0.s8 %v1969
    %v1971 = vlaneseq
    %v1972 = vshrl.u32 %v1971, 7
    %v1973 = vsub.s32 %v1970, %v1972
    %v1974 = vrot.slane %v1960, %v1973
    %v1976 = vunpack.c.l.s4 1966171168
    %v1977 = vunpack.c.0.s8 %v1976
    %v1978 = vlaneseq
    %v1979 = vshrl.u32 %v1978, 7
    %v1980 = vsub.s32 %v1977, %v1979
    %v1981 = vrot.slane %v1951, %v1980
    %v1982 = vcombine.low %v1967, %v1974
    %v1984 = vunpack.c.l.s4 1966171168
    %v1985 = vunpack.c.0.s8 %v1984
    %v1986 = vlaneseq
    %v1987 = vshrl.u32 %v1986, 7
    %v1988 = vsub.s32 %v1985, %v1987
    %v1989 = vrot.slane %v1982, %v1988
    %v1991 = vunpack.c.l.s4 1966171168
    %v1992 = vunpack.c.0.s8 %v1991
    %v1993 = vlaneseq
    %v1994 = vshrl.u32 %v1993, 7
    %v1995 = vsub.s32 %v1992, %v1994
    %v1996 = vrot.slane %v1981, %v1995
    %v1997 = vcombine.low %v1989, %v1996
    %v1999 = vadd.f32 %v1273, %v1997
    %v2000 = vld [vmem:[#allocation7] sm:$0xff]
    %v2001 = vld [vmem:[#allocation7 + $0x8] sm:$0xff]
    %v2002 = vld [vmem:[#allocation7 + $0x10] sm:$0xff]
    %v2003 = vld [vmem:[#allocation7 + $0x18] sm:$0xff]
    %v2004 = vld [vmem:[#allocation7 + $0x20] sm:$0xff]
    %v2005 = vld [vmem:[#allocation7 + $0x28] sm:$0xff]
    %v2006 = vld [vmem:[#allocation7 + $0x30] sm:$0xff]
    %v2007 = vld [vmem:[#allocation7 + $0x38] sm:$0xff]
    %v2008 = vld [vmem:[#allocation7 + $0x40] sm:$0xff]
    %v2009 = vld [vmem:[#allocation7 + $0x48] sm:$0xff]
    %v2010 = vld [vmem:[#allocation7 + $0x50] sm:$0xff]
    %v2011 = vld [vmem:[#allocation7 + $0x58] sm:$0xff]
    %v2012 = vld [vmem:[#allocation7 + $0x60] sm:$0xff]
    %v2013 = vld [vmem:[#allocation7 + $0x68] sm:$0xff]
    %v2014 = vld [vmem:[#allocation7 + $0x70] sm:$0xff]
    %v2015 = vld [vmem:[#allocation7 + $0x78] sm:$0xff]
    %v2016 = vld [vmem:[#allocation7 + $0x80] sm:$0xff]
    %v2017 = vld [vmem:[#allocation7 + $0x88] sm:$0xff]
    %v2018 = vld [vmem:[#allocation7 + $0x90] sm:$0xff]
    %v2019 = vld [vmem:[#allocation7 + $0x98] sm:$0xff]
    %v2020 = vld [vmem:[#allocation7 + $0xa0] sm:$0xff]
    %v2021 = vld [vmem:[#allocation7 + $0xa8] sm:$0xff]
    %v2022 = vld [vmem:[#allocation7 + $0xb0] sm:$0xff]
    %v2023 = vld [vmem:[#allocation7 + $0xb8] sm:$0xff]
    %v2024 = vld [vmem:[#allocation7 + $0xc0] sm:$0xff]
    %v2025 = vld [vmem:[#allocation7 + $0xc8] sm:$0xff]
    %v2026 = vld [vmem:[#allocation7 + $0xd0] sm:$0xff]
    %v2027 = vld [vmem:[#allocation7 + $0xd8] sm:$0xff]
    %v2028 = vld [vmem:[#allocation7 + $0xe0] sm:$0xff]
    %v2029 = vld [vmem:[#allocation7 + $0xe8] sm:$0xff]
    %v2030 = vld [vmem:[#allocation7 + $0xf0] sm:$0xff]
    %v2031 = vld [vmem:[#allocation7 + $0xf8] sm:$0xff]
    %v2032 = vld [vmem:[#allocation7 + $0x100] sm:$0xff]
    %v2033 = vld [vmem:[#allocation7 + $0x108] sm:$0xff]
    %v2034 = vld [vmem:[#allocation7 + $0x110] sm:$0xff]
    %v2035 = vld [vmem:[#allocation7 + $0x118] sm:$0xff]
    %v2036 = vld [vmem:[#allocation7 + $0x120] sm:$0xff]
    %v2037 = vld [vmem:[#allocation7 + $0x128] sm:$0xff]
    %v2038 = vld [vmem:[#allocation7 + $0x130] sm:$0xff]
    %v2039 = vld [vmem:[#allocation7 + $0x138] sm:$0xff]
    %v2040 = vld [vmem:[#allocation7 + $0x140] sm:$0xff]
    %v2041 = vld [vmem:[#allocation7 + $0x148] sm:$0xff]
    %v2042 = vld [vmem:[#allocation7 + $0x150] sm:$0xff]
    %v2043 = vld [vmem:[#allocation7 + $0x158] sm:$0xff]
    %v2044 = vld [vmem:[#allocation7 + $0x160] sm:$0xff]
    %v2045 = vld [vmem:[#allocation7 + $0x168] sm:$0xff]
    %v2046 = vld [vmem:[#allocation7 + $0x170] sm:$0xff]
    %v2047 = vld [vmem:[#allocation7 + $0x178] sm:$0xff]
    %v2048 = vld [vmem:[#allocation7 + $0x180] sm:$0xff]
    %v2049 = vld [vmem:[#allocation7 + $0x188] sm:$0xff]
    %v2050 = vld [vmem:[#allocation7 + $0x190] sm:$0xff]
    %v2051 = vld [vmem:[#allocation7 + $0x198] sm:$0xff]
    %v2052 = vld [vmem:[#allocation7 + $0x1a0] sm:$0xff]
    %v2053 = vld [vmem:[#allocation7 + $0x1a8] sm:$0xff]
    %v2054 = vld [vmem:[#allocation7 + $0x1b0] sm:$0xff]
    %v2055 = vld [vmem:[#allocation7 + $0x1b8] sm:$0xff]
    %v2056 = vld [vmem:[#allocation7 + $0x1c0] sm:$0xff]
    %v2057 = vld [vmem:[#allocation7 + $0x1c8] sm:$0xff]
    %v2058 = vld [vmem:[#allocation7 + $0x1d0] sm:$0xff]
    %v2059 = vld [vmem:[#allocation7 + $0x1d8] sm:$0xff]
    %v2060 = vld [vmem:[#allocation7 + $0x1e0] sm:$0xff]
    %v2061 = vld [vmem:[#allocation7 + $0x1e8] sm:$0xff]
    %v2062 = vld [vmem:[#allocation7 + $0x1f0] sm:$0xff]
    %v2063 = vld [vmem:[#allocation7 + $0x1f8] sm:$0xff]
    %v2064 = vld [vmem:[#allocation7 + $0x200] sm:$0xff]
    %v2065 = vld [vmem:[#allocation7 + $0x208] sm:$0xff]
    %v2066 = vld [vmem:[#allocation7 + $0x210] sm:$0xff]
    %v2067 = vld [vmem:[#allocation7 + $0x218] sm:$0xff]
    %v2068 = vld [vmem:[#allocation7 + $0x220] sm:$0xff]
    %v2069 = vld [vmem:[#allocation7 + $0x228] sm:$0xff]
    %v2070 = vld [vmem:[#allocation7 + $0x230] sm:$0xff]
    %v2071 = vld [vmem:[#allocation7 + $0x238] sm:$0xff]
    %v2072 = vld [vmem:[#allocation7 + $0x240] sm:$0xff]
    %v2073 = vld [vmem:[#allocation7 + $0x248] sm:$0xff]
    %v2074 = vld [vmem:[#allocation7 + $0x250] sm:$0xff]
    %v2075 = vld [vmem:[#allocation7 + $0x258] sm:$0xff]
    %v2076 = vld [vmem:[#allocation7 + $0x260] sm:$0xff]
    %v2077 = vld [vmem:[#allocation7 + $0x268] sm:$0xff]
    %v2078 = vld [vmem:[#allocation7 + $0x270] sm:$0xff]
    %v2079 = vld [vmem:[#allocation7 + $0x278] sm:$0xff]
    %v2080 = vld [vmem:[#allocation7 + $0x280] sm:$0xff]
    %v2081 = vld [vmem:[#allocation7 + $0x288] sm:$0xff]
    %v2082 = vld [vmem:[#allocation7 + $0x290] sm:$0xff]
    %v2083 = vld [vmem:[#allocation7 + $0x298] sm:$0xff]
    %v2084 = vld [vmem:[#allocation7 + $0x2a0] sm:$0xff]
    %v2085 = vld [vmem:[#allocation7 + $0x2a8] sm:$0xff]
    %v2086 = vld [vmem:[#allocation7 + $0x2b0] sm:$0xff]
    %v2087 = vld [vmem:[#allocation7 + $0x2b8] sm:$0xff]
    %v2088 = vld [vmem:[#allocation7 + $0x2c0] sm:$0xff]
    %v2089 = vld [vmem:[#allocation7 + $0x2c8] sm:$0xff]
    %v2090 = vld [vmem:[#allocation7 + $0x2d0] sm:$0xff]
    %v2091 = vld [vmem:[#allocation7 + $0x2d8] sm:$0xff]
    %v2092 = vld [vmem:[#allocation7 + $0x2e0] sm:$0xff]
    %v2093 = vld [vmem:[#allocation7 + $0x2e8] sm:$0xff]
    %v2094 = vld [vmem:[#allocation7 + $0x2f0] sm:$0xff]
    %v2095 = vld [vmem:[#allocation7 + $0x2f8] sm:$0xff]
    %v2096 = vld [vmem:[#allocation7 + $0x300] sm:$0xff]
    %v2097 = vld [vmem:[#allocation7 + $0x308] sm:$0xff]
    %v2098 = vld [vmem:[#allocation7 + $0x310] sm:$0xff]
    %v2099 = vld [vmem:[#allocation7 + $0x318] sm:$0xff]
    %v2100 = vld [vmem:[#allocation7 + $0x320] sm:$0xff]
    %v2101 = vld [vmem:[#allocation7 + $0x328] sm:$0xff]
    %v2102 = vld [vmem:[#allocation7 + $0x330] sm:$0xff]
    %v2103 = vld [vmem:[#allocation7 + $0x338] sm:$0xff]
    %v2104 = vld [vmem:[#allocation7 + $0x340] sm:$0xff]
    %v2105 = vld [vmem:[#allocation7 + $0x348] sm:$0xff]
    %v2106 = vld [vmem:[#allocation7 + $0x350] sm:$0xff]
    %v2107 = vld [vmem:[#allocation7 + $0x358] sm:$0xff]
    %v2108 = vld [vmem:[#allocation7 + $0x360] sm:$0xff]
    %v2109 = vld [vmem:[#allocation7 + $0x368] sm:$0xff]
    %v2110 = vld [vmem:[#allocation7 + $0x370] sm:$0xff]
    %v2111 = vld [vmem:[#allocation7 + $0x378] sm:$0xff]
    %v2112 = vld [vmem:[#allocation7 + $0x380] sm:$0xff]
    %v2113 = vld [vmem:[#allocation7 + $0x388] sm:$0xff]
    %v2114 = vld [vmem:[#allocation7 + $0x390] sm:$0xff]
    %v2115 = vld [vmem:[#allocation7 + $0x398] sm:$0xff]
    %v2116 = vld [vmem:[#allocation7 + $0x3a0] sm:$0xff]
    %v2117 = vld [vmem:[#allocation7 + $0x3a8] sm:$0xff]
    %v2118 = vld [vmem:[#allocation7 + $0x3b0] sm:$0xff]
    %v2119 = vld [vmem:[#allocation7 + $0x3b8] sm:$0xff]
    %v2120 = vld [vmem:[#allocation7 + $0x3c0] sm:$0xff]
    %v2121 = vld [vmem:[#allocation7 + $0x3c8] sm:$0xff]
    %v2122 = vld [vmem:[#allocation7 + $0x3d0] sm:$0xff]
    %v2123 = vld [vmem:[#allocation7 + $0x3d8] sm:$0xff]
    %v2124 = vld [vmem:[#allocation7 + $0x3e0] sm:$0xff]
    %v2125 = vld [vmem:[#allocation7 + $0x3e8] sm:$0xff]
    %v2126 = vld [vmem:[#allocation7 + $0x3f0] sm:$0xff]
    %v2127 = vld [vmem:[#allocation7 + $0x3f8] sm:$0xff]
    %v2128 = vld [vmem:[#allocation7 + $0x400] sm:$0xff]
    %v2129 = vld [vmem:[#allocation7 + $0x408] sm:$0xff]
    %v2130 = vld [vmem:[#allocation7 + $0x410] sm:$0xff]
    %v2131 = vld [vmem:[#allocation7 + $0x418] sm:$0xff]
    %v2132 = vld [vmem:[#allocation7 + $0x420] sm:$0xff]
    %v2133 = vld [vmem:[#allocation7 + $0x428] sm:$0xff]
    %v2134 = vld [vmem:[#allocation7 + $0x430] sm:$0xff]
    %v2135 = vld [vmem:[#allocation7 + $0x438] sm:$0xff]
    %v2136 = vld [vmem:[#allocation7 + $0x440] sm:$0xff]
    %v2137 = vld [vmem:[#allocation7 + $0x448] sm:$0xff]
    %v2138 = vld [vmem:[#allocation7 + $0x450] sm:$0xff]
    %v2139 = vld [vmem:[#allocation7 + $0x458] sm:$0xff]
    %v2140 = vld [vmem:[#allocation7 + $0x460] sm:$0xff]
    %v2141 = vld [vmem:[#allocation7 + $0x468] sm:$0xff]
    %v2142 = vld [vmem:[#allocation7 + $0x470] sm:$0xff]
    %v2143 = vld [vmem:[#allocation7 + $0x478] sm:$0xff]
    %v2144 = vld [vmem:[#allocation7 + $0x480] sm:$0xff]
    %v2145 = vld [vmem:[#allocation7 + $0x488] sm:$0xff]
    %v2146 = vld [vmem:[#allocation7 + $0x490] sm:$0xff]
    %v2147 = vld [vmem:[#allocation7 + $0x498] sm:$0xff]
    %v2148 = vld [vmem:[#allocation7 + $0x4a0] sm:$0xff]
    %v2149 = vld [vmem:[#allocation7 + $0x4a8] sm:$0xff]
    %v2150 = vld [vmem:[#allocation7 + $0x4b0] sm:$0xff]
    %v2151 = vld [vmem:[#allocation7 + $0x4b8] sm:$0xff]
    %v2152 = vld [vmem:[#allocation7 + $0x4c0] sm:$0xff]
    %v2153 = vld [vmem:[#allocation7 + $0x4c8] sm:$0xff]
    %v2154 = vld [vmem:[#allocation7 + $0x4d0] sm:$0xff]
    %v2155 = vld [vmem:[#allocation7 + $0x4d8] sm:$0xff]
    %v2156 = vld [vmem:[#allocation7 + $0x4e0] sm:$0xff]
    %v2157 = vld [vmem:[#allocation7 + $0x4e8] sm:$0xff]
    %v2158 = vld [vmem:[#allocation7 + $0x4f0] sm:$0xff]
    %v2159 = vld [vmem:[#allocation7 + $0x4f8] sm:$0xff]
    %v2160 = vld [vmem:[%s4] sm:$0x3]
    %v2162 = vlaneseq
    %v2163 = vshrl.u32 %v2162, 7
    %v2164 = vsub.s32 0, %v2163
    %v2165 = vrot.slane %v1999, %v2164
    %v2166 = vlaneseq
    %v2167 = vshrl.u32 %v2166, 7
    %v2168 = vsub.s32 1, %v2167
    %v2169 = vrot.slane %v1999, %v2168
    %v2170 = vlaneseq
    %v2171 = vshrl.u32 %v2170, 7
    %v2172 = vsub.s32 2, %v2171
    %v2173 = vrot.slane %v1999, %v2172
    %v2174 = vlaneseq
    %v2175 = vshrl.u32 %v2174, 7
    %v2176 = vsub.s32 3, %v2175
    %v2177 = vrot.slane %v1999, %v2176
    %v2178 = vlaneseq
    %v2179 = vshrl.u32 %v2178, 7
    %v2180 = vsub.s32 4, %v2179
    %v2181 = vrot.slane %v1999, %v2180
    %v2188 = vlaneseq
    %v2189 = vshrl.u32 %v2188, 7
    %v2190 = vsub.s32 0, %v2189
    %v2191 = vrot.slane %v2160, %v2190
    %v2192 = vlaneseq
    %v2193 = vshrl.u32 %v2192, 7
    %v2194 = vsub.s32 1, %v2193
    %v2195 = vrot.slane %v2160, %v2194
    %2198 = vmatprep.subr.mxu0 %v2001
    %2199 = vmatpush1.msra.mxu0 %v2000
    %2200 = vmatprep.subr.mxu0 %v2003
    %2201 = vmatpush1.msra.mxu0 %v2002
    %2202 = vmatprep.subr.mxu0 %v2005
    %2203 = vmatpush1.msra.mxu0 %v2004
    %2204 = vmatprep.subr.mxu0 %v2007
    %2205 = vmatpush1.msra.mxu0 %v2006
    %2206 = vmatprep.subr.mxu0 %v2009
    %2207 = vmatpush1.msra.mxu0 %v2008
    %2208 = vmatprep.subr.mxu0 %v2011
    %2209 = vmatpush1.msra.mxu0 %v2010
    %2210 = vmatprep.subr.mxu0 %v2013
    %2211 = vmatpush1.msra.mxu0 %v2012
    %2212 = vmatprep.subr.mxu0 %v2015
    %2213 = vmatpush1.msra.mxu0 %v2014
    %2214 = vmatprep.subr.mxu0 %v2017
    %2215 = vmatpush1.msra.mxu0 %v2016
    %2216 = vmatprep.subr.mxu0 %v2019
    %2217 = vmatpush1.msra.mxu0 %v2018
    %2218 = vmatprep.subr.mxu0 %v2021
    %2219 = vmatpush1.msra.mxu0 %v2020
    %2220 = vmatprep.subr.mxu0 %v2023
    %2221 = vmatpush1.msra.mxu0 %v2022
    %2222 = vmatprep.subr.mxu0 %v2025
    %2223 = vmatpush1.msra.mxu0 %v2024
    %2224 = vmatprep.subr.mxu0 %v2027
    %2225 = vmatpush1.msra.mxu0 %v2026
    %2226 = vmatprep.subr.mxu0 %v2029
    %2227 = vmatpush1.msra.mxu0 %v2028
    %2228 = vmatprep.subr.mxu0 %v2031
    %2229 = vmatpush1.msra.mxu0 %v2030
    %2230 = vmatprep.subr.mxu0 %v2033
    %2231 = vmatpush1.msra.mxu0 %v2032
    %2232 = vmatprep.subr.mxu0 %v2035
    %2233 = vmatpush1.msra.mxu0 %v2034
    %2234 = vmatprep.subr.mxu0 %v2037
    %2235 = vmatpush1.msra.mxu0 %v2036
    %2236 = vmatprep.subr.mxu0 %v2039
    %2237 = vmatpush1.msra.mxu0 %v2038
    %2238 = vmatprep.subr.mxu0 %v2041
    %2239 = vmatpush1.msra.mxu0 %v2040
    %2240 = vmatprep.subr.mxu0 %v2043
    %2241 = vmatpush1.msra.mxu0 %v2042
    %2242 = vmatprep.subr.mxu0 %v2045
    %2243 = vmatpush1.msra.mxu0 %v2044
    %2244 = vmatprep.subr.mxu0 %v2047
    %2245 = vmatpush1.msra.mxu0 %v2046
    %2246 = vmatprep.subr.mxu0 %v2049
    %2247 = vmatpush1.msra.mxu0 %v2048
    %2248 = vmatprep.subr.mxu0 %v2051
    %2249 = vmatpush1.msra.mxu0 %v2050
    %2250 = vmatprep.subr.mxu0 %v2053
    %2251 = vmatpush1.msra.mxu0 %v2052
    %2252 = vmatprep.subr.mxu0 %v2055
    %2253 = vmatpush1.msra.mxu0 %v2054
    %2254 = vmatprep.subr.mxu0 %v2057
    %2255 = vmatpush1.msra.mxu0 %v2056
    %2256 = vmatprep.subr.mxu0 %v2059
    %2257 = vmatpush1.msra.mxu0 %v2058
    %2258 = vmatprep.subr.mxu0 %v2061
    %2259 = vmatpush1.msra.mxu0 %v2060
    %2260 = vmatprep.subr.mxu0 %v2063
    %2261 = vmatpush1.msra.mxu0 %v2062
    %2262 = vmatprep.mubr.f32.mxu0 %v2169
    %2263 = vmatmul.mubr.f32.gmra.mrb[0].mxu0 %v2165
    %v2264 = vpop.f32.mrb[0].mxu0
    %v2265 = vadd.f32 %v2191, %v2264
    %v2266 = vpop.f32.mrb[0].mxu0
    %v2267 = vadd.f32 %v2195, %v2266
    %2268 = vdwg.mxu0
    %2269 = vmatprep.subr.mxu0 %v2065
    %2270 = vmatpush1.msra.mxu0 %v2064
    %2271 = vmatprep.subr.mxu0 %v2067
    %2272 = vmatpush1.msra.mxu0 %v2066
    %2273 = vmatprep.subr.mxu0 %v2069
    %2274 = vmatpush1.msra.mxu0 %v2068
    %2275 = vmatprep.subr.mxu0 %v2071
    %2276 = vmatpush1.msra.mxu0 %v2070
    %2277 = vmatprep.subr.mxu0 %v2073
    %2278 = vmatpush1.msra.mxu0 %v2072
    %2279 = vmatprep.subr.mxu0 %v2075
    %2280 = vmatpush1.msra.mxu0 %v2074
    %2281 = vmatprep.subr.mxu0 %v2077
    %2282 = vmatpush1.msra.mxu0 %v2076
    %2283 = vmatprep.subr.mxu0 %v2079
    %2284 = vmatpush1.msra.mxu0 %v2078
    %2285 = vmatprep.subr.mxu0 %v2081
    %2286 = vmatpush1.msra.mxu0 %v2080
    %2287 = vmatprep.subr.mxu0 %v2083
    %2288 = vmatpush1.msra.mxu0 %v2082
    %2289 = vmatprep.subr.mxu0 %v2085
    %2290 = vmatpush1.msra.mxu0 %v2084
    %2291 = vmatprep.subr.mxu0 %v2087
    %2292 = vmatpush1.msra.mxu0 %v2086
    %2293 = vmatprep.subr.mxu0 %v2089
    %2294 = vmatpush1.msra.mxu0 %v2088
    %2295 = vmatprep.subr.mxu0 %v2091
    %2296 = vmatpush1.msra.mxu0 %v2090
    %2297 = vmatprep.subr.mxu0 %v2093
    %2298 = vmatpush1.msra.mxu0 %v2092
    %2299 = vmatprep.subr.mxu0 %v2095
    %2300 = vmatpush1.msra.mxu0 %v2094
    %2301 = vmatprep.subr.mxu0 %v2097
    %2302 = vmatpush1.msra.mxu0 %v2096
    %2303 = vmatprep.subr.mxu0 %v2099
    %2304 = vmatpush1.msra.mxu0 %v2098
    %2305 = vmatprep.subr.mxu0 %v2101
    %2306 = vmatpush1.msra.mxu0 %v2100
    %2307 = vmatprep.subr.mxu0 %v2103
    %2308 = vmatpush1.msra.mxu0 %v2102
    %2309 = vmatprep.subr.mxu0 %v2105
    %2310 = vmatpush1.msra.mxu0 %v2104
    %2311 = vmatprep.subr.mxu0 %v2107
    %2312 = vmatpush1.msra.mxu0 %v2106
    %2313 = vmatprep.subr.mxu0 %v2109
    %2314 = vmatpush1.msra.mxu0 %v2108
    %2315 = vmatprep.subr.mxu0 %v2111
    %2316 = vmatpush1.msra.mxu0 %v2110
    %2317 = vmatprep.subr.mxu0 %v2113
    %2318 = vmatpush1.msra.mxu0 %v2112
    %2319 = vmatprep.subr.mxu0 %v2115
    %2320 = vmatpush1.msra.mxu0 %v2114
    %2321 = vmatprep.subr.mxu0 %v2117
    %2322 = vmatpush1.msra.mxu0 %v2116
    %2323 = vmatprep.subr.mxu0 %v2119
    %2324 = vmatpush1.msra.mxu0 %v2118
    %2325 = vmatprep.subr.mxu0 %v2121
    %2326 = vmatpush1.msra.mxu0 %v2120
    %2327 = vmatprep.subr.mxu0 %v2123
    %2328 = vmatpush1.msra.mxu0 %v2122
    %2329 = vmatprep.subr.mxu0 %v2125
    %2330 = vmatpush1.msra.mxu0 %v2124
    %2331 = vmatprep.subr.mxu0 %v2127
    %2332 = vmatpush1.msra.mxu0 %v2126
    %2333 = vmatprep.mubr.f32.mxu0 %v2177
    %2334 = vmatmul.mubr.f32.gmra.mrb[0].mxu0 %v2173
    %v2335 = vpop.f32.mrb[0].mxu0
    %v2336 = vadd.f32 %v2265, %v2335
    %v2337 = vpop.f32.mrb[0].mxu0
    %v2338 = vadd.f32 %v2267, %v2337
    %2339 = vdwg.mxu0
    %2340 = vmatprep.subr.mxu0 %v2129
    %2341 = vmatpush1.msra.mxu0 %v2128
    %2342 = vmatprep.subr.mxu0 %v2131
    %2343 = vmatpush1.msra.mxu0 %v2130
    %2344 = vmatprep.subr.mxu0 %v2133
    %2345 = vmatpush1.msra.mxu0 %v2132
    %2346 = vmatprep.subr.mxu0 %v2135
    %2347 = vmatpush1.msra.mxu0 %v2134
    %2348 = vmatprep.subr.mxu0 %v2137
    %2349 = vmatpush1.msra.mxu0 %v2136
    %2350 = vmatprep.subr.mxu0 %v2139
    %2351 = vmatpush1.msra.mxu0 %v2138
    %2352 = vmatprep.subr.mxu0 %v2141
    %2353 = vmatpush1.msra.mxu0 %v2140
    %2354 = vmatprep.subr.mxu0 %v2143
    %2355 = vmatpush1.msra.mxu0 %v2142
    %2356 = vmatprep.subr.mxu0 %v2145
    %2357 = vmatpush1.msra.mxu0 %v2144
    %2358 = vmatprep.subr.mxu0 %v2147
    %2359 = vmatpush1.msra.mxu0 %v2146
    %2360 = vmatprep.subr.mxu0 %v2149
    %2361 = vmatpush1.msra.mxu0 %v2148
    %2362 = vmatprep.subr.mxu0 %v2151
    %2363 = vmatpush1.msra.mxu0 %v2150
    %2364 = vmatprep.subr.mxu0 %v2153
    %2365 = vmatpush1.msra.mxu0 %v2152
    %2366 = vmatprep.subr.mxu0 %v2155
    %2367 = vmatpush1.msra.mxu0 %v2154
    %2368 = vmatprep.subr.mxu0 %v2157
    %2369 = vmatpush1.msra.mxu0 %v2156
    %2370 = vmatprep.subr.mxu0 %v2159
    %2371 = vmatpush1.msra.mxu0 %v2158
    %2372 = vmatprep.subr.mxu0 0.0
    %2373 = vmatpush1.msra.mxu0 0.0
    %2374 = vmatprep.subr.mxu0 0.0
    %2375 = vmatpush1.msra.mxu0 0.0
    %2376 = vmatprep.subr.mxu0 0.0
    %2377 = vmatpush1.msra.mxu0 0.0
    %2378 = vmatprep.subr.mxu0 0.0
    %2379 = vmatpush1.msra.mxu0 0.0
    %2380 = vmatprep.subr.mxu0 0.0
    %2381 = vmatpush1.msra.mxu0 0.0
    %2382 = vmatprep.subr.mxu0 0.0
    %2383 = vmatpush1.msra.mxu0 0.0
    %2384 = vmatprep.subr.mxu0 0.0
    %2385 = vmatpush1.msra.mxu0 0.0
    %2386 = vmatprep.subr.mxu0 0.0
    %2387 = vmatpush1.msra.mxu0 0.0
    %2388 = vmatprep.subr.mxu0 0.0
    %2389 = vmatpush1.msra.mxu0 0.0
    %2390 = vmatprep.subr.mxu0 0.0
    %2391 = vmatpush1.msra.mxu0 0.0
    %2392 = vmatprep.subr.mxu0 0.0
    %2393 = vmatpush1.msra.mxu0 0.0
    %2394 = vmatprep.subr.mxu0 0.0
    %2395 = vmatpush1.msra.mxu0 0.0
    %2396 = vmatprep.subr.mxu0 0.0
    %2397 = vmatpush1.msra.mxu0 0.0
    %2398 = vmatprep.subr.mxu0 0.0
    %2399 = vmatpush1.msra.mxu0 0.0
    %2400 = vmatprep.subr.mxu0 0.0
    %2401 = vmatpush1.msra.mxu0 0.0
    %2402 = vmatprep.subr.mxu0 0.0
    %2403 = vmatpush1.msra.mxu0 0.0
    %2404 = vmatprep.mubr.f32.mxu0 0.0
    %2405 = vmatmul.mubr.f32.gmra.mrb[0].mxu0 %v2181
    %v2406 = vpop.f32.mrb[0].mxu0
    %v2407 = vadd.f32 %v2336, %v2406
    %v2408 = vpop.f32.mrb[0].mxu0
    %v2409 = vadd.f32 %v2338, %v2408
    %2410 = vdwg.mxu0
    %v2411 = vsel %vm1215, %v2407, -inf
    %v2412 = vsel %vm1215, %v2409, -inf
    %v2413 = vmax.f32 %v2411, %v2412
    %2414 = vmax.xlane.f32.xlu0 %v2413
    %v2415 = vpop.xlane.xlu0 %2414
    %v2416 = vsub.f32 %v2407, %v2415
    %v2417 = vsub.f32 %v2409, %v2415
    %v2418 = vmul.f32 %v2416, 1.442695
    %v2419 = vpow.pop %v2418
    %v2420 = vmul.f32 %v2417, 1.442695
    %v2421 = vpow.pop %v2420
    %v2422 = vsel %vm1215, %v2419, 0.0
    %v2423 = vsel %vm1215, %v2421, 0.0
    %v2424 = vadd.f32 %v2422, %v2423
    %2425 = vadd.xlane.f32.xlu0 %v2424
    %v2426 = vpop.xlane.xlu0 %2425
    %v2427 = vlog2.pop %v2426
    %v2428 = vmul.f32 %v2427, 0.6931472
    %v2429 = vadd.f32 %v2415, %v2428
    %v2430 = vsub.f32 %v2407, %v2429
    %v2431 = vsub.f32 %v2409, %v2429
    %v2434 = vcombine.low %v2430, %v2431
    %v2436 = vunpack.c.l.s4 1966171168
    %v2437 = vunpack.c.0.s8 %v2436
    %v2438 = vlaneseq
    %v2439 = vshrl.u32 %v2438, 7
    %v2440 = vsub.s32 %v2437, %v2439
    %v2441 = vrot.slane %v2434, %v2440
    %v2443 = vunpack.c.l.s4 1966171168
    %v2444 = vunpack.c.0.s8 %v2443
    %v2445 = vlaneseq
    %v2446 = vshrl.u32 %v2445, 7
    %v2447 = vsub.s32 %v2444, %v2446
    %v2448 = vrot.slane %v2441, %v2447
    %s2450 = scalar_lea.vmem [#allocation8], 1
    %2451 = vst.msk [vmem:[%s2450] ss:$8 sm:$0x3] %vm1258, %v2448
    %2452 = vst.msk [vmem:[%s2450] ss:$8 sm:$0x0] %vm1258, %v2448
    %s2453 = sadd.s32 %s73, 1
    %p2454 = scmp.lt.s32.totalorder %s2453, 1
    %s2455 = scalar_select %p2454, 1, 0
    %v2456 = vstv %s2455
    %vm2457 = vcmp.eq.s32.totalorder %v2456, 1
    %v2458 = vsel %vm2457, %v1999, %v1269
    %2459 = vst.msk [vmem:[#allocation9] sm:$0x7] %vm1267, %v2458
    %v2460 = vld [vmem:[#allocation9] sm:$0x7]
    %s2461 = scalar_lea.vmem [#allocation2], 2
    %v2462 = vld [vmem:[%s2461] ss:$8 sm:$0xf]
    %v2463 = vld [vmem:[%s2461] ss:$8 sm:$0x10]
    %v2464 = vor.u32 %v2462, %v2463
    %v2465 = vld [vmem:[#allocation5] sm:$0xff]
    %v2466 = vld [vmem:[#allocation5 + $0x8] sm:$0xff]
    %v2467 = vld [vmem:[#allocation5 + $0x10] sm:$0xff]
    %v2468 = vld [vmem:[#allocation5 + $0x18] sm:$0xff]
    %v2469 = vld [vmem:[#allocation5 + $0x20] sm:$0xff]
    %v2470 = vld [vmem:[#allocation5 + $0x28] sm:$0xff]
    %v2471 = vld [vmem:[#allocation5 + $0x30] sm:$0xff]
    %v2472 = vld [vmem:[#allocation5 + $0x38] sm:$0xff]
    %v2473 = vld [vmem:[#allocation5 + $0x40] sm:$0xff]
    %v2474 = vld [vmem:[#allocation5 + $0x48] sm:$0xff]
    %v2475 = vld [vmem:[#allocation5 + $0x50] sm:$0xff]
    %v2476 = vld [vmem:[#allocation5 + $0x58] sm:$0xff]
    %v2477 = vld [vmem:[#allocation5 + $0x60] sm:$0xff]
    %v2478 = vld [vmem:[#allocation5 + $0x68] sm:$0xff]
    %v2479 = vld [vmem:[#allocation5 + $0x70] sm:$0xff]
    %v2480 = vld [vmem:[#allocation5 + $0x78] sm:$0xff]
    %v2481 = vld [vmem:[#allocation5 + $0x80] sm:$0xff]
    %v2482 = vld [vmem:[#allocation5 + $0x88] sm:$0xff]
    %v2483 = vld [vmem:[#allocation5 + $0x90] sm:$0xff]
    %v2484 = vld [vmem:[#allocation5 + $0x98] sm:$0xff]
    %v2485 = vld [vmem:[#allocation5 + $0xa0] sm:$0xff]
    %v2486 = vld [vmem:[#allocation5 + $0xa8] sm:$0xff]
    %v2487 = vld [vmem:[#allocation5 + $0xb0] sm:$0xff]
    %v2488 = vld [vmem:[#allocation5 + $0xb8] sm:$0xff]
    %v2489 = vld [vmem:[#allocation5 + $0xc0] sm:$0xff]
    %v2490 = vld [vmem:[#allocation5 + $0xc8] sm:$0xff]
    %v2491 = vld [vmem:[#allocation5 + $0xd0] sm:$0xff]
    %v2492 = vld [vmem:[#allocation5 + $0xd8] sm:$0xff]
    %v2493 = vld [vmem:[#allocation5 + $0xe0] sm:$0xff]
    %v2494 = vld [vmem:[#allocation5 + $0xe8] sm:$0xff]
    %v2495 = vld [vmem:[#allocation5 + $0xf0] sm:$0xff]
    %v2496 = vld [vmem:[#allocation5 + $0xf8] sm:$0xff]
    %v2497 = vld [vmem:[#allocation5 + $0x100] sm:$0xff]
    %v2498 = vld [vmem:[#allocation5 + $0x108] sm:$0xff]
    %v2499 = vld [vmem:[#allocation5 + $0x110] sm:$0xff]
    %v2500 = vld [vmem:[#allocation5 + $0x118] sm:$0xff]
    %v2501 = vld [vmem:[#allocation5 + $0x120] sm:$0xff]
    %v2502 = vld [vmem:[#allocation5 + $0x128] sm:$0xff]
    %v2503 = vld [vmem:[#allocation5 + $0x130] sm:$0xff]
    %v2504 = vld [vmem:[#allocation5 + $0x138] sm:$0xff]
    %v2505 = vld [vmem:[#allocation5 + $0x140] sm:$0xff]
    %v2506 = vld [vmem:[#allocation5 + $0x148] sm:$0xff]
    %v2507 = vld [vmem:[#allocation5 + $0x150] sm:$0xff]
    %v2508 = vld [vmem:[#allocation5 + $0x158] sm:$0xff]
    %v2509 = vld [vmem:[#allocation5 + $0x160] sm:$0xff]
    %v2510 = vld [vmem:[#allocation5 + $0x168] sm:$0xff]
    %v2511 = vld [vmem:[#allocation5 + $0x170] sm:$0xff]
    %v2512 = vld [vmem:[#allocation5 + $0x178] sm:$0xff]
    %v2513 = vld [vmem:[#allocation5 + $0x180] sm:$0xff]
    %v2514 = vld [vmem:[#allocation5 + $0x188] sm:$0xff]
    %v2515 = vld [vmem:[#allocation5 + $0x190] sm:$0xff]
    %v2516 = vld [vmem:[#allocation5 + $0x198] sm:$0xff]
    %v2517 = vld [vmem:[#allocation5 + $0x1a0] sm:$0xff]
    %v2518 = vld [vmem:[#allocation5 + $0x1a8] sm:$0xff]
    %v2519 = vld [vmem:[#allocation5 + $0x1b0] sm:$0xff]
    %v2520 = vld [vmem:[#allocation5 + $0x1b8] sm:$0xff]
    %v2521 = vld [vmem:[#allocation5 + $0x1c0] sm:$0xff]
    %v2522 = vld [vmem:[#allocation5 + $0x1c8] sm:$0xff]
    %v2523 = vld [vmem:[#allocation5 + $0x1d0] sm:$0xff]
    %v2524 = vld [vmem:[#allocation5 + $0x1d8] sm:$0xff]
    %v2525 = vld [vmem:[#allocation5 + $0x1e0] sm:$0xff]
    %v2526 = vld [vmem:[#allocation5 + $0x1e8] sm:$0xff]
    %v2527 = vld [vmem:[#allocation5 + $0x1f0] sm:$0xff]
    %v2528 = vld [vmem:[#allocation5 + $0x1f8] sm:$0xff]
    %v2529 = vld [vmem:[#allocation5 + $0x200] sm:$0xff]
    %v2530 = vld [vmem:[#allocation5 + $0x208] sm:$0xff]
    %v2531 = vld [vmem:[#allocation5 + $0x210] sm:$0xff]
    %v2532 = vld [vmem:[#allocation5 + $0x218] sm:$0xff]
    %v2533 = vld [vmem:[#allocation5 + $0x220] sm:$0xff]
    %v2534 = vld [vmem:[#allocation5 + $0x228] sm:$0xff]
    %v2535 = vld [vmem:[#allocation5 + $0x230] sm:$0xff]
    %v2536 = vld [vmem:[#allocation5 + $0x238] sm:$0xff]
    %v2537 = vld [vmem:[#allocation5 + $0x240] sm:$0xff]
    %v2538 = vld [vmem:[#allocation5 + $0x248] sm:$0xff]
    %v2539 = vld [vmem:[#allocation5 + $0x250] sm:$0xff]
    %v2540 = vld [vmem:[#allocation5 + $0x258] sm:$0xff]
    %v2541 = vld [vmem:[#allocation5 + $0x260] sm:$0xff]
    %v2542 = vld [vmem:[#allocation5 + $0x268] sm:$0xff]
    %v2543 = vld [vmem:[#allocation5 + $0x270] sm:$0xff]
    %v2544 = vld [vmem:[#allocation5 + $0x278] sm:$0xff]
    %v2545 = vld [vmem:[#allocation5 + $0x280] sm:$0xff]
    %v2546 = vld [vmem:[#allocation5 + $0x288] sm:$0xff]
    %v2547 = vld [vmem:[#allocation5 + $0x290] sm:$0xff]
    %v2548 = vld [vmem:[#allocation5 + $0x298] sm:$0xff]
    %v2549 = vld [vmem:[#allocation5 + $0x2a0] sm:$0xff]
    %v2550 = vld [vmem:[#allocation5 + $0x2a8] sm:$0xff]
    %v2551 = vld [vmem:[#allocation5 + $0x2b0] sm:$0xff]
    %v2552 = vld [vmem:[#allocation5 + $0x2b8] sm:$0xff]
    %v2553 = vld [vmem:[#allocation5 + $0x2c0] sm:$0xff]
    %v2554 = vld [vmem:[#allocation5 + $0x2c8] sm:$0xff]
    %v2555 = vld [vmem:[#allocation5 + $0x2d0] sm:$0xff]
    %v2556 = vld [vmem:[#allocation5 + $0x2d8] sm:$0xff]
    %v2557 = vld [vmem:[#allocation5 + $0x2e0] sm:$0xff]
    %v2558 = vld [vmem:[#allocation5 + $0x2e8] sm:$0xff]
    %v2559 = vld [vmem:[#allocation5 + $0x2f0] sm:$0xff]
    %v2560 = vld [vmem:[#allocation5 + $0x2f8] sm:$0xff]
    %v2561 = vld [vmem:[#allocation5 + $0x300] sm:$0xff]
    %v2562 = vld [vmem:[#allocation5 + $0x308] sm:$0xff]
    %v2563 = vld [vmem:[#allocation5 + $0x310] sm:$0xff]
    %v2564 = vld [vmem:[#allocation5 + $0x318] sm:$0xff]
    %v2565 = vld [vmem:[#allocation5 + $0x320] sm:$0xff]
    %v2566 = vld [vmem:[#allocation5 + $0x328] sm:$0xff]
    %v2567 = vld [vmem:[#allocation5 + $0x330] sm:$0xff]
    %v2568 = vld [vmem:[#allocation5 + $0x338] sm:$0xff]
    %v2569 = vld [vmem:[#allocation5 + $0x340] sm:$0xff]
    %v2570 = vld [vmem:[#allocation5 + $0x348] sm:$0xff]
    %v2571 = vld [vmem:[#allocation5 + $0x350] sm:$0xff]
    %v2572 = vld [vmem:[#allocation5 + $0x358] sm:$0xff]
    %v2573 = vld [vmem:[#allocation5 + $0x360] sm:$0xff]
    %v2574 = vld [vmem:[#allocation5 + $0x368] sm:$0xff]
    %v2575 = vld [vmem:[#allocation5 + $0x370] sm:$0xff]
    %v2576 = vld [vmem:[#allocation5 + $0x378] sm:$0xff]
    %v2577 = vld [vmem:[#allocation5 + $0x380] sm:$0xff]
    %v2578 = vld [vmem:[#allocation5 + $0x388] sm:$0xff]
    %v2579 = vld [vmem:[#allocation5 + $0x390] sm:$0xff]
    %v2580 = vld [vmem:[#allocation5 + $0x398] sm:$0xff]
    %v2581 = vld [vmem:[#allocation5 + $0x3a0] sm:$0xff]
    %v2582 = vld [vmem:[#allocation5 + $0x3a8] sm:$0xff]
    %v2583 = vld [vmem:[#allocation5 + $0x3b0] sm:$0xff]
    %v2584 = vld [vmem:[#allocation5 + $0x3b8] sm:$0xff]
    %v2585 = vld [vmem:[#allocation5 + $0x3c0] sm:$0xff]
    %v2586 = vld [vmem:[#allocation5 + $0x3c8] sm:$0xff]
    %v2587 = vld [vmem:[#allocation5 + $0x3d0] sm:$0xff]
    %v2588 = vld [vmem:[#allocation5 + $0x3d8] sm:$0xff]
    %v2589 = vld [vmem:[#allocation5 + $0x3e0] sm:$0xff]
    %v2590 = vld [vmem:[#allocation5 + $0x3e8] sm:$0xff]
    %v2591 = vld [vmem:[#allocation5 + $0x3f0] sm:$0xff]
    %v2592 = vld [vmem:[#allocation5 + $0x3f8] sm:$0xff]
    %v2593 = vld [vmem:[#allocation5 + $0x400] sm:$0xff]
    %v2594 = vld [vmem:[#allocation5 + $0x408] sm:$0xff]
    %v2595 = vld [vmem:[#allocation5 + $0x410] sm:$0xff]
    %v2596 = vld [vmem:[#allocation5 + $0x418] sm:$0xff]
    %v2597 = vld [vmem:[#allocation5 + $0x420] sm:$0xff]
    %v2598 = vld [vmem:[#allocation5 + $0x428] sm:$0xff]
    %v2599 = vld [vmem:[#allocation5 + $0x430] sm:$0xff]
    %v2600 = vld [vmem:[#allocation5 + $0x438] sm:$0xff]
    %v2601 = vld [vmem:[#allocation5 + $0x440] sm:$0xff]
    %v2602 = vld [vmem:[#allocation5 + $0x448] sm:$0xff]
    %v2603 = vld [vmem:[#allocation5 + $0x450] sm:$0xff]
    %v2604 = vld [vmem:[#allocation5 + $0x458] sm:$0xff]
    %v2605 = vld [vmem:[#allocation5 + $0x460] sm:$0xff]
    %v2606 = vld [vmem:[#allocation5 + $0x468] sm:$0xff]
    %v2607 = vld [vmem:[#allocation5 + $0x470] sm:$0xff]
    %v2608 = vld [vmem:[#allocation5 + $0x478] sm:$0xff]
    %v2609 = vld [vmem:[#allocation5 + $0x480] sm:$0xff]
    %v2610 = vld [vmem:[#allocation5 + $0x488] sm:$0xff]
    %v2611 = vld [vmem:[#allocation5 + $0x490] sm:$0xff]
    %v2612 = vld [vmem:[#allocation5 + $0x498] sm:$0xff]
    %v2613 = vld [vmem:[#allocation5 + $0x4a0] sm:$0xff]
    %v2614 = vld [vmem:[#allocation5 + $0x4a8] sm:$0xff]
    %v2615 = vld [vmem:[#allocation5 + $0x4b0] sm:$0xff]
    %v2616 = vld [vmem:[#allocation5 + $0x4b8] sm:$0xff]
    %v2617 = vld [vmem:[#allocation5 + $0x4c0] sm:$0xff]
    %v2618 = vld [vmem:[#allocation5 + $0x4c8] sm:$0xff]
    %v2619 = vld [vmem:[#allocation5 + $0x4d0] sm:$0xff]
    %v2620 = vld [vmem:[#allocation5 + $0x4d8] sm:$0xff]
    %v2621 = vld [vmem:[#allocation5 + $0x4e0] sm:$0xff]
    %v2622 = vld [vmem:[#allocation5 + $0x4e8] sm:$0xff]
    %v2623 = vld [vmem:[#allocation5 + $0x4f0] sm:$0xff]
    %v2624 = vld [vmem:[#allocation5 + $0x4f8] sm:$0xff]
    %v2625 = vld [vmem:[#allocation5 + $0x500] sm:$0xff]
    %v2626 = vld [vmem:[#allocation5 + $0x508] sm:$0xff]
    %v2627 = vld [vmem:[#allocation5 + $0x510] sm:$0xff]
    %v2628 = vld [vmem:[#allocation5 + $0x518] sm:$0xff]
    %v2629 = vld [vmem:[#allocation5 + $0x520] sm:$0xff]
    %v2630 = vld [vmem:[#allocation5 + $0x528] sm:$0xff]
    %v2631 = vld [vmem:[#allocation5 + $0x530] sm:$0xff]
    %v2632 = vld [vmem:[#allocation5 + $0x538] sm:$0xff]
    %v2633 = vld [vmem:[#allocation5 + $0x540] sm:$0xff]
    %v2634 = vld [vmem:[#allocation5 + $0x548] sm:$0xff]
    %v2635 = vld [vmem:[#allocation5 + $0x550] sm:$0xff]
    %v2636 = vld [vmem:[#allocation5 + $0x558] sm:$0xff]
    %v2637 = vld [vmem:[#allocation5 + $0x560] sm:$0xff]
    %v2638 = vld [vmem:[#allocation5 + $0x568] sm:$0xff]
    %v2639 = vld [vmem:[#allocation5 + $0x570] sm:$0xff]
    %v2640 = vld [vmem:[#allocation5 + $0x578] sm:$0xff]
    %v2641 = vld [vmem:[#allocation5 + $0x580] sm:$0xff]
    %v2642 = vld [vmem:[#allocation5 + $0x588] sm:$0xff]
    %v2643 = vld [vmem:[#allocation5 + $0x590] sm:$0xff]
    %v2644 = vld [vmem:[#allocation5 + $0x598] sm:$0xff]
    %v2645 = vld [vmem:[#allocation5 + $0x5a0] sm:$0xff]
    %v2646 = vld [vmem:[#allocation5 + $0x5a8] sm:$0xff]
    %v2647 = vld [vmem:[#allocation5 + $0x5b0] sm:$0xff]
    %v2648 = vld [vmem:[#allocation5 + $0x5b8] sm:$0xff]
    %v2649 = vld [vmem:[#allocation5 + $0x5c0] sm:$0xff]
    %v2650 = vld [vmem:[#allocation5 + $0x5c8] sm:$0xff]
    %v2651 = vld [vmem:[#allocation5 + $0x5d0] sm:$0xff]
    %v2652 = vld [vmem:[#allocation5 + $0x5d8] sm:$0xff]
    %v2653 = vld [vmem:[#allocation5 + $0x5e0] sm:$0xff]
    %v2654 = vld [vmem:[#allocation5 + $0x5e8] sm:$0xff]
    %v2655 = vld [vmem:[#allocation5 + $0x5f0] sm:$0xff]
    %v2656 = vld [vmem:[#allocation5 + $0x5f8] sm:$0xff]
    %v2657 = vld [vmem:[#allocation5 + $0x600] sm:$0xff]
    %v2658 = vld [vmem:[#allocation5 + $0x608] sm:$0xff]
    %v2659 = vld [vmem:[#allocation5 + $0x610] sm:$0xff]
    %v2660 = vld [vmem:[#allocation5 + $0x618] sm:$0xff]
    %v2661 = vld [vmem:[#allocation5 + $0x620] sm:$0xff]
    %v2662 = vld [vmem:[#allocation5 + $0x628] sm:$0xff]
    %v2663 = vld [vmem:[#allocation5 + $0x630] sm:$0xff]
    %v2664 = vld [vmem:[#allocation5 + $0x638] sm:$0xff]
    %v2665 = vld [vmem:[#allocation5 + $0x640] sm:$0xff]
    %v2666 = vld [vmem:[#allocation5 + $0x648] sm:$0xff]
    %v2667 = vld [vmem:[#allocation5 + $0x650] sm:$0xff]
    %v2668 = vld [vmem:[#allocation5 + $0x658] sm:$0xff]
    %v2669 = vld [vmem:[#allocation5 + $0x660] sm:$0xff]
    %v2670 = vld [vmem:[#allocation5 + $0x668] sm:$0xff]
    %v2671 = vld [vmem:[#allocation5 + $0x670] sm:$0xff]
    %v2672 = vld [vmem:[#allocation5 + $0x678] sm:$0xff]
    %v2673 = vld [vmem:[#allocation5 + $0x680] sm:$0xff]
    %v2674 = vld [vmem:[#allocation5 + $0x688] sm:$0xff]
    %v2675 = vld [vmem:[#allocation5 + $0x690] sm:$0xff]
    %v2676 = vld [vmem:[#allocation5 + $0x698] sm:$0xff]
    %v2677 = vld [vmem:[#allocation5 + $0x6a0] sm:$0xff]
    %v2678 = vld [vmem:[#allocation5 + $0x6a8] sm:$0xff]
    %v2679 = vld [vmem:[#allocation5 + $0x6b0] sm:$0xff]
    %v2680 = vld [vmem:[#allocation5 + $0x6b8] sm:$0xff]
    %v2681 = vld [vmem:[#allocation5 + $0x6c0] sm:$0xff]
    %v2682 = vld [vmem:[#allocation5 + $0x6c8] sm:$0xff]
    %v2683 = vld [vmem:[#allocation5 + $0x6d0] sm:$0xff]
    %v2684 = vld [vmem:[#allocation5 + $0x6d8] sm:$0xff]
    %v2685 = vld [vmem:[#allocation5 + $0x6e0] sm:$0xff]
    %v2686 = vld [vmem:[#allocation5 + $0x6e8] sm:$0xff]
    %v2687 = vld [vmem:[#allocation5 + $0x6f0] sm:$0xff]
    %v2688 = vld [vmem:[#allocation5 + $0x6f8] sm:$0xff]
    %v2689 = vld [vmem:[#allocation5 + $0x700] sm:$0xff]
    %v2690 = vld [vmem:[#allocation5 + $0x708] sm:$0xff]
    %v2691 = vld [vmem:[#allocation5 + $0x710] sm:$0xff]
    %v2692 = vld [vmem:[#allocation5 + $0x718] sm:$0xff]
    %v2693 = vld [vmem:[#allocation5 + $0x720] sm:$0xff]
    %v2694 = vld [vmem:[#allocation5 + $0x728] sm:$0xff]
    %v2695 = vld [vmem:[#allocation5 + $0x730] sm:$0xff]
    %v2696 = vld [vmem:[#allocation5 + $0x738] sm:$0xff]
    %v2697 = vld [vmem:[#allocation5 + $0x740] sm:$0xff]
    %v2698 = vld [vmem:[#allocation5 + $0x748] sm:$0xff]
    %v2699 = vld [vmem:[#allocation5 + $0x750] sm:$0xff]
    %v2700 = vld [vmem:[#allocation5 + $0x758] sm:$0xff]
    %v2701 = vld [vmem:[#allocation5 + $0x760] sm:$0xff]
    %v2702 = vld [vmem:[#allocation5 + $0x768] sm:$0xff]
    %v2703 = vld [vmem:[#allocation5 + $0x770] sm:$0xff]
    %v2704 = vld [vmem:[#allocation5 + $0x778] sm:$0xff]
    %v2706 = vlaneseq
    %v2707 = vshrl.u32 %v2706, 7
    %v2708 = vsub.s32 0, %v2707
    %v2709 = vrot.slane %v2460, %v2708
    %v2710 = vlaneseq
    %v2711 = vshrl.u32 %v2710, 7
    %v2712 = vsub.s32 1, %v2711
    %v2713 = vrot.slane %v2460, %v2712
    %v2714 = vlaneseq
    %v2715 = vshrl.u32 %v2714, 7
    %v2716 = vsub.s32 2, %v2715
    %v2717 = vrot.slane %v2460, %v2716
    %2721 = vmatprep.subr.mxu0 %v2466
    %2722 = vmatpush1.msra.mxu0 %v2465
    %2723 = vmatprep.subr.mxu0 %v2471
    %2724 = vmatpush1.msra.mxu0 %v2470
    %2725 = vmatprep.subr.mxu0 %v2476
    %2726 = vmatpush1.msra.mxu0 %v2475
    %2727 = vmatprep.subr.mxu0 %v2481
    %2728 = vmatpush1.msra.mxu0 %v2480
    %2729 = vmatprep.subr.mxu0 %v2486
    %2730 = vmatpush1.msra.mxu0 %v2485
    %2731 = vmatprep.subr.mxu0 %v2491
    %2732 = vmatpush1.msra.mxu0 %v2490
    %2733 = vmatprep.subr.mxu0 %v2496
    %2734 = vmatpush1.msra.mxu0 %v2495
    %2735 = vmatprep.subr.mxu0 %v2501
    %2736 = vmatpush1.msra.mxu0 %v2500
    %2737 = vmatprep.subr.mxu0 %v2506
    %2738 = vmatpush1.msra.mxu0 %v2505
    %2739 = vmatprep.subr.mxu0 %v2511
    %2740 = vmatpush1.msra.mxu0 %v2510
    %2741 = vmatprep.subr.mxu0 %v2516
    %2742 = vmatpush1.msra.mxu0 %v2515
    %2743 = vmatprep.subr.mxu0 %v2521
    %2744 = vmatpush1.msra.mxu0 %v2520
    %2745 = vmatprep.subr.mxu0 %v2526
    %2746 = vmatpush1.msra.mxu0 %v2525
    %2747 = vmatprep.subr.mxu0 %v2531
    %2748 = vmatpush1.msra.mxu0 %v2530
    %2749 = vmatprep.subr.mxu0 %v2536
    %2750 = vmatpush1.msra.mxu0 %v2535
    %2751 = vmatprep.subr.mxu0 %v2541
    %2752 = vmatpush1.msra.mxu0 %v2540
    %2753 = vmatprep.subr.mxu0 %v2546
    %2754 = vmatpush1.msra.mxu0 %v2545
    %2755 = vmatprep.subr.mxu0 %v2551
    %2756 = vmatpush1.msra.mxu0 %v2550
    %2757 = vmatprep.subr.mxu0 %v2556
    %2758 = vmatpush1.msra.mxu0 %v2555
    %2759 = vmatprep.subr.mxu0 %v2561
    %2760 = vmatpush1.msra.mxu0 %v2560
    %2761 = vmatprep.subr.mxu0 %v2566
    %2762 = vmatpush1.msra.mxu0 %v2565
    %2763 = vmatprep.subr.mxu0 %v2571
    %2764 = vmatpush1.msra.mxu0 %v2570
    %2765 = vmatprep.subr.mxu0 %v2576
    %2766 = vmatpush1.msra.mxu0 %v2575
    %2767 = vmatprep.subr.mxu0 %v2581
    %2768 = vmatpush1.msra.mxu0 %v2580
    %2769 = vmatprep.subr.mxu0 %v2586
    %2770 = vmatpush1.msra.mxu0 %v2585
    %2771 = vmatprep.subr.mxu0 %v2591
    %2772 = vmatpush1.msra.mxu0 %v2590
    %2773 = vmatprep.subr.mxu0 %v2596
    %2774 = vmatpush1.msra.mxu0 %v2595
    %2775 = vmatprep.subr.mxu0 %v2601
    %2776 = vmatpush1.msra.mxu0 %v2600
    %2777 = vmatprep.subr.mxu0 %v2606
    %2778 = vmatpush1.msra.mxu0 %v2605
    %2779 = vmatprep.subr.mxu0 %v2611
    %2780 = vmatpush1.msra.mxu0 %v2610
    %2781 = vmatprep.subr.mxu0 %v2616
    %2782 = vmatpush1.msra.mxu0 %v2615
    %2783 = vmatprep.subr.mxu0 %v2621
    %2784 = vmatpush1.msra.mxu0 %v2620
    %2785 = vmatprep.mubr.f32.mxu0 %v2713
    %2786 = vmatmul.mubr.f32.gmra.mrb[0].mxu0 %v2709
    %v2787 = vpop.f32.mrb[0].mxu0
    %v2788 = vadd.f32 0.0, %v2787
    %v2789 = vpop.f32.mrb[0].mxu0
    %v2790 = vadd.f32 0.0, %v2789
    %2791 = vdwg.mxu0
    %2792 = vmatprep.subr.mxu0 %v2626
    %2793 = vmatpush1.msra.mxu0 %v2625
    %2794 = vmatprep.subr.mxu0 %v2631
    %2795 = vmatpush1.msra.mxu0 %v2630
    %2796 = vmatprep.subr.mxu0 %v2636
    %2797 = vmatpush1.msra.mxu0 %v2635
    %2798 = vmatprep.subr.mxu0 %v2641
    %2799 = vmatpush1.msra.mxu0 %v2640
    %2800 = vmatprep.subr.mxu0 %v2646
    %2801 = vmatpush1.msra.mxu0 %v2645
    %2802 = vmatprep.subr.mxu0 %v2651
    %2803 = vmatpush1.msra.mxu0 %v2650
    %2804 = vmatprep.subr.mxu0 %v2656
    %2805 = vmatpush1.msra.mxu0 %v2655
    %2806 = vmatprep.subr.mxu0 %v2661
    %2807 = vmatpush1.msra.mxu0 %v2660
    %2808 = vmatprep.subr.mxu0 %v2666
    %2809 = vmatpush1.msra.mxu0 %v2665
    %2810 = vmatprep.subr.mxu0 %v2671
    %2811 = vmatpush1.msra.mxu0 %v2670
    %2812 = vmatprep.subr.mxu0 %v2676
    %2813 = vmatpush1.msra.mxu0 %v2675
    %2814 = vmatprep.subr.mxu0 %v2681
    %2815 = vmatpush1.msra.mxu0 %v2680
    %2816 = vmatprep.subr.mxu0 %v2686
    %2817 = vmatpush1.msra.mxu0 %v2685
    %2818 = vmatprep.subr.mxu0 %v2691
    %2819 = vmatpush1.msra.mxu0 %v2690
    %2820 = vmatprep.subr.mxu0 %v2696
    %2821 = vmatpush1.msra.mxu0 %v2695
    %2822 = vmatprep.subr.mxu0 %v2701
    %2823 = vmatpush1.msra.mxu0 %v2700
    %2824 = vmatprep.subr.mxu0 0.0
    %2825 = vmatpush1.msra.mxu0 0.0
    %2826 = vmatprep.subr.mxu0 0.0
    %2827 = vmatpush1.msra.mxu0 0.0
    %2828 = vmatprep.subr.mxu0 0.0
    %2829 = vmatpush1.msra.mxu0 0.0
    %2830 = vmatprep.subr.mxu0 0.0
    %2831 = vmatpush1.msra.mxu0 0.0
    %2832 = vmatprep.subr.mxu0 0.0
    %2833 = vmatpush1.msra.mxu0 0.0
    %2834 = vmatprep.subr.mxu0 0.0
    %2835 = vmatpush1.msra.mxu0 0.0
    %2836 = vmatprep.subr.mxu0 0.0
    %2837 = vmatpush1.msra.mxu0 0.0
    %2838 = vmatprep.subr.mxu0 0.0
    %2839 = vmatpush1.msra.mxu0 0.0
    %2840 = vmatprep.subr.mxu0 0.0
    %2841 = vmatpush1.msra.mxu0 0.0
    %2842 = vmatprep.subr.mxu0 0.0
    %2843 = vmatpush1.msra.mxu0 0.0
    %2844 = vmatprep.subr.mxu0 0.0
    %2845 = vmatpush1.msra.mxu0 0.0
    %2846 = vmatprep.subr.mxu0 0.0
    %2847 = vmatpush1.msra.mxu0 0.0
    %2848 = vmatprep.subr.mxu0 0.0
    %2849 = vmatpush1.msra.mxu0 0.0
    %2850 = vmatprep.subr.mxu0 0.0
    %2851 = vmatpush1.msra.mxu0 0.0
    %2852 = vmatprep.subr.mxu0 0.0
    %2853 = vmatpush1.msra.mxu0 0.0
    %2854 = vmatprep.subr.mxu0 0.0
    %2855 = vmatpush1.msra.mxu0 0.0
    %2856 = vmatprep.mubr.f32.mxu0 0.0
    %2857 = vmatmul.mubr.f32.gmra.mrb[0].mxu0 %v2717
    %v2858 = vpop.f32.mrb[0].mxu0
    %v2859 = vadd.f32 %v2788, %v2858
    %v2860 = vpop.f32.mrb[0].mxu0
    %v2861 = vadd.f32 %v2790, %v2860
    %2862 = vdwg.mxu0
    %2863 = vmatprep.subr.mxu0 %v2468
    %2864 = vmatpush1.msra.mxu0 %v2467
    %2865 = vmatprep.subr.mxu0 %v2473
    %2866 = vmatpush1.msra.mxu0 %v2472
    %2867 = vmatprep.subr.mxu0 %v2478
    %2868 = vmatpush1.msra.mxu0 %v2477
    %2869 = vmatprep.subr.mxu0 %v2483
    %2870 = vmatpush1.msra.mxu0 %v2482
    %2871 = vmatprep.subr.mxu0 %v2488
    %2872 = vmatpush1.msra.mxu0 %v2487
    %2873 = vmatprep.subr.mxu0 %v2493
    %2874 = vmatpush1.msra.mxu0 %v2492
    %2875 = vmatprep.subr.mxu0 %v2498
    %2876 = vmatpush1.msra.mxu0 %v2497
    %2877 = vmatprep.subr.mxu0 %v2503
    %2878 = vmatpush1.msra.mxu0 %v2502
    %2879 = vmatprep.subr.mxu0 %v2508
    %2880 = vmatpush1.msra.mxu0 %v2507
    %2881 = vmatprep.subr.mxu0 %v2513
    %2882 = vmatpush1.msra.mxu0 %v2512
    %2883 = vmatprep.subr.mxu0 %v2518
    %2884 = vmatpush1.msra.mxu0 %v2517
    %2885 = vmatprep.subr.mxu0 %v2523
    %2886 = vmatpush1.msra.mxu0 %v2522
    %2887 = vmatprep.subr.mxu0 %v2528
    %2888 = vmatpush1.msra.mxu0 %v2527
    %2889 = vmatprep.subr.mxu0 %v2533
    %2890 = vmatpush1.msra.mxu0 %v2532
    %2891 = vmatprep.subr.mxu0 %v2538
    %2892 = vmatpush1.msra.mxu0 %v2537
    %2893 = vmatprep.subr.mxu0 %v2543
    %2894 = vmatpush1.msra.mxu0 %v2542
    %2895 = vmatprep.subr.mxu0 %v2548
    %2896 = vmatpush1.msra.mxu0 %v2547
    %2897 = vmatprep.subr.mxu0 %v2553
    %2898 = vmatpush1.msra.mxu0 %v2552
    %2899 = vmatprep.subr.mxu0 %v2558
    %2900 = vmatpush1.msra.mxu0 %v2557
    %2901 = vmatprep.subr.mxu0 %v2563
    %2902 = vmatpush1.msra.mxu0 %v2562
    %2903 = vmatprep.subr.mxu0 %v2568
    %2904 = vmatpush1.msra.mxu0 %v2567
    %2905 = vmatprep.subr.mxu0 %v2573
    %2906 = vmatpush1.msra.mxu0 %v2572
    %2907 = vmatprep.subr.mxu0 %v2578
    %2908 = vmatpush1.msra.mxu0 %v2577
    %2909 = vmatprep.subr.mxu0 %v2583
    %2910 = vmatpush1.msra.mxu0 %v2582
    %2911 = vmatprep.subr.mxu0 %v2588
    %2912 = vmatpush1.msra.mxu0 %v2587
    %2913 = vmatprep.subr.mxu0 %v2593
    %2914 = vmatpush1.msra.mxu0 %v2592
    %2915 = vmatprep.subr.mxu0 %v2598
    %2916 = vmatpush1.msra.mxu0 %v2597
    %2917 = vmatprep.subr.mxu0 %v2603
    %2918 = vmatpush1.msra.mxu0 %v2602
    %2919 = vmatprep.subr.mxu0 %v2608
    %2920 = vmatpush1.msra.mxu0 %v2607
    %2921 = vmatprep.subr.mxu0 %v2613
    %2922 = vmatpush1.msra.mxu0 %v2612
    %2923 = vmatprep.subr.mxu0 %v2618
    %2924 = vmatpush1.msra.mxu0 %v2617
    %2925 = vmatprep.subr.mxu0 %v2623
    %2926 = vmatpush1.msra.mxu0 %v2622
    %2927 = vmatprep.mubr.f32.mxu0 %v2713
    %2928 = vmatmul.mubr.f32.gmra.mrb[0].mxu0 %v2709
    %v2929 = vpop.f32.mrb[0].mxu0
    %v2930 = vadd.f32 0.0, %v2929
    %v2931 = vpop.f32.mrb[0].mxu0
    %v2932 = vadd.f32 0.0, %v2931
    %2933 = vdwg.mxu0
    %2934 = vmatprep.subr.mxu0 %v2628
    %2935 = vmatpush1.msra.mxu0 %v2627
    %2936 = vmatprep.subr.mxu0 %v2633
    %2937 = vmatpush1.msra.mxu0 %v2632
    %2938 = vmatprep.subr.mxu0 %v2638
    %2939 = vmatpush1.msra.mxu0 %v2637
    %2940 = vmatprep.subr.mxu0 %v2643
    %2941 = vmatpush1.msra.mxu0 %v2642
    %2942 = vmatprep.subr.mxu0 %v2648
    %2943 = vmatpush1.msra.mxu0 %v2647
    %2944 = vmatprep.subr.mxu0 %v2653
    %2945 = vmatpush1.msra.mxu0 %v2652
    %2946 = vmatprep.subr.mxu0 %v2658
    %2947 = vmatpush1.msra.mxu0 %v2657
    %2948 = vmatprep.subr.mxu0 %v2663
    %2949 = vmatpush1.msra.mxu0 %v2662
    %2950 = vmatprep.subr.mxu0 %v2668
    %2951 = vmatpush1.msra.mxu0 %v2667
    %2952 = vmatprep.subr.mxu0 %v2673
    %2953 = vmatpush1.msra.mxu0 %v2672
    %2954 = vmatprep.subr.mxu0 %v2678
    %2955 = vmatpush1.msra.mxu0 %v2677
    %2956 = vmatprep.subr.mxu0 %v2683
    %2957 = vmatpush1.msra.mxu0 %v2682
    %2958 = vmatprep.subr.mxu0 %v2688
    %2959 = vmatpush1.msra.mxu0 %v2687
    %2960 = vmatprep.subr.mxu0 %v2693
    %2961 = vmatpush1.msra.mxu0 %v2692
    %2962 = vmatprep.subr.mxu0 %v2698
    %2963 = vmatpush1.msra.mxu0 %v2697
    %2964 = vmatprep.subr.mxu0 %v2703
    %2965 = vmatpush1.msra.mxu0 %v2702
    %2966 = vmatprep.subr.mxu0 0.0
    %2967 = vmatpush1.msra.mxu0 0.0
    %2968 = vmatprep.subr.mxu0 0.0
    %2969 = vmatpush1.msra.mxu0 0.0
    %2970 = vmatprep.subr.mxu0 0.0
    %2971 = vmatpush1.msra.mxu0 0.0
    %2972 = vmatprep.subr.mxu0 0.0
    %2973 = vmatpush1.msra.mxu0 0.0
    %2974 = vmatprep.subr.mxu0 0.0
    %2975 = vmatpush1.msra.mxu0 0.0
    %2976 = vmatprep.subr.mxu0 0.0
    %2977 = vmatpush1.msra.mxu0 0.0
    %2978 = vmatprep.subr.mxu0 0.0
    %2979 = vmatpush1.msra.mxu0 0.0
    %2980 = vmatprep.subr.mxu0 0.0
    %2981 = vmatpush1.msra.mxu0 0.0
    %2982 = vmatprep.subr.mxu0 0.0
    %2983 = vmatpush1.msra.mxu0 0.0
    %2984 = vmatprep.subr.mxu0 0.0
    %2985 = vmatpush1.msra.mxu0 0.0
    %2986 = vmatprep.subr.mxu0 0.0
    %2987 = vmatpush1.msra.mxu0 0.0
    %2988 = vmatprep.subr.mxu0 0.0
    %2989 = vmatpush1.msra.mxu0 0.0
    %2990 = vmatprep.subr.mxu0 0.0
    %2991 = vmatpush1.msra.mxu0 0.0
    %2992 = vmatprep.subr.mxu0 0.0
    %2993 = vmatpush1.msra.mxu0 0.0
    %2994 = vmatprep.subr.mxu0 0.0
    %2995 = vmatpush1.msra.mxu0 0.0
    %2996 = vmatprep.subr.mxu0 0.0
    %2997 = vmatpush1.msra.mxu0 0.0
    %2998 = vmatprep.mubr.f32.mxu0 0.0
    %2999 = vmatmul.mubr.f32.gmra.mrb[0].mxu0 %v2717
    %v3000 = vpop.f32.mrb[0].mxu0
    %v3001 = vadd.f32 %v2930, %v3000
    %v3002 = vpop.f32.mrb[0].mxu0
    %v3003 = vadd.f32 %v2932, %v3002
    %3004 = vdwg.mxu0
    %3005 = vmatprep.subr.mxu0 0.0
    %3006 = vmatpush1.msra.mxu0 %v2469
    %3007 = vmatprep.subr.mxu0 0.0
    %3008 = vmatpush1.msra.mxu0 %v2474
    %3009 = vmatprep.subr.mxu0 0.0
    %3010 = vmatpush1.msra.mxu0 %v2479
    %3011 = vmatprep.subr.mxu0 0.0
    %3012 = vmatpush1.msra.mxu0 %v2484
    %3013 = vmatprep.subr.mxu0 0.0
    %3014 = vmatpush1.msra.mxu0 %v2489
    %3015 = vmatprep.subr.mxu0 0.0
    %3016 = vmatpush1.msra.mxu0 %v2494
    %3017 = vmatprep.subr.mxu0 0.0
    %3018 = vmatpush1.msra.mxu0 %v2499
    %3019 = vmatprep.subr.mxu0 0.0
    %3020 = vmatpush1.msra.mxu0 %v2504
    %3021 = vmatprep.subr.mxu0 0.0
    %3022 = vmatpush1.msra.mxu0 %v2509
    %3023 = vmatprep.subr.mxu0 0.0
    %3024 = vmatpush1.msra.mxu0 %v2514
    %3025 = vmatprep.subr.mxu0 0.0
    %3026 = vmatpush1.msra.mxu0 %v2519
    %3027 = vmatprep.subr.mxu0 0.0
    %3028 = vmatpush1.msra.mxu0 %v2524
    %3029 = vmatprep.subr.mxu0 0.0
    %3030 = vmatpush1.msra.mxu0 %v2529
    %3031 = vmatprep.subr.mxu0 0.0
    %3032 = vmatpush1.msra.mxu0 %v2534
    %3033 = vmatprep.subr.mxu0 0.0
    %3034 = vmatpush1.msra.mxu0 %v2539
    %3035 = vmatprep.subr.mxu0 0.0
    %3036 = vmatpush1.msra.mxu0 %v2544
    %3037 = vmatprep.subr.mxu0 0.0
    %3038 = vmatpush1.msra.mxu0 %v2549
    %3039 = vmatprep.subr.mxu0 0.0
    %3040 = vmatpush1.msra.mxu0 %v2554
    %3041 = vmatprep.subr.mxu0 0.0
    %3042 = vmatpush1.msra.mxu0 %v2559
    %3043 = vmatprep.subr.mxu0 0.0
    %3044 = vmatpush1.msra.mxu0 %v2564
    %3045 = vmatprep.subr.mxu0 0.0
    %3046 = vmatpush1.msra.mxu0 %v2569
    %3047 = vmatprep.subr.mxu0 0.0
    %3048 = vmatpush1.msra.mxu0 %v2574
    %3049 = vmatprep.subr.mxu0 0.0
    %3050 = vmatpush1.msra.mxu0 %v2579
    %3051 = vmatprep.subr.mxu0 0.0
    %3052 = vmatpush1.msra.mxu0 %v2584
    %3053 = vmatprep.subr.mxu0 0.0
    %3054 = vmatpush1.msra.mxu0 %v2589
    %3055 = vmatprep.subr.mxu0 0.0
    %3056 = vmatpush1.msra.mxu0 %v2594
    %3057 = vmatprep.subr.mxu0 0.0
    %3058 = vmatpush1.msra.mxu0 %v2599
    %3059 = vmatprep.subr.mxu0 0.0
    %3060 = vmatpush1.msra.mxu0 %v2604
    %3061 = vmatprep.subr.mxu0 0.0
    %3062 = vmatpush1.msra.mxu0 %v2609
    %3063 = vmatprep.subr.mxu0 0.0
    %3064 = vmatpush1.msra.mxu0 %v2614
    %3065 = vmatprep.subr.mxu0 0.0
    %3066 = vmatpush1.msra.mxu0 %v2619
    %3067 = vmatprep.subr.mxu0 0.0
    %3068 = vmatpush1.msra.mxu0 %v2624
    %3069 = vmatprep.mubr.f32.mxu0 %v2713
    %3070 = vmatmul.mubr.f32.gmra.mrb[0].mxu0 %v2709
    %v3071 = vpop.f32.mrb[0].mxu0
    %v3072 = vadd.f32 0.0, %v3071
    %v3073 = vpop.f32.mrb[0].mxu0
    %3074 = vdwg.mxu0
    %3075 = vmatprep.subr.mxu0 0.0
    %3076 = vmatpush1.msra.mxu0 %v2629
    %3077 = vmatprep.subr.mxu0 0.0
    %3078 = vmatpush1.msra.mxu0 %v2634
    %3079 = vmatprep.subr.mxu0 0.0
    %3080 = vmatpush1.msra.mxu0 %v2639
    %3081 = vmatprep.subr.mxu0 0.0
    %3082 = vmatpush1.msra.mxu0 %v2644
    %3083 = vmatprep.subr.mxu0 0.0
    %3084 = vmatpush1.msra.mxu0 %v2649
    %3085 = vmatprep.subr.mxu0 0.0
    %3086 = vmatpush1.msra.mxu0 %v2654
    %3087 = vmatprep.subr.mxu0 0.0
    %3088 = vmatpush1.msra.mxu0 %v2659
    %3089 = vmatprep.subr.mxu0 0.0
    %3090 = vmatpush1.msra.mxu0 %v2664
    %3091 = vmatprep.subr.mxu0 0.0
    %3092 = vmatpush1.msra.mxu0 %v2669
    %3093 = vmatprep.subr.mxu0 0.0
    %3094 = vmatpush1.msra.mxu0 %v2674
    %3095 = vmatprep.subr.mxu0 0.0
    %3096 = vmatpush1.msra.mxu0 %v2679
    %3097 = vmatprep.subr.mxu0 0.0
    %3098 = vmatpush1.msra.mxu0 %v2684
    %3099 = vmatprep.subr.mxu0 0.0
    %3100 = vmatpush1.msra.mxu0 %v2689
    %3101 = vmatprep.subr.mxu0 0.0
    %3102 = vmatpush1.msra.mxu0 %v2694
    %3103 = vmatprep.subr.mxu0 0.0
    %3104 = vmatpush1.msra.mxu0 %v2699
    %3105 = vmatprep.subr.mxu0 0.0
    %3106 = vmatpush1.msra.mxu0 %v2704
    %3107 = vmatprep.subr.mxu0 0.0
    %3108 = vmatpush1.msra.mxu0 0.0
    %3109 = vmatprep.subr.mxu0 0.0
    %3110 = vmatpush1.msra.mxu0 0.0
    %3111 = vmatprep.subr.mxu0 0.0
    %3112 = vmatpush1.msra.mxu0 0.0
    %3113 = vmatprep.subr.mxu0 0.0
    %3114 = vmatpush1.msra.mxu0 0.0
    %3115 = vmatprep.subr.mxu0 0.0
    %3116 = vmatpush1.msra.mxu0 0.0
    %3117 = vmatprep.subr.mxu0 0.0
    %3118 = vmatpush1.msra.mxu0 0.0
    %3119 = vmatprep.subr.mxu0 0.0
    %3120 = vmatpush1.msra.mxu0 0.0
    %3121 = vmatprep.subr.mxu0 0.0
    %3122 = vmatpush1.msra.mxu0 0.0
    %3123 = vmatprep.subr.mxu0 0.0
    %3124 = vmatpush1.msra.mxu0 0.0
    %3125 = vmatprep.subr.mxu0 0.0
    %3126 = vmatpush1.msra.mxu0 0.0
    %3127 = vmatprep.subr.mxu0 0.0
    %3128 = vmatpush1.msra.mxu0 0.0
    %3129 = vmatprep.subr.mxu0 0.0
    %3130 = vmatpush1.msra.mxu0 0.0
    %3131 = vmatprep.subr.mxu0 0.0
    %3132 = vmatpush1.msra.mxu0 0.0
    %3133 = vmatprep.subr.mxu0 0.0
    %3134 = vmatpush1.msra.mxu0 0.0
    %3135 = vmatprep.subr.mxu0 0.0
    %3136 = vmatpush1.msra.mxu0 0.0
    %3137 = vmatprep.subr.mxu0 0.0
    %3138 = vmatpush1.msra.mxu0 0.0
    %3139 = vmatprep.mubr.f32.mxu0 0.0
    %3140 = vmatmul.mubr.f32.gmra.mrb[0].mxu0 %v2717
    %v3141 = vpop.f32.mrb[0].mxu0
    %v3142 = vadd.f32 %v3072, %v3141
    %v3143 = vpop.f32.mrb[0].mxu0
    %3144 = vdwg.mxu0
    %v3150 = vcombine.low %v2859, %v2861
    %v3151 = vcombine.low %v3001, %v3003
    %v3153 = vunpack.c.l.s4 1966171168
    %v3154 = vunpack.c.0.s8 %v3153
    %v3155 = vlaneseq
    %v3156 = vshrl.u32 %v3155, 7
    %v3157 = vsub.s32 %v3154, %v3156
    %v3158 = vrot.slane %v3150, %v3157
    %v3160 = vunpack.c.l.s4 1966171168
    %v3161 = vunpack.c.0.s8 %v3160
    %v3162 = vlaneseq
    %v3163 = vshrl.u32 %v3162, 7
    %v3164 = vsub.s32 %v3161, %v3163
    %v3165 = vrot.slane %v3151, %v3164
    %v3167 = vunpack.c.l.s4 1966171168
    %v3168 = vunpack.c.0.s8 %v3167
    %v3169 = vlaneseq
    %v3170 = vshrl.u32 %v3169, 7
    %v3171 = vsub.s32 %v3168, %v3170
    %v3172 = vrot.slane %v3142, %v3171
    %v3173 = vcombine.low %v3158, %v3165
    %v3175 = vunpack.c.l.s4 1966171168
    %v3176 = vunpack.c.0.s8 %v3175
    %v3177 = vlaneseq
    %v3178 = vshrl.u32 %v3177, 7
    %v3179 = vsub.s32 %v3176, %v3178
    %v3180 = vrot.slane %v3173, %v3179
    %v3182 = vunpack.c.l.s4 1966171168
    %v3183 = vunpack.c.0.s8 %v3182
    %v3184 = vlaneseq
    %v3185 = vshrl.u32 %v3184, 7
    %v3186 = vsub.s32 %v3183, %v3185
    %v3187 = vrot.slane %v3172, %v3186
    %v3188 = vcombine.low %v3180, %v3187
    %v3190 = vadd.f32 %v2464, %v3188
    %v3191 = vld [vmem:[#allocation7] sm:$0xff]
    %v3192 = vld [vmem:[#allocation7 + $0x8] sm:$0xff]
    %v3193 = vld [vmem:[#allocation7 + $0x10] sm:$0xff]
    %v3194 = vld [vmem:[#allocation7 + $0x18] sm:$0xff]
    %v3195 = vld [vmem:[#allocation7 + $0x20] sm:$0xff]
    %v3196 = vld [vmem:[#allocation7 + $0x28] sm:$0xff]
    %v3197 = vld [vmem:[#allocation7 + $0x30] sm:$0xff]
    %v3198 = vld [vmem:[#allocation7 + $0x38] sm:$0xff]
    %v3199 = vld [vmem:[#allocation7 + $0x40] sm:$0xff]
    %v3200 = vld [vmem:[#allocation7 + $0x48] sm:$0xff]
    %v3201 = vld [vmem:[#allocation7 + $0x50] sm:$0xff]
    %v3202 = vld [vmem:[#allocation7 + $0x58] sm:$0xff]
    %v3203 = vld [vmem:[#allocation7 + $0x60] sm:$0xff]
    %v3204 = vld [vmem:[#allocation7 + $0x68] sm:$0xff]
    %v3205 = vld [vmem:[#allocation7 + $0x70] sm:$0xff]
    %v3206 = vld [vmem:[#allocation7 + $0x78] sm:$0xff]
    %v3207 = vld [vmem:[#allocation7 + $0x80] sm:$0xff]
    %v3208 = vld [vmem:[#allocation7 + $0x88] sm:$0xff]
    %v3209 = vld [vmem:[#allocation7 + $0x90] sm:$0xff]
    %v3210 = vld [vmem:[#allocation7 + $0x98] sm:$0xff]
    %v3211 = vld [vmem:[#allocation7 + $0xa0] sm:$0xff]
    %v3212 = vld [vmem:[#allocation7 + $0xa8] sm:$0xff]
    %v3213 = vld [vmem:[#allocation7 + $0xb0] sm:$0xff]
    %v3214 = vld [vmem:[#allocation7 + $0xb8] sm:$0xff]
    %v3215 = vld [vmem:[#allocation7 + $0xc0] sm:$0xff]
    %v3216 = vld [vmem:[#allocation7 + $0xc8] sm:$0xff]
    %v3217 = vld [vmem:[#allocation7 + $0xd0] sm:$0xff]
    %v3218 = vld [vmem:[#allocation7 + $0xd8] sm:$0xff]
    %v3219 = vld [vmem:[#allocation7 + $0xe0] sm:$0xff]
    %v3220 = vld [vmem:[#allocation7 + $0xe8] sm:$0xff]
    %v3221 = vld [vmem:[#allocation7 + $0xf0] sm:$0xff]
    %v3222 = vld [vmem:[#allocation7 + $0xf8] sm:$0xff]
    %v3223 = vld [vmem:[#allocation7 + $0x100] sm:$0xff]
    %v3224 = vld [vmem:[#allocation7 + $0x108] sm:$0xff]
    %v3225 = vld [vmem:[#allocation7 + $0x110] sm:$0xff]
    %v3226 = vld [vmem:[#allocation7 + $0x118] sm:$0xff]
    %v3227 = vld [vmem:[#allocation7 + $0x120] sm:$0xff]
    %v3228 = vld [vmem:[#allocation7 + $0x128] sm:$0xff]
    %v3229 = vld [vmem:[#allocation7 + $0x130] sm:$0xff]
    %v3230 = vld [vmem:[#allocation7 + $0x138] sm:$0xff]
    %v3231 = vld [vmem:[#allocation7 + $0x140] sm:$0xff]
    %v3232 = vld [vmem:[#allocation7 + $0x148] sm:$0xff]
    %v3233 = vld [vmem:[#allocation7 + $0x150] sm:$0xff]
    %v3234 = vld [vmem:[#allocation7 + $0x158] sm:$0xff]
    %v3235 = vld [vmem:[#allocation7 + $0x160] sm:$0xff]
    %v3236 = vld [vmem:[#allocation7 + $0x168] sm:$0xff]
    %v3237 = vld [vmem:[#allocation7 + $0x170] sm:$0xff]
    %v3238 = vld [vmem:[#allocation7 + $0x178] sm:$0xff]
    %v3239 = vld [vmem:[#allocation7 + $0x180] sm:$0xff]
    %v3240 = vld [vmem:[#allocation7 + $0x188] sm:$0xff]
    %v3241 = vld [vmem:[#allocation7 + $0x190] sm:$0xff]
    %v3242 = vld [vmem:[#allocation7 + $0x198] sm:$0xff]
    %v3243 = vld [vmem:[#allocation7 + $0x1a0] sm:$0xff]
    %v3244 = vld [vmem:[#allocation7 + $0x1a8] sm:$0xff]
    %v3245 = vld [vmem:[#allocation7 + $0x1b0] sm:$0xff]
    %v3246 = vld [vmem:[#allocation7 + $0x1b8] sm:$0xff]
    %v3247 = vld [vmem:[#allocation7 + $0x1c0] sm:$0xff]
    %v3248 = vld [vmem:[#allocation7 + $0x1c8] sm:$0xff]
    %v3249 = vld [vmem:[#allocation7 + $0x1d0] sm:$0xff]
    %v3250 = vld [vmem:[#allocation7 + $0x1d8] sm:$0xff]
    %v3251 = vld [vmem:[#allocation7 + $0x1e0] sm:$0xff]
    %v3252 = vld [vmem:[#allocation7 + $0x1e8] sm:$0xff]
    %v3253 = vld [vmem:[#allocation7 + $0x1f0] sm:$0xff]
    %v3254 = vld [vmem:[#allocation7 + $0x1f8] sm:$0xff]
    %v3255 = vld [vmem:[#allocation7 + $0x200] sm:$0xff]
    %v3256 = vld [vmem:[#allocation7 + $0x208] sm:$0xff]
    %v3257 = vld [vmem:[#allocation7 + $0x210] sm:$0xff]
    %v3258 = vld [vmem:[#allocation7 + $0x218] sm:$0xff]
    %v3259 = vld [vmem:[#allocation7 + $0x220] sm:$0xff]
    %v3260 = vld [vmem:[#allocation7 + $0x228] sm:$0xff]
    %v3261 = vld [vmem:[#allocation7 + $0x230] sm:$0xff]
    %v3262 = vld [vmem:[#allocation7 + $0x238] sm:$0xff]
    %v3263 = vld [vmem:[#allocation7 + $0x240] sm:$0xff]
    %v3264 = vld [vmem:[#allocation7 + $0x248] sm:$0xff]
    %v3265 = vld [vmem:[#allocation7 + $0x250] sm:$0xff]
    %v3266 = vld [vmem:[#allocation7 + $0x258] sm:$0xff]
    %v3267 = vld [vmem:[#allocation7 + $0x260] sm:$0xff]
    %v3268 = vld [vmem:[#allocation7 + $0x268] sm:$0xff]
    %v3269 = vld [vmem:[#allocation7 + $0x270] sm:$0xff]
    %v3270 = vld [vmem:[#allocation7 + $0x278] sm:$0xff]
    %v3271 = vld [vmem:[#allocation7 + $0x280] sm:$0xff]
    %v3272 = vld [vmem:[#allocation7 + $0x288] sm:$0xff]
    %v3273 = vld [vmem:[#allocation7 + $0x290] sm:$0xff]
    %v3274 = vld [vmem:[#allocation7 + $0x298] sm:$0xff]
    %v3275 = vld [vmem:[#allocation7 + $0x2a0] sm:$0xff]
    %v3276 = vld [vmem:[#allocation7 + $0x2a8] sm:$0xff]
    %v3277 = vld [vmem:[#allocation7 + $0x2b0] sm:$0xff]
    %v3278 = vld [vmem:[#allocation7 + $0x2b8] sm:$0xff]
    %v3279 = vld [vmem:[#allocation7 + $0x2c0] sm:$0xff]
    %v3280 = vld [vmem:[#allocation7 + $0x2c8] sm:$0xff]
    %v3281 = vld [vmem:[#allocation7 + $0x2d0] sm:$0xff]
    %v3282 = vld [vmem:[#allocation7 + $0x2d8] sm:$0xff]
    %v3283 = vld [vmem:[#allocation7 + $0x2e0] sm:$0xff]
    %v3284 = vld [vmem:[#allocation7 + $0x2e8] sm:$0xff]
    %v3285 = vld [vmem:[#allocation7 + $0x2f0] sm:$0xff]
    %v3286 = vld [vmem:[#allocation7 + $0x2f8] sm:$0xff]
    %v3287 = vld [vmem:[#allocation7 + $0x300] sm:$0xff]
    %v3288 = vld [vmem:[#allocation7 + $0x308] sm:$0xff]
    %v3289 = vld [vmem:[#allocation7 + $0x310] sm:$0xff]
    %v3290 = vld [vmem:[#allocation7 + $0x318] sm:$0xff]
    %v3291 = vld [vmem:[#allocation7 + $0x320] sm:$0xff]
    %v3292 = vld [vmem:[#allocation7 + $0x328] sm:$0xff]
    %v3293 = vld [vmem:[#allocation7 + $0x330] sm:$0xff]
    %v3294 = vld [vmem:[#allocation7 + $0x338] sm:$0xff]
    %v3295 = vld [vmem:[#allocation7 + $0x340] sm:$0xff]
    %v3296 = vld [vmem:[#allocation7 + $0x348] sm:$0xff]
    %v3297 = vld [vmem:[#allocation7 + $0x350] sm:$0xff]
    %v3298 = vld [vmem:[#allocation7 + $0x358] sm:$0xff]
    %v3299 = vld [vmem:[#allocation7 + $0x360] sm:$0xff]
    %v3300 = vld [vmem:[#allocation7 + $0x368] sm:$0xff]
    %v3301 = vld [vmem:[#allocation7 + $0x370] sm:$0xff]
    %v3302 = vld [vmem:[#allocation7 + $0x378] sm:$0xff]
    %v3303 = vld [vmem:[#allocation7 + $0x380] sm:$0xff]
    %v3304 = vld [vmem:[#allocation7 + $0x388] sm:$0xff]
    %v3305 = vld [vmem:[#allocation7 + $0x390] sm:$0xff]
    %v3306 = vld [vmem:[#allocation7 + $0x398] sm:$0xff]
    %v3307 = vld [vmem:[#allocation7 + $0x3a0] sm:$0xff]
    %v3308 = vld [vmem:[#allocation7 + $0x3a8] sm:$0xff]
    %v3309 = vld [vmem:[#allocation7 + $0x3b0] sm:$0xff]
    %v3310 = vld [vmem:[#allocation7 + $0x3b8] sm:$0xff]
    %v3311 = vld [vmem:[#allocation7 + $0x3c0] sm:$0xff]
    %v3312 = vld [vmem:[#allocation7 + $0x3c8] sm:$0xff]
    %v3313 = vld [vmem:[#allocation7 + $0x3d0] sm:$0xff]
    %v3314 = vld [vmem:[#allocation7 + $0x3d8] sm:$0xff]
    %v3315 = vld [vmem:[#allocation7 + $0x3e0] sm:$0xff]
    %v3316 = vld [vmem:[#allocation7 + $0x3e8] sm:$0xff]
    %v3317 = vld [vmem:[#allocation7 + $0x3f0] sm:$0xff]
    %v3318 = vld [vmem:[#allocation7 + $0x3f8] sm:$0xff]
    %v3319 = vld [vmem:[#allocation7 + $0x400] sm:$0xff]
    %v3320 = vld [vmem:[#allocation7 + $0x408] sm:$0xff]
    %v3321 = vld [vmem:[#allocation7 + $0x410] sm:$0xff]
    %v3322 = vld [vmem:[#allocation7 + $0x418] sm:$0xff]
    %v3323 = vld [vmem:[#allocation7 + $0x420] sm:$0xff]
    %v3324 = vld [vmem:[#allocation7 + $0x428] sm:$0xff]
    %v3325 = vld [vmem:[#allocation7 + $0x430] sm:$0xff]
    %v3326 = vld [vmem:[#allocation7 + $0x438] sm:$0xff]
    %v3327 = vld [vmem:[#allocation7 + $0x440] sm:$0xff]
    %v3328 = vld [vmem:[#allocation7 + $0x448] sm:$0xff]
    %v3329 = vld [vmem:[#allocation7 + $0x450] sm:$0xff]
    %v3330 = vld [vmem:[#allocation7 + $0x458] sm:$0xff]
    %v3331 = vld [vmem:[#allocation7 + $0x460] sm:$0xff]
    %v3332 = vld [vmem:[#allocation7 + $0x468] sm:$0xff]
    %v3333 = vld [vmem:[#allocation7 + $0x470] sm:$0xff]
    %v3334 = vld [vmem:[#allocation7 + $0x478] sm:$0xff]
    %v3335 = vld [vmem:[#allocation7 + $0x480] sm:$0xff]
    %v3336 = vld [vmem:[#allocation7 + $0x488] sm:$0xff]
    %v3337 = vld [vmem:[#allocation7 + $0x490] sm:$0xff]
    %v3338 = vld [vmem:[#allocation7 + $0x498] sm:$0xff]
    %v3339 = vld [vmem:[#allocation7 + $0x4a0] sm:$0xff]
    %v3340 = vld [vmem:[#allocation7 + $0x4a8] sm:$0xff]
    %v3341 = vld [vmem:[#allocation7 + $0x4b0] sm:$0xff]
    %v3342 = vld [vmem:[#allocation7 + $0x4b8] sm:$0xff]
    %v3343 = vld [vmem:[#allocation7 + $0x4c0] sm:$0xff]
    %v3344 = vld [vmem:[#allocation7 + $0x4c8] sm:$0xff]
    %v3345 = vld [vmem:[#allocation7 + $0x4d0] sm:$0xff]
    %v3346 = vld [vmem:[#allocation7 + $0x4d8] sm:$0xff]
    %v3347 = vld [vmem:[#allocation7 + $0x4e0] sm:$0xff]
    %v3348 = vld [vmem:[#allocation7 + $0x4e8] sm:$0xff]
    %v3349 = vld [vmem:[#allocation7 + $0x4f0] sm:$0xff]
    %v3350 = vld [vmem:[#allocation7 + $0x4f8] sm:$0xff]
    %v3351 = vld [vmem:[%s4] sm:$0x3]
    %v3353 = vlaneseq
    %v3354 = vshrl.u32 %v3353, 7
    %v3355 = vsub.s32 0, %v3354
    %v3356 = vrot.slane %v3190, %v3355
    %v3357 = vlaneseq
    %v3358 = vshrl.u32 %v3357, 7
    %v3359 = vsub.s32 1, %v3358
    %v3360 = vrot.slane %v3190, %v3359
    %v3361 = vlaneseq
    %v3362 = vshrl.u32 %v3361, 7
    %v3363 = vsub.s32 2, %v3362
    %v3364 = vrot.slane %v3190, %v3363
    %v3365 = vlaneseq
    %v3366 = vshrl.u32 %v3365, 7
    %v3367 = vsub.s32 3, %v3366
    %v3368 = vrot.slane %v3190, %v3367
    %v3369 = vlaneseq
    %v3370 = vshrl.u32 %v3369, 7
    %v3371 = vsub.s32 4, %v3370
    %v3372 = vrot.slane %v3190, %v3371
    %v3379 = vlaneseq
    %v3380 = vshrl.u32 %v3379, 7
    %v3381 = vsub.s32 0, %v3380
    %v3382 = vrot.slane %v3351, %v3381
    %v3383 = vlaneseq
    %v3384 = vshrl.u32 %v3383, 7
    %v3385 = vsub.s32 1, %v3384
    %v3386 = vrot.slane %v3351, %v3385
    %3389 = vmatprep.subr.mxu0 %v3192
    %3390 = vmatpush1.msra.mxu0 %v3191
    %3391 = vmatprep.subr.mxu0 %v3194
    %3392 = vmatpush1.msra.mxu0 %v3193
    %3393 = vmatprep.subr.mxu0 %v3196
    %3394 = vmatpush1.msra.mxu0 %v3195
    %3395 = vmatprep.subr.mxu0 %v3198
    %3396 = vmatpush1.msra.mxu0 %v3197
    %3397 = vmatprep.subr.mxu0 %v3200
    %3398 = vmatpush1.msra.mxu0 %v3199
    %3399 = vmatprep.subr.mxu0 %v3202
    %3400 = vmatpush1.msra.mxu0 %v3201
    %3401 = vmatprep.subr.mxu0 %v3204
    %3402 = vmatpush1.msra.mxu0 %v3203
    %3403 = vmatprep.subr.mxu0 %v3206
    %3404 = vmatpush1.msra.mxu0 %v3205
    %3405 = vmatprep.subr.mxu0 %v3208
    %3406 = vmatpush1.msra.mxu0 %v3207
    %3407 = vmatprep.subr.mxu0 %v3210
    %3408 = vmatpush1.msra.mxu0 %v3209
    %3409 = vmatprep.subr.mxu0 %v3212
    %3410 = vmatpush1.msra.mxu0 %v3211
    %3411 = vmatprep.subr.mxu0 %v3214
    %3412 = vmatpush1.msra.mxu0 %v3213
    %3413 = vmatprep.subr.mxu0 %v3216
    %3414 = vmatpush1.msra.mxu0 %v3215
    %3415 = vmatprep.subr.mxu0 %v3218
    %3416 = vmatpush1.msra.mxu0 %v3217
    %3417 = vmatprep.subr.mxu0 %v3220
    %3418 = vmatpush1.msra.mxu0 %v3219
    %3419 = vmatprep.subr.mxu0 %v3222
    %3420 = vmatpush1.msra.mxu0 %v3221
    %3421 = vmatprep.subr.mxu0 %v3224
    %3422 = vmatpush1.msra.mxu0 %v3223
    %3423 = vmatprep.subr.mxu0 %v3226
    %3424 = vmatpush1.msra.mxu0 %v3225
    %3425 = vmatprep.subr.mxu0 %v3228
    %3426 = vmatpush1.msra.mxu0 %v3227
    %3427 = vmatprep.subr.mxu0 %v3230
    %3428 = vmatpush1.msra.mxu0 %v3229
    %3429 = vmatprep.subr.mxu0 %v3232
    %3430 = vmatpush1.msra.mxu0 %v3231
    %3431 = vmatprep.subr.mxu0 %v3234
    %3432 = vmatpush1.msra.mxu0 %v3233
    %3433 = vmatprep.subr.mxu0 %v3236
    %3434 = vmatpush1.msra.mxu0 %v3235
    %3435 = vmatprep.subr.mxu0 %v3238
    %3436 = vmatpush1.msra.mxu0 %v3237
    %3437 = vmatprep.subr.mxu0 %v3240
    %3438 = vmatpush1.msra.mxu0 %v3239
    %3439 = vmatprep.subr.mxu0 %v3242
    %3440 = vmatpush1.msra.mxu0 %v3241
    %3441 = vmatprep.subr.mxu0 %v3244
    %3442 = vmatpush1.msra.mxu0 %v3243
    %3443 = vmatprep.subr.mxu0 %v3246
    %3444 = vmatpush1.msra.mxu0 %v3245
    %3445 = vmatprep.subr.mxu0 %v3248
    %3446 = vmatpush1.msra.mxu0 %v3247
    %3447 = vmatprep.subr.mxu0 %v3250
    %3448 = vmatpush1.msra.mxu0 %v3249
    %3449 = vmatprep.subr.mxu0 %v3252
    %3450 = vmatpush1.msra.mxu0 %v3251
    %3451 = vmatprep.subr.mxu0 %v3254
    %3452 = vmatpush1.msra.mxu0 %v3253
    %3453 = vmatprep.mubr.f32.mxu0 %v3360
    %3454 = vmatmul.mubr.f32.gmra.mrb[0].mxu0 %v3356
    %v3455 = vpop.f32.mrb[0].mxu0
    %v3456 = vadd.f32 %v3382, %v3455
    %v3457 = vpop.f32.mrb[0].mxu0
    %v3458 = vadd.f32 %v3386, %v3457
    %3459 = vdwg.mxu0
    %3460 = vmatprep.subr.mxu0 %v3256
    %3461 = vmatpush1.msra.mxu0 %v3255
    %3462 = vmatprep.subr.mxu0 %v3258
    %3463 = vmatpush1.msra.mxu0 %v3257
    %3464 = vmatprep.subr.mxu0 %v3260
    %3465 = vmatpush1.msra.mxu0 %v3259
    %3466 = vmatprep.subr.mxu0 %v3262
    %3467 = vmatpush1.msra.mxu0 %v3261
    %3468 = vmatprep.subr.mxu0 %v3264
    %3469 = vmatpush1.msra.mxu0 %v3263
    %3470 = vmatprep.subr.mxu0 %v3266
    %3471 = vmatpush1.msra.mxu0 %v3265
    %3472 = vmatprep.subr.mxu0 %v3268
    %3473 = vmatpush1.msra.mxu0 %v3267
    %3474 = vmatprep.subr.mxu0 %v3270
    %3475 = vmatpush1.msra.mxu0 %v3269
    %3476 = vmatprep.subr.mxu0 %v3272
    %3477 = vmatpush1.msra.mxu0 %v3271
    %3478 = vmatprep.subr.mxu0 %v3274
    %3479 = vmatpush1.msra.mxu0 %v3273
    %3480 = vmatprep.subr.mxu0 %v3276
    %3481 = vmatpush1.msra.mxu0 %v3275
    %3482 = vmatprep.subr.mxu0 %v3278
    %3483 = vmatpush1.msra.mxu0 %v3277
    %3484 = vmatprep.subr.mxu0 %v3280
    %3485 = vmatpush1.msra.mxu0 %v3279
    %3486 = vmatprep.subr.mxu0 %v3282
    %3487 = vmatpush1.msra.mxu0 %v3281
    %3488 = vmatprep.subr.mxu0 %v3284
    %3489 = vmatpush1.msra.mxu0 %v3283
    %3490 = vmatprep.subr.mxu0 %v3286
    %3491 = vmatpush1.msra.mxu0 %v3285
    %3492 = vmatprep.subr.mxu0 %v3288
    %3493 = vmatpush1.msra.mxu0 %v3287
    %3494 = vmatprep.subr.mxu0 %v3290
    %3495 = vmatpush1.msra.mxu0 %v3289
    %3496 = vmatprep.subr.mxu0 %v3292
    %3497 = vmatpush1.msra.mxu0 %v3291
    %3498 = vmatprep.subr.mxu0 %v3294
    %3499 = vmatpush1.msra.mxu0 %v3293
    %3500 = vmatprep.subr.mxu0 %v3296
    %3501 = vmatpush1.msra.mxu0 %v3295
    %3502 = vmatprep.subr.mxu0 %v3298
    %3503 = vmatpush1.msra.mxu0 %v3297
    %3504 = vmatprep.subr.mxu0 %v3300
    %3505 = vmatpush1.msra.mxu0 %v3299
    %3506 = vmatprep.subr.mxu0 %v3302
    %3507 = vmatpush1.msra.mxu0 %v3301
    %3508 = vmatprep.subr.mxu0 %v3304
    %3509 = vmatpush1.msra.mxu0 %v3303
    %3510 = vmatprep.subr.mxu0 %v3306
    %3511 = vmatpush1.msra.mxu0 %v3305
    %3512 = vmatprep.subr.mxu0 %v3308
    %3513 = vmatpush1.msra.mxu0 %v3307
    %3514 = vmatprep.subr.mxu0 %v3310
    %3515 = vmatpush1.msra.mxu0 %v3309
    %3516 = vmatprep.subr.mxu0 %v3312
    %3517 = vmatpush1.msra.mxu0 %v3311
    %3518 = vmatprep.subr.mxu0 %v3314
    %3519 = vmatpush1.msra.mxu0 %v3313
    %3520 = vmatprep.subr.mxu0 %v3316
    %3521 = vmatpush1.msra.mxu0 %v3315
    %3522 = vmatprep.subr.mxu0 %v3318
    %3523 = vmatpush1.msra.mxu0 %v3317
    %3524 = vmatprep.mubr.f32.mxu0 %v3368
    %3525 = vmatmul.mubr.f32.gmra.mrb[0].mxu0 %v3364
    %v3526 = vpop.f32.mrb[0].mxu0
    %v3527 = vadd.f32 %v3456, %v3526
    %v3528 = vpop.f32.mrb[0].mxu0
    %v3529 = vadd.f32 %v3458, %v3528
    %3530 = vdwg.mxu0
    %3531 = vmatprep.subr.mxu0 %v3320
    %3532 = vmatpush1.msra.mxu0 %v3319
    %3533 = vmatprep.subr.mxu0 %v3322
    %3534 = vmatpush1.msra.mxu0 %v3321
    %3535 = vmatprep.subr.mxu0 %v3324
    %3536 = vmatpush1.msra.mxu0 %v3323
    %3537 = vmatprep.subr.mxu0 %v3326
    %3538 = vmatpush1.msra.mxu0 %v3325
    %3539 = vmatprep.subr.mxu0 %v3328
    %3540 = vmatpush1.msra.mxu0 %v3327
    %3541 = vmatprep.subr.mxu0 %v3330
    %3542 = vmatpush1.msra.mxu0 %v3329
    %3543 = vmatprep.subr.mxu0 %v3332
    %3544 = vmatpush1.msra.mxu0 %v3331
    %3545 = vmatprep.subr.mxu0 %v3334
    %3546 = vmatpush1.msra.mxu0 %v3333
    %3547 = vmatprep.subr.mxu0 %v3336
    %3548 = vmatpush1.msra.mxu0 %v3335
    %3549 = vmatprep.subr.mxu0 %v3338
    %3550 = vmatpush1.msra.mxu0 %v3337
    %3551 = vmatprep.subr.mxu0 %v3340
    %3552 = vmatpush1.msra.mxu0 %v3339
    %3553 = vmatprep.subr.mxu0 %v3342
    %3554 = vmatpush1.msra.mxu0 %v3341
    %3555 = vmatprep.subr.mxu0 %v3344
    %3556 = vmatpush1.msra.mxu0 %v3343
    %3557 = vmatprep.subr.mxu0 %v3346
    %3558 = vmatpush1.msra.mxu0 %v3345
    %3559 = vmatprep.subr.mxu0 %v3348
    %3560 = vmatpush1.msra.mxu0 %v3347
    %3561 = vmatprep.subr.mxu0 %v3350
    %3562 = vmatpush1.msra.mxu0 %v3349
    %3563 = vmatprep.subr.mxu0 0.0
    %3564 = vmatpush1.msra.mxu0 0.0
    %3565 = vmatprep.subr.mxu0 0.0
    %3566 = vmatpush1.msra.mxu0 0.0
    %3567 = vmatprep.subr.mxu0 0.0
    %3568 = vmatpush1.msra.mxu0 0.0
    %3569 = vmatprep.subr.mxu0 0.0
    %3570 = vmatpush1.msra.mxu0 0.0
    %3571 = vmatprep.subr.mxu0 0.0
    %3572 = vmatpush1.msra.mxu0 0.0
    %3573 = vmatprep.subr.mxu0 0.0
    %3574 = vmatpush1.msra.mxu0 0.0
    %3575 = vmatprep.subr.mxu0 0.0
    %3576 = vmatpush1.msra.mxu0 0.0
    %3577 = vmatprep.subr.mxu0 0.0
    %3578 = vmatpush1.msra.mxu0 0.0
    %3579 = vmatprep.subr.mxu0 0.0
    %3580 = vmatpush1.msra.mxu0 0.0
    %3581 = vmatprep.subr.mxu0 0.0
    %3582 = vmatpush1.msra.mxu0 0.0
    %3583 = vmatprep.subr.mxu0 0.0
    %3584 = vmatpush1.msra.mxu0 0.0
    %3585 = vmatprep.subr.mxu0 0.0
    %3586 = vmatpush1.msra.mxu0 0.0
    %3587 = vmatprep.subr.mxu0 0.0
    %3588 = vmatpush1.msra.mxu0 0.0
    %3589 = vmatprep.subr.mxu0 0.0
    %3590 = vmatpush1.msra.mxu0 0.0
    %3591 = vmatprep.subr.mxu0 0.0
    %3592 = vmatpush1.msra.mxu0 0.0
    %3593 = vmatprep.subr.mxu0 0.0
    %3594 = vmatpush1.msra.mxu0 0.0
    %3595 = vmatprep.mubr.f32.mxu0 0.0
    %3596 = vmatmul.mubr.f32.gmra.mrb[0].mxu0 %v3372
    %v3597 = vpop.f32.mrb[0].mxu0
    %v3598 = vadd.f32 %v3527, %v3597
    %v3599 = vpop.f32.mrb[0].mxu0
    %v3600 = vadd.f32 %v3529, %v3599
    %3601 = vdwg.mxu0
    %v3602 = vsel %vm1215, %v3598, -inf
    %v3603 = vsel %vm1215, %v3600, -inf
    %v3604 = vmax.f32 %v3602, %v3603
    %3605 = vmax.xlane.f32.xlu0 %v3604
    %v3606 = vpop.xlane.xlu0 %3605
    %v3607 = vsub.f32 %v3598, %v3606
    %v3608 = vsub.f32 %v3600, %v3606
    %v3609 = vmul.f32 %v3607, 1.442695
    %v3610 = vpow.pop %v3609
    %v3611 = vmul.f32 %v3608, 1.442695
    %v3612 = vpow.pop %v3611
    %v3613 = vsel %vm1215, %v3610, 0.0
    %v3614 = vsel %vm1215, %v3612, 0.0
    %v3615 = vadd.f32 %v3613, %v3614
    %3616 = vadd.xlane.f32.xlu0 %v3615
    %v3617 = vpop.xlane.xlu0 %3616
    %v3618 = vlog2.pop %v3617
    %v3619 = vmul.f32 %v3618, 0.6931472
    %v3620 = vadd.f32 %v3606, %v3619
    %v3621 = vsub.f32 %v3598, %v3620
    %v3622 = vsub.f32 %v3600, %v3620
    %v3625 = vcombine.low %v3621, %v3622
    %v3627 = vunpack.c.l.s4 1966171168
    %v3628 = vunpack.c.0.s8 %v3627
    %v3629 = vlaneseq
    %v3630 = vshrl.u32 %v3629, 7
    %v3631 = vsub.s32 %v3628, %v3630
    %v3632 = vrot.slane %v3625, %v3631
    %v3634 = vunpack.c.l.s4 1966171168
    %v3635 = vunpack.c.0.s8 %v3634
    %v3636 = vlaneseq
    %v3637 = vshrl.u32 %v3636, 7
    %v3638 = vsub.s32 %v3635, %v3637
    %v3639 = vrot.slane %v3632, %v3638
    %s3641 = scalar_lea.vmem [#allocation8], 2
    %3642 = vst.msk [vmem:[%s3641] ss:$8 sm:$0x3] %vm1258, %v3639
    %3643 = vst.msk [vmem:[%s3641] ss:$8 sm:$0x0] %vm1258, %v3639
    %s3644 = sadd.s32 %s73, 2
    %p3645 = scmp.lt.s32.totalorder %s3644, 1
    %s3646 = scalar_select %p3645, 1, 0
    %v3647 = vstv %s3646
    %vm3648 = vcmp.eq.s32.totalorder %v3647, 1
    %v3649 = vsel %vm3648, %v3190, %v2460
    %3650 = vst.msk [vmem:[#allocation9] sm:$0x7] %vm1267, %v3649
    %v3651 = vld [vmem:[#allocation9] sm:$0x7]
    %s3652 = scalar_lea.vmem [#allocation2], 3
    %v3653 = vld [vmem:[%s3652] ss:$8 sm:$0xf]
    %v3654 = vld [vmem:[%s3652] ss:$8 sm:$0x10]
    %v3655 = vor.u32 %v3653, %v3654
    %v3656 = vld [vmem:[#allocation5] sm:$0xff]
    %v3657 = vld [vmem:[#allocation5 + $0x8] sm:$0xff]
    %v3658 = vld [vmem:[#allocation5 + $0x10] sm:$0xff]
    %v3659 = vld [vmem:[#allocation5 + $0x18] sm:$0xff]
    %v3660 = vld [vmem:[#allocation5 + $0x20] sm:$0xff]
    %v3661 = vld [vmem:[#allocation5 + $0x28] sm:$0xff]
    %v3662 = vld [vmem:[#allocation5 + $0x30] sm:$0xff]
    %v3663 = vld [vmem:[#allocation5 + $0x38] sm:$0xff]
    %v3664 = vld [vmem:[#allocation5 + $0x40] sm:$0xff]
    %v3665 = vld [vmem:[#allocation5 + $0x48] sm:$0xff]
    %v3666 = vld [vmem:[#allocation5 + $0x50] sm:$0xff]
    %v3667 = vld [vmem:[#allocation5 + $0x58] sm:$0xff]
    %v3668 = vld [vmem:[#allocation5 + $0x60] sm:$0xff]
    %v3669 = vld [vmem:[#allocation5 + $0x68] sm:$0xff]
    %v3670 = vld [vmem:[#allocation5 + $0x70] sm:$0xff]
    %v3671 = vld [vmem:[#allocation5 + $0x78] sm:$0xff]
    %v3672 = vld [vmem:[#allocation5 + $0x80] sm:$0xff]
    %v3673 = vld [vmem:[#allocation5 + $0x88] sm:$0xff]
    %v3674 = vld [vmem:[#allocation5 + $0x90] sm:$0xff]
    %v3675 = vld [vmem:[#allocation5 + $0x98] sm:$0xff]
    %v3676 = vld [vmem:[#allocation5 + $0xa0] sm:$0xff]
    %v3677 = vld [vmem:[#allocation5 + $0xa8] sm:$0xff]
    %v3678 = vld [vmem:[#allocation5 + $0xb0] sm:$0xff]
    %v3679 = vld [vmem:[#allocation5 + $0xb8] sm:$0xff]
    %v3680 = vld [vmem:[#allocation5 + $0xc0] sm:$0xff]
    %v3681 = vld [vmem:[#allocation5 + $0xc8] sm:$0xff]
    %v3682 = vld [vmem:[#allocation5 + $0xd0] sm:$0xff]
    %v3683 = vld [vmem:[#allocation5 + $0xd8] sm:$0xff]
    %v3684 = vld [vmem:[#allocation5 + $0xe0] sm:$0xff]
    %v3685 = vld [vmem:[#allocation5 + $0xe8] sm:$0xff]
    %v3686 = vld [vmem:[#allocation5 + $0xf0] sm:$0xff]
    %v3687 = vld [vmem:[#allocation5 + $0xf8] sm:$0xff]
    %v3688 = vld [vmem:[#allocation5 + $0x100] sm:$0xff]
    %v3689 = vld [vmem:[#allocation5 + $0x108] sm:$0xff]
    %v3690 = vld [vmem:[#allocation5 + $0x110] sm:$0xff]
    %v3691 = vld [vmem:[#allocation5 + $0x118] sm:$0xff]
    %v3692 = vld [vmem:[#allocation5 + $0x120] sm:$0xff]
    %v3693 = vld [vmem:[#allocation5 + $0x128] sm:$0xff]
    %v3694 = vld [vmem:[#allocation5 + $0x130] sm:$0xff]
    %v3695 = vld [vmem:[#allocation5 + $0x138] sm:$0xff]
    %v3696 = vld [vmem:[#allocation5 + $0x140] sm:$0xff]
    %v3697 = vld [vmem:[#allocation5 + $0x148] sm:$0xff]
    %v3698 = vld [vmem:[#allocation5 + $0x150] sm:$0xff]
    %v3699 = vld [vmem:[#allocation5 + $0x158] sm:$0xff]
    %v3700 = vld [vmem:[#allocation5 + $0x160] sm:$0xff]
    %v3701 = vld [vmem:[#allocation5 + $0x168] sm:$0xff]
    %v3702 = vld [vmem:[#allocation5 + $0x170] sm:$0xff]
    %v3703 = vld [vmem:[#allocation5 + $0x178] sm:$0xff]
    %v3704 = vld [vmem:[#allocation5 + $0x180] sm:$0xff]
    %v3705 = vld [vmem:[#allocation5 + $0x188] sm:$0xff]
    %v3706 = vld [vmem:[#allocation5 + $0x190] sm:$0xff]
    %v3707 = vld [vmem:[#allocation5 + $0x198] sm:$0xff]
    %v3708 = vld [vmem:[#allocation5 + $0x1a0] sm:$0xff]
    %v3709 = vld [vmem:[#allocation5 + $0x1a8] sm:$0xff]
    %v3710 = vld [vmem:[#allocation5 + $0x1b0] sm:$0xff]
    %v3711 = vld [vmem:[#allocation5 + $0x1b8] sm:$0xff]
    %v3712 = vld [vmem:[#allocation5 + $0x1c0] sm:$0xff]
    %v3713 = vld [vmem:[#allocation5 + $0x1c8] sm:$0xff]
    %v3714 = vld [vmem:[#allocation5 + $0x1d0] sm:$0xff]
    %v3715 = vld [vmem:[#allocation5 + $0x1d8] sm:$0xff]
    %v3716 = vld [vmem:[#allocation5 + $0x1e0] sm:$0xff]
    %v3717 = vld [vmem:[#allocation5 + $0x1e8] sm:$0xff]
    %v3718 = vld [vmem:[#allocation5 + $0x1f0] sm:$0xff]
    %v3719 = vld [vmem:[#allocation5 + $0x1f8] sm:$0xff]
    %v3720 = vld [vmem:[#allocation5 + $0x200] sm:$0xff]
    %v3721 = vld [vmem:[#allocation5 + $0x208] sm:$0xff]
    %v3722 = vld [vmem:[#allocation5 + $0x210] sm:$0xff]
    %v3723 = vld [vmem:[#allocation5 + $0x218] sm:$0xff]
    %v3724 = vld [vmem:[#allocation5 + $0x220] sm:$0xff]
    %v3725 = vld [vmem:[#allocation5 + $0x228] sm:$0xff]
    %v3726 = vld [vmem:[#allocation5 + $0x230] sm:$0xff]
    %v3727 = vld [vmem:[#allocation5 + $0x238] sm:$0xff]
    %v3728 = vld [vmem:[#allocation5 + $0x240] sm:$0xff]
    %v3729 = vld [vmem:[#allocation5 + $0x248] sm:$0xff]
    %v3730 = vld [vmem:[#allocation5 + $0x250] sm:$0xff]
    %v3731 = vld [vmem:[#allocation5 + $0x258] sm:$0xff]
    %v3732 = vld [vmem:[#allocation5 + $0x260] sm:$0xff]
    %v3733 = vld [vmem:[#allocation5 + $0x268] sm:$0xff]
    %v3734 = vld [vmem:[#allocation5 + $0x270] sm:$0xff]
    %v3735 = vld [vmem:[#allocation5 + $0x278] sm:$0xff]
    %v3736 = vld [vmem:[#allocation5 + $0x280] sm:$0xff]
    %v3737 = vld [vmem:[#allocation5 + $0x288] sm:$0xff]
    %v3738 = vld [vmem:[#allocation5 + $0x290] sm:$0xff]
    %v3739 = vld [vmem:[#allocation5 + $0x298] sm:$0xff]
    %v3740 = vld [vmem:[#allocation5 + $0x2a0] sm:$0xff]
    %v3741 = vld [vmem:[#allocation5 + $0x2a8] sm:$0xff]
    %v3742 = vld [vmem:[#allocation5 + $0x2b0] sm:$0xff]
    %v3743 = vld [vmem:[#allocation5 + $0x2b8] sm:$0xff]
    %v3744 = vld [vmem:[#allocation5 + $0x2c0] sm:$0xff]
    %v3745 = vld [vmem:[#allocation5 + $0x2c8] sm:$0xff]
    %v3746 = vld [vmem:[#allocation5 + $0x2d0] sm:$0xff]
    %v3747 = vld [vmem:[#allocation5 + $0x2d8] sm:$0xff]
    %v3748 = vld [vmem:[#allocation5 + $0x2e0] sm:$0xff]
    %v3749 = vld [vmem:[#allocation5 + $0x2e8] sm:$0xff]
    %v3750 = vld [vmem:[#allocation5 + $0x2f0] sm:$0xff]
    %v3751 = vld [vmem:[#allocation5 + $0x2f8] sm:$0xff]
    %v3752 = vld [vmem:[#allocation5 + $0x300] sm:$0xff]
    %v3753 = vld [vmem:[#allocation5 + $0x308] sm:$0xff]
    %v3754 = vld [vmem:[#allocation5 + $0x310] sm:$0xff]
    %v3755 = vld [vmem:[#allocation5 + $0x318] sm:$0xff]
    %v3756 = vld [vmem:[#allocation5 + $0x320] sm:$0xff]
    %v3757 = vld [vmem:[#allocation5 + $0x328] sm:$0xff]
    %v3758 = vld [vmem:[#allocation5 + $0x330] sm:$0xff]
    %v3759 = vld [vmem:[#allocation5 + $0x338] sm:$0xff]
    %v3760 = vld [vmem:[#allocation5 + $0x340] sm:$0xff]
    %v3761 = vld [vmem:[#allocation5 + $0x348] sm:$0xff]
    %v3762 = vld [vmem:[#allocation5 + $0x350] sm:$0xff]
    %v3763 = vld [vmem:[#allocation5 + $0x358] sm:$0xff]
    %v3764 = vld [vmem:[#allocation5 + $0x360] sm:$0xff]
    %v3765 = vld [vmem:[#allocation5 + $0x368] sm:$0xff]
    %v3766 = vld [vmem:[#allocation5 + $0x370] sm:$0xff]
    %v3767 = vld [vmem:[#allocation5 + $0x378] sm:$0xff]
    %v3768 = vld [vmem:[#allocation5 + $0x380] sm:$0xff]
    %v3769 = vld [vmem:[#allocation5 + $0x388] sm:$0xff]
    %v3770 = vld [vmem:[#allocation5 + $0x390] sm:$0xff]
    %v3771 = vld [vmem:[#allocation5 + $0x398] sm:$0xff]
    %v3772 = vld [vmem:[#allocation5 + $0x3a0] sm:$0xff]
    %v3773 = vld [vmem:[#allocation5 + $0x3a8] sm:$0xff]
    %v3774 = vld [vmem:[#allocation5 + $0x3b0] sm:$0xff]
    %v3775 = vld [vmem:[#allocation5 + $0x3b8] sm:$0xff]
    %v3776 = vld [vmem:[#allocation5 + $0x3c0] sm:$0xff]
    %v3777 = vld [vmem:[#allocation5 + $0x3c8] sm:$0xff]
    %v3778 = vld [vmem:[#allocation5 + $0x3d0] sm:$0xff]
    %v3779 = vld [vmem:[#allocation5 + $0x3d8] sm:$0xff]
    %v3780 = vld [vmem:[#allocation5 + $0x3e0] sm:$0xff]
    %v3781 = vld [vmem:[#allocation5 + $0x3e8] sm:$0xff]
    %v3782 = vld [vmem:[#allocation5 + $0x3f0] sm:$0xff]
    %v3783 = vld [vmem:[#allocation5 + $0x3f8] sm:$0xff]
    %v3784 = vld [vmem:[#allocation5 + $0x400] sm:$0xff]
    %v3785 = vld [vmem:[#allocation5 + $0x408] sm:$0xff]
    %v3786 = vld [vmem:[#allocation5 + $0x410] sm:$0xff]
    %v3787 = vld [vmem:[#allocation5 + $0x418] sm:$0xff]
    %v3788 = vld [vmem:[#allocation5 + $0x420] sm:$0xff]
    %v3789 = vld [vmem:[#allocation5 + $0x428] sm:$0xff]
    %v3790 = vld [vmem:[#allocation5 + $0x430] sm:$0xff]
    %v3791 = vld [vmem:[#allocation5 + $0x438] sm:$0xff]
    %v3792 = vld [vmem:[#allocation5 + $0x440] sm:$0xff]
    %v3793 = vld [vmem:[#allocation5 + $0x448] sm:$0xff]
    %v3794 = vld [vmem:[#allocation5 + $0x450] sm:$0xff]
    %v3795 = vld [vmem:[#allocation5 + $0x458] sm:$0xff]
    %v3796 = vld [vmem:[#allocation5 + $0x460] sm:$0xff]
    %v3797 = vld [vmem:[#allocation5 + $0x468] sm:$0xff]
    %v3798 = vld [vmem:[#allocation5 + $0x470] sm:$0xff]
    %v3799 = vld [vmem:[#allocation5 + $0x478] sm:$0xff]
    %v3800 = vld [vmem:[#allocation5 + $0x480] sm:$0xff]
    %v3801 = vld [vmem:[#allocation5 + $0x488] sm:$0xff]
    %v3802 = vld [vmem:[#allocation5 + $0x490] sm:$0xff]
    %v3803 = vld [vmem:[#allocation5 + $0x498] sm:$0xff]
    %v3804 = vld [vmem:[#allocation5 + $0x4a0] sm:$0xff]
    %v3805 = vld [vmem:[#allocation5 + $0x4a8] sm:$0xff]
    %v3806 = vld [vmem:[#allocation5 + $0x4b0] sm:$0xff]
    %v3807 = vld [vmem:[#allocation5 + $0x4b8] sm:$0xff]
    %v3808 = vld [vmem:[#allocation5 + $0x4c0] sm:$0xff]
    %v3809 = vld [vmem:[#allocation5 + $0x4c8] sm:$0xff]
    %v3810 = vld [vmem:[#allocation5 + $0x4d0] sm:$0xff]
    %v3811 = vld [vmem:[#allocation5 + $0x4d8] sm:$0xff]
    %v3812 = vld [vmem:[#allocation5 + $0x4e0] sm:$0xff]
    %v3813 = vld [vmem:[#allocation5 + $0x4e8] sm:$0xff]
    %v3814 = vld [vmem:[#allocation5 + $0x4f0] sm:$0xff]
    %v3815 = vld [vmem:[#allocation5 + $0x4f8] sm:$0xff]
    %v3816 = vld [vmem:[#allocation5 + $0x500] sm:$0xff]
    %v3817 = vld [vmem:[#allocation5 + $0x508] sm:$0xff]
    %v3818 = vld [vmem:[#allocation5 + $0x510] sm:$0xff]
    %v3819 = vld [vmem:[#allocation5 + $0x518] sm:$0xff]
    %v3820 = vld [vmem:[#allocation5 + $0x520] sm:$0xff]
    %v3821 = vld [vmem:[#allocation5 + $0x528] sm:$0xff]
    %v3822 = vld [vmem:[#allocation5 + $0x530] sm:$0xff]
    %v3823 = vld [vmem:[#allocation5 + $0x538] sm:$0xff]
    %v3824 = vld [vmem:[#allocation5 + $0x540] sm:$0xff]
    %v3825 = vld [vmem:[#allocation5 + $0x548] sm:$0xff]
    %v3826 = vld [vmem:[#allocation5 + $0x550] sm:$0xff]
    %v3827 = vld [vmem:[#allocation5 + $0x558] sm:$0xff]
    %v3828 = vld [vmem:[#allocation5 + $0x560] sm:$0xff]
    %v3829 = vld [vmem:[#allocation5 + $0x568] sm:$0xff]
    %v3830 = vld [vmem:[#allocation5 + $0x570] sm:$0xff]
    %v3831 = vld [vmem:[#allocation5 + $0x578] sm:$0xff]
    %v3832 = vld [vmem:[#allocation5 + $0x580] sm:$0xff]
    %v3833 = vld [vmem:[#allocation5 + $0x588] sm:$0xff]
    %v3834 = vld [vmem:[#allocation5 + $0x590] sm:$0xff]
    %v3835 = vld [vmem:[#allocation5 + $0x598] sm:$0xff]
    %v3836 = vld [vmem:[#allocation5 + $0x5a0] sm:$0xff]
    %v3837 = vld [vmem:[#allocation5 + $0x5a8] sm:$0xff]
    %v3838 = vld [vmem:[#allocation5 + $0x5b0] sm:$0xff]
    %v3839 = vld [vmem:[#allocation5 + $0x5b8] sm:$0xff]
    %v3840 = vld [vmem:[#allocation5 + $0x5c0] sm:$0xff]
    %v3841 = vld [vmem:[#allocation5 + $0x5c8] sm:$0xff]
    %v3842 = vld [vmem:[#allocation5 + $0x5d0] sm:$0xff]
    %v3843 = vld [vmem:[#allocation5 + $0x5d8] sm:$0xff]
    %v3844 = vld [vmem:[#allocation5 + $0x5e0] sm:$0xff]
    %v3845 = vld [vmem:[#allocation5 + $0x5e8] sm:$0xff]
    %v3846 = vld [vmem:[#allocation5 + $0x5f0] sm:$0xff]
    %v3847 = vld [vmem:[#allocation5 + $0x5f8] sm:$0xff]
    %v3848 = vld [vmem:[#allocation5 + $0x600] sm:$0xff]
    %v3849 = vld [vmem:[#allocation5 + $0x608] sm:$0xff]
    %v3850 = vld [vmem:[#allocation5 + $0x610] sm:$0xff]
    %v3851 = vld [vmem:[#allocation5 + $0x618] sm:$0xff]
    %v3852 = vld [vmem:[#allocation5 + $0x620] sm:$0xff]
    %v3853 = vld [vmem:[#allocation5 + $0x628] sm:$0xff]
    %v3854 = vld [vmem:[#allocation5 + $0x630] sm:$0xff]
    %v3855 = vld [vmem:[#allocation5 + $0x638] sm:$0xff]
    %v3856 = vld [vmem:[#allocation5 + $0x640] sm:$0xff]
    %v3857 = vld [vmem:[#allocation5 + $0x648] sm:$0xff]
    %v3858 = vld [vmem:[#allocation5 + $0x650] sm:$0xff]
    %v3859 = vld [vmem:[#allocation5 + $0x658] sm:$0xff]
    %v3860 = vld [vmem:[#allocation5 + $0x660] sm:$0xff]
    %v3861 = vld [vmem:[#allocation5 + $0x668] sm:$0xff]
    %v3862 = vld [vmem:[#allocation5 + $0x670] sm:$0xff]
    %v3863 = vld [vmem:[#allocation5 + $0x678] sm:$0xff]
    %v3864 = vld [vmem:[#allocation5 + $0x680] sm:$0xff]
    %v3865 = vld [vmem:[#allocation5 + $0x688] sm:$0xff]
    %v3866 = vld [vmem:[#allocation5 + $0x690] sm:$0xff]
    %v3867 = vld [vmem:[#allocation5 + $0x698] sm:$0xff]
    %v3868 = vld [vmem:[#allocation5 + $0x6a0] sm:$0xff]
    %v3869 = vld [vmem:[#allocation5 + $0x6a8] sm:$0xff]
    %v3870 = vld [vmem:[#allocation5 + $0x6b0] sm:$0xff]
    %v3871 = vld [vmem:[#allocation5 + $0x6b8] sm:$0xff]
    %v3872 = vld [vmem:[#allocation5 + $0x6c0] sm:$0xff]
    %v3873 = vld [vmem:[#allocation5 + $0x6c8] sm:$0xff]
    %v3874 = vld [vmem:[#allocation5 + $0x6d0] sm:$0xff]
    %v3875 = vld [vmem:[#allocation5 + $0x6d8] sm:$0xff]
    %v3876 = vld [vmem:[#allocation5 + $0x6e0] sm:$0xff]
    %v3877 = vld [vmem:[#allocation5 + $0x6e8] sm:$0xff]
    %v3878 = vld [vmem:[#allocation5 + $0x6f0] sm:$0xff]
    %v3879 = vld [vmem:[#allocation5 + $0x6f8] sm:$0xff]
    %v3880 = vld [vmem:[#allocation5 + $0x700] sm:$0xff]
    %v3881 = vld [vmem:[#allocation5 + $0x708] sm:$0xff]
    %v3882 = vld [vmem:[#allocation5 + $0x710] sm:$0xff]
    %v3883 = vld [vmem:[#allocation5 + $0x718] sm:$0xff]
    %v3884 = vld [vmem:[#allocation5 + $0x720] sm:$0xff]
    %v3885 = vld [vmem:[#allocation5 + $0x728] sm:$0xff]
    %v3886 = vld [vmem:[#allocation5 + $0x730] sm:$0xff]
    %v3887 = vld [vmem:[#allocation5 + $0x738] sm:$0xff]
    %v3888 = vld [vmem:[#allocation5 + $0x740] sm:$0xff]
    %v3889 = vld [vmem:[#allocation5 + $0x748] sm:$0xff]
    %v3890 = vld [vmem:[#allocation5 + $0x750] sm:$0xff]
    %v3891 = vld [vmem:[#allocation5 + $0x758] sm:$0xff]
    %v3892 = vld [vmem:[#allocation5 + $0x760] sm:$0xff]
    %v3893 = vld [vmem:[#allocation5 + $0x768] sm:$0xff]
    %v3894 = vld [vmem:[#allocation5 + $0x770] sm:$0xff]
    %v3895 = vld [vmem:[#allocation5 + $0x778] sm:$0xff]
    %v3897 = vlaneseq
    %v3898 = vshrl.u32 %v3897, 7
    %v3899 = vsub.s32 0, %v3898
    %v3900 = vrot.slane %v3651, %v3899
    %v3901 = vlaneseq
    %v3902 = vshrl.u32 %v3901, 7
    %v3903 = vsub.s32 1, %v3902
    %v3904 = vrot.slane %v3651, %v3903
    %v3905 = vlaneseq
    %v3906 = vshrl.u32 %v3905, 7
    %v3907 = vsub.s32 2, %v3906
    %v3908 = vrot.slane %v3651, %v3907
    %3912 = vmatprep.subr.mxu0 %v3657
    %3913 = vmatpush1.msra.mxu0 %v3656
    %3914 = vmatprep.subr.mxu0 %v3662
    %3915 = vmatpush1.msra.mxu0 %v3661
    %3916 = vmatprep.subr.mxu0 %v3667
    %3917 = vmatpush1.msra.mxu0 %v3666
    %3918 = vmatprep.subr.mxu0 %v3672
    %3919 = vmatpush1.msra.mxu0 %v3671
    %3920 = vmatprep.subr.mxu0 %v3677
    %3921 = vmatpush1.msra.mxu0 %v3676
    %3922 = vmatprep.subr.mxu0 %v3682
    %3923 = vmatpush1.msra.mxu0 %v3681
    %3924 = vmatprep.subr.mxu0 %v3687
    %3925 = vmatpush1.msra.mxu0 %v3686
    %3926 = vmatprep.subr.mxu0 %v3692
    %3927 = vmatpush1.msra.mxu0 %v3691
    %3928 = vmatprep.subr.mxu0 %v3697
    %3929 = vmatpush1.msra.mxu0 %v3696
    %3930 = vmatprep.subr.mxu0 %v3702
    %3931 = vmatpush1.msra.mxu0 %v3701
    %3932 = vmatprep.subr.mxu0 %v3707
    %3933 = vmatpush1.msra.mxu0 %v3706
    %3934 = vmatprep.subr.mxu0 %v3712
    %3935 = vmatpush1.msra.mxu0 %v3711
    %3936 = vmatprep.subr.mxu0 %v3717
    %3937 = vmatpush1.msra.mxu0 %v3716
    %3938 = vmatprep.subr.mxu0 %v3722
    %3939 = vmatpush1.msra.mxu0 %v3721
    %3940 = vmatprep.subr.mxu0 %v3727
    %3941 = vmatpush1.msra.mxu0 %v3726
    %3942 = vmatprep.subr.mxu0 %v3732
    %3943 = vmatpush1.msra.mxu0 %v3731
    %3944 = vmatprep.subr.mxu0 %v3737
    %3945 = vmatpush1.msra.mxu0 %v3736
    %3946 = vmatprep.subr.mxu0 %v3742
    %3947 = vmatpush1.msra.mxu0 %v3741
    %3948 = vmatprep.subr.mxu0 %v3747
    %3949 = vmatpush1.msra.mxu0 %v3746
    %3950 = vmatprep.subr.mxu0 %v3752
    %3951 = vmatpush1.msra.mxu0 %v3751
    %3952 = vmatprep.subr.mxu0 %v3757
    %3953 = vmatpush1.msra.mxu0 %v3756
    %3954 = vmatprep.subr.mxu0 %v3762
    %3955 = vmatpush1.msra.mxu0 %v3761
    %3956 = vmatprep.subr.mxu0 %v3767
    %3957 = vmatpush1.msra.mxu0 %v3766
    %3958 = vmatprep.subr.mxu0 %v3772
    %3959 = vmatpush1.msra.mxu0 %v3771
    %3960 = vmatprep.subr.mxu0 %v3777
    %3961 = vmatpush1.msra.mxu0 %v3776
    %3962 = vmatprep.subr.mxu0 %v3782
    %3963 = vmatpush1.msra.mxu0 %v3781
    %3964 = vmatprep.subr.mxu0 %v3787
    %3965 = vmatpush1.msra.mxu0 %v3786
    %3966 = vmatprep.subr.mxu0 %v3792
    %3967 = vmatpush1.msra.mxu0 %v3791
    %3968 = vmatprep.subr.mxu0 %v3797
    %3969 = vmatpush1.msra.mxu0 %v3796
    %3970 = vmatprep.subr.mxu0 %v3802
    %3971 = vmatpush1.msra.mxu0 %v3801
    %3972 = vmatprep.subr.mxu0 %v3807
    %3973 = vmatpush1.msra.mxu0 %v3806
    %3974 = vmatprep.subr.mxu0 %v3812
    %3975 = vmatpush1.msra.mxu0 %v3811
    %3976 = vmatprep.mubr.f32.mxu0 %v3904
    %3977 = vmatmul.mubr.f32.gmra.mrb[0].mxu0 %v3900
    %v3978 = vpop.f32.mrb[0].mxu0
    %v3979 = vadd.f32 0.0, %v3978
    %v3980 = vpop.f32.mrb[0].mxu0
    %v3981 = vadd.f32 0.0, %v3980
    %3982 = vdwg.mxu0
    %3983 = vmatprep.subr.mxu0 %v3817
    %3984 = vmatpush1.msra.mxu0 %v3816
    %3985 = vmatprep.subr.mxu0 %v3822
    %3986 = vmatpush1.msra.mxu0 %v3821
    %3987 = vmatprep.subr.mxu0 %v3827
    %3988 = vmatpush1.msra.mxu0 %v3826
    %3989 = vmatprep.subr.mxu0 %v3832
    %3990 = vmatpush1.msra.mxu0 %v3831
    %3991 = vmatprep.subr.mxu0 %v3837
    %3992 = vmatpush1.msra.mxu0 %v3836
    %3993 = vmatprep.subr.mxu0 %v3842
    %3994 = vmatpush1.msra.mxu0 %v3841
    %3995 = vmatprep.subr.mxu0 %v3847
    %3996 = vmatpush1.msra.mxu0 %v3846
    %3997 = vmatprep.subr.mxu0 %v3852
    %3998 = vmatpush1.msra.mxu0 %v3851
    %3999 = vmatprep.subr.mxu0 %v3857
    %4000 = vmatpush1.msra.mxu0 %v3856
    %4001 = vmatprep.subr.mxu0 %v3862
    %4002 = vmatpush1.msra.mxu0 %v3861
    %4003 = vmatprep.subr.mxu0 %v3867
    %4004 = vmatpush1.msra.mxu0 %v3866
    %4005 = vmatprep.subr.mxu0 %v3872
    %4006 = vmatpush1.msra.mxu0 %v3871
    %4007 = vmatprep.subr.mxu0 %v3877
    %4008 = vmatpush1.msra.mxu0 %v3876
    %4009 = vmatprep.subr.mxu0 %v3882
    %4010 = vmatpush1.msra.mxu0 %v3881
    %4011 = vmatprep.subr.mxu0 %v3887
    %4012 = vmatpush1.msra.mxu0 %v3886
    %4013 = vmatprep.subr.mxu0 %v3892
    %4014 = vmatpush1.msra.mxu0 %v3891
    %4015 = vmatprep.subr.mxu0 0.0
    %4016 = vmatpush1.msra.mxu0 0.0
    %4017 = vmatprep.subr.mxu0 0.0
    %4018 = vmatpush1.msra.mxu0 0.0
    %4019 = vmatprep.subr.mxu0 0.0
    %4020 = vmatpush1.msra.mxu0 0.0
    %4021 = vmatprep.subr.mxu0 0.0
    %4022 = vmatpush1.msra.mxu0 0.0
    %4023 = vmatprep.subr.mxu0 0.0
    %4024 = vmatpush1.msra.mxu0 0.0
    %4025 = vmatprep.subr.mxu0 0.0
    %4026 = vmatpush1.msra.mxu0 0.0
    %4027 = vmatprep.subr.mxu0 0.0
    %4028 = vmatpush1.msra.mxu0 0.0
    %4029 = vmatprep.subr.mxu0 0.0
    %4030 = vmatpush1.msra.mxu0 0.0
    %4031 = vmatprep.subr.mxu0 0.0
    %4032 = vmatpush1.msra.mxu0 0.0
    %4033 = vmatprep.subr.mxu0 0.0
    %4034 = vmatpush1.msra.mxu0 0.0
    %4035 = vmatprep.subr.mxu0 0.0
    %4036 = vmatpush1.msra.mxu0 0.0
    %4037 = vmatprep.subr.mxu0 0.0
    %4038 = vmatpush1.msra.mxu0 0.0
    %4039 = vmatprep.subr.mxu0 0.0
    %4040 = vmatpush1.msra.mxu0 0.0
    %4041 = vmatprep.subr.mxu0 0.0
    %4042 = vmatpush1.msra.mxu0 0.0
    %4043 = vmatprep.subr.mxu0 0.0
    %4044 = vmatpush1.msra.mxu0 0.0
    %4045 = vmatprep.subr.mxu0 0.0
    %4046 = vmatpush1.msra.mxu0 0.0
    %4047 = vmatprep.mubr.f32.mxu0 0.0
    %4048 = vmatmul.mubr.f32.gmra.mrb[0].mxu0 %v3908
    %v4049 = vpop.f32.mrb[0].mxu0
    %v4050 = vadd.f32 %v3979, %v4049
    %v4051 = vpop.f32.mrb[0].mxu0
    %v4052 = vadd.f32 %v3981, %v4051
    %4053 = vdwg.mxu0
    %4054 = vmatprep.subr.mxu0 %v3659
    %4055 = vmatpush1.msra.mxu0 %v3658
    %4056 = vmatprep.subr.mxu0 %v3664
    %4057 = vmatpush1.msra.mxu0 %v3663
    %4058 = vmatprep.subr.mxu0 %v3669
    %4059 = vmatpush1.msra.mxu0 %v3668
    %4060 = vmatprep.subr.mxu0 %v3674
    %4061 = vmatpush1.msra.mxu0 %v3673
    %4062 = vmatprep.subr.mxu0 %v3679
    %4063 = vmatpush1.msra.mxu0 %v3678
    %4064 = vmatprep.subr.mxu0 %v3684
    %4065 = vmatpush1.msra.mxu0 %v3683
    %4066 = vmatprep.subr.mxu0 %v3689
    %4067 = vmatpush1.msra.mxu0 %v3688
    %4068 = vmatprep.subr.mxu0 %v3694
    %4069 = vmatpush1.msra.mxu0 %v3693
    %4070 = vmatprep.subr.mxu0 %v3699
    %4071 = vmatpush1.msra.mxu0 %v3698
    %4072 = vmatprep.subr.mxu0 %v3704
    %4073 = vmatpush1.msra.mxu0 %v3703
    %4074 = vmatprep.subr.mxu0 %v3709
    %4075 = vmatpush1.msra.mxu0 %v3708
    %4076 = vmatprep.subr.mxu0 %v3714
    %4077 = vmatpush1.msra.mxu0 %v3713
    %4078 = vmatprep.subr.mxu0 %v3719
    %4079 = vmatpush1.msra.mxu0 %v3718
    %4080 = vmatprep.subr.mxu0 %v3724
    %4081 = vmatpush1.msra.mxu0 %v3723
    %4082 = vmatprep.subr.mxu0 %v3729
    %4083 = vmatpush1.msra.mxu0 %v3728
    %4084 = vmatprep.subr.mxu0 %v3734
    %4085 = vmatpush1.msra.mxu0 %v3733
    %4086 = vmatprep.subr.mxu0 %v3739
    %4087 = vmatpush1.msra.mxu0 %v3738
    %4088 = vmatprep.subr.mxu0 %v3744
    %4089 = vmatpush1.msra.mxu0 %v3743
    %4090 = vmatprep.subr.mxu0 %v3749
    %4091 = vmatpush1.msra.mxu0 %v3748
    %4092 = vmatprep.subr.mxu0 %v3754
    %4093 = vmatpush1.msra.mxu0 %v3753
    %4094 = vmatprep.subr.mxu0 %v3759
    %4095 = vmatpush1.msra.mxu0 %v3758
    %4096 = vmatprep.subr.mxu0 %v3764
    %4097 = vmatpush1.msra.mxu0 %v3763
    %4098 = vmatprep.subr.mxu0 %v3769
    %4099 = vmatpush1.msra.mxu0 %v3768
    %4100 = vmatprep.subr.mxu0 %v3774
    %4101 = vmatpush1.msra.mxu0 %v3773
    %4102 = vmatprep.subr.mxu0 %v3779
    %4103 = vmatpush1.msra.mxu0 %v3778
    %4104 = vmatprep.subr.mxu0 %v3784
    %4105 = vmatpush1.msra.mxu0 %v3783
    %4106 = vmatprep.subr.mxu0 %v3789
    %4107 = vmatpush1.msra.mxu0 %v3788
    %4108 = vmatprep.subr.mxu0 %v3794
    %4109 = vmatpush1.msra.mxu0 %v3793
    %4110 = vmatprep.subr.mxu0 %v3799
    %4111 = vmatpush1.msra.mxu0 %v3798
    %4112 = vmatprep.subr.mxu0 %v3804
    %4113 = vmatpush1.msra.mxu0 %v3803
    %4114 = vmatprep.subr.mxu0 %v3809
    %4115 = vmatpush1.msra.mxu0 %v3808
    %4116 = vmatprep.subr.mxu0 %v3814
    %4117 = vmatpush1.msra.mxu0 %v3813
    %4118 = vmatprep.mubr.f32.mxu0 %v3904
    %4119 = vmatmul.mubr.f32.gmra.mrb[0].mxu0 %v3900
    %v4120 = vpop.f32.mrb[0].mxu0
    %v4121 = vadd.f32 0.0, %v4120
    %v4122 = vpop.f32.mrb[0].mxu0
    %v4123 = vadd.f32 0.0, %v4122
    %4124 = vdwg.mxu0
    %4125 = vmatprep.subr.mxu0 %v3819
    %4126 = vmatpush1.msra.mxu0 %v3818
    %4127 = vmatprep.subr.mxu0 %v3824
    %4128 = vmatpush1.msra.mxu0 %v3823
    %4129 = vmatprep.subr.mxu0 %v3829
    %4130 = vmatpush1.msra.mxu0 %v3828
    %4131 = vmatprep.subr.mxu0 %v3834
    %4132 = vmatpush1.msra.mxu0 %v3833
    %4133 = vmatprep.subr.mxu0 %v3839
    %4134 = vmatpush1.msra.mxu0 %v3838
    %4135 = vmatprep.subr.mxu0 %v3844
    %4136 = vmatpush1.msra.mxu0 %v3843
    %4137 = vmatprep.subr.mxu0 %v3849
    %4138 = vmatpush1.msra.mxu0 %v3848
    %4139 = vmatprep.subr.mxu0 %v3854
    %4140 = vmatpush1.msra.mxu0 %v3853
    %4141 = vmatprep.subr.mxu0 %v3859
    %4142 = vmatpush1.msra.mxu0 %v3858
    %4143 = vmatprep.subr.mxu0 %v3864
    %4144 = vmatpush1.msra.mxu0 %v3863
    %4145 = vmatprep.subr.mxu0 %v3869
    %4146 = vmatpush1.msra.mxu0 %v3868
    %4147 = vmatprep.subr.mxu0 %v3874
    %4148 = vmatpush1.msra.mxu0 %v3873
    %4149 = vmatprep.subr.mxu0 %v3879
    %4150 = vmatpush1.msra.mxu0 %v3878
    %4151 = vmatprep.subr.mxu0 %v3884
    %4152 = vmatpush1.msra.mxu0 %v3883
    %4153 = vmatprep.subr.mxu0 %v3889
    %4154 = vmatpush1.msra.mxu0 %v3888
    %4155 = vmatprep.subr.mxu0 %v3894
    %4156 = vmatpush1.msra.mxu0 %v3893
    %4157 = vmatprep.subr.mxu0 0.0
    %4158 = vmatpush1.msra.mxu0 0.0
    %4159 = vmatprep.subr.mxu0 0.0
    %4160 = vmatpush1.msra.mxu0 0.0
    %4161 = vmatprep.subr.mxu0 0.0
    %4162 = vmatpush1.msra.mxu0 0.0
    %4163 = vmatprep.subr.mxu0 0.0
    %4164 = vmatpush1.msra.mxu0 0.0
    %4165 = vmatprep.subr.mxu0 0.0
    %4166 = vmatpush1.msra.mxu0 0.0
    %4167 = vmatprep.subr.mxu0 0.0
    %4168 = vmatpush1.msra.mxu0 0.0
    %4169 = vmatprep.subr.mxu0 0.0
    %4170 = vmatpush1.msra.mxu0 0.0
    %4171 = vmatprep.subr.mxu0 0.0
    %4172 = vmatpush1.msra.mxu0 0.0
    %4173 = vmatprep.subr.mxu0 0.0
    %4174 = vmatpush1.msra.mxu0 0.0
    %4175 = vmatprep.subr.mxu0 0.0
    %4176 = vmatpush1.msra.mxu0 0.0
    %4177 = vmatprep.subr.mxu0 0.0
    %4178 = vmatpush1.msra.mxu0 0.0
    %4179 = vmatprep.subr.mxu0 0.0
    %4180 = vmatpush1.msra.mxu0 0.0
    %4181 = vmatprep.subr.mxu0 0.0
    %4182 = vmatpush1.msra.mxu0 0.0
    %4183 = vmatprep.subr.mxu0 0.0
    %4184 = vmatpush1.msra.mxu0 0.0
    %4185 = vmatprep.subr.mxu0 0.0
    %4186 = vmatpush1.msra.mxu0 0.0
    %4187 = vmatprep.subr.mxu0 0.0
    %4188 = vmatpush1.msra.mxu0 0.0
    %4189 = vmatprep.mubr.f32.mxu0 0.0
    %4190 = vmatmul.mubr.f32.gmra.mrb[0].mxu0 %v3908
    %v4191 = vpop.f32.mrb[0].mxu0
    %v4192 = vadd.f32 %v4121, %v4191
    %v4193 = vpop.f32.mrb[0].mxu0
    %v4194 = vadd.f32 %v4123, %v4193
    %4195 = vdwg.mxu0
    %4196 = vmatprep.subr.mxu0 0.0
    %4197 = vmatpush1.msra.mxu0 %v3660
    %4198 = vmatprep.subr.mxu0 0.0
    %4199 = vmatpush1.msra.mxu0 %v3665
    %4200 = vmatprep.subr.mxu0 0.0
    %4201 = vmatpush1.msra.mxu0 %v3670
    %4202 = vmatprep.subr.mxu0 0.0
    %4203 = vmatpush1.msra.mxu0 %v3675
    %4204 = vmatprep.subr.mxu0 0.0
    %4205 = vmatpush1.msra.mxu0 %v3680
    %4206 = vmatprep.subr.mxu0 0.0
    %4207 = vmatpush1.msra.mxu0 %v3685
    %4208 = vmatprep.subr.mxu0 0.0
    %4209 = vmatpush1.msra.mxu0 %v3690
    %4210 = vmatprep.subr.mxu0 0.0
    %4211 = vmatpush1.msra.mxu0 %v3695
    %4212 = vmatprep.subr.mxu0 0.0
    %4213 = vmatpush1.msra.mxu0 %v3700
    %4214 = vmatprep.subr.mxu0 0.0
    %4215 = vmatpush1.msra.mxu0 %v3705
    %4216 = vmatprep.subr.mxu0 0.0
    %4217 = vmatpush1.msra.mxu0 %v3710
    %4218 = vmatprep.subr.mxu0 0.0
    %4219 = vmatpush1.msra.mxu0 %v3715
    %4220 = vmatprep.subr.mxu0 0.0
    %4221 = vmatpush1.msra.mxu0 %v3720
    %4222 = vmatprep.subr.mxu0 0.0
    %4223 = vmatpush1.msra.mxu0 %v3725
    %4224 = vmatprep.subr.mxu0 0.0
    %4225 = vmatpush1.msra.mxu0 %v3730
    %4226 = vmatprep.subr.mxu0 0.0
    %4227 = vmatpush1.msra.mxu0 %v3735
    %4228 = vmatprep.subr.mxu0 0.0
    %4229 = vmatpush1.msra.mxu0 %v3740
    %4230 = vmatprep.subr.mxu0 0.0
    %4231 = vmatpush1.msra.mxu0 %v3745
    %4232 = vmatprep.subr.mxu0 0.0
    %4233 = vmatpush1.msra.mxu0 %v3750
    %4234 = vmatprep.subr.mxu0 0.0
    %4235 = vmatpush1.msra.mxu0 %v3755
    %4236 = vmatprep.subr.mxu0 0.0
    %4237 = vmatpush1.msra.mxu0 %v3760
    %4238 = vmatprep.subr.mxu0 0.0
    %4239 = vmatpush1.msra.mxu0 %v3765
    %4240 = vmatprep.subr.mxu0 0.0
    %4241 = vmatpush1.msra.mxu0 %v3770
    %4242 = vmatprep.subr.mxu0 0.0
    %4243 = vmatpush1.msra.mxu0 %v3775
    %4244 = vmatprep.subr.mxu0 0.0
    %4245 = vmatpush1.msra.mxu0 %v3780
    %4246 = vmatprep.subr.mxu0 0.0
    %4247 = vmatpush1.msra.mxu0 %v3785
    %4248 = vmatprep.subr.mxu0 0.0
    %4249 = vmatpush1.msra.mxu0 %v3790
    %4250 = vmatprep.subr.mxu0 0.0
    %4251 = vmatpush1.msra.mxu0 %v3795
    %4252 = vmatprep.subr.mxu0 0.0
    %4253 = vmatpush1.msra.mxu0 %v3800
    %4254 = vmatprep.subr.mxu0 0.0
    %4255 = vmatpush1.msra.mxu0 %v3805
    %4256 = vmatprep.subr.mxu0 0.0
    %4257 = vmatpush1.msra.mxu0 %v3810
    %4258 = vmatprep.subr.mxu0 0.0
    %4259 = vmatpush1.msra.mxu0 %v3815
    %4260 = vmatprep.mubr.f32.mxu0 %v3904
    %4261 = vmatmul.mubr.f32.gmra.mrb[0].mxu0 %v3900
    %v4262 = vpop.f32.mrb[0].mxu0
    %v4263 = vadd.f32 0.0, %v4262
    %v4264 = vpop.f32.mrb[0].mxu0
    %4265 = vdwg.mxu0
    %4266 = vmatprep.subr.mxu0 0.0
    %4267 = vmatpush1.msra.mxu0 %v3820
    %4268 = vmatprep.subr.mxu0 0.0
    %4269 = vmatpush1.msra.mxu0 %v3825
    %4270 = vmatprep.subr.mxu0 0.0
    %4271 = vmatpush1.msra.mxu0 %v3830
    %4272 = vmatprep.subr.mxu0 0.0
    %4273 = vmatpush1.msra.mxu0 %v3835
    %4274 = vmatprep.subr.mxu0 0.0
    %4275 = vmatpush1.msra.mxu0 %v3840
    %4276 = vmatprep.subr.mxu0 0.0
    %4277 = vmatpush1.msra.mxu0 %v3845
    %4278 = vmatprep.subr.mxu0 0.0
    %4279 = vmatpush1.msra.mxu0 %v3850
    %4280 = vmatprep.subr.mxu0 0.0
    %4281 = vmatpush1.msra.mxu0 %v3855
    %4282 = vmatprep.subr.mxu0 0.0
    %4283 = vmatpush1.msra.mxu0 %v3860
    %4284 = vmatprep.subr.mxu0 0.0
    %4285 = vmatpush1.msra.mxu0 %v3865
    %4286 = vmatprep.subr.mxu0 0.0
    %4287 = vmatpush1.msra.mxu0 %v3870
    %4288 = vmatprep.subr.mxu0 0.0
    %4289 = vmatpush1.msra.mxu0 %v3875
    %4290 = vmatprep.subr.mxu0 0.0
    %4291 = vmatpush1.msra.mxu0 %v3880
    %4292 = vmatprep.subr.mxu0 0.0
    %4293 = vmatpush1.msra.mxu0 %v3885
    %4294 = vmatprep.subr.mxu0 0.0
    %4295 = vmatpush1.msra.mxu0 %v3890
    %4296 = vmatprep.subr.mxu0 0.0
    %4297 = vmatpush1.msra.mxu0 %v3895
    %4298 = vmatprep.subr.mxu0 0.0
    %4299 = vmatpush1.msra.mxu0 0.0
    %4300 = vmatprep.subr.mxu0 0.0
    %4301 = vmatpush1.msra.mxu0 0.0
    %4302 = vmatprep.subr.mxu0 0.0
    %4303 = vmatpush1.msra.mxu0 0.0
    %4304 = vmatprep.subr.mxu0 0.0
    %4305 = vmatpush1.msra.mxu0 0.0
    %4306 = vmatprep.subr.mxu0 0.0
    %4307 = vmatpush1.msra.mxu0 0.0
    %4308 = vmatprep.subr.mxu0 0.0
    %4309 = vmatpush1.msra.mxu0 0.0
    %4310 = vmatprep.subr.mxu0 0.0
    %4311 = vmatpush1.msra.mxu0 0.0
    %4312 = vmatprep.subr.mxu0 0.0
    %4313 = vmatpush1.msra.mxu0 0.0
    %4314 = vmatprep.subr.mxu0 0.0
    %4315 = vmatpush1.msra.mxu0 0.0
    %4316 = vmatprep.subr.mxu0 0.0
    %4317 = vmatpush1.msra.mxu0 0.0
    %4318 = vmatprep.subr.mxu0 0.0
    %4319 = vmatpush1.msra.mxu0 0.0
    %4320 = vmatprep.subr.mxu0 0.0
    %4321 = vmatpush1.msra.mxu0 0.0
    %4322 = vmatprep.subr.mxu0 0.0
    %4323 = vmatpush1.msra.mxu0 0.0
    %4324 = vmatprep.subr.mxu0 0.0
    %4325 = vmatpush1.msra.mxu0 0.0
    %4326 = vmatprep.subr.mxu0 0.0
    %4327 = vmatpush1.msra.mxu0 0.0
    %4328 = vmatprep.subr.mxu0 0.0
    %4329 = vmatpush1.msra.mxu0 0.0
    %4330 = vmatprep.mubr.f32.mxu0 0.0
    %4331 = vmatmul.mubr.f32.gmra.mrb[0].mxu0 %v3908
    %v4332 = vpop.f32.mrb[0].mxu0
    %v4333 = vadd.f32 %v4263, %v4332
    %v4334 = vpop.f32.mrb[0].mxu0
    %4335 = vdwg.mxu0
    %v4341 = vcombine.low %v4050, %v4052
    %v4342 = vcombine.low %v4192, %v4194
    %v4344 = vunpack.c.l.s4 1966171168
    %v4345 = vunpack.c.0.s8 %v4344
    %v4346 = vlaneseq
    %v4347 = vshrl.u32 %v4346, 7
    %v4348 = vsub.s32 %v4345, %v4347
    %v4349 = vrot.slane %v4341, %v4348
    %v4351 = vunpack.c.l.s4 1966171168
    %v4352 = vunpack.c.0.s8 %v4351
    %v4353 = vlaneseq
    %v4354 = vshrl.u32 %v4353, 7
    %v4355 = vsub.s32 %v4352, %v4354
    %v4356 = vrot.slane %v4342, %v4355
    %v4358 = vunpack.c.l.s4 1966171168
    %v4359 = vunpack.c.0.s8 %v4358
    %v4360 = vlaneseq
    %v4361 = vshrl.u32 %v4360, 7
    %v4362 = vsub.s32 %v4359, %v4361
    %v4363 = vrot.slane %v4333, %v4362
    %v4364 = vcombine.low %v4349, %v4356
    %v4366 = vunpack.c.l.s4 1966171168
    %v4367 = vunpack.c.0.s8 %v4366
    %v4368 = vlaneseq
    %v4369 = vshrl.u32 %v4368, 7
    %v4370 = vsub.s32 %v4367, %v4369
    %v4371 = vrot.slane %v4364, %v4370
    %v4373 = vunpack.c.l.s4 1966171168
    %v4374 = vunpack.c.0.s8 %v4373
    %v4375 = vlaneseq
    %v4376 = vshrl.u32 %v4375, 7
    %v4377 = vsub.s32 %v4374, %v4376
    %v4378 = vrot.slane %v4363, %v4377
    %v4379 = vcombine.low %v4371, %v4378
    %v4381 = vadd.f32 %v3655, %v4379
    %v4382 = vld [vmem:[#allocation7] sm:$0xff]
    %v4383 = vld [vmem:[#allocation7 + $0x8] sm:$0xff]
    %v4384 = vld [vmem:[#allocation7 + $0x10] sm:$0xff]
    %v4385 = vld [vmem:[#allocation7 + $0x18] sm:$0xff]
    %v4386 = vld [vmem:[#allocation7 + $0x20] sm:$0xff]
    %v4387 = vld [vmem:[#allocation7 + $0x28] sm:$0xff]
    %v4388 = vld [vmem:[#allocation7 + $0x30] sm:$0xff]
    %v4389 = vld [vmem:[#allocation7 + $0x38] sm:$0xff]
    %v4390 = vld [vmem:[#allocation7 + $0x40] sm:$0xff]
    %v4391 = vld [vmem:[#allocation7 + $0x48] sm:$0xff]
    %v4392 = vld [vmem:[#allocation7 + $0x50] sm:$0xff]
    %v4393 = vld [vmem:[#allocation7 + $0x58] sm:$0xff]
    %v4394 = vld [vmem:[#allocation7 + $0x60] sm:$0xff]
    %v4395 = vld [vmem:[#allocation7 + $0x68] sm:$0xff]
    %v4396 = vld [vmem:[#allocation7 + $0x70] sm:$0xff]
    %v4397 = vld [vmem:[#allocation7 + $0x78] sm:$0xff]
    %v4398 = vld [vmem:[#allocation7 + $0x80] sm:$0xff]
    %v4399 = vld [vmem:[#allocation7 + $0x88] sm:$0xff]
    %v4400 = vld [vmem:[#allocation7 + $0x90] sm:$0xff]
    %v4401 = vld [vmem:[#allocation7 + $0x98] sm:$0xff]
    %v4402 = vld [vmem:[#allocation7 + $0xa0] sm:$0xff]
    %v4403 = vld [vmem:[#allocation7 + $0xa8] sm:$0xff]
    %v4404 = vld [vmem:[#allocation7 + $0xb0] sm:$0xff]
    %v4405 = vld [vmem:[#allocation7 + $0xb8] sm:$0xff]
    %v4406 = vld [vmem:[#allocation7 + $0xc0] sm:$0xff]
    %v4407 = vld [vmem:[#allocation7 + $0xc8] sm:$0xff]
    %v4408 = vld [vmem:[#allocation7 + $0xd0] sm:$0xff]
    %v4409 = vld [vmem:[#allocation7 + $0xd8] sm:$0xff]
    %v4410 = vld [vmem:[#allocation7 + $0xe0] sm:$0xff]
    %v4411 = vld [vmem:[#allocation7 + $0xe8] sm:$0xff]
    %v4412 = vld [vmem:[#allocation7 + $0xf0] sm:$0xff]
    %v4413 = vld [vmem:[#allocation7 + $0xf8] sm:$0xff]
    %v4414 = vld [vmem:[#allocation7 + $0x100] sm:$0xff]
    %v4415 = vld [vmem:[#allocation7 + $0x108] sm:$0xff]
    %v4416 = vld [vmem:[#allocation7 + $0x110] sm:$0xff]
    %v4417 = vld [vmem:[#allocation7 + $0x118] sm:$0xff]
    %v4418 = vld [vmem:[#allocation7 + $0x120] sm:$0xff]
    %v4419 = vld [vmem:[#allocation7 + $0x128] sm:$0xff]
    %v4420 = vld [vmem:[#allocation7 + $0x130] sm:$0xff]
    %v4421 = vld [vmem:[#allocation7 + $0x138] sm:$0xff]
    %v4422 = vld [vmem:[#allocation7 + $0x140] sm:$0xff]
    %v4423 = vld [vmem:[#allocation7 + $0x148] sm:$0xff]
    %v4424 = vld [vmem:[#allocation7 + $0x150] sm:$0xff]
    %v4425 = vld [vmem:[#allocation7 + $0x158] sm:$0xff]
    %v4426 = vld [vmem:[#allocation7 + $0x160] sm:$0xff]
    %v4427 = vld [vmem:[#allocation7 + $0x168] sm:$0xff]
    %v4428 = vld [vmem:[#allocation7 + $0x170] sm:$0xff]
    %v4429 = vld [vmem:[#allocation7 + $0x178] sm:$0xff]
    %v4430 = vld [vmem:[#allocation7 + $0x180] sm:$0xff]
    %v4431 = vld [vmem:[#allocation7 + $0x188] sm:$0xff]
    %v4432 = vld [vmem:[#allocation7 + $0x190] sm:$0xff]
    %v4433 = vld [vmem:[#allocation7 + $0x198] sm:$0xff]
    %v4434 = vld [vmem:[#allocation7 + $0x1a0] sm:$0xff]
    %v4435 = vld [vmem:[#allocation7 + $0x1a8] sm:$0xff]
    %v4436 = vld [vmem:[#allocation7 + $0x1b0] sm:$0xff]
    %v4437 = vld [vmem:[#allocation7 + $0x1b8] sm:$0xff]
    %v4438 = vld [vmem:[#allocation7 + $0x1c0] sm:$0xff]
    %v4439 = vld [vmem:[#allocation7 + $0x1c8] sm:$0xff]
    %v4440 = vld [vmem:[#allocation7 + $0x1d0] sm:$0xff]
    %v4441 = vld [vmem:[#allocation7 + $0x1d8] sm:$0xff]
    %v4442 = vld [vmem:[#allocation7 + $0x1e0] sm:$0xff]
    %v4443 = vld [vmem:[#allocation7 + $0x1e8] sm:$0xff]
    %v4444 = vld [vmem:[#allocation7 + $0x1f0] sm:$0xff]
    %v4445 = vld [vmem:[#allocation7 + $0x1f8] sm:$0xff]
    %v4446 = vld [vmem:[#allocation7 + $0x200] sm:$0xff]
    %v4447 = vld [vmem:[#allocation7 + $0x208] sm:$0xff]
    %v4448 = vld [vmem:[#allocation7 + $0x210] sm:$0xff]
    %v4449 = vld [vmem:[#allocation7 + $0x218] sm:$0xff]
    %v4450 = vld [vmem:[#allocation7 + $0x220] sm:$0xff]
    %v4451 = vld [vmem:[#allocation7 + $0x228] sm:$0xff]
    %v4452 = vld [vmem:[#allocation7 + $0x230] sm:$0xff]
    %v4453 = vld [vmem:[#allocation7 + $0x238] sm:$0xff]
    %v4454 = vld [vmem:[#allocation7 + $0x240] sm:$0xff]
    %v4455 = vld [vmem:[#allocation7 + $0x248] sm:$0xff]
    %v4456 = vld [vmem:[#allocation7 + $0x250] sm:$0xff]
    %v4457 = vld [vmem:[#allocation7 + $0x258] sm:$0xff]
    %v4458 = vld [vmem:[#allocation7 + $0x260] sm:$0xff]
    %v4459 = vld [vmem:[#allocation7 + $0x268] sm:$0xff]
    %v4460 = vld [vmem:[#allocation7 + $0x270] sm:$0xff]
    %v4461 = vld [vmem:[#allocation7 + $0x278] sm:$0xff]
    %v4462 = vld [vmem:[#allocation7 + $0x280] sm:$0xff]
    %v4463 = vld [vmem:[#allocation7 + $0x288] sm:$0xff]
    %v4464 = vld [vmem:[#allocation7 + $0x290] sm:$0xff]
    %v4465 = vld [vmem:[#allocation7 + $0x298] sm:$0xff]
    %v4466 = vld [vmem:[#allocation7 + $0x2a0] sm:$0xff]
    %v4467 = vld [vmem:[#allocation7 + $0x2a8] sm:$0xff]
    %v4468 = vld [vmem:[#allocation7 + $0x2b0] sm:$0xff]
    %v4469 = vld [vmem:[#allocation7 + $0x2b8] sm:$0xff]
    %v4470 = vld [vmem:[#allocation7 + $0x2c0] sm:$0xff]
    %v4471 = vld [vmem:[#allocation7 + $0x2c8] sm:$0xff]
    %v4472 = vld [vmem:[#allocation7 + $0x2d0] sm:$0xff]
    %v4473 = vld [vmem:[#allocation7 + $0x2d8] sm:$0xff]
    %v4474 = vld [vmem:[#allocation7 + $0x2e0] sm:$0xff]
    %v4475 = vld [vmem:[#allocation7 + $0x2e8] sm:$0xff]
    %v4476 = vld [vmem:[#allocation7 + $0x2f0] sm:$0xff]
    %v4477 = vld [vmem:[#allocation7 + $0x2f8] sm:$0xff]
    %v4478 = vld [vmem:[#allocation7 + $0x300] sm:$0xff]
    %v4479 = vld [vmem:[#allocation7 + $0x308] sm:$0xff]
    %v4480 = vld [vmem:[#allocation7 + $0x310] sm:$0xff]
    %v4481 = vld [vmem:[#allocation7 + $0x318] sm:$0xff]
    %v4482 = vld [vmem:[#allocation7 + $0x320] sm:$0xff]
    %v4483 = vld [vmem:[#allocation7 + $0x328] sm:$0xff]
    %v4484 = vld [vmem:[#allocation7 + $0x330] sm:$0xff]
    %v4485 = vld [vmem:[#allocation7 + $0x338] sm:$0xff]
    %v4486 = vld [vmem:[#allocation7 + $0x340] sm:$0xff]
    %v4487 = vld [vmem:[#allocation7 + $0x348] sm:$0xff]
    %v4488 = vld [vmem:[#allocation7 + $0x350] sm:$0xff]
    %v4489 = vld [vmem:[#allocation7 + $0x358] sm:$0xff]
    %v4490 = vld [vmem:[#allocation7 + $0x360] sm:$0xff]
    %v4491 = vld [vmem:[#allocation7 + $0x368] sm:$0xff]
    %v4492 = vld [vmem:[#allocation7 + $0x370] sm:$0xff]
    %v4493 = vld [vmem:[#allocation7 + $0x378] sm:$0xff]
    %v4494 = vld [vmem:[#allocation7 + $0x380] sm:$0xff]
    %v4495 = vld [vmem:[#allocation7 + $0x388] sm:$0xff]
    %v4496 = vld [vmem:[#allocation7 + $0x390] sm:$0xff]
    %v4497 = vld [vmem:[#allocation7 + $0x398] sm:$0xff]
    %v4498 = vld [vmem:[#allocation7 + $0x3a0] sm:$0xff]
    %v4499 = vld [vmem:[#allocation7 + $0x3a8] sm:$0xff]
    %v4500 = vld [vmem:[#allocation7 + $0x3b0] sm:$0xff]
    %v4501 = vld [vmem:[#allocation7 + $0x3b8] sm:$0xff]
    %v4502 = vld [vmem:[#allocation7 + $0x3c0] sm:$0xff]
    %v4503 = vld [vmem:[#allocation7 + $0x3c8] sm:$0xff]
    %v4504 = vld [vmem:[#allocation7 + $0x3d0] sm:$0xff]
    %v4505 = vld [vmem:[#allocation7 + $0x3d8] sm:$0xff]
    %v4506 = vld [vmem:[#allocation7 + $0x3e0] sm:$0xff]
    %v4507 = vld [vmem:[#allocation7 + $0x3e8] sm:$0xff]
    %v4508 = vld [vmem:[#allocation7 + $0x3f0] sm:$0xff]
    %v4509 = vld [vmem:[#allocation7 + $0x3f8] sm:$0xff]
    %v4510 = vld [vmem:[#allocation7 + $0x400] sm:$0xff]
    %v4511 = vld [vmem:[#allocation7 + $0x408] sm:$0xff]
    %v4512 = vld [vmem:[#allocation7 + $0x410] sm:$0xff]
    %v4513 = vld [vmem:[#allocation7 + $0x418] sm:$0xff]
    %v4514 = vld [vmem:[#allocation7 + $0x420] sm:$0xff]
    %v4515 = vld [vmem:[#allocation7 + $0x428] sm:$0xff]
    %v4516 = vld [vmem:[#allocation7 + $0x430] sm:$0xff]
    %v4517 = vld [vmem:[#allocation7 + $0x438] sm:$0xff]
    %v4518 = vld [vmem:[#allocation7 + $0x440] sm:$0xff]
    %v4519 = vld [vmem:[#allocation7 + $0x448] sm:$0xff]
    %v4520 = vld [vmem:[#allocation7 + $0x450] sm:$0xff]
    %v4521 = vld [vmem:[#allocation7 + $0x458] sm:$0xff]
    %v4522 = vld [vmem:[#allocation7 + $0x460] sm:$0xff]
    %v4523 = vld [vmem:[#allocation7 + $0x468] sm:$0xff]
    %v4524 = vld [vmem:[#allocation7 + $0x470] sm:$0xff]
    %v4525 = vld [vmem:[#allocation7 + $0x478] sm:$0xff]
    %v4526 = vld [vmem:[#allocation7 + $0x480] sm:$0xff]
    %v4527 = vld [vmem:[#allocation7 + $0x488] sm:$0xff]
    %v4528 = vld [vmem:[#allocation7 + $0x490] sm:$0xff]
    %v4529 = vld [vmem:[#allocation7 + $0x498] sm:$0xff]
    %v4530 = vld [vmem:[#allocation7 + $0x4a0] sm:$0xff]
    %v4531 = vld [vmem:[#allocation7 + $0x4a8] sm:$0xff]
    %v4532 = vld [vmem:[#allocation7 + $0x4b0] sm:$0xff]
    %v4533 = vld [vmem:[#allocation7 + $0x4b8] sm:$0xff]
    %v4534 = vld [vmem:[#allocation7 + $0x4c0] sm:$0xff]
    %v4535 = vld [vmem:[#allocation7 + $0x4c8] sm:$0xff]
    %v4536 = vld [vmem:[#allocation7 + $0x4d0] sm:$0xff]
    %v4537 = vld [vmem:[#allocation7 + $0x4d8] sm:$0xff]
    %v4538 = vld [vmem:[#allocation7 + $0x4e0] sm:$0xff]
    %v4539 = vld [vmem:[#allocation7 + $0x4e8] sm:$0xff]
    %v4540 = vld [vmem:[#allocation7 + $0x4f0] sm:$0xff]
    %v4541 = vld [vmem:[#allocation7 + $0x4f8] sm:$0xff]
    %v4542 = vld [vmem:[%s4] sm:$0x3]
    %v4544 = vlaneseq
    %v4545 = vshrl.u32 %v4544, 7
    %v4546 = vsub.s32 0, %v4545
    %v4547 = vrot.slane %v4381, %v4546
    %v4548 = vlaneseq
    %v4549 = vshrl.u32 %v4548, 7
    %v4550 = vsub.s32 1, %v4549
    %v4551 = vrot.slane %v4381, %v4550
    %v4552 = vlaneseq
    %v4553 = vshrl.u32 %v4552, 7
    %v4554 = vsub.s32 2, %v4553
    %v4555 = vrot.slane %v4381, %v4554
    %v4556 = vlaneseq
    %v4557 = vshrl.u32 %v4556, 7
    %v4558 = vsub.s32 3, %v4557
    %v4559 = vrot.slane %v4381, %v4558
    %v4560 = vlaneseq
    %v4561 = vshrl.u32 %v4560, 7
    %v4562 = vsub.s32 4, %v4561
    %v4563 = vrot.slane %v4381, %v4562
    %v4570 = vlaneseq
    %v4571 = vshrl.u32 %v4570, 7
    %v4572 = vsub.s32 0, %v4571
    %v4573 = vrot.slane %v4542, %v4572
    %v4574 = vlaneseq
    %v4575 = vshrl.u32 %v4574, 7
    %v4576 = vsub.s32 1, %v4575
    %v4577 = vrot.slane %v4542, %v4576
    %4580 = vmatprep.subr.mxu0 %v4383
    %4581 = vmatpush1.msra.mxu0 %v4382
    %4582 = vmatprep.subr.mxu0 %v4385
    %4583 = vmatpush1.msra.mxu0 %v4384
    %4584 = vmatprep.subr.mxu0 %v4387
    %4585 = vmatpush1.msra.mxu0 %v4386
    %4586 = vmatprep.subr.mxu0 %v4389
    %4587 = vmatpush1.msra.mxu0 %v4388
    %4588 = vmatprep.subr.mxu0 %v4391
    %4589 = vmatpush1.msra.mxu0 %v4390
    %4590 = vmatprep.subr.mxu0 %v4393
    %4591 = vmatpush1.msra.mxu0 %v4392
    %4592 = vmatprep.subr.mxu0 %v4395
    %4593 = vmatpush1.msra.mxu0 %v4394
    %4594 = vmatprep.subr.mxu0 %v4397
    %4595 = vmatpush1.msra.mxu0 %v4396
    %4596 = vmatprep.subr.mxu0 %v4399
    %4597 = vmatpush1.msra.mxu0 %v4398
    %4598 = vmatprep.subr.mxu0 %v4401
    %4599 = vmatpush1.msra.mxu0 %v4400
    %4600 = vmatprep.subr.mxu0 %v4403
    %4601 = vmatpush1.msra.mxu0 %v4402
    %4602 = vmatprep.subr.mxu0 %v4405
    %4603 = vmatpush1.msra.mxu0 %v4404
    %4604 = vmatprep.subr.mxu0 %v4407
    %4605 = vmatpush1.msra.mxu0 %v4406
    %4606 = vmatprep.subr.mxu0 %v4409
    %4607 = vmatpush1.msra.mxu0 %v4408
    %4608 = vmatprep.subr.mxu0 %v4411
    %4609 = vmatpush1.msra.mxu0 %v4410
    %4610 = vmatprep.subr.mxu0 %v4413
    %4611 = vmatpush1.msra.mxu0 %v4412
    %4612 = vmatprep.subr.mxu0 %v4415
    %4613 = vmatpush1.msra.mxu0 %v4414
    %4614 = vmatprep.subr.mxu0 %v4417
    %4615 = vmatpush1.msra.mxu0 %v4416
    %4616 = vmatprep.subr.mxu0 %v4419
    %4617 = vmatpush1.msra.mxu0 %v4418
    %4618 = vmatprep.subr.mxu0 %v4421
    %4619 = vmatpush1.msra.mxu0 %v4420
    %4620 = vmatprep.subr.mxu0 %v4423
    %4621 = vmatpush1.msra.mxu0 %v4422
    %4622 = vmatprep.subr.mxu0 %v4425
    %4623 = vmatpush1.msra.mxu0 %v4424
    %4624 = vmatprep.subr.mxu0 %v4427
    %4625 = vmatpush1.msra.mxu0 %v4426
    %4626 = vmatprep.subr.mxu0 %v4429
    %4627 = vmatpush1.msra.mxu0 %v4428
    %4628 = vmatprep.subr.mxu0 %v4431
    %4629 = vmatpush1.msra.mxu0 %v4430
    %4630 = vmatprep.subr.mxu0 %v4433
    %4631 = vmatpush1.msra.mxu0 %v4432
    %4632 = vmatprep.subr.mxu0 %v4435
    %4633 = vmatpush1.msra.mxu0 %v4434
    %4634 = vmatprep.subr.mxu0 %v4437
    %4635 = vmatpush1.msra.mxu0 %v4436
    %4636 = vmatprep.subr.mxu0 %v4439
    %4637 = vmatpush1.msra.mxu0 %v4438
    %4638 = vmatprep.subr.mxu0 %v4441
    %4639 = vmatpush1.msra.mxu0 %v4440
    %4640 = vmatprep.subr.mxu0 %v4443
    %4641 = vmatpush1.msra.mxu0 %v4442
    %4642 = vmatprep.subr.mxu0 %v4445
    %4643 = vmatpush1.msra.mxu0 %v4444
    %4644 = vmatprep.mubr.f32.mxu0 %v4551
    %4645 = vmatmul.mubr.f32.gmra.mrb[0].mxu0 %v4547
    %v4646 = vpop.f32.mrb[0].mxu0
    %v4647 = vadd.f32 %v4573, %v4646
    %v4648 = vpop.f32.mrb[0].mxu0
    %v4649 = vadd.f32 %v4577, %v4648
    %4650 = vdwg.mxu0
    %4651 = vmatprep.subr.mxu0 %v4447
    %4652 = vmatpush1.msra.mxu0 %v4446
    %4653 = vmatprep.subr.mxu0 %v4449
    %4654 = vmatpush1.msra.mxu0 %v4448
    %4655 = vmatprep.subr.mxu0 %v4451
    %4656 = vmatpush1.msra.mxu0 %v4450
    %4657 = vmatprep.subr.mxu0 %v4453
    %4658 = vmatpush1.msra.mxu0 %v4452
    %4659 = vmatprep.subr.mxu0 %v4455
    %4660 = vmatpush1.msra.mxu0 %v4454
    %4661 = vmatprep.subr.mxu0 %v4457
    %4662 = vmatpush1.msra.mxu0 %v4456
    %4663 = vmatprep.subr.mxu0 %v4459
    %4664 = vmatpush1.msra.mxu0 %v4458
    %4665 = vmatprep.subr.mxu0 %v4461
    %4666 = vmatpush1.msra.mxu0 %v4460
    %4667 = vmatprep.subr.mxu0 %v4463
    %4668 = vmatpush1.msra.mxu0 %v4462
    %4669 = vmatprep.subr.mxu0 %v4465
    %4670 = vmatpush1.msra.mxu0 %v4464
    %4671 = vmatprep.subr.mxu0 %v4467
    %4672 = vmatpush1.msra.mxu0 %v4466
    %4673 = vmatprep.subr.mxu0 %v4469
    %4674 = vmatpush1.msra.mxu0 %v4468
    %4675 = vmatprep.subr.mxu0 %v4471
    %4676 = vmatpush1.msra.mxu0 %v4470
    %4677 = vmatprep.subr.mxu0 %v4473
    %4678 = vmatpush1.msra.mxu0 %v4472
    %4679 = vmatprep.subr.mxu0 %v4475
    %4680 = vmatpush1.msra.mxu0 %v4474
    %4681 = vmatprep.subr.mxu0 %v4477
    %4682 = vmatpush1.msra.mxu0 %v4476
    %4683 = vmatprep.subr.mxu0 %v4479
    %4684 = vmatpush1.msra.mxu0 %v4478
    %4685 = vmatprep.subr.mxu0 %v4481
    %4686 = vmatpush1.msra.mxu0 %v4480
    %4687 = vmatprep.subr.mxu0 %v4483
    %4688 = vmatpush1.msra.mxu0 %v4482
    %4689 = vmatprep.subr.mxu0 %v4485
    %4690 = vmatpush1.msra.mxu0 %v4484
    %4691 = vmatprep.subr.mxu0 %v4487
    %4692 = vmatpush1.msra.mxu0 %v4486
    %4693 = vmatprep.subr.mxu0 %v4489
    %4694 = vmatpush1.msra.mxu0 %v4488
    %4695 = vmatprep.subr.mxu0 %v4491
    %4696 = vmatpush1.msra.mxu0 %v4490
    %4697 = vmatprep.subr.mxu0 %v4493
    %4698 = vmatpush1.msra.mxu0 %v4492
    %4699 = vmatprep.subr.mxu0 %v4495
    %4700 = vmatpush1.msra.mxu0 %v4494
    %4701 = vmatprep.subr.mxu0 %v4497
    %4702 = vmatpush1.msra.mxu0 %v4496
    %4703 = vmatprep.subr.mxu0 %v4499
    %4704 = vmatpush1.msra.mxu0 %v4498
    %4705 = vmatprep.subr.mxu0 %v4501
    %4706 = vmatpush1.msra.mxu0 %v4500
    %4707 = vmatprep.subr.mxu0 %v4503
    %4708 = vmatpush1.msra.mxu0 %v4502
    %4709 = vmatprep.subr.mxu0 %v4505
    %4710 = vmatpush1.msra.mxu0 %v4504
    %4711 = vmatprep.subr.mxu0 %v4507
    %4712 = vmatpush1.msra.mxu0 %v4506
    %4713 = vmatprep.subr.mxu0 %v4509
    %4714 = vmatpush1.msra.mxu0 %v4508
    %4715 = vmatprep.mubr.f32.mxu0 %v4559
    %4716 = vmatmul.mubr.f32.gmra.mrb[0].mxu0 %v4555
    %v4717 = vpop.f32.mrb[0].mxu0
    %v4718 = vadd.f32 %v4647, %v4717
    %v4719 = vpop.f32.mrb[0].mxu0
    %v4720 = vadd.f32 %v4649, %v4719
    %4721 = vdwg.mxu0
    %4722 = vmatprep.subr.mxu0 %v4511
    %4723 = vmatpush1.msra.mxu0 %v4510
    %4724 = vmatprep.subr.mxu0 %v4513
    %4725 = vmatpush1.msra.mxu0 %v4512
    %4726 = vmatprep.subr.mxu0 %v4515
    %4727 = vmatpush1.msra.mxu0 %v4514
    %4728 = vmatprep.subr.mxu0 %v4517
    %4729 = vmatpush1.msra.mxu0 %v4516
    %4730 = vmatprep.subr.mxu0 %v4519
    %4731 = vmatpush1.msra.mxu0 %v4518
    %4732 = vmatprep.subr.mxu0 %v4521
    %4733 = vmatpush1.msra.mxu0 %v4520
    %4734 = vmatprep.subr.mxu0 %v4523
    %4735 = vmatpush1.msra.mxu0 %v4522
    %4736 = vmatprep.subr.mxu0 %v4525
    %4737 = vmatpush1.msra.mxu0 %v4524
    %4738 = vmatprep.subr.mxu0 %v4527
    %4739 = vmatpush1.msra.mxu0 %v4526
    %4740 = vmatprep.subr.mxu0 %v4529
    %4741 = vmatpush1.msra.mxu0 %v4528
    %4742 = vmatprep.subr.mxu0 %v4531
    %4743 = vmatpush1.msra.mxu0 %v4530
    %4744 = vmatprep.subr.mxu0 %v4533
    %4745 = vmatpush1.msra.mxu0 %v4532
    %4746 = vmatprep.subr.mxu0 %v4535
    %4747 = vmatpush1.msra.mxu0 %v4534
    %4748 = vmatprep.subr.mxu0 %v4537
    %4749 = vmatpush1.msra.mxu0 %v4536
    %4750 = vmatprep.subr.mxu0 %v4539
    %4751 = vmatpush1.msra.mxu0 %v4538
    %4752 = vmatprep.subr.mxu0 %v4541
    %4753 = vmatpush1.msra.mxu0 %v4540
    %4754 = vmatprep.subr.mxu0 0.0
    %4755 = vmatpush1.msra.mxu0 0.0
    %4756 = vmatprep.subr.mxu0 0.0
    %4757 = vmatpush1.msra.mxu0 0.0
    %4758 = vmatprep.subr.mxu0 0.0
    %4759 = vmatpush1.msra.mxu0 0.0
    %4760 = vmatprep.subr.mxu0 0.0
    %4761 = vmatpush1.msra.mxu0 0.0
    %4762 = vmatprep.subr.mxu0 0.0
    %4763 = vmatpush1.msra.mxu0 0.0
    %4764 = vmatprep.subr.mxu0 0.0
    %4765 = vmatpush1.msra.mxu0 0.0
    %4766 = vmatprep.subr.mxu0 0.0
    %4767 = vmatpush1.msra.mxu0 0.0
    %4768 = vmatprep.subr.mxu0 0.0
    %4769 = vmatpush1.msra.mxu0 0.0
    %4770 = vmatprep.subr.mxu0 0.0
    %4771 = vmatpush1.msra.mxu0 0.0
    %4772 = vmatprep.subr.mxu0 0.0
    %4773 = vmatpush1.msra.mxu0 0.0
    %4774 = vmatprep.subr.mxu0 0.0
    %4775 = vmatpush1.msra.mxu0 0.0
    %4776 = vmatprep.subr.mxu0 0.0
    %4777 = vmatpush1.msra.mxu0 0.0
    %4778 = vmatprep.subr.mxu0 0.0
    %4779 = vmatpush1.msra.mxu0 0.0
    %4780 = vmatprep.subr.mxu0 0.0
    %4781 = vmatpush1.msra.mxu0 0.0
    %4782 = vmatprep.subr.mxu0 0.0
    %4783 = vmatpush1.msra.mxu0 0.0
    %4784 = vmatprep.subr.mxu0 0.0
    %4785 = vmatpush1.msra.mxu0 0.0
    %4786 = vmatprep.mubr.f32.mxu0 0.0
    %4787 = vmatmul.mubr.f32.gmra.mrb[0].mxu0 %v4563
    %v4788 = vpop.f32.mrb[0].mxu0
    %v4789 = vadd.f32 %v4718, %v4788
    %v4790 = vpop.f32.mrb[0].mxu0
    %v4791 = vadd.f32 %v4720, %v4790
    %4792 = vdwg.mxu0
    %v4793 = vsel %vm1215, %v4789, -inf
    %v4794 = vsel %vm1215, %v4791, -inf
    %v4795 = vmax.f32 %v4793, %v4794
    %4796 = vmax.xlane.f32.xlu0 %v4795
    %v4797 = vpop.xlane.xlu0 %4796
    %v4798 = vsub.f32 %v4789, %v4797
    %v4799 = vsub.f32 %v4791, %v4797
    %v4800 = vmul.f32 %v4798, 1.442695
    %v4801 = vpow.pop %v4800
    %v4802 = vmul.f32 %v4799, 1.442695
    %v4803 = vpow.pop %v4802
    %v4804 = vsel %vm1215, %v4801, 0.0
    %v4805 = vsel %vm1215, %v4803, 0.0
    %v4806 = vadd.f32 %v4804, %v4805
    %4807 = vadd.xlane.f32.xlu0 %v4806
    %v4808 = vpop.xlane.xlu0 %4807
    %v4809 = vlog2.pop %v4808
    %v4810 = vmul.f32 %v4809, 0.6931472
    %v4811 = vadd.f32 %v4797, %v4810
    %v4812 = vsub.f32 %v4789, %v4811
    %v4813 = vsub.f32 %v4791, %v4811
    %v4816 = vcombine.low %v4812, %v4813
    %v4818 = vunpack.c.l.s4 1966171168
    %v4819 = vunpack.c.0.s8 %v4818
    %v4820 = vlaneseq
    %v4821 = vshrl.u32 %v4820, 7
    %v4822 = vsub.s32 %v4819, %v4821
    %v4823 = vrot.slane %v4816, %v4822
    %v4825 = vunpack.c.l.s4 1966171168
    %v4826 = vunpack.c.0.s8 %v4825
    %v4827 = vlaneseq
    %v4828 = vshrl.u32 %v4827, 7
    %v4829 = vsub.s32 %v4826, %v4828
    %v4830 = vrot.slane %v4823, %v4829
    %s4832 = scalar_lea.vmem [#allocation8], 3
    %4833 = vst.msk [vmem:[%s4832] ss:$8 sm:$0x3] %vm1258, %v4830
    %4834 = vst.msk [vmem:[%s4832] ss:$8 sm:$0x0] %vm1258, %v4830
    %s4835 = sadd.s32 %s73, 3
    %p4836 = scmp.lt.s32.totalorder %s4835, 1
    %s4837 = scalar_select %p4836, 1, 0
    %v4838 = vstv %s4837
    %vm4839 = vcmp.eq.s32.totalorder %v4838, 1
    %v4840 = vsel %vm4839, %v4381, %v3651
    %4841 = vst.msk [vmem:[#allocation9] sm:$0x7] %vm1267, %v4840
    %v4842 = vld [vmem:[#allocation9] sm:$0x7]
    %s4843 = scalar_lea.vmem [#allocation2], 4
    %v4844 = vld [vmem:[%s4843] ss:$8 sm:$0xf]
    %v4845 = vld [vmem:[%s4843] ss:$8 sm:$0x10]
    %v4846 = vor.u32 %v4844, %v4845
    %v4847 = vld [vmem:[#allocation5] sm:$0xff]
    %v4848 = vld [vmem:[#allocation5 + $0x8] sm:$0xff]
    %v4849 = vld [vmem:[#allocation5 + $0x10] sm:$0xff]
    %v4850 = vld [vmem:[#allocation5 + $0x18] sm:$0xff]
    %v4851 = vld [vmem:[#allocation5 + $0x20] sm:$0xff]
    %v4852 = vld [vmem:[#allocation5 + $0x28] sm:$0xff]
    %v4853 = vld [vmem:[#allocation5 + $0x30] sm:$0xff]
    %v4854 = vld [vmem:[#allocation5 + $0x38] sm:$0xff]
    %v4855 = vld [vmem:[#allocation5 + $0x40] sm:$0xff]
    %v4856 = vld [vmem:[#allocation5 + $0x48] sm:$0xff]
    %v4857 = vld [vmem:[#allocation5 + $0x50] sm:$0xff]
    %v4858 = vld [vmem:[#allocation5 + $0x58] sm:$0xff]
    %v4859 = vld [vmem:[#allocation5 + $0x60] sm:$0xff]
    %v4860 = vld [vmem:[#allocation5 + $0x68] sm:$0xff]
    %v4861 = vld [vmem:[#allocation5 + $0x70] sm:$0xff]
    %v4862 = vld [vmem:[#allocation5 + $0x78] sm:$0xff]
    %v4863 = vld [vmem:[#allocation5 + $0x80] sm:$0xff]
    %v4864 = vld [vmem:[#allocation5 + $0x88] sm:$0xff]
    %v4865 = vld [vmem:[#allocation5 + $0x90] sm:$0xff]
    %v4866 = vld [vmem:[#allocation5 + $0x98] sm:$0xff]
    %v4867 = vld [vmem:[#allocation5 + $0xa0] sm:$0xff]
    %v4868 = vld [vmem:[#allocation5 + $0xa8] sm:$0xff]
    %v4869 = vld [vmem:[#allocation5 + $0xb0] sm:$0xff]
    %v4870 = vld [vmem:[#allocation5 + $0xb8] sm:$0xff]
    %v4871 = vld [vmem:[#allocation5 + $0xc0] sm:$0xff]
    %v4872 = vld [vmem:[#allocation5 + $0xc8] sm:$0xff]
    %v4873 = vld [vmem:[#allocation5 + $0xd0] sm:$0xff]
    %v4874 = vld [vmem:[#allocation5 + $0xd8] sm:$0xff]
    %v4875 = vld [vmem:[#allocation5 + $0xe0] sm:$0xff]
    %v4876 = vld [vmem:[#allocation5 + $0xe8] sm:$0xff]
    %v4877 = vld [vmem:[#allocation5 + $0xf0] sm:$0xff]
    %v4878 = vld [vmem:[#allocation5 + $0xf8] sm:$0xff]
    %v4879 = vld [vmem:[#allocation5 + $0x100] sm:$0xff]
    %v4880 = vld [vmem:[#allocation5 + $0x108] sm:$0xff]
    %v4881 = vld [vmem:[#allocation5 + $0x110] sm:$0xff]
    %v4882 = vld [vmem:[#allocation5 + $0x118] sm:$0xff]
    %v4883 = vld [vmem:[#allocation5 + $0x120] sm:$0xff]
    %v4884 = vld [vmem:[#allocation5 + $0x128] sm:$0xff]
    %v4885 = vld [vmem:[#allocation5 + $0x130] sm:$0xff]
    %v4886 = vld [vmem:[#allocation5 + $0x138] sm:$0xff]
    %v4887 = vld [vmem:[#allocation5 + $0x140] sm:$0xff]
    %v4888 = vld [vmem:[#allocation5 + $0x148] sm:$0xff]
    %v4889 = vld [vmem:[#allocation5 + $0x150] sm:$0xff]
    %v4890 = vld [vmem:[#allocation5 + $0x158] sm:$0xff]
    %v4891 = vld [vmem:[#allocation5 + $0x160] sm:$0xff]
    %v4892 = vld [vmem:[#allocation5 + $0x168] sm:$0xff]
    %v4893 = vld [vmem:[#allocation5 + $0x170] sm:$0xff]
    %v4894 = vld [vmem:[#allocation5 + $0x178] sm:$0xff]
    %v4895 = vld [vmem:[#allocation5 + $0x180] sm:$0xff]
    %v4896 = vld [vmem:[#allocation5 + $0x188] sm:$0xff]
    %v4897 = vld [vmem:[#allocation5 + $0x190] sm:$0xff]
    %v4898 = vld [vmem:[#allocation5 + $0x198] sm:$0xff]
    %v4899 = vld [vmem:[#allocation5 + $0x1a0] sm:$0xff]
    %v4900 = vld [vmem:[#allocation5 + $0x1a8] sm:$0xff]
    %v4901 = vld [vmem:[#allocation5 + $0x1b0] sm:$0xff]
    %v4902 = vld [vmem:[#allocation5 + $0x1b8] sm:$0xff]
    %v4903 = vld [vmem:[#allocation5 + $0x1c0] sm:$0xff]
    %v4904 = vld [vmem:[#allocation5 + $0x1c8] sm:$0xff]
    %v4905 = vld [vmem:[#allocation5 + $0x1d0] sm:$0xff]
    %v4906 = vld [vmem:[#allocation5 + $0x1d8] sm:$0xff]
    %v4907 = vld [vmem:[#allocation5 + $0x1e0] sm:$0xff]
    %v4908 = vld [vmem:[#allocation5 + $0x1e8] sm:$0xff]
    %v4909 = vld [vmem:[#allocation5 + $0x1f0] sm:$0xff]
    %v4910 = vld [vmem:[#allocation5 + $0x1f8] sm:$0xff]
    %v4911 = vld [vmem:[#allocation5 + $0x200] sm:$0xff]
    %v4912 = vld [vmem:[#allocation5 + $0x208] sm:$0xff]
    %v4913 = vld [vmem:[#allocation5 + $0x210] sm:$0xff]
    %v4914 = vld [vmem:[#allocation5 + $0x218] sm:$0xff]
    %v4915 = vld [vmem:[#allocation5 + $0x220] sm:$0xff]
    %v4916 = vld [vmem:[#allocation5 + $0x228] sm:$0xff]
    %v4917 = vld [vmem:[#allocation5 + $0x230] sm:$0xff]
    %v4918 = vld [vmem:[#allocation5 + $0x238] sm:$0xff]
    %v4919 = vld [vmem:[#allocation5 + $0x240] sm:$0xff]
    %v4920 = vld [vmem:[#allocation5 + $0x248] sm:$0xff]
    %v4921 = vld [vmem:[#allocation5 + $0x250] sm:$0xff]
    %v4922 = vld [vmem:[#allocation5 + $0x258] sm:$0xff]
    %v4923 = vld [vmem:[#allocation5 + $0x260] sm:$0xff]
    %v4924 = vld [vmem:[#allocation5 + $0x268] sm:$0xff]
    %v4925 = vld [vmem:[#allocation5 + $0x270] sm:$0xff]
    %v4926 = vld [vmem:[#allocation5 + $0x278] sm:$0xff]
    %v4927 = vld [vmem:[#allocation5 + $0x280] sm:$0xff]
    %v4928 = vld [vmem:[#allocation5 + $0x288] sm:$0xff]
    %v4929 = vld [vmem:[#allocation5 + $0x290] sm:$0xff]
    %v4930 = vld [vmem:[#allocation5 + $0x298] sm:$0xff]
    %v4931 = vld [vmem:[#allocation5 + $0x2a0] sm:$0xff]
    %v4932 = vld [vmem:[#allocation5 + $0x2a8] sm:$0xff]
    %v4933 = vld [vmem:[#allocation5 + $0x2b0] sm:$0xff]
    %v4934 = vld [vmem:[#allocation5 + $0x2b8] sm:$0xff]
    %v4935 = vld [vmem:[#allocation5 + $0x2c0] sm:$0xff]
    %v4936 = vld [vmem:[#allocation5 + $0x2c8] sm:$0xff]
    %v4937 = vld [vmem:[#allocation5 + $0x2d0] sm:$0xff]
    %v4938 = vld [vmem:[#allocation5 + $0x2d8] sm:$0xff]
    %v4939 = vld [vmem:[#allocation5 + $0x2e0] sm:$0xff]
    %v4940 = vld [vmem:[#allocation5 + $0x2e8] sm:$0xff]
    %v4941 = vld [vmem:[#allocation5 + $0x2f0] sm:$0xff]
    %v4942 = vld [vmem:[#allocation5 + $0x2f8] sm:$0xff]
    %v4943 = vld [vmem:[#allocation5 + $0x300] sm:$0xff]
    %v4944 = vld [vmem:[#allocation5 + $0x308] sm:$0xff]
    %v4945 = vld [vmem:[#allocation5 + $0x310] sm:$0xff]
    %v4946 = vld [vmem:[#allocation5 + $0x318] sm:$0xff]
    %v4947 = vld [vmem:[#allocation5 + $0x320] sm:$0xff]
    %v4948 = vld [vmem:[#allocation5 + $0x328] sm:$0xff]
    %v4949 = vld [vmem:[#allocation5 + $0x330] sm:$0xff]
    %v4950 = vld [vmem:[#allocation5 + $0x338] sm:$0xff]
    %v4951 = vld [vmem:[#allocation5 + $0x340] sm:$0xff]
    %v4952 = vld [vmem:[#allocation5 + $0x348] sm:$0xff]
    %v4953 = vld [vmem:[#allocation5 + $0x350] sm:$0xff]
    %v4954 = vld [vmem:[#allocation5 + $0x358] sm:$0xff]
    %v4955 = vld [vmem:[#allocation5 + $0x360] sm:$0xff]
    %v4956 = vld [vmem:[#allocation5 + $0x368] sm:$0xff]
    %v4957 = vld [vmem:[#allocation5 + $0x370] sm:$0xff]
    %v4958 = vld [vmem:[#allocation5 + $0x378] sm:$0xff]
    %v4959 = vld [vmem:[#allocation5 + $0x380] sm:$0xff]
    %v4960 = vld [vmem:[#allocation5 + $0x388] sm:$0xff]
    %v4961 = vld [vmem:[#allocation5 + $0x390] sm:$0xff]
    %v4962 = vld [vmem:[#allocation5 + $0x398] sm:$0xff]
    %v4963 = vld [vmem:[#allocation5 + $0x3a0] sm:$0xff]
    %v4964 = vld [vmem:[#allocation5 + $0x3a8] sm:$0xff]
    %v4965 = vld [vmem:[#allocation5 + $0x3b0] sm:$0xff]
    %v4966 = vld [vmem:[#allocation5 + $0x3b8] sm:$0xff]
    %v4967 = vld [vmem:[#allocation5 + $0x3c0] sm:$0xff]
    %v4968 = vld [vmem:[#allocation5 + $0x3c8] sm:$0xff]
    %v4969 = vld [vmem:[#allocation5 + $0x3d0] sm:$0xff]
    %v4970 = vld [vmem:[#allocation5 + $0x3d8] sm:$0xff]
    %v4971 = vld [vmem:[#allocation5 + $0x3e0] sm:$0xff]
    %v4972 = vld [vmem:[#allocation5 + $0x3e8] sm:$0xff]
    %v4973 = vld [vmem:[#allocation5 + $0x3f0] sm:$0xff]
    %v4974 = vld [vmem:[#allocation5 + $0x3f8] sm:$0xff]
    %v4975 = vld [vmem:[#allocation5 + $0x400] sm:$0xff]
    %v4976 = vld [vmem:[#allocation5 + $0x408] sm:$0xff]
    %v4977 = vld [vmem:[#allocation5 + $0x410] sm:$0xff]
    %v4978 = vld [vmem:[#allocation5 + $0x418] sm:$0xff]
    %v4979 = vld [vmem:[#allocation5 + $0x420] sm:$0xff]
    %v4980 = vld [vmem:[#allocation5 + $0x428] sm:$0xff]
    %v4981 = vld [vmem:[#allocation5 + $0x430] sm:$0xff]
    %v4982 = vld [vmem:[#allocation5 + $0x438] sm:$0xff]
    %v4983 = vld [vmem:[#allocation5 + $0x440] sm:$0xff]
    %v4984 = vld [vmem:[#allocation5 + $0x448] sm:$0xff]
    %v4985 = vld [vmem:[#allocation5 + $0x450] sm:$0xff]
    %v4986 = vld [vmem:[#allocation5 + $0x458] sm:$0xff]
    %v4987 = vld [vmem:[#allocation5 + $0x460] sm:$0xff]
    %v4988 = vld [vmem:[#allocation5 + $0x468] sm:$0xff]
    %v4989 = vld [vmem:[#allocation5 + $0x470] sm:$0xff]
    %v4990 = vld [vmem:[#allocation5 + $0x478] sm:$0xff]
    %v4991 = vld [vmem:[#allocation5 + $0x480] sm:$0xff]
    %v4992 = vld [vmem:[#allocation5 + $0x488] sm:$0xff]
    %v4993 = vld [vmem:[#allocation5 + $0x490] sm:$0xff]
    %v4994 = vld [vmem:[#allocation5 + $0x498] sm:$0xff]
    %v4995 = vld [vmem:[#allocation5 + $0x4a0] sm:$0xff]
    %v4996 = vld [vmem:[#allocation5 + $0x4a8] sm:$0xff]
    %v4997 = vld [vmem:[#allocation5 + $0x4b0] sm:$0xff]
    %v4998 = vld [vmem:[#allocation5 + $0x4b8] sm:$0xff]
    %v4999 = vld [vmem:[#allocation5 + $0x4c0] sm:$0xff]
    %v5000 = vld [vmem:[#allocation5 + $0x4c8] sm:$0xff]
    %v5001 = vld [vmem:[#allocation5 + $0x4d0] sm:$0xff]
    %v5002 = vld [vmem:[#allocation5 + $0x4d8] sm:$0xff]
    %v5003 = vld [vmem:[#allocation5 + $0x4e0] sm:$0xff]
    %v5004 = vld [vmem:[#allocation5 + $0x4e8] sm:$0xff]
    %v5005 = vld [vmem:[#allocation5 + $0x4f0] sm:$0xff]
    %v5006 = vld [vmem:[#allocation5 + $0x4f8] sm:$0xff]
    %v5007 = vld [vmem:[#allocation5 + $0x500] sm:$0xff]
    %v5008 = vld [vmem:[#allocation5 + $0x508] sm:$0xff]
    %v5009 = vld [vmem:[#allocation5 + $0x510] sm:$0xff]
    %v5010 = vld [vmem:[#allocation5 + $0x518] sm:$0xff]
    %v5011 = vld [vmem:[#allocation5 + $0x520] sm:$0xff]
    %v5012 = vld [vmem:[#allocation5 + $0x528] sm:$0xff]
    %v5013 = vld [vmem:[#allocation5 + $0x530] sm:$0xff]
    %v5014 = vld [vmem:[#allocation5 + $0x538] sm:$0xff]
    %v5015 = vld [vmem:[#allocation5 + $0x540] sm:$0xff]
    %v5016 = vld [vmem:[#allocation5 + $0x548] sm:$0xff]
    %v5017 = vld [vmem:[#allocation5 + $0x550] sm:$0xff]
    %v5018 = vld [vmem:[#allocation5 + $0x558] sm:$0xff]
    %v5019 = vld [vmem:[#allocation5 + $0x560] sm:$0xff]
    %v5020 = vld [vmem:[#allocation5 + $0x568] sm:$0xff]
    %v5021 = vld [vmem:[#allocation5 + $0x570] sm:$0xff]
    %v5022 = vld [vmem:[#allocation5 + $0x578] sm:$0xff]
    %v5023 = vld [vmem:[#allocation5 + $0x580] sm:$0xff]
    %v5024 = vld [vmem:[#allocation5 + $0x588] sm:$0xff]
    %v5025 = vld [vmem:[#allocation5 + $0x590] sm:$0xff]
    %v5026 = vld [vmem:[#allocation5 + $0x598] sm:$0xff]
    %v5027 = vld [vmem:[#allocation5 + $0x5a0] sm:$0xff]
    %v5028 = vld [vmem:[#allocation5 + $0x5a8] sm:$0xff]
    %v5029 = vld [vmem:[#allocation5 + $0x5b0] sm:$0xff]
    %v5030 = vld [vmem:[#allocation5 + $0x5b8] sm:$0xff]
    %v5031 = vld [vmem:[#allocation5 + $0x5c0] sm:$0xff]
    %v5032 = vld [vmem:[#allocation5 + $0x5c8] sm:$0xff]
    %v5033 = vld [vmem:[#allocation5 + $0x5d0] sm:$0xff]
    %v5034 = vld [vmem:[#allocation5 + $0x5d8] sm:$0xff]
    %v5035 = vld [vmem:[#allocation5 + $0x5e0] sm:$0xff]
    %v5036 = vld [vmem:[#allocation5 + $0x5e8] sm:$0xff]
    %v5037 = vld [vmem:[#allocation5 + $0x5f0] sm:$0xff]
    %v5038 = vld [vmem:[#allocation5 + $0x5f8] sm:$0xff]
    %v5039 = vld [vmem:[#allocation5 + $0x600] sm:$0xff]
    %v5040 = vld [vmem:[#allocation5 + $0x608] sm:$0xff]
    %v5041 = vld [vmem:[#allocation5 + $0x610] sm:$0xff]
    %v5042 = vld [vmem:[#allocation5 + $0x618] sm:$0xff]
    %v5043 = vld [vmem:[#allocation5 + $0x620] sm:$0xff]
    %v5044 = vld [vmem:[#allocation5 + $0x628] sm:$0xff]
    %v5045 = vld [vmem:[#allocation5 + $0x630] sm:$0xff]
    %v5046 = vld [vmem:[#allocation5 + $0x638] sm:$0xff]
    %v5047 = vld [vmem:[#allocation5 + $0x640] sm:$0xff]
    %v5048 = vld [vmem:[#allocation5 + $0x648] sm:$0xff]
    %v5049 = vld [vmem:[#allocation5 + $0x650] sm:$0xff]
    %v5050 = vld [vmem:[#allocation5 + $0x658] sm:$0xff]
    %v5051 = vld [vmem:[#allocation5 + $0x660] sm:$0xff]
    %v5052 = vld [vmem:[#allocation5 + $0x668] sm:$0xff]
    %v5053 = vld [vmem:[#allocation5 + $0x670] sm:$0xff]
    %v5054 = vld [vmem:[#allocation5 + $0x678] sm:$0xff]
    %v5055 = vld [vmem:[#allocation5 + $0x680] sm:$0xff]
    %v5056 = vld [vmem:[#allocation5 + $0x688] sm:$0xff]
    %v5057 = vld [vmem:[#allocation5 + $0x690] sm:$0xff]
    %v5058 = vld [vmem:[#allocation5 + $0x698] sm:$0xff]
    %v5059 = vld [vmem:[#allocation5 + $0x6a0] sm:$0xff]
    %v5060 = vld [vmem:[#allocation5 + $0x6a8] sm:$0xff]
    %v5061 = vld [vmem:[#allocation5 + $0x6b0] sm:$0xff]
    %v5062 = vld [vmem:[#allocation5 + $0x6b8] sm:$0xff]
    %v5063 = vld [vmem:[#allocation5 + $0x6c0] sm:$0xff]
    %v5064 = vld [vmem:[#allocation5 + $0x6c8] sm:$0xff]
    %v5065 = vld [vmem:[#allocation5 + $0x6d0] sm:$0xff]
    %v5066 = vld [vmem:[#allocation5 + $0x6d8] sm:$0xff]
    %v5067 = vld [vmem:[#allocation5 + $0x6e0] sm:$0xff]
    %v5068 = vld [vmem:[#allocation5 + $0x6e8] sm:$0xff]
    %v5069 = vld [vmem:[#allocation5 + $0x6f0] sm:$0xff]
    %v5070 = vld [vmem:[#allocation5 + $0x6f8] sm:$0xff]
    %v5071 = vld [vmem:[#allocation5 + $0x700] sm:$0xff]
    %v5072 = vld [vmem:[#allocation5 + $0x708] sm:$0xff]
    %v5073 = vld [vmem:[#allocation5 + $0x710] sm:$0xff]
    %v5074 = vld [vmem:[#allocation5 + $0x718] sm:$0xff]
    %v5075 = vld [vmem:[#allocation5 + $0x720] sm:$0xff]
    %v5076 = vld [vmem:[#allocation5 + $0x728] sm:$0xff]
    %v5077 = vld [vmem:[#allocation5 + $0x730] sm:$0xff]
    %v5078 = vld [vmem:[#allocation5 + $0x738] sm:$0xff]
    %v5079 = vld [vmem:[#allocation5 + $0x740] sm:$0xff]
    %v5080 = vld [vmem:[#allocation5 + $0x748] sm:$0xff]
    %v5081 = vld [vmem:[#allocation5 + $0x750] sm:$0xff]
    %v5082 = vld [vmem:[#allocation5 + $0x758] sm:$0xff]
    %v5083 = vld [vmem:[#allocation5 + $0x760] sm:$0xff]
    %v5084 = vld [vmem:[#allocation5 + $0x768] sm:$0xff]
    %v5085 = vld [vmem:[#allocation5 + $0x770] sm:$0xff]
    %v5086 = vld [vmem:[#allocation5 + $0x778] sm:$0xff]
    %v5088 = vlaneseq
    %v5089 = vshrl.u32 %v5088, 7
    %v5090 = vsub.s32 0, %v5089
    %v5091 = vrot.slane %v4842, %v5090
    %v5092 = vlaneseq
    %v5093 = vshrl.u32 %v5092, 7
    %v5094 = vsub.s32 1, %v5093
    %v5095 = vrot.slane %v4842, %v5094
    %v5096 = vlaneseq
    %v5097 = vshrl.u32 %v5096, 7
    %v5098 = vsub.s32 2, %v5097
    %v5099 = vrot.slane %v4842, %v5098
    %5103 = vmatprep.subr.mxu0 %v4848
    %5104 = vmatpush1.msra.mxu0 %v4847
    %5105 = vmatprep.subr.mxu0 %v4853
    %5106 = vmatpush1.msra.mxu0 %v4852
    %5107 = vmatprep.subr.mxu0 %v4858
    %5108 = vmatpush1.msra.mxu0 %v4857
    %5109 = vmatprep.subr.mxu0 %v4863
    %5110 = vmatpush1.msra.mxu0 %v4862
    %5111 = vmatprep.subr.mxu0 %v4868
    %5112 = vmatpush1.msra.mxu0 %v4867
    %5113 = vmatprep.subr.mxu0 %v4873
    %5114 = vmatpush1.msra.mxu0 %v4872
    %5115 = vmatprep.subr.mxu0 %v4878
    %5116 = vmatpush1.msra.mxu0 %v4877
    %5117 = vmatprep.subr.mxu0 %v4883
    %5118 = vmatpush1.msra.mxu0 %v4882
    %5119 = vmatprep.subr.mxu0 %v4888
    %5120 = vmatpush1.msra.mxu0 %v4887
    %5121 = vmatprep.subr.mxu0 %v4893
    %5122 = vmatpush1.msra.mxu0 %v4892
    %5123 = vmatprep.subr.mxu0 %v4898
    %5124 = vmatpush1.msra.mxu0 %v4897
    %5125 = vmatprep.subr.mxu0 %v4903
    %5126 = vmatpush1.msra.mxu0 %v4902
    %5127 = vmatprep.subr.mxu0 %v4908
    %5128 = vmatpush1.msra.mxu0 %v4907
    %5129 = vmatprep.subr.mxu0 %v4913
    %5130 = vmatpush1.msra.mxu0 %v4912
    %5131 = vmatprep.subr.mxu0 %v4918
    %5132 = vmatpush1.msra.mxu0 %v4917
    %5133 = vmatprep.subr.mxu0 %v4923
    %5134 = vmatpush1.msra.mxu0 %v4922
    %5135 = vmatprep.subr.mxu0 %v4928
    %5136 = vmatpush1.msra.mxu0 %v4927
    %5137 = vmatprep.subr.mxu0 %v4933
    %5138 = vmatpush1.msra.mxu0 %v4932
    %5139 = vmatprep.subr.mxu0 %v4938
    %5140 = vmatpush1.msra.mxu0 %v4937
    %5141 = vmatprep.subr.mxu0 %v4943
    %5142 = vmatpush1.msra.mxu0 %v4942
    %5143 = vmatprep.subr.mxu0 %v4948
    %5144 = vmatpush1.msra.mxu0 %v4947
    %5145 = vmatprep.subr.mxu0 %v4953
    %5146 = vmatpush1.msra.mxu0 %v4952
    %5147 = vmatprep.subr.mxu0 %v4958
    %5148 = vmatpush1.msra.mxu0 %v4957
    %5149 = vmatprep.subr.mxu0 %v4963
    %5150 = vmatpush1.msra.mxu0 %v4962
    %5151 = vmatprep.subr.mxu0 %v4968
    %5152 = vmatpush1.msra.mxu0 %v4967
    %5153 = vmatprep.subr.mxu0 %v4973
    %5154 = vmatpush1.msra.mxu0 %v4972
    %5155 = vmatprep.subr.mxu0 %v4978
    %5156 = vmatpush1.msra.mxu0 %v4977
    %5157 = vmatprep.subr.mxu0 %v4983
    %5158 = vmatpush1.msra.mxu0 %v4982
    %5159 = vmatprep.subr.mxu0 %v4988
    %5160 = vmatpush1.msra.mxu0 %v4987
    %5161 = vmatprep.subr.mxu0 %v4993
    %5162 = vmatpush1.msra.mxu0 %v4992
    %5163 = vmatprep.subr.mxu0 %v4998
    %5164 = vmatpush1.msra.mxu0 %v4997
    %5165 = vmatprep.subr.mxu0 %v5003
    %5166 = vmatpush1.msra.mxu0 %v5002
    %5167 = vmatprep.mubr.f32.mxu0 %v5095
    %5168 = vmatmul.mubr.f32.gmra.mrb[0].mxu0 %v5091
    %v5169 = vpop.f32.mrb[0].mxu0
    %v5170 = vadd.f32 0.0, %v5169
    %v5171 = vpop.f32.mrb[0].mxu0
    %v5172 = vadd.f32 0.0, %v5171
    %5173 = vdwg.mxu0
    %5174 = vmatprep.subr.mxu0 %v5008
    %5175 = vmatpush1.msra.mxu0 %v5007
    %5176 = vmatprep.subr.mxu0 %v5013
    %5177 = vmatpush1.msra.mxu0 %v5012
    %5178 = vmatprep.subr.mxu0 %v5018
    %5179 = vmatpush1.msra.mxu0 %v5017
    %5180 = vmatprep.subr.mxu0 %v5023
    %5181 = vmatpush1.msra.mxu0 %v5022
    %5182 = vmatprep.subr.mxu0 %v5028
    %5183 = vmatpush1.msra.mxu0 %v5027
    %5184 = vmatprep.subr.mxu0 %v5033
    %5185 = vmatpush1.msra.mxu0 %v5032
    %5186 = vmatprep.subr.mxu0 %v5038
    %5187 = vmatpush1.msra.mxu0 %v5037
    %5188 = vmatprep.subr.mxu0 %v5043
    %5189 = vmatpush1.msra.mxu0 %v5042
    %5190 = vmatprep.subr.mxu0 %v5048
    %5191 = vmatpush1.msra.mxu0 %v5047
    %5192 = vmatprep.subr.mxu0 %v5053
    %5193 = vmatpush1.msra.mxu0 %v5052
    %5194 = vmatprep.subr.mxu0 %v5058
    %5195 = vmatpush1.msra.mxu0 %v5057
    %5196 = vmatprep.subr.mxu0 %v5063
    %5197 = vmatpush1.msra.mxu0 %v5062
    %5198 = vmatprep.subr.mxu0 %v5068
    %5199 = vmatpush1.msra.mxu0 %v5067
    %5200 = vmatprep.subr.mxu0 %v5073
    %5201 = vmatpush1.msra.mxu0 %v5072
    %5202 = vmatprep.subr.mxu0 %v5078
    %5203 = vmatpush1.msra.mxu0 %v5077
    %5204 = vmatprep.subr.mxu0 %v5083
    %5205 = vmatpush1.msra.mxu0 %v5082
    %5206 = vmatprep.subr.mxu0 0.0
    %5207 = vmatpush1.msra.mxu0 0.0
    %5208 = vmatprep.subr.mxu0 0.0
    %5209 = vmatpush1.msra.mxu0 0.0
    %5210 = vmatprep.subr.mxu0 0.0
    %5211 = vmatpush1.msra.mxu0 0.0
    %5212 = vmatprep.subr.mxu0 0.0
    %5213 = vmatpush1.msra.mxu0 0.0
    %5214 = vmatprep.subr.mxu0 0.0
    %5215 = vmatpush1.msra.mxu0 0.0
    %5216 = vmatprep.subr.mxu0 0.0
    %5217 = vmatpush1.msra.mxu0 0.0
    %5218 = vmatprep.subr.mxu0 0.0
    %5219 = vmatpush1.msra.mxu0 0.0
    %5220 = vmatprep.subr.mxu0 0.0
    %5221 = vmatpush1.msra.mxu0 0.0
    %5222 = vmatprep.subr.mxu0 0.0
    %5223 = vmatpush1.msra.mxu0 0.0
    %5224 = vmatprep.subr.mxu0 0.0
    %5225 = vmatpush1.msra.mxu0 0.0
    %5226 = vmatprep.subr.mxu0 0.0
    %5227 = vmatpush1.msra.mxu0 0.0
    %5228 = vmatprep.subr.mxu0 0.0
    %5229 = vmatpush1.msra.mxu0 0.0
    %5230 = vmatprep.subr.mxu0 0.0
    %5231 = vmatpush1.msra.mxu0 0.0
    %5232 = vmatprep.subr.mxu0 0.0
    %5233 = vmatpush1.msra.mxu0 0.0
    %5234 = vmatprep.subr.mxu0 0.0
    %5235 = vmatpush1.msra.mxu0 0.0
    %5236 = vmatprep.subr.mxu0 0.0
    %5237 = vmatpush1.msra.mxu0 0.0
    %5238 = vmatprep.mubr.f32.mxu0 0.0
    %5239 = vmatmul.mubr.f32.gmra.mrb[0].mxu0 %v5099
    %v5240 = vpop.f32.mrb[0].mxu0
    %v5241 = vadd.f32 %v5170, %v5240
    %v5242 = vpop.f32.mrb[0].mxu0
    %v5243 = vadd.f32 %v5172, %v5242
    %5244 = vdwg.mxu0
    %5245 = vmatprep.subr.mxu0 %v4850
    %5246 = vmatpush1.msra.mxu0 %v4849
    %5247 = vmatprep.subr.mxu0 %v4855
    %5248 = vmatpush1.msra.mxu0 %v4854
    %5249 = vmatprep.subr.mxu0 %v4860
    %5250 = vmatpush1.msra.mxu0 %v4859
    %5251 = vmatprep.subr.mxu0 %v4865
    %5252 = vmatpush1.msra.mxu0 %v4864
    %5253 = vmatprep.subr.mxu0 %v4870
    %5254 = vmatpush1.msra.mxu0 %v4869
    %5255 = vmatprep.subr.mxu0 %v4875
    %5256 = vmatpush1.msra.mxu0 %v4874
    %5257 = vmatprep.subr.mxu0 %v4880
    %5258 = vmatpush1.msra.mxu0 %v4879
    %5259 = vmatprep.subr.mxu0 %v4885
    %5260 = vmatpush1.msra.mxu0 %v4884
    %5261 = vmatprep.subr.mxu0 %v4890
    %5262 = vmatpush1.msra.mxu0 %v4889
    %5263 = vmatprep.subr.mxu0 %v4895
    %5264 = vmatpush1.msra.mxu0 %v4894
    %5265 = vmatprep.subr.mxu0 %v4900
    %5266 = vmatpush1.msra.mxu0 %v4899
    %5267 = vmatprep.subr.mxu0 %v4905
    %5268 = vmatpush1.msra.mxu0 %v4904
    %5269 = vmatprep.subr.mxu0 %v4910
    %5270 = vmatpush1.msra.mxu0 %v4909
    %5271 = vmatprep.subr.mxu0 %v4915
    %5272 = vmatpush1.msra.mxu0 %v4914
    %5273 = vmatprep.subr.mxu0 %v4920
    %5274 = vmatpush1.msra.mxu0 %v4919
    %5275 = vmatprep.subr.mxu0 %v4925
    %5276 = vmatpush1.msra.mxu0 %v4924
    %5277 = vmatprep.subr.mxu0 %v4930
    %5278 = vmatpush1.msra.mxu0 %v4929
    %5279 = vmatprep.subr.mxu0 %v4935
    %5280 = vmatpush1.msra.mxu0 %v4934
    %5281 = vmatprep.subr.mxu0 %v4940
    %5282 = vmatpush1.msra.mxu0 %v4939
    %5283 = vmatprep.subr.mxu0 %v4945
    %5284 = vmatpush1.msra.mxu0 %v4944
    %5285 = vmatprep.subr.mxu0 %v4950
    %5286 = vmatpush1.msra.mxu0 %v4949
    %5287 = vmatprep.subr.mxu0 %v4955
    %5288 = vmatpush1.msra.mxu0 %v4954
    %5289 = vmatprep.subr.mxu0 %v4960
    %5290 = vmatpush1.msra.mxu0 %v4959
    %5291 = vmatprep.subr.mxu0 %v4965
    %5292 = vmatpush1.msra.mxu0 %v4964
    %5293 = vmatprep.subr.mxu0 %v4970
    %5294 = vmatpush1.msra.mxu0 %v4969
    %5295 = vmatprep.subr.mxu0 %v4975
    %5296 = vmatpush1.msra.mxu0 %v4974
    %5297 = vmatprep.subr.mxu0 %v4980
    %5298 = vmatpush1.msra.mxu0 %v4979
    %5299 = vmatprep.subr.mxu0 %v4985
    %5300 = vmatpush1.msra.mxu0 %v4984
    %5301 = vmatprep.subr.mxu0 %v4990
    %5302 = vmatpush1.msra.mxu0 %v4989
    %5303 = vmatprep.subr.mxu0 %v4995
    %5304 = vmatpush1.msra.mxu0 %v4994
    %5305 = vmatprep.subr.mxu0 %v5000
    %5306 = vmatpush1.msra.mxu0 %v4999
    %5307 = vmatprep.subr.mxu0 %v5005
    %5308 = vmatpush1.msra.mxu0 %v5004
    %5309 = vmatprep.mubr.f32.mxu0 %v5095
    %5310 = vmatmul.mubr.f32.gmra.mrb[0].mxu0 %v5091
    %v5311 = vpop.f32.mrb[0].mxu0
    %v5312 = vadd.f32 0.0, %v5311
    %v5313 = vpop.f32.mrb[0].mxu0
    %v5314 = vadd.f32 0.0, %v5313
    %5315 = vdwg.mxu0
    %5316 = vmatprep.subr.mxu0 %v5010
    %5317 = vmatpush1.msra.mxu0 %v5009
    %5318 = vmatprep.subr.mxu0 %v5015
    %5319 = vmatpush1.msra.mxu0 %v5014
    %5320 = vmatprep.subr.mxu0 %v5020
    %5321 = vmatpush1.msra.mxu0 %v5019
    %5322 = vmatprep.subr.mxu0 %v5025
    %5323 = vmatpush1.msra.mxu0 %v5024
    %5324 = vmatprep.subr.mxu0 %v5030
    %5325 = vmatpush1.msra.mxu0 %v5029
    %5326 = vmatprep.subr.mxu0 %v5035
    %5327 = vmatpush1.msra.mxu0 %v5034
    %5328 = vmatprep.subr.mxu0 %v5040
    %5329 = vmatpush1.msra.mxu0 %v5039
    %5330 = vmatprep.subr.mxu0 %v5045
    %5331 = vmatpush1.msra.mxu0 %v5044
    %5332 = vmatprep.subr.mxu0 %v5050
    %5333 = vmatpush1.msra.mxu0 %v5049
    %5334 = vmatprep.subr.mxu0 %v5055
    %5335 = vmatpush1.msra.mxu0 %v5054
    %5336 = vmatprep.subr.mxu0 %v5060
    %5337 = vmatpush1.msra.mxu0 %v5059
    %5338 = vmatprep.subr.mxu0 %v5065
    %5339 = vmatpush1.msra.mxu0 %v5064
    %5340 = vmatprep.subr.mxu0 %v5070
    %5341 = vmatpush1.msra.mxu0 %v5069
    %5342 = vmatprep.subr.mxu0 %v5075
    %5343 = vmatpush1.msra.mxu0 %v5074
    %5344 = vmatprep.subr.mxu0 %v5080
    %5345 = vmatpush1.msra.mxu0 %v5079
    %5346 = vmatprep.subr.mxu0 %v5085
    %5347 = vmatpush1.msra.mxu0 %v5084
    %5348 = vmatprep.subr.mxu0 0.0
    %5349 = vmatpush1.msra.mxu0 0.0
    %5350 = vmatprep.subr.mxu0 0.0
    %5351 = vmatpush1.msra.mxu0 0.0
    %5352 = vmatprep.subr.mxu0 0.0
    %5353 = vmatpush1.msra.mxu0 0.0
    %5354 = vmatprep.subr.mxu0 0.0
    %5355 = vmatpush1.msra.mxu0 0.0
    %5356 = vmatprep.subr.mxu0 0.0
    %5357 = vmatpush1.msra.mxu0 0.0
    %5358 = vmatprep.subr.mxu0 0.0
    %5359 = vmatpush1.msra.mxu0 0.0
    %5360 = vmatprep.subr.mxu0 0.0
    %5361 = vmatpush1.msra.mxu0 0.0
    %5362 = vmatprep.subr.mxu0 0.0
    %5363 = vmatpush1.msra.mxu0 0.0
    %5364 = vmatprep.subr.mxu0 0.0
    %5365 = vmatpush1.msra.mxu0 0.0
    %5366 = vmatprep.subr.mxu0 0.0
    %5367 = vmatpush1.msra.mxu0 0.0
    %5368 = vmatprep.subr.mxu0 0.0
    %5369 = vmatpush1.msra.mxu0 0.0
    %5370 = vmatprep.subr.mxu0 0.0
    %5371 = vmatpush1.msra.mxu0 0.0
    %5372 = vmatprep.subr.mxu0 0.0
    %5373 = vmatpush1.msra.mxu0 0.0
    %5374 = vmatprep.subr.mxu0 0.0
    %5375 = vmatpush1.msra.mxu0 0.0
    %5376 = vmatprep.subr.mxu0 0.0
    %5377 = vmatpush1.msra.mxu0 0.0
    %5378 = vmatprep.subr.mxu0 0.0
    %5379 = vmatpush1.msra.mxu0 0.0
    %5380 = vmatprep.mubr.f32.mxu0 0.0
    %5381 = vmatmul.mubr.f32.gmra.mrb[0].mxu0 %v5099
    %v5382 = vpop.f32.mrb[0].mxu0
    %v5383 = vadd.f32 %v5312, %v5382
    %v5384 = vpop.f32.mrb[0].mxu0
    %v5385 = vadd.f32 %v5314, %v5384
    %5386 = vdwg.mxu0
    %5387 = vmatprep.subr.mxu0 0.0
    %5388 = vmatpush1.msra.mxu0 %v4851
    %5389 = vmatprep.subr.mxu0 0.0
    %5390 = vmatpush1.msra.mxu0 %v4856
    %5391 = vmatprep.subr.mxu0 0.0
    %5392 = vmatpush1.msra.mxu0 %v4861
    %5393 = vmatprep.subr.mxu0 0.0
    %5394 = vmatpush1.msra.mxu0 %v4866
    %5395 = vmatprep.subr.mxu0 0.0
    %5396 = vmatpush1.msra.mxu0 %v4871
    %5397 = vmatprep.subr.mxu0 0.0
    %5398 = vmatpush1.msra.mxu0 %v4876
    %5399 = vmatprep.subr.mxu0 0.0
    %5400 = vmatpush1.msra.mxu0 %v4881
    %5401 = vmatprep.subr.mxu0 0.0
    %5402 = vmatpush1.msra.mxu0 %v4886
    %5403 = vmatprep.subr.mxu0 0.0
    %5404 = vmatpush1.msra.mxu0 %v4891
    %5405 = vmatprep.subr.mxu0 0.0
    %5406 = vmatpush1.msra.mxu0 %v4896
    %5407 = vmatprep.subr.mxu0 0.0
    %5408 = vmatpush1.msra.mxu0 %v4901
    %5409 = vmatprep.subr.mxu0 0.0
    %5410 = vmatpush1.msra.mxu0 %v4906
    %5411 = vmatprep.subr.mxu0 0.0
    %5412 = vmatpush1.msra.mxu0 %v4911
    %5413 = vmatprep.subr.mxu0 0.0
    %5414 = vmatpush1.msra.mxu0 %v4916
    %5415 = vmatprep.subr.mxu0 0.0
    %5416 = vmatpush1.msra.mxu0 %v4921
    %5417 = vmatprep.subr.mxu0 0.0
    %5418 = vmatpush1.msra.mxu0 %v4926
    %5419 = vmatprep.subr.mxu0 0.0
    %5420 = vmatpush1.msra.mxu0 %v4931
    %5421 = vmatprep.subr.mxu0 0.0
    %5422 = vmatpush1.msra.mxu0 %v4936
    %5423 = vmatprep.subr.mxu0 0.0
    %5424 = vmatpush1.msra.mxu0 %v4941
    %5425 = vmatprep.subr.mxu0 0.0
    %5426 = vmatpush1.msra.mxu0 %v4946
    %5427 = vmatprep.subr.mxu0 0.0
    %5428 = vmatpush1.msra.mxu0 %v4951
    %5429 = vmatprep.subr.mxu0 0.0
    %5430 = vmatpush1.msra.mxu0 %v4956
    %5431 = vmatprep.subr.mxu0 0.0
    %5432 = vmatpush1.msra.mxu0 %v4961
    %5433 = vmatprep.subr.mxu0 0.0
    %5434 = vmatpush1.msra.mxu0 %v4966
    %5435 = vmatprep.subr.mxu0 0.0
    %5436 = vmatpush1.msra.mxu0 %v4971
    %5437 = vmatprep.subr.mxu0 0.0
    %5438 = vmatpush1.msra.mxu0 %v4976
    %5439 = vmatprep.subr.mxu0 0.0
    %5440 = vmatpush1.msra.mxu0 %v4981
    %5441 = vmatprep.subr.mxu0 0.0
    %5442 = vmatpush1.msra.mxu0 %v4986
    %5443 = vmatprep.subr.mxu0 0.0
    %5444 = vmatpush1.msra.mxu0 %v4991
    %5445 = vmatprep.subr.mxu0 0.0
    %5446 = vmatpush1.msra.mxu0 %v4996
    %5447 = vmatprep.subr.mxu0 0.0
    %5448 = vmatpush1.msra.mxu0 %v5001
    %5449 = vmatprep.subr.mxu0 0.0
    %5450 = vmatpush1.msra.mxu0 %v5006
    %5451 = vmatprep.mubr.f32.mxu0 %v5095
    %5452 = vmatmul.mubr.f32.gmra.mrb[0].mxu0 %v5091
    %v5453 = vpop.f32.mrb[0].mxu0
    %v5454 = vadd.f32 0.0, %v5453
    %v5455 = vpop.f32.mrb[0].mxu0
    %5456 = vdwg.mxu0
    %5457 = vmatprep.subr.mxu0 0.0
    %5458 = vmatpush1.msra.mxu0 %v5011
    %5459 = vmatprep.subr.mxu0 0.0
    %5460 = vmatpush1.msra.mxu0 %v5016
    %5461 = vmatprep.subr.mxu0 0.0
    %5462 = vmatpush1.msra.mxu0 %v5021
    %5463 = vmatprep.subr.mxu0 0.0
    %5464 = vmatpush1.msra.mxu0 %v5026
    %5465 = vmatprep.subr.mxu0 0.0
    %5466 = vmatpush1.msra.mxu0 %v5031
    %5467 = vmatprep.subr.mxu0 0.0
    %5468 = vmatpush1.msra.mxu0 %v5036
    %5469 = vmatprep.subr.mxu0 0.0
    %5470 = vmatpush1.msra.mxu0 %v5041
    %5471 = vmatprep.subr.mxu0 0.0
    %5472 = vmatpush1.msra.mxu0 %v5046
    %5473 = vmatprep.subr.mxu0 0.0
    %5474 = vmatpush1.msra.mxu0 %v5051
    %5475 = vmatprep.subr.mxu0 0.0
    %5476 = vmatpush1.msra.mxu0 %v5056
    %5477 = vmatprep.subr.mxu0 0.0
    %5478 = vmatpush1.msra.mxu0 %v5061
    %5479 = vmatprep.subr.mxu0 0.0
    %5480 = vmatpush1.msra.mxu0 %v5066
    %5481 = vmatprep.subr.mxu0 0.0
    %5482 = vmatpush1.msra.mxu0 %v5071
    %5483 = vmatprep.subr.mxu0 0.0
    %5484 = vmatpush1.msra.mxu0 %v5076
    %5485 = vmatprep.subr.mxu0 0.0
    %5486 = vmatpush1.msra.mxu0 %v5081
    %5487 = vmatprep.subr.mxu0 0.0
    %5488 = vmatpush1.msra.mxu0 %v5086
    %5489 = vmatprep.subr.mxu0 0.0
    %5490 = vmatpush1.msra.mxu0 0.0
    %5491 = vmatprep.subr.mxu0 0.0
    %5492 = vmatpush1.msra.mxu0 0.0
    %5493 = vmatprep.subr.mxu0 0.0
    %5494 = vmatpush1.msra.mxu0 0.0
    %5495 = vmatprep.subr.mxu0 0.0
    %5496 = vmatpush1.msra.mxu0 0.0
    %5497 = vmatprep.subr.mxu0 0.0
    %5498 = vmatpush1.msra.mxu0 0.0
    %5499 = vmatprep.subr.mxu0 0.0
    %5500 = vmatpush1.msra.mxu0 0.0
    %5501 = vmatprep.subr.mxu0 0.0
    %5502 = vmatpush1.msra.mxu0 0.0
    %5503 = vmatprep.subr.mxu0 0.0
    %5504 = vmatpush1.msra.mxu0 0.0
    %5505 = vmatprep.subr.mxu0 0.0
    %5506 = vmatpush1.msra.mxu0 0.0
    %5507 = vmatprep.subr.mxu0 0.0
    %5508 = vmatpush1.msra.mxu0 0.0
    %5509 = vmatprep.subr.mxu0 0.0
    %5510 = vmatpush1.msra.mxu0 0.0
    %5511 = vmatprep.subr.mxu0 0.0
    %5512 = vmatpush1.msra.mxu0 0.0
    %5513 = vmatprep.subr.mxu0 0.0
    %5514 = vmatpush1.msra.mxu0 0.0
    %5515 = vmatprep.subr.mxu0 0.0
    %5516 = vmatpush1.msra.mxu0 0.0
    %5517 = vmatprep.subr.mxu0 0.0
    %5518 = vmatpush1.msra.mxu0 0.0
    %5519 = vmatprep.subr.mxu0 0.0
    %5520 = vmatpush1.msra.mxu0 0.0
    %5521 = vmatprep.mubr.f32.mxu0 0.0
    %5522 = vmatmul.mubr.f32.gmra.mrb[0].mxu0 %v5099
    %v5523 = vpop.f32.mrb[0].mxu0
    %v5524 = vadd.f32 %v5454, %v5523
    %v5525 = vpop.f32.mrb[0].mxu0
    %5526 = vdwg.mxu0
    %v5532 = vcombine.low %v5241, %v5243
    %v5533 = vcombine.low %v5383, %v5385
    %v5535 = vunpack.c.l.s4 1966171168
    %v5536 = vunpack.c.0.s8 %v5535
    %v5537 = vlaneseq
    %v5538 = vshrl.u32 %v5537, 7
    %v5539 = vsub.s32 %v5536, %v5538
    %v5540 = vrot.slane %v5532, %v5539
    %v5542 = vunpack.c.l.s4 1966171168
    %v5543 = vunpack.c.0.s8 %v5542
    %v5544 = vlaneseq
    %v5545 = vshrl.u32 %v5544, 7
    %v5546 = vsub.s32 %v5543, %v5545
    %v5547 = vrot.slane %v5533, %v5546
    %v5549 = vunpack.c.l.s4 1966171168
    %v5550 = vunpack.c.0.s8 %v5549
    %v5551 = vlaneseq
    %v5552 = vshrl.u32 %v5551, 7
    %v5553 = vsub.s32 %v5550, %v5552
    %v5554 = vrot.slane %v5524, %v5553
    %v5555 = vcombine.low %v5540, %v5547
    %v5557 = vunpack.c.l.s4 1966171168
    %v5558 = vunpack.c.0.s8 %v5557
    %v5559 = vlaneseq
    %v5560 = vshrl.u32 %v5559, 7
    %v5561 = vsub.s32 %v5558, %v5560
    %v5562 = vrot.slane %v5555, %v5561
    %v5564 = vunpack.c.l.s4 1966171168
    %v5565 = vunpack.c.0.s8 %v5564
    %v5566 = vlaneseq
    %v5567 = vshrl.u32 %v5566, 7
    %v5568 = vsub.s32 %v5565, %v5567
    %v5569 = vrot.slane %v5554, %v5568
    %v5570 = vcombine.low %v5562, %v5569
    %v5572 = vadd.f32 %v4846, %v5570
    %v5573 = vld [vmem:[#allocation7] sm:$0xff]
    %v5574 = vld [vmem:[#allocation7 + $0x8] sm:$0xff]
    %v5575 = vld [vmem:[#allocation7 + $0x10] sm:$0xff]
    %v5576 = vld [vmem:[#allocation7 + $0x18] sm:$0xff]
    %v5577 = vld [vmem:[#allocation7 + $0x20] sm:$0xff]
    %v5578 = vld [vmem:[#allocation7 + $0x28] sm:$0xff]
    %v5579 = vld [vmem:[#allocation7 + $0x30] sm:$0xff]
    %v5580 = vld [vmem:[#allocation7 + $0x38] sm:$0xff]
    %v5581 = vld [vmem:[#allocation7 + $0x40] sm:$0xff]
    %v5582 = vld [vmem:[#allocation7 + $0x48] sm:$0xff]
    %v5583 = vld [vmem:[#allocation7 + $0x50] sm:$0xff]
    %v5584 = vld [vmem:[#allocation7 + $0x58] sm:$0xff]
    %v5585 = vld [vmem:[#allocation7 + $0x60] sm:$0xff]
    %v5586 = vld [vmem:[#allocation7 + $0x68] sm:$0xff]
    %v5587 = vld [vmem:[#allocation7 + $0x70] sm:$0xff]
    %v5588 = vld [vmem:[#allocation7 + $0x78] sm:$0xff]
    %v5589 = vld [vmem:[#allocation7 + $0x80] sm:$0xff]
    %v5590 = vld [vmem:[#allocation7 + $0x88] sm:$0xff]
    %v5591 = vld [vmem:[#allocation7 + $0x90] sm:$0xff]
    %v5592 = vld [vmem:[#allocation7 + $0x98] sm:$0xff]
    %v5593 = vld [vmem:[#allocation7 + $0xa0] sm:$0xff]
    %v5594 = vld [vmem:[#allocation7 + $0xa8] sm:$0xff]
    %v5595 = vld [vmem:[#allocation7 + $0xb0] sm:$0xff]
    %v5596 = vld [vmem:[#allocation7 + $0xb8] sm:$0xff]
    %v5597 = vld [vmem:[#allocation7 + $0xc0] sm:$0xff]
    %v5598 = vld [vmem:[#allocation7 + $0xc8] sm:$0xff]
    %v5599 = vld [vmem:[#allocation7 + $0xd0] sm:$0xff]
    %v5600 = vld [vmem:[#allocation7 + $0xd8] sm:$0xff]
    %v5601 = vld [vmem:[#allocation7 + $0xe0] sm:$0xff]
    %v5602 = vld [vmem:[#allocation7 + $0xe8] sm:$0xff]
    %v5603 = vld [vmem:[#allocation7 + $0xf0] sm:$0xff]
    %v5604 = vld [vmem:[#allocation7 + $0xf8] sm:$0xff]
    %v5605 = vld [vmem:[#allocation7 + $0x100] sm:$0xff]
    %v5606 = vld [vmem:[#allocation7 + $0x108] sm:$0xff]
    %v5607 = vld [vmem:[#allocation7 + $0x110] sm:$0xff]
    %v5608 = vld [vmem:[#allocation7 + $0x118] sm:$0xff]
    %v5609 = vld [vmem:[#allocation7 + $0x120] sm:$0xff]
    %v5610 = vld [vmem:[#allocation7 + $0x128] sm:$0xff]
    %v5611 = vld [vmem:[#allocation7 + $0x130] sm:$0xff]
    %v5612 = vld [vmem:[#allocation7 + $0x138] sm:$0xff]
    %v5613 = vld [vmem:[#allocation7 + $0x140] sm:$0xff]
    %v5614 = vld [vmem:[#allocation7 + $0x148] sm:$0xff]
    %v5615 = vld [vmem:[#allocation7 + $0x150] sm:$0xff]
    %v5616 = vld [vmem:[#allocation7 + $0x158] sm:$0xff]
    %v5617 = vld [vmem:[#allocation7 + $0x160] sm:$0xff]
    %v5618 = vld [vmem:[#allocation7 + $0x168] sm:$0xff]
    %v5619 = vld [vmem:[#allocation7 + $0x170] sm:$0xff]
    %v5620 = vld [vmem:[#allocation7 + $0x178] sm:$0xff]
    %v5621 = vld [vmem:[#allocation7 + $0x180] sm:$0xff]
    %v5622 = vld [vmem:[#allocation7 + $0x188] sm:$0xff]
    %v5623 = vld [vmem:[#allocation7 + $0x190] sm:$0xff]
    %v5624 = vld [vmem:[#allocation7 + $0x198] sm:$0xff]
    %v5625 = vld [vmem:[#allocation7 + $0x1a0] sm:$0xff]
    %v5626 = vld [vmem:[#allocation7 + $0x1a8] sm:$0xff]
    %v5627 = vld [vmem:[#allocation7 + $0x1b0] sm:$0xff]
    %v5628 = vld [vmem:[#allocation7 + $0x1b8] sm:$0xff]
    %v5629 = vld [vmem:[#allocation7 + $0x1c0] sm:$0xff]
    %v5630 = vld [vmem:[#allocation7 + $0x1c8] sm:$0xff]
    %v5631 = vld [vmem:[#allocation7 + $0x1d0] sm:$0xff]
    %v5632 = vld [vmem:[#allocation7 + $0x1d8] sm:$0xff]
    %v5633 = vld [vmem:[#allocation7 + $0x1e0] sm:$0xff]
    %v5634 = vld [vmem:[#allocation7 + $0x1e8] sm:$0xff]
    %v5635 = vld [vmem:[#allocation7 + $0x1f0] sm:$0xff]
    %v5636 = vld [vmem:[#allocation7 + $0x1f8] sm:$0xff]
    %v5637 = vld [vmem:[#allocation7 + $0x200] sm:$0xff]
    %v5638 = vld [vmem:[#allocation7 + $0x208] sm:$0xff]
    %v5639 = vld [vmem:[#allocation7 + $0x210] sm:$0xff]
    %v5640 = vld [vmem:[#allocation7 + $0x218] sm:$0xff]
    %v5641 = vld [vmem:[#allocation7 + $0x220] sm:$0xff]
    %v5642 = vld [vmem:[#allocation7 + $0x228] sm:$0xff]
    %v5643 = vld [vmem:[#allocation7 + $0x230] sm:$0xff]
    %v5644 = vld [vmem:[#allocation7 + $0x238] sm:$0xff]
    %v5645 = vld [vmem:[#allocation7 + $0x240] sm:$0xff]
    %v5646 = vld [vmem:[#allocation7 + $0x248] sm:$0xff]
    %v5647 = vld [vmem:[#allocation7 + $0x250] sm:$0xff]
    %v5648 = vld [vmem:[#allocation7 + $0x258] sm:$0xff]
    %v5649 = vld [vmem:[#allocation7 + $0x260] sm:$0xff]
    %v5650 = vld [vmem:[#allocation7 + $0x268] sm:$0xff]
    %v5651 = vld [vmem:[#allocation7 + $0x270] sm:$0xff]
    %v5652 = vld [vmem:[#allocation7 + $0x278] sm:$0xff]
    %v5653 = vld [vmem:[#allocation7 + $0x280] sm:$0xff]
    %v5654 = vld [vmem:[#allocation7 + $0x288] sm:$0xff]
    %v5655 = vld [vmem:[#allocation7 + $0x290] sm:$0xff]
    %v5656 = vld [vmem:[#allocation7 + $0x298] sm:$0xff]
    %v5657 = vld [vmem:[#allocation7 + $0x2a0] sm:$0xff]
    %v5658 = vld [vmem:[#allocation7 + $0x2a8] sm:$0xff]
    %v5659 = vld [vmem:[#allocation7 + $0x2b0] sm:$0xff]
    %v5660 = vld [vmem:[#allocation7 + $0x2b8] sm:$0xff]
    %v5661 = vld [vmem:[#allocation7 + $0x2c0] sm:$0xff]
    %v5662 = vld [vmem:[#allocation7 + $0x2c8] sm:$0xff]
    %v5663 = vld [vmem:[#allocation7 + $0x2d0] sm:$0xff]
    %v5664 = vld [vmem:[#allocation7 + $0x2d8] sm:$0xff]
    %v5665 = vld [vmem:[#allocation7 + $0x2e0] sm:$0xff]
    %v5666 = vld [vmem:[#allocation7 + $0x2e8] sm:$0xff]
    %v5667 = vld [vmem:[#allocation7 + $0x2f0] sm:$0xff]
    %v5668 = vld [vmem:[#allocation7 + $0x2f8] sm:$0xff]
    %v5669 = vld [vmem:[#allocation7 + $0x300] sm:$0xff]
    %v5670 = vld [vmem:[#allocation7 + $0x308] sm:$0xff]
    %v5671 = vld [vmem:[#allocation7 + $0x310] sm:$0xff]
    %v5672 = vld [vmem:[#allocation7 + $0x318] sm:$0xff]
    %v5673 = vld [vmem:[#allocation7 + $0x320] sm:$0xff]
    %v5674 = vld [vmem:[#allocation7 + $0x328] sm:$0xff]
    %v5675 = vld [vmem:[#allocation7 + $0x330] sm:$0xff]
    %v5676 = vld [vmem:[#allocation7 + $0x338] sm:$0xff]
    %v5677 = vld [vmem:[#allocation7 + $0x340] sm:$0xff]
    %v5678 = vld [vmem:[#allocation7 + $0x348] sm:$0xff]
    %v5679 = vld [vmem:[#allocation7 + $0x350] sm:$0xff]
    %v5680 = vld [vmem:[#allocation7 + $0x358] sm:$0xff]
    %v5681 = vld [vmem:[#allocation7 + $0x360] sm:$0xff]
    %v5682 = vld [vmem:[#allocation7 + $0x368] sm:$0xff]
    %v5683 = vld [vmem:[#allocation7 + $0x370] sm:$0xff]
    %v5684 = vld [vmem:[#allocation7 + $0x378] sm:$0xff]
    %v5685 = vld [vmem:[#allocation7 + $0x380] sm:$0xff]
    %v5686 = vld [vmem:[#allocation7 + $0x388] sm:$0xff]
    %v5687 = vld [vmem:[#allocation7 + $0x390] sm:$0xff]
    %v5688 = vld [vmem:[#allocation7 + $0x398] sm:$0xff]
    %v5689 = vld [vmem:[#allocation7 + $0x3a0] sm:$0xff]
    %v5690 = vld [vmem:[#allocation7 + $0x3a8] sm:$0xff]
    %v5691 = vld [vmem:[#allocation7 + $0x3b0] sm:$0xff]
    %v5692 = vld [vmem:[#allocation7 + $0x3b8] sm:$0xff]
    %v5693 = vld [vmem:[#allocation7 + $0x3c0] sm:$0xff]
    %v5694 = vld [vmem:[#allocation7 + $0x3c8] sm:$0xff]
    %v5695 = vld [vmem:[#allocation7 + $0x3d0] sm:$0xff]
    %v5696 = vld [vmem:[#allocation7 + $0x3d8] sm:$0xff]
    %v5697 = vld [vmem:[#allocation7 + $0x3e0] sm:$0xff]
    %v5698 = vld [vmem:[#allocation7 + $0x3e8] sm:$0xff]
    %v5699 = vld [vmem:[#allocation7 + $0x3f0] sm:$0xff]
    %v5700 = vld [vmem:[#allocation7 + $0x3f8] sm:$0xff]
    %v5701 = vld [vmem:[#allocation7 + $0x400] sm:$0xff]
    %v5702 = vld [vmem:[#allocation7 + $0x408] sm:$0xff]
    %v5703 = vld [vmem:[#allocation7 + $0x410] sm:$0xff]
    %v5704 = vld [vmem:[#allocation7 + $0x418] sm:$0xff]
    %v5705 = vld [vmem:[#allocation7 + $0x420] sm:$0xff]
    %v5706 = vld [vmem:[#allocation7 + $0x428] sm:$0xff]
    %v5707 = vld [vmem:[#allocation7 + $0x430] sm:$0xff]
    %v5708 = vld [vmem:[#allocation7 + $0x438] sm:$0xff]
    %v5709 = vld [vmem:[#allocation7 + $0x440] sm:$0xff]
    %v5710 = vld [vmem:[#allocation7 + $0x448] sm:$0xff]
    %v5711 = vld [vmem:[#allocation7 + $0x450] sm:$0xff]
    %v5712 = vld [vmem:[#allocation7 + $0x458] sm:$0xff]
    %v5713 = vld [vmem:[#allocation7 + $0x460] sm:$0xff]
    %v5714 = vld [vmem:[#allocation7 + $0x468] sm:$0xff]
    %v5715 = vld [vmem:[#allocation7 + $0x470] sm:$0xff]
    %v5716 = vld [vmem:[#allocation7 + $0x478] sm:$0xff]
    %v5717 = vld [vmem:[#allocation7 + $0x480] sm:$0xff]
    %v5718 = vld [vmem:[#allocation7 + $0x488] sm:$0xff]
    %v5719 = vld [vmem:[#allocation7 + $0x490] sm:$0xff]
    %v5720 = vld [vmem:[#allocation7 + $0x498] sm:$0xff]
    %v5721 = vld [vmem:[#allocation7 + $0x4a0] sm:$0xff]
    %v5722 = vld [vmem:[#allocation7 + $0x4a8] sm:$0xff]
    %v5723 = vld [vmem:[#allocation7 + $0x4b0] sm:$0xff]
    %v5724 = vld [vmem:[#allocation7 + $0x4b8] sm:$0xff]
    %v5725 = vld [vmem:[#allocation7 + $0x4c0] sm:$0xff]
    %v5726 = vld [vmem:[#allocation7 + $0x4c8] sm:$0xff]
    %v5727 = vld [vmem:[#allocation7 + $0x4d0] sm:$0xff]
    %v5728 = vld [vmem:[#allocation7 + $0x4d8] sm:$0xff]
    %v5729 = vld [vmem:[#allocation7 + $0x4e0] sm:$0xff]
    %v5730 = vld [vmem:[#allocation7 + $0x4e8] sm:$0xff]
    %v5731 = vld [vmem:[#allocation7 + $0x4f0] sm:$0xff]
    %v5732 = vld [vmem:[#allocation7 + $0x4f8] sm:$0xff]
    %v5733 = vld [vmem:[%s4] sm:$0x3]
    %v5735 = vlaneseq
    %v5736 = vshrl.u32 %v5735, 7
    %v5737 = vsub.s32 0, %v5736
    %v5738 = vrot.slane %v5572, %v5737
    %v5739 = vlaneseq
    %v5740 = vshrl.u32 %v5739, 7
    %v5741 = vsub.s32 1, %v5740
    %v5742 = vrot.slane %v5572, %v5741
    %v5743 = vlaneseq
    %v5744 = vshrl.u32 %v5743, 7
    %v5745 = vsub.s32 2, %v5744
    %v5746 = vrot.slane %v5572, %v5745
    %v5747 = vlaneseq
    %v5748 = vshrl.u32 %v5747, 7
    %v5749 = vsub.s32 3, %v5748
    %v5750 = vrot.slane %v5572, %v5749
    %v5751 = vlaneseq
    %v5752 = vshrl.u32 %v5751, 7
    %v5753 = vsub.s32 4, %v5752
    %v5754 = vrot.slane %v5572, %v5753
    %v5761 = vlaneseq
    %v5762 = vshrl.u32 %v5761, 7
    %v5763 = vsub.s32 0, %v5762
    %v5764 = vrot.slane %v5733, %v5763
    %v5765 = vlaneseq
    %v5766 = vshrl.u32 %v5765, 7
    %v5767 = vsub.s32 1, %v5766
    %v5768 = vrot.slane %v5733, %v5767
    %5771 = vmatprep.subr.mxu0 %v5574
    %5772 = vmatpush1.msra.mxu0 %v5573
    %5773 = vmatprep.subr.mxu0 %v5576
    %5774 = vmatpush1.msra.mxu0 %v5575
    %5775 = vmatprep.subr.mxu0 %v5578
    %5776 = vmatpush1.msra.mxu0 %v5577
    %5777 = vmatprep.subr.mxu0 %v5580
    %5778 = vmatpush1.msra.mxu0 %v5579
    %5779 = vmatprep.subr.mxu0 %v5582
    %5780 = vmatpush1.msra.mxu0 %v5581
    %5781 = vmatprep.subr.mxu0 %v5584
    %5782 = vmatpush1.msra.mxu0 %v5583
    %5783 = vmatprep.subr.mxu0 %v5586
    %5784 = vmatpush1.msra.mxu0 %v5585
    %5785 = vmatprep.subr.mxu0 %v5588
    %5786 = vmatpush1.msra.mxu0 %v5587
    %5787 = vmatprep.subr.mxu0 %v5590
    %5788 = vmatpush1.msra.mxu0 %v5589
    %5789 = vmatprep.subr.mxu0 %v5592
    %5790 = vmatpush1.msra.mxu0 %v5591
    %5791 = vmatprep.subr.mxu0 %v5594
    %5792 = vmatpush1.msra.mxu0 %v5593
    %5793 = vmatprep.subr.mxu0 %v5596
    %5794 = vmatpush1.msra.mxu0 %v5595
    %5795 = vmatprep.subr.mxu0 %v5598
    %5796 = vmatpush1.msra.mxu0 %v5597
    %5797 = vmatprep.subr.mxu0 %v5600
    %5798 = vmatpush1.msra.mxu0 %v5599
    %5799 = vmatprep.subr.mxu0 %v5602
    %5800 = vmatpush1.msra.mxu0 %v5601
    %5801 = vmatprep.subr.mxu0 %v5604
    %5802 = vmatpush1.msra.mxu0 %v5603
    %5803 = vmatprep.subr.mxu0 %v5606
    %5804 = vmatpush1.msra.mxu0 %v5605
    %5805 = vmatprep.subr.mxu0 %v5608
    %5806 = vmatpush1.msra.mxu0 %v5607
    %5807 = vmatprep.subr.mxu0 %v5610
    %5808 = vmatpush1.msra.mxu0 %v5609
    %5809 = vmatprep.subr.mxu0 %v5612
    %5810 = vmatpush1.msra.mxu0 %v5611
    %5811 = vmatprep.subr.mxu0 %v5614
    %5812 = vmatpush1.msra.mxu0 %v5613
    %5813 = vmatprep.subr.mxu0 %v5616
    %5814 = vmatpush1.msra.mxu0 %v5615
    %5815 = vmatprep.subr.mxu0 %v5618
    %5816 = vmatpush1.msra.mxu0 %v5617
    %5817 = vmatprep.subr.mxu0 %v5620
    %5818 = vmatpush1.msra.mxu0 %v5619
    %5819 = vmatprep.subr.mxu0 %v5622
    %5820 = vmatpush1.msra.mxu0 %v5621
    %5821 = vmatprep.subr.mxu0 %v5624
    %5822 = vmatpush1.msra.mxu0 %v5623
    %5823 = vmatprep.subr.mxu0 %v5626
    %5824 = vmatpush1.msra.mxu0 %v5625
    %5825 = vmatprep.subr.mxu0 %v5628
    %5826 = vmatpush1.msra.mxu0 %v5627
    %5827 = vmatprep.subr.mxu0 %v5630
    %5828 = vmatpush1.msra.mxu0 %v5629
    %5829 = vmatprep.subr.mxu0 %v5632
    %5830 = vmatpush1.msra.mxu0 %v5631
    %5831 = vmatprep.subr.mxu0 %v5634
    %5832 = vmatpush1.msra.mxu0 %v5633
    %5833 = vmatprep.subr.mxu0 %v5636
    %5834 = vmatpush1.msra.mxu0 %v5635
    %5835 = vmatprep.mubr.f32.mxu0 %v5742
    %5836 = vmatmul.mubr.f32.gmra.mrb[0].mxu0 %v5738
    %v5837 = vpop.f32.mrb[0].mxu0
    %v5838 = vadd.f32 %v5764, %v5837
    %v5839 = vpop.f32.mrb[0].mxu0
    %v5840 = vadd.f32 %v5768, %v5839
    %5841 = vdwg.mxu0
    %5842 = vmatprep.subr.mxu0 %v5638
    %5843 = vmatpush1.msra.mxu0 %v5637
    %5844 = vmatprep.subr.mxu0 %v5640
    %5845 = vmatpush1.msra.mxu0 %v5639
    %5846 = vmatprep.subr.mxu0 %v5642
    %5847 = vmatpush1.msra.mxu0 %v5641
    %5848 = vmatprep.subr.mxu0 %v5644
    %5849 = vmatpush1.msra.mxu0 %v5643
    %5850 = vmatprep.subr.mxu0 %v5646
    %5851 = vmatpush1.msra.mxu0 %v5645
    %5852 = vmatprep.subr.mxu0 %v5648
    %5853 = vmatpush1.msra.mxu0 %v5647
    %5854 = vmatprep.subr.mxu0 %v5650
    %5855 = vmatpush1.msra.mxu0 %v5649
    %5856 = vmatprep.subr.mxu0 %v5652
    %5857 = vmatpush1.msra.mxu0 %v5651
    %5858 = vmatprep.subr.mxu0 %v5654
    %5859 = vmatpush1.msra.mxu0 %v5653
    %5860 = vmatprep.subr.mxu0 %v5656
    %5861 = vmatpush1.msra.mxu0 %v5655
    %5862 = vmatprep.subr.mxu0 %v5658
    %5863 = vmatpush1.msra.mxu0 %v5657
    %5864 = vmatprep.subr.mxu0 %v5660
    %5865 = vmatpush1.msra.mxu0 %v5659
    %5866 = vmatprep.subr.mxu0 %v5662
    %5867 = vmatpush1.msra.mxu0 %v5661
    %5868 = vmatprep.subr.mxu0 %v5664
    %5869 = vmatpush1.msra.mxu0 %v5663
    %5870 = vmatprep.subr.mxu0 %v5666
    %5871 = vmatpush1.msra.mxu0 %v5665
    %5872 = vmatprep.subr.mxu0 %v5668
    %5873 = vmatpush1.msra.mxu0 %v5667
    %5874 = vmatprep.subr.mxu0 %v5670
    %5875 = vmatpush1.msra.mxu0 %v5669
    %5876 = vmatprep.subr.mxu0 %v5672
    %5877 = vmatpush1.msra.mxu0 %v5671
    %5878 = vmatprep.subr.mxu0 %v5674
    %5879 = vmatpush1.msra.mxu0 %v5673
    %5880 = vmatprep.subr.mxu0 %v5676
    %5881 = vmatpush1.msra.mxu0 %v5675
    %5882 = vmatprep.subr.mxu0 %v5678
    %5883 = vmatpush1.msra.mxu0 %v5677
    %5884 = vmatprep.subr.mxu0 %v5680
    %5885 = vmatpush1.msra.mxu0 %v5679
    %5886 = vmatprep.subr.mxu0 %v5682
    %5887 = vmatpush1.msra.mxu0 %v5681
    %5888 = vmatprep.subr.mxu0 %v5684
    %5889 = vmatpush1.msra.mxu0 %v5683
    %5890 = vmatprep.subr.mxu0 %v5686
    %5891 = vmatpush1.msra.mxu0 %v5685
    %5892 = vmatprep.subr.mxu0 %v5688
    %5893 = vmatpush1.msra.mxu0 %v5687
    %5894 = vmatprep.subr.mxu0 %v5690
    %5895 = vmatpush1.msra.mxu0 %v5689
    %5896 = vmatprep.subr.mxu0 %v5692
    %5897 = vmatpush1.msra.mxu0 %v5691
    %5898 = vmatprep.subr.mxu0 %v5694
    %5899 = vmatpush1.msra.mxu0 %v5693
    %5900 = vmatprep.subr.mxu0 %v5696
    %5901 = vmatpush1.msra.mxu0 %v5695
    %5902 = vmatprep.subr.mxu0 %v5698
    %5903 = vmatpush1.msra.mxu0 %v5697
    %5904 = vmatprep.subr.mxu0 %v5700
    %5905 = vmatpush1.msra.mxu0 %v5699
    %5906 = vmatprep.mubr.f32.mxu0 %v5750
    %5907 = vmatmul.mubr.f32.gmra.mrb[0].mxu0 %v5746
    %v5908 = vpop.f32.mrb[0].mxu0
    %v5909 = vadd.f32 %v5838, %v5908
    %v5910 = vpop.f32.mrb[0].mxu0
    %v5911 = vadd.f32 %v5840, %v5910
    %5912 = vdwg.mxu0
    %5913 = vmatprep.subr.mxu0 %v5702
    %5914 = vmatpush1.msra.mxu0 %v5701
    %5915 = vmatprep.subr.mxu0 %v5704
    %5916 = vmatpush1.msra.mxu0 %v5703
    %5917 = vmatprep.subr.mxu0 %v5706
    %5918 = vmatpush1.msra.mxu0 %v5705
    %5919 = vmatprep.subr.mxu0 %v5708
    %5920 = vmatpush1.msra.mxu0 %v5707
    %5921 = vmatprep.subr.mxu0 %v5710
    %5922 = vmatpush1.msra.mxu0 %v5709
    %5923 = vmatprep.subr.mxu0 %v5712
    %5924 = vmatpush1.msra.mxu0 %v5711
    %5925 = vmatprep.subr.mxu0 %v5714
    %5926 = vmatpush1.msra.mxu0 %v5713
    %5927 = vmatprep.subr.mxu0 %v5716
    %5928 = vmatpush1.msra.mxu0 %v5715
    %5929 = vmatprep.subr.mxu0 %v5718
    %5930 = vmatpush1.msra.mxu0 %v5717
    %5931 = vmatprep.subr.mxu0 %v5720
    %5932 = vmatpush1.msra.mxu0 %v5719
    %5933 = vmatprep.subr.mxu0 %v5722
    %5934 = vmatpush1.msra.mxu0 %v5721
    %5935 = vmatprep.subr.mxu0 %v5724
    %5936 = vmatpush1.msra.mxu0 %v5723
    %5937 = vmatprep.subr.mxu0 %v5726
    %5938 = vmatpush1.msra.mxu0 %v5725
    %5939 = vmatprep.subr.mxu0 %v5728
    %5940 = vmatpush1.msra.mxu0 %v5727
    %5941 = vmatprep.subr.mxu0 %v5730
    %5942 = vmatpush1.msra.mxu0 %v5729
    %5943 = vmatprep.subr.mxu0 %v5732
    %5944 = vmatpush1.msra.mxu0 %v5731
    %5945 = vmatprep.subr.mxu0 0.0
    %5946 = vmatpush1.msra.mxu0 0.0
    %5947 = vmatprep.subr.mxu0 0.0
    %5948 = vmatpush1.msra.mxu0 0.0
    %5949 = vmatprep.subr.mxu0 0.0
    %5950 = vmatpush1.msra.mxu0 0.0
    %5951 = vmatprep.subr.mxu0 0.0
    %5952 = vmatpush1.msra.mxu0 0.0
    %5953 = vmatprep.subr.mxu0 0.0
    %5954 = vmatpush1.msra.mxu0 0.0
    %5955 = vmatprep.subr.mxu0 0.0
    %5956 = vmatpush1.msra.mxu0 0.0
    %5957 = vmatprep.subr.mxu0 0.0
    %5958 = vmatpush1.msra.mxu0 0.0
    %5959 = vmatprep.subr.mxu0 0.0
    %5960 = vmatpush1.msra.mxu0 0.0
    %5961 = vmatprep.subr.mxu0 0.0
    %5962 = vmatpush1.msra.mxu0 0.0
    %5963 = vmatprep.subr.mxu0 0.0
    %5964 = vmatpush1.msra.mxu0 0.0
    %5965 = vmatprep.subr.mxu0 0.0
    %5966 = vmatpush1.msra.mxu0 0.0
    %5967 = vmatprep.subr.mxu0 0.0
    %5968 = vmatpush1.msra.mxu0 0.0
    %5969 = vmatprep.subr.mxu0 0.0
    %5970 = vmatpush1.msra.mxu0 0.0
    %5971 = vmatprep.subr.mxu0 0.0
    %5972 = vmatpush1.msra.mxu0 0.0
    %5973 = vmatprep.subr.mxu0 0.0
    %5974 = vmatpush1.msra.mxu0 0.0
    %5975 = vmatprep.subr.mxu0 0.0
    %5976 = vmatpush1.msra.mxu0 0.0
    %5977 = vmatprep.mubr.f32.mxu0 0.0
    %5978 = vmatmul.mubr.f32.gmra.mrb[0].mxu0 %v5754
    %v5979 = vpop.f32.mrb[0].mxu0
    %v5980 = vadd.f32 %v5909, %v5979
    %v5981 = vpop.f32.mrb[0].mxu0
    %v5982 = vadd.f32 %v5911, %v5981
    %5983 = vdwg.mxu0
    %v5984 = vsel %vm1215, %v5980, -inf
    %v5985 = vsel %vm1215, %v5982, -inf
    %v5986 = vmax.f32 %v5984, %v5985
    %5987 = vmax.xlane.f32.xlu0 %v5986
    %v5988 = vpop.xlane.xlu0 %5987
    %v5989 = vsub.f32 %v5980, %v5988
    %v5990 = vsub.f32 %v5982, %v5988
    %v5991 = vmul.f32 %v5989, 1.442695
    %v5992 = vpow.pop %v5991
    %v5993 = vmul.f32 %v5990, 1.442695
    %v5994 = vpow.pop %v5993
    %v5995 = vsel %vm1215, %v5992, 0.0
    %v5996 = vsel %vm1215, %v5994, 0.0
    %v5997 = vadd.f32 %v5995, %v5996
    %5998 = vadd.xlane.f32.xlu0 %v5997
    %v5999 = vpop.xlane.xlu0 %5998
    %v6000 = vlog2.pop %v5999
    %v6001 = vmul.f32 %v6000, 0.6931472
    %v6002 = vadd.f32 %v5988, %v6001
    %v6003 = vsub.f32 %v5980, %v6002
    %v6004 = vsub.f32 %v5982, %v6002
    %v6007 = vcombine.low %v6003, %v6004
    %v6009 = vunpack.c.l.s4 1966171168
    %v6010 = vunpack.c.0.s8 %v6009
    %v6011 = vlaneseq
    %v6012 = vshrl.u32 %v6011, 7
    %v6013 = vsub.s32 %v6010, %v6012
    %v6014 = vrot.slane %v6007, %v6013
    %v6016 = vunpack.c.l.s4 1966171168
    %v6017 = vunpack.c.0.s8 %v6016
    %v6018 = vlaneseq
    %v6019 = vshrl.u32 %v6018, 7
    %v6020 = vsub.s32 %v6017, %v6019
    %v6021 = vrot.slane %v6014, %v6020
    %s6023 = scalar_lea.vmem [#allocation8], 4
    %6024 = vst.msk [vmem:[%s6023] ss:$8 sm:$0x3] %vm1258, %v6021
    %6025 = vst.msk [vmem:[%s6023] ss:$8 sm:$0x0] %vm1258, %v6021
    %s6026 = sadd.s32 %s73, 4
    %p6027 = scmp.lt.s32.totalorder %s6026, 1
    %s6028 = scalar_select %p6027, 1, 0
    %v6029 = vstv %s6028
    %vm6030 = vcmp.eq.s32.totalorder %v6029, 1
    %v6031 = vsel %vm6030, %v5572, %v4842
    %6032 = vst.msk [vmem:[#allocation9] sm:$0x7] %vm1267, %v6031
    %v6033 = vld [vmem:[#allocation9] sm:$0x7]
    %s6034 = scalar_lea.vmem [#allocation2], 5
    %v6035 = vld [vmem:[%s6034] ss:$8 sm:$0xf]
    %v6036 = vld [vmem:[%s6034] ss:$8 sm:$0x10]
    %v6037 = vor.u32 %v6035, %v6036
    %v6038 = vld [vmem:[#allocation5] sm:$0xff]
    %v6039 = vld [vmem:[#allocation5 + $0x8] sm:$0xff]
    %v6040 = vld [vmem:[#allocation5 + $0x10] sm:$0xff]
    %v6041 = vld [vmem:[#allocation5 + $0x18] sm:$0xff]
    %v6042 = vld [vmem:[#allocation5 + $0x20] sm:$0xff]
    %v6043 = vld [vmem:[#allocation5 + $0x28] sm:$0xff]
    %v6044 = vld [vmem:[#allocation5 + $0x30] sm:$0xff]
    %v6045 = vld [vmem:[#allocation5 + $0x38] sm:$0xff]
    %v6046 = vld [vmem:[#allocation5 + $0x40] sm:$0xff]
    %v6047 = vld [vmem:[#allocation5 + $0x48] sm:$0xff]
    %v6048 = vld [vmem:[#allocation5 + $0x50] sm:$0xff]
    %v6049 = vld [vmem:[#allocation5 + $0x58] sm:$0xff]
    %v6050 = vld [vmem:[#allocation5 + $0x60] sm:$0xff]
    %v6051 = vld [vmem:[#allocation5 + $0x68] sm:$0xff]
    %v6052 = vld [vmem:[#allocation5 + $0x70] sm:$0xff]
    %v6053 = vld [vmem:[#allocation5 + $0x78] sm:$0xff]
    %v6054 = vld [vmem:[#allocation5 + $0x80] sm:$0xff]
    %v6055 = vld [vmem:[#allocation5 + $0x88] sm:$0xff]
    %v6056 = vld [vmem:[#allocation5 + $0x90] sm:$0xff]
    %v6057 = vld [vmem:[#allocation5 + $0x98] sm:$0xff]
    %v6058 = vld [vmem:[#allocation5 + $0xa0] sm:$0xff]
    %v6059 = vld [vmem:[#allocation5 + $0xa8] sm:$0xff]
    %v6060 = vld [vmem:[#allocation5 + $0xb0] sm:$0xff]
    %v6061 = vld [vmem:[#allocation5 + $0xb8] sm:$0xff]
    %v6062 = vld [vmem:[#allocation5 + $0xc0] sm:$0xff]
    %v6063 = vld [vmem:[#allocation5 + $0xc8] sm:$0xff]
    %v6064 = vld [vmem:[#allocation5 + $0xd0] sm:$0xff]
    %v6065 = vld [vmem:[#allocation5 + $0xd8] sm:$0xff]
    %v6066 = vld [vmem:[#allocation5 + $0xe0] sm:$0xff]
    %v6067 = vld [vmem:[#allocation5 + $0xe8] sm:$0xff]
    %v6068 = vld [vmem:[#allocation5 + $0xf0] sm:$0xff]
    %v6069 = vld [vmem:[#allocation5 + $0xf8] sm:$0xff]
    %v6070 = vld [vmem:[#allocation5 + $0x100] sm:$0xff]
    %v6071 = vld [vmem:[#allocation5 + $0x108] sm:$0xff]
    %v6072 = vld [vmem:[#allocation5 + $0x110] sm:$0xff]
    %v6073 = vld [vmem:[#allocation5 + $0x118] sm:$0xff]
    %v6074 = vld [vmem:[#allocation5 + $0x120] sm:$0xff]
    %v6075 = vld [vmem:[#allocation5 + $0x128] sm:$0xff]
    %v6076 = vld [vmem:[#allocation5 + $0x130] sm:$0xff]
    %v6077 = vld [vmem:[#allocation5 + $0x138] sm:$0xff]
    %v6078 = vld [vmem:[#allocation5 + $0x140] sm:$0xff]
    %v6079 = vld [vmem:[#allocation5 + $0x148] sm:$0xff]
    %v6080 = vld [vmem:[#allocation5 + $0x150] sm:$0xff]
    %v6081 = vld [vmem:[#allocation5 + $0x158] sm:$0xff]
    %v6082 = vld [vmem:[#allocation5 + $0x160] sm:$0xff]
    %v6083 = vld [vmem:[#allocation5 + $0x168] sm:$0xff]
    %v6084 = vld [vmem:[#allocation5 + $0x170] sm:$0xff]
    %v6085 = vld [vmem:[#allocation5 + $0x178] sm:$0xff]
    %v6086 = vld [vmem:[#allocation5 + $0x180] sm:$0xff]
    %v6087 = vld [vmem:[#allocation5 + $0x188] sm:$0xff]
    %v6088 = vld [vmem:[#allocation5 + $0x190] sm:$0xff]
    %v6089 = vld [vmem:[#allocation5 + $0x198] sm:$0xff]
    %v6090 = vld [vmem:[#allocation5 + $0x1a0] sm:$0xff]
    %v6091 = vld [vmem:[#allocation5 + $0x1a8] sm:$0xff]
    %v6092 = vld [vmem:[#allocation5 + $0x1b0] sm:$0xff]
    %v6093 = vld [vmem:[#allocation5 + $0x1b8] sm:$0xff]
    %v6094 = vld [vmem:[#allocation5 + $0x1c0] sm:$0xff]
    %v6095 = vld [vmem:[#allocation5 + $0x1c8] sm:$0xff]
    %v6096 = vld [vmem:[#allocation5 + $0x1d0] sm:$0xff]
    %v6097 = vld [vmem:[#allocation5 + $0x1d8] sm:$0xff]
    %v6098 = vld [vmem:[#allocation5 + $0x1e0] sm:$0xff]
    %v6099 = vld [vmem:[#allocation5 + $0x1e8] sm:$0xff]
    %v6100 = vld [vmem:[#allocation5 + $0x1f0] sm:$0xff]
    %v6101 = vld [vmem:[#allocation5 + $0x1f8] sm:$0xff]
    %v6102 = vld [vmem:[#allocation5 + $0x200] sm:$0xff]
    %v6103 = vld [vmem:[#allocation5 + $0x208] sm:$0xff]
    %v6104 = vld [vmem:[#allocation5 + $0x210] sm:$0xff]
    %v6105 = vld [vmem:[#allocation5 + $0x218] sm:$0xff]
    %v6106 = vld [vmem:[#allocation5 + $0x220] sm:$0xff]
    %v6107 = vld [vmem:[#allocation5 + $0x228] sm:$0xff]
    %v6108 = vld [vmem:[#allocation5 + $0x230] sm:$0xff]
    %v6109 = vld [vmem:[#allocation5 + $0x238] sm:$0xff]
    %v6110 = vld [vmem:[#allocation5 + $0x240] sm:$0xff]
    %v6111 = vld [vmem:[#allocation5 + $0x248] sm:$0xff]
    %v6112 = vld [vmem:[#allocation5 + $0x250] sm:$0xff]
    %v6113 = vld [vmem:[#allocation5 + $0x258] sm:$0xff]
    %v6114 = vld [vmem:[#allocation5 + $0x260] sm:$0xff]
    %v6115 = vld [vmem:[#allocation5 + $0x268] sm:$0xff]
    %v6116 = vld [vmem:[#allocation5 + $0x270] sm:$0xff]
    %v6117 = vld [vmem:[#allocation5 + $0x278] sm:$0xff]
    %v6118 = vld [vmem:[#allocation5 + $0x280] sm:$0xff]
    %v6119 = vld [vmem:[#allocation5 + $0x288] sm:$0xff]
    %v6120 = vld [vmem:[#allocation5 + $0x290] sm:$0xff]
    %v6121 = vld [vmem:[#allocation5 + $0x298] sm:$0xff]
    %v6122 = vld [vmem:[#allocation5 + $0x2a0] sm:$0xff]
    %v6123 = vld [vmem:[#allocation5 + $0x2a8] sm:$0xff]
    %v6124 = vld [vmem:[#allocation5 + $0x2b0] sm:$0xff]
    %v6125 = vld [vmem:[#allocation5 + $0x2b8] sm:$0xff]
    %v6126 = vld [vmem:[#allocation5 + $0x2c0] sm:$0xff]
    %v6127 = vld [vmem:[#allocation5 + $0x2c8] sm:$0xff]
    %v6128 = vld [vmem:[#allocation5 + $0x2d0] sm:$0xff]
    %v6129 = vld [vmem:[#allocation5 + $0x2d8] sm:$0xff]
    %v6130 = vld [vmem:[#allocation5 + $0x2e0] sm:$0xff]
    %v6131 = vld [vmem:[#allocation5 + $0x2e8] sm:$0xff]
    %v6132 = vld [vmem:[#allocation5 + $0x2f0] sm:$0xff]
    %v6133 = vld [vmem:[#allocation5 + $0x2f8] sm:$0xff]
    %v6134 = vld [vmem:[#allocation5 + $0x300] sm:$0xff]
    %v6135 = vld [vmem:[#allocation5 + $0x308] sm:$0xff]
    %v6136 = vld [vmem:[#allocation5 + $0x310] sm:$0xff]
    %v6137 = vld [vmem:[#allocation5 + $0x318] sm:$0xff]
    %v6138 = vld [vmem:[#allocation5 + $0x320] sm:$0xff]
    %v6139 = vld [vmem:[#allocation5 + $0x328] sm:$0xff]
    %v6140 = vld [vmem:[#allocation5 + $0x330] sm:$0xff]
    %v6141 = vld [vmem:[#allocation5 + $0x338] sm:$0xff]
    %v6142 = vld [vmem:[#allocation5 + $0x340] sm:$0xff]
    %v6143 = vld [vmem:[#allocation5 + $0x348] sm:$0xff]
    %v6144 = vld [vmem:[#allocation5 + $0x350] sm:$0xff]
    %v6145 = vld [vmem:[#allocation5 + $0x358] sm:$0xff]
    %v6146 = vld [vmem:[#allocation5 + $0x360] sm:$0xff]
    %v6147 = vld [vmem:[#allocation5 + $0x368] sm:$0xff]
    %v6148 = vld [vmem:[#allocation5 + $0x370] sm:$0xff]
    %v6149 = vld [vmem:[#allocation5 + $0x378] sm:$0xff]
    %v6150 = vld [vmem:[#allocation5 + $0x380] sm:$0xff]
    %v6151 = vld [vmem:[#allocation5 + $0x388] sm:$0xff]
    %v6152 = vld [vmem:[#allocation5 + $0x390] sm:$0xff]
    %v6153 = vld [vmem:[#allocation5 + $0x398] sm:$0xff]
    %v6154 = vld [vmem:[#allocation5 + $0x3a0] sm:$0xff]
    %v6155 = vld [vmem:[#allocation5 + $0x3a8] sm:$0xff]
    %v6156 = vld [vmem:[#allocation5 + $0x3b0] sm:$0xff]
    %v6157 = vld [vmem:[#allocation5 + $0x3b8] sm:$0xff]
    %v6158 = vld [vmem:[#allocation5 + $0x3c0] sm:$0xff]
    %v6159 = vld [vmem:[#allocation5 + $0x3c8] sm:$0xff]
    %v6160 = vld [vmem:[#allocation5 + $0x3d0] sm:$0xff]
    %v6161 = vld [vmem:[#allocation5 + $0x3d8] sm:$0xff]
    %v6162 = vld [vmem:[#allocation5 + $0x3e0] sm:$0xff]
    %v6163 = vld [vmem:[#allocation5 + $0x3e8] sm:$0xff]
    %v6164 = vld [vmem:[#allocation5 + $0x3f0] sm:$0xff]
    %v6165 = vld [vmem:[#allocation5 + $0x3f8] sm:$0xff]
    %v6166 = vld [vmem:[#allocation5 + $0x400] sm:$0xff]
    %v6167 = vld [vmem:[#allocation5 + $0x408] sm:$0xff]
    %v6168 = vld [vmem:[#allocation5 + $0x410] sm:$0xff]
    %v6169 = vld [vmem:[#allocation5 + $0x418] sm:$0xff]
    %v6170 = vld [vmem:[#allocation5 + $0x420] sm:$0xff]
    %v6171 = vld [vmem:[#allocation5 + $0x428] sm:$0xff]
    %v6172 = vld [vmem:[#allocation5 + $0x430] sm:$0xff]
    %v6173 = vld [vmem:[#allocation5 + $0x438] sm:$0xff]
    %v6174 = vld [vmem:[#allocation5 + $0x440] sm:$0xff]
    %v6175 = vld [vmem:[#allocation5 + $0x448] sm:$0xff]
    %v6176 = vld [vmem:[#allocation5 + $0x450] sm:$0xff]
    %v6177 = vld [vmem:[#allocation5 + $0x458] sm:$0xff]
    %v6178 = vld [vmem:[#allocation5 + $0x460] sm:$0xff]
    %v6179 = vld [vmem:[#allocation5 + $0x468] sm:$0xff]
    %v6180 = vld [vmem:[#allocation5 + $0x470] sm:$0xff]
    %v6181 = vld [vmem:[#allocation5 + $0x478] sm:$0xff]
    %v6182 = vld [vmem:[#allocation5 + $0x480] sm:$0xff]
    %v6183 = vld [vmem:[#allocation5 + $0x488] sm:$0xff]
    %v6184 = vld [vmem:[#allocation5 + $0x490] sm:$0xff]
    %v6185 = vld [vmem:[#allocation5 + $0x498] sm:$0xff]
    %v6186 = vld [vmem:[#allocation5 + $0x4a0] sm:$0xff]
    %v6187 = vld [vmem:[#allocation5 + $0x4a8] sm:$0xff]
    %v6188 = vld [vmem:[#allocation5 + $0x4b0] sm:$0xff]
    %v6189 = vld [vmem:[#allocation5 + $0x4b8] sm:$0xff]
    %v6190 = vld [vmem:[#allocation5 + $0x4c0] sm:$0xff]
    %v6191 = vld [vmem:[#allocation5 + $0x4c8] sm:$0xff]
    %v6192 = vld [vmem:[#allocation5 + $0x4d0] sm:$0xff]
    %v6193 = vld [vmem:[#allocation5 + $0x4d8] sm:$0xff]
    %v6194 = vld [vmem:[#allocation5 + $0x4e0] sm:$0xff]
    %v6195 = vld [vmem:[#allocation5 + $0x4e8] sm:$0xff]
    %v6196 = vld [vmem:[#allocation5 + $0x4f0] sm:$0xff]
    %v6197 = vld [vmem:[#allocation5 + $0x4f8] sm:$0xff]
    %v6198 = vld [vmem:[#allocation5 + $0x500] sm:$0xff]
    %v6199 = vld [vmem:[#allocation5 + $0x508] sm:$0xff]
    %v6200 = vld [vmem:[#allocation5 + $0x510] sm:$0xff]
    %v6201 = vld [vmem:[#allocation5 + $0x518] sm:$0xff]
    %v6202 = vld [vmem:[#allocation5 + $0x520] sm:$0xff]
    %v6203 = vld [vmem:[#allocation5 + $0x528] sm:$0xff]
    %v6204 = vld [vmem:[#allocation5 + $0x530] sm:$0xff]
    %v6205 = vld [vmem:[#allocation5 + $0x538] sm:$0xff]
    %v6206 = vld [vmem:[#allocation5 + $0x540] sm:$0xff]
    %v6207 = vld [vmem:[#allocation5 + $0x548] sm:$0xff]
    %v6208 = vld [vmem:[#allocation5 + $0x550] sm:$0xff]
    %v6209 = vld [vmem:[#allocation5 + $0x558] sm:$0xff]
    %v6210 = vld [vmem:[#allocation5 + $0x560] sm:$0xff]
    %v6211 = vld [vmem:[#allocation5 + $0x568] sm:$0xff]
    %v6212 = vld [vmem:[#allocation5 + $0x570] sm:$0xff]
    %v6213 = vld [vmem:[#allocation5 + $0x578] sm:$0xff]
    %v6214 = vld [vmem:[#allocation5 + $0x580] sm:$0xff]
    %v6215 = vld [vmem:[#allocation5 + $0x588] sm:$0xff]
    %v6216 = vld [vmem:[#allocation5 + $0x590] sm:$0xff]
    %v6217 = vld [vmem:[#allocation5 + $0x598] sm:$0xff]
    %v6218 = vld [vmem:[#allocation5 + $0x5a0] sm:$0xff]
    %v6219 = vld [vmem:[#allocation5 + $0x5a8] sm:$0xff]
    %v6220 = vld [vmem:[#allocation5 + $0x5b0] sm:$0xff]
    %v6221 = vld [vmem:[#allocation5 + $0x5b8] sm:$0xff]
    %v6222 = vld [vmem:[#allocation5 + $0x5c0] sm:$0xff]
    %v6223 = vld [vmem:[#allocation5 + $0x5c8] sm:$0xff]
    %v6224 = vld [vmem:[#allocation5 + $0x5d0] sm:$0xff]
    %v6225 = vld [vmem:[#allocation5 + $0x5d8] sm:$0xff]
    %v6226 = vld [vmem:[#allocation5 + $0x5e0] sm:$0xff]
    %v6227 = vld [vmem:[#allocation5 + $0x5e8] sm:$0xff]
    %v6228 = vld [vmem:[#allocation5 + $0x5f0] sm:$0xff]
    %v6229 = vld [vmem:[#allocation5 + $0x5f8] sm:$0xff]
    %v6230 = vld [vmem:[#allocation5 + $0x600] sm:$0xff]
    %v6231 = vld [vmem:[#allocation5 + $0x608] sm:$0xff]
    %v6232 = vld [vmem:[#allocation5 + $0x610] sm:$0xff]
    %v6233 = vld [vmem:[#allocation5 + $0x618] sm:$0xff]
    %v6234 = vld [vmem:[#allocation5 + $0x620] sm:$0xff]
    %v6235 = vld [vmem:[#allocation5 + $0x628] sm:$0xff]
    %v6236 = vld [vmem:[#allocation5 + $0x630] sm:$0xff]
    %v6237 = vld [vmem:[#allocation5 + $0x638] sm:$0xff]
    %v6238 = vld [vmem:[#allocation5 + $0x640] sm:$0xff]
    %v6239 = vld [vmem:[#allocation5 + $0x648] sm:$0xff]
    %v6240 = vld [vmem:[#allocation5 + $0x650] sm:$0xff]
    %v6241 = vld [vmem:[#allocation5 + $0x658] sm:$0xff]
    %v6242 = vld [vmem:[#allocation5 + $0x660] sm:$0xff]
    %v6243 = vld [vmem:[#allocation5 + $0x668] sm:$0xff]
    %v6244 = vld [vmem:[#allocation5 + $0x670] sm:$0xff]
    %v6245 = vld [vmem:[#allocation5 + $0x678] sm:$0xff]
    %v6246 = vld [vmem:[#allocation5 + $0x680] sm:$0xff]
    %v6247 = vld [vmem:[#allocation5 + $0x688] sm:$0xff]
    %v6248 = vld [vmem:[#allocation5 + $0x690] sm:$0xff]
    %v6249 = vld [vmem:[#allocation5 + $0x698] sm:$0xff]
    %v6250 = vld [vmem:[#allocation5 + $0x6a0] sm:$0xff]
    %v6251 = vld [vmem:[#allocation5 + $0x6a8] sm:$0xff]
    %v6252 = vld [vmem:[#allocation5 + $0x6b0] sm:$0xff]
    %v6253 = vld [vmem:[#allocation5 + $0x6b8] sm:$0xff]
    %v6254 = vld [vmem:[#allocation5 + $0x6c0] sm:$0xff]
    %v6255 = vld [vmem:[#allocation5 + $0x6c8] sm:$0xff]
    %v6256 = vld [vmem:[#allocation5 + $0x6d0] sm:$0xff]
    %v6257 = vld [vmem:[#allocation5 + $0x6d8] sm:$0xff]
    %v6258 = vld [vmem:[#allocation5 + $0x6e0] sm:$0xff]
    %v6259 = vld [vmem:[#allocation5 + $0x6e8] sm:$0xff]
    %v6260 = vld [vmem:[#allocation5 + $0x6f0] sm:$0xff]
    %v6261 = vld [vmem:[#allocation5 + $0x6f8] sm:$0xff]
    %v6262 = vld [vmem:[#allocation5 + $0x700] sm:$0xff]
    %v6263 = vld [vmem:[#allocation5 + $0x708] sm:$0xff]
    %v6264 = vld [vmem:[#allocation5 + $0x710] sm:$0xff]
    %v6265 = vld [vmem:[#allocation5 + $0x718] sm:$0xff]
    %v6266 = vld [vmem:[#allocation5 + $0x720] sm:$0xff]
    %v6267 = vld [vmem:[#allocation5 + $0x728] sm:$0xff]
    %v6268 = vld [vmem:[#allocation5 + $0x730] sm:$0xff]
    %v6269 = vld [vmem:[#allocation5 + $0x738] sm:$0xff]
    %v6270 = vld [vmem:[#allocation5 + $0x740] sm:$0xff]
    %v6271 = vld [vmem:[#allocation5 + $0x748] sm:$0xff]
    %v6272 = vld [vmem:[#allocation5 + $0x750] sm:$0xff]
    %v6273 = vld [vmem:[#allocation5 + $0x758] sm:$0xff]
    %v6274 = vld [vmem:[#allocation5 + $0x760] sm:$0xff]
    %v6275 = vld [vmem:[#allocation5 + $0x768] sm:$0xff]
    %v6276 = vld [vmem:[#allocation5 + $0x770] sm:$0xff]
    %v6277 = vld [vmem:[#allocation5 + $0x778] sm:$0xff]
    %v6279 = vlaneseq
    %v6280 = vshrl.u32 %v6279, 7
    %v6281 = vsub.s32 0, %v6280
    %v6282 = vrot.slane %v6033, %v6281
    %v6283 = vlaneseq
    %v6284 = vshrl.u32 %v6283, 7
    %v6285 = vsub.s32 1, %v6284
    %v6286 = vrot.slane %v6033, %v6285
    %v6287 = vlaneseq
    %v6288 = vshrl.u32 %v6287, 7
    %v6289 = vsub.s32 2, %v6288
    %v6290 = vrot.slane %v6033, %v6289
    %6294 = vmatprep.subr.mxu0 %v6039
    %6295 = vmatpush1.msra.mxu0 %v6038
    %6296 = vmatprep.subr.mxu0 %v6044
    %6297 = vmatpush1.msra.mxu0 %v6043
    %6298 = vmatprep.subr.mxu0 %v6049
    %6299 = vmatpush1.msra.mxu0 %v6048
    %6300 = vmatprep.subr.mxu0 %v6054
    %6301 = vmatpush1.msra.mxu0 %v6053
    %6302 = vmatprep.subr.mxu0 %v6059
    %6303 = vmatpush1.msra.mxu0 %v6058
    %6304 = vmatprep.subr.mxu0 %v6064
    %6305 = vmatpush1.msra.mxu0 %v6063
    %6306 = vmatprep.subr.mxu0 %v6069
    %6307 = vmatpush1.msra.mxu0 %v6068
    %6308 = vmatprep.subr.mxu0 %v6074
    %6309 = vmatpush1.msra.mxu0 %v6073
    %6310 = vmatprep.subr.mxu0 %v6079
    %6311 = vmatpush1.msra.mxu0 %v6078
    %6312 = vmatprep.subr.mxu0 %v6084
    %6313 = vmatpush1.msra.mxu0 %v6083
    %6314 = vmatprep.subr.mxu0 %v6089
    %6315 = vmatpush1.msra.mxu0 %v6088
    %6316 = vmatprep.subr.mxu0 %v6094
    %6317 = vmatpush1.msra.mxu0 %v6093
    %6318 = vmatprep.subr.mxu0 %v6099
    %6319 = vmatpush1.msra.mxu0 %v6098
    %6320 = vmatprep.subr.mxu0 %v6104
    %6321 = vmatpush1.msra.mxu0 %v6103
    %6322 = vmatprep.subr.mxu0 %v6109
    %6323 = vmatpush1.msra.mxu0 %v6108
    %6324 = vmatprep.subr.mxu0 %v6114
    %6325 = vmatpush1.msra.mxu0 %v6113
    %6326 = vmatprep.subr.mxu0 %v6119
    %6327 = vmatpush1.msra.mxu0 %v6118
    %6328 = vmatprep.subr.mxu0 %v6124
    %6329 = vmatpush1.msra.mxu0 %v6123
    %6330 = vmatprep.subr.mxu0 %v6129
    %6331 = vmatpush1.msra.mxu0 %v6128
    %6332 = vmatprep.subr.mxu0 %v6134
    %6333 = vmatpush1.msra.mxu0 %v6133
    %6334 = vmatprep.subr.mxu0 %v6139
    %6335 = vmatpush1.msra.mxu0 %v6138
    %6336 = vmatprep.subr.mxu0 %v6144
    %6337 = vmatpush1.msra.mxu0 %v6143
    %6338 = vmatprep.subr.mxu0 %v6149
    %6339 = vmatpush1.msra.mxu0 %v6148
    %6340 = vmatprep.subr.mxu0 %v6154
    %6341 = vmatpush1.msra.mxu0 %v6153
    %6342 = vmatprep.subr.mxu0 %v6159
    %6343 = vmatpush1.msra.mxu0 %v6158
    %6344 = vmatprep.subr.mxu0 %v6164
    %6345 = vmatpush1.msra.mxu0 %v6163
    %6346 = vmatprep.subr.mxu0 %v6169
    %6347 = vmatpush1.msra.mxu0 %v6168
    %6348 = vmatprep.subr.mxu0 %v6174
    %6349 = vmatpush1.msra.mxu0 %v6173
    %6350 = vmatprep.subr.mxu0 %v6179
    %6351 = vmatpush1.msra.mxu0 %v6178
    %6352 = vmatprep.subr.mxu0 %v6184
    %6353 = vmatpush1.msra.mxu0 %v6183
    %6354 = vmatprep.subr.mxu0 %v6189
    %6355 = vmatpush1.msra.mxu0 %v6188
    %6356 = vmatprep.subr.mxu0 %v6194
    %6357 = vmatpush1.msra.mxu0 %v6193
    %6358 = vmatprep.mubr.f32.mxu0 %v6286
    %6359 = vmatmul.mubr.f32.gmra.mrb[0].mxu0 %v6282
    %v6360 = vpop.f32.mrb[0].mxu0
    %v6361 = vadd.f32 0.0, %v6360
    %v6362 = vpop.f32.mrb[0].mxu0
    %v6363 = vadd.f32 0.0, %v6362
    %6364 = vdwg.mxu0
    %6365 = vmatprep.subr.mxu0 %v6199
    %6366 = vmatpush1.msra.mxu0 %v6198
    %6367 = vmatprep.subr.mxu0 %v6204
    %6368 = vmatpush1.msra.mxu0 %v6203
    %6369 = vmatprep.subr.mxu0 %v6209
    %6370 = vmatpush1.msra.mxu0 %v6208
    %6371 = vmatprep.subr.mxu0 %v6214
    %6372 = vmatpush1.msra.mxu0 %v6213
    %6373 = vmatprep.subr.mxu0 %v6219
    %6374 = vmatpush1.msra.mxu0 %v6218
    %6375 = vmatprep.subr.mxu0 %v6224
    %6376 = vmatpush1.msra.mxu0 %v6223
    %6377 = vmatprep.subr.mxu0 %v6229
    %6378 = vmatpush1.msra.mxu0 %v6228
    %6379 = vmatprep.subr.mxu0 %v6234
    %6380 = vmatpush1.msra.mxu0 %v6233
    %6381 = vmatprep.subr.mxu0 %v6239
    %6382 = vmatpush1.msra.mxu0 %v6238
    %6383 = vmatprep.subr.mxu0 %v6244
    %6384 = vmatpush1.msra.mxu0 %v6243
    %6385 = vmatprep.subr.mxu0 %v6249
    %6386 = vmatpush1.msra.mxu0 %v6248
    %6387 = vmatprep.subr.mxu0 %v6254
    %6388 = vmatpush1.msra.mxu0 %v6253
    %6389 = vmatprep.subr.mxu0 %v6259
    %6390 = vmatpush1.msra.mxu0 %v6258
    %6391 = vmatprep.subr.mxu0 %v6264
    %6392 = vmatpush1.msra.mxu0 %v6263
    %6393 = vmatprep.subr.mxu0 %v6269
    %6394 = vmatpush1.msra.mxu0 %v6268
    %6395 = vmatprep.subr.mxu0 %v6274
    %6396 = vmatpush1.msra.mxu0 %v6273
    %6397 = vmatprep.subr.mxu0 0.0
    %6398 = vmatpush1.msra.mxu0 0.0
    %6399 = vmatprep.subr.mxu0 0.0
    %6400 = vmatpush1.msra.mxu0 0.0
    %6401 = vmatprep.subr.mxu0 0.0
    %6402 = vmatpush1.msra.mxu0 0.0
    %6403 = vmatprep.subr.mxu0 0.0
    %6404 = vmatpush1.msra.mxu0 0.0
    %6405 = vmatprep.subr.mxu0 0.0
    %6406 = vmatpush1.msra.mxu0 0.0
    %6407 = vmatprep.subr.mxu0 0.0
    %6408 = vmatpush1.msra.mxu0 0.0
    %6409 = vmatprep.subr.mxu0 0.0
    %6410 = vmatpush1.msra.mxu0 0.0
    %6411 = vmatprep.subr.mxu0 0.0
    %6412 = vmatpush1.msra.mxu0 0.0
    %6413 = vmatprep.subr.mxu0 0.0
    %6414 = vmatpush1.msra.mxu0 0.0
    %6415 = vmatprep.subr.mxu0 0.0
    %6416 = vmatpush1.msra.mxu0 0.0
    %6417 = vmatprep.subr.mxu0 0.0
    %6418 = vmatpush1.msra.mxu0 0.0
    %6419 = vmatprep.subr.mxu0 0.0
    %6420 = vmatpush1.msra.mxu0 0.0
    %6421 = vmatprep.subr.mxu0 0.0
    %6422 = vmatpush1.msra.mxu0 0.0
    %6423 = vmatprep.subr.mxu0 0.0
    %6424 = vmatpush1.msra.mxu0 0.0
    %6425 = vmatprep.subr.mxu0 0.0
    %6426 = vmatpush1.msra.mxu0 0.0
    %6427 = vmatprep.subr.mxu0 0.0
    %6428 = vmatpush1.msra.mxu0 0.0
    %6429 = vmatprep.mubr.f32.mxu0 0.0
    %6430 = vmatmul.mubr.f32.gmra.mrb[0].mxu0 %v6290
    %v6431 = vpop.f32.mrb[0].mxu0
    %v6432 = vadd.f32 %v6361, %v6431
    %v6433 = vpop.f32.mrb[0].mxu0
    %v6434 = vadd.f32 %v6363, %v6433
    %6435 = vdwg.mxu0
    %6436 = vmatprep.subr.mxu0 %v6041
    %6437 = vmatpush1.msra.mxu0 %v6040
    %6438 = vmatprep.subr.mxu0 %v6046
    %6439 = vmatpush1.msra.mxu0 %v6045
    %6440 = vmatprep.subr.mxu0 %v6051
    %6441 = vmatpush1.msra.mxu0 %v6050
    %6442 = vmatprep.subr.mxu0 %v6056
    %6443 = vmatpush1.msra.mxu0 %v6055
    %6444 = vmatprep.subr.mxu0 %v6061
    %6445 = vmatpush1.msra.mxu0 %v6060
    %6446 = vmatprep.subr.mxu0 %v6066
    %6447 = vmatpush1.msra.mxu0 %v6065
    %6448 = vmatprep.subr.mxu0 %v6071
    %6449 = vmatpush1.msra.mxu0 %v6070
    %6450 = vmatprep.subr.mxu0 %v6076
    %6451 = vmatpush1.msra.mxu0 %v6075
    %6452 = vmatprep.subr.mxu0 %v6081
    %6453 = vmatpush1.msra.mxu0 %v6080
    %6454 = vmatprep.subr.mxu0 %v6086
    %6455 = vmatpush1.msra.mxu0 %v6085
    %6456 = vmatprep.subr.mxu0 %v6091
    %6457 = vmatpush1.msra.mxu0 %v6090
    %6458 = vmatprep.subr.mxu0 %v6096
    %6459 = vmatpush1.msra.mxu0 %v6095
    %6460 = vmatprep.subr.mxu0 %v6101
    %6461 = vmatpush1.msra.mxu0 %v6100
    %6462 = vmatprep.subr.mxu0 %v6106
    %6463 = vmatpush1.msra.mxu0 %v6105
    %6464 = vmatprep.subr.mxu0 %v6111
    %6465 = vmatpush1.msra.mxu0 %v6110
    %6466 = vmatprep.subr.mxu0 %v6116
    %6467 = vmatpush1.msra.mxu0 %v6115
    %6468 = vmatprep.subr.mxu0 %v6121
    %6469 = vmatpush1.msra.mxu0 %v6120
    %6470 = vmatprep.subr.mxu0 %v6126
    %6471 = vmatpush1.msra.mxu0 %v6125
    %6472 = vmatprep.subr.mxu0 %v6131
    %6473 = vmatpush1.msra.mxu0 %v6130
    %6474 = vmatprep.subr.mxu0 %v6136
    %6475 = vmatpush1.msra.mxu0 %v6135
    %6476 = vmatprep.subr.mxu0 %v6141
    %6477 = vmatpush1.msra.mxu0 %v6140
    %6478 = vmatprep.subr.mxu0 %v6146
    %6479 = vmatpush1.msra.mxu0 %v6145
    %6480 = vmatprep.subr.mxu0 %v6151
    %6481 = vmatpush1.msra.mxu0 %v6150
    %6482 = vmatprep.subr.mxu0 %v6156
    %6483 = vmatpush1.msra.mxu0 %v6155
    %6484 = vmatprep.subr.mxu0 %v6161
    %6485 = vmatpush1.msra.mxu0 %v6160
    %6486 = vmatprep.subr.mxu0 %v6166
    %6487 = vmatpush1.msra.mxu0 %v6165
    %6488 = vmatprep.subr.mxu0 %v6171
    %6489 = vmatpush1.msra.mxu0 %v6170
    %6490 = vmatprep.subr.mxu0 %v6176
    %6491 = vmatpush1.msra.mxu0 %v6175
    %6492 = vmatprep.subr.mxu0 %v6181
    %6493 = vmatpush1.msra.mxu0 %v6180
    %6494 = vmatprep.subr.mxu0 %v6186
    %6495 = vmatpush1.msra.mxu0 %v6185
    %6496 = vmatprep.subr.mxu0 %v6191
    %6497 = vmatpush1.msra.mxu0 %v6190
    %6498 = vmatprep.subr.mxu0 %v6196
    %6499 = vmatpush1.msra.mxu0 %v6195
    %6500 = vmatprep.mubr.f32.mxu0 %v6286
    %6501 = vmatmul.mubr.f32.gmra.mrb[0].mxu0 %v6282
    %v6502 = vpop.f32.mrb[0].mxu0
    %v6503 = vadd.f32 0.0, %v6502
    %v6504 = vpop.f32.mrb[0].mxu0
    %v6505 = vadd.f32 0.0, %v6504
    %6506 = vdwg.mxu0
    %6507 = vmatprep.subr.mxu0 %v6201
    %6508 = vmatpush1.msra.mxu0 %v6200
    %6509 = vmatprep.subr.mxu0 %v6206
    %6510 = vmatpush1.msra.mxu0 %v6205
    %6511 = vmatprep.subr.mxu0 %v6211
    %6512 = vmatpush1.msra.mxu0 %v6210
    %6513 = vmatprep.subr.mxu0 %v6216
    %6514 = vmatpush1.msra.mxu0 %v6215
    %6515 = vmatprep.subr.mxu0 %v6221
    %6516 = vmatpush1.msra.mxu0 %v6220
    %6517 = vmatprep.subr.mxu0 %v6226
    %6518 = vmatpush1.msra.mxu0 %v6225
    %6519 = vmatprep.subr.mxu0 %v6231
    %6520 = vmatpush1.msra.mxu0 %v6230
    %6521 = vmatprep.subr.mxu0 %v6236
    %6522 = vmatpush1.msra.mxu0 %v6235
    %6523 = vmatprep.subr.mxu0 %v6241
    %6524 = vmatpush1.msra.mxu0 %v6240
    %6525 = vmatprep.subr.mxu0 %v6246
    %6526 = vmatpush1.msra.mxu0 %v6245
    %6527 = vmatprep.subr.mxu0 %v6251
    %6528 = vmatpush1.msra.mxu0 %v6250
    %6529 = vmatprep.subr.mxu0 %v6256
    %6530 = vmatpush1.msra.mxu0 %v6255
    %6531 = vmatprep.subr.mxu0 %v6261
    %6532 = vmatpush1.msra.mxu0 %v6260
    %6533 = vmatprep.subr.mxu0 %v6266
    %6534 = vmatpush1.msra.mxu0 %v6265
    %6535 = vmatprep.subr.mxu0 %v6271
    %6536 = vmatpush1.msra.mxu0 %v6270
    %6537 = vmatprep.subr.mxu0 %v6276
    %6538 = vmatpush1.msra.mxu0 %v6275
    %6539 = vmatprep.subr.mxu0 0.0
    %6540 = vmatpush1.msra.mxu0 0.0
    %6541 = vmatprep.subr.mxu0 0.0
    %6542 = vmatpush1.msra.mxu0 0.0
    %6543 = vmatprep.subr.mxu0 0.0
    %6544 = vmatpush1.msra.mxu0 0.0
    %6545 = vmatprep.subr.mxu0 0.0
    %6546 = vmatpush1.msra.mxu0 0.0
    %6547 = vmatprep.subr.mxu0 0.0
    %6548 = vmatpush1.msra.mxu0 0.0
    %6549 = vmatprep.subr.mxu0 0.0
    %6550 = vmatpush1.msra.mxu0 0.0
    %6551 = vmatprep.subr.mxu0 0.0
    %6552 = vmatpush1.msra.mxu0 0.0
    %6553 = vmatprep.subr.mxu0 0.0
    %6554 = vmatpush1.msra.mxu0 0.0
    %6555 = vmatprep.subr.mxu0 0.0
    %6556 = vmatpush1.msra.mxu0 0.0
    %6557 = vmatprep.subr.mxu0 0.0
    %6558 = vmatpush1.msra.mxu0 0.0
    %6559 = vmatprep.subr.mxu0 0.0
    %6560 = vmatpush1.msra.mxu0 0.0
    %6561 = vmatprep.subr.mxu0 0.0
    %6562 = vmatpush1.msra.mxu0 0.0
    %6563 = vmatprep.subr.mxu0 0.0
    %6564 = vmatpush1.msra.mxu0 0.0
    %6565 = vmatprep.subr.mxu0 0.0
    %6566 = vmatpush1.msra.mxu0 0.0
    %6567 = vmatprep.subr.mxu0 0.0
    %6568 = vmatpush1.msra.mxu0 0.0
    %6569 = vmatprep.subr.mxu0 0.0
    %6570 = vmatpush1.msra.mxu0 0.0
    %6571 = vmatprep.mubr.f32.mxu0 0.0
    %6572 = vmatmul.mubr.f32.gmra.mrb[0].mxu0 %v6290
    %v6573 = vpop.f32.mrb[0].mxu0
    %v6574 = vadd.f32 %v6503, %v6573
    %v6575 = vpop.f32.mrb[0].mxu0
    %v6576 = vadd.f32 %v6505, %v6575
    %6577 = vdwg.mxu0
    %6578 = vmatprep.subr.mxu0 0.0
    %6579 = vmatpush1.msra.mxu0 %v6042
    %6580 = vmatprep.subr.mxu0 0.0
    %6581 = vmatpush1.msra.mxu0 %v6047
    %6582 = vmatprep.subr.mxu0 0.0
    %6583 = vmatpush1.msra.mxu0 %v6052
    %6584 = vmatprep.subr.mxu0 0.0
    %6585 = vmatpush1.msra.mxu0 %v6057
    %6586 = vmatprep.subr.mxu0 0.0
    %6587 = vmatpush1.msra.mxu0 %v6062
    %6588 = vmatprep.subr.mxu0 0.0
    %6589 = vmatpush1.msra.mxu0 %v6067
    %6590 = vmatprep.subr.mxu0 0.0
    %6591 = vmatpush1.msra.mxu0 %v6072
    %6592 = vmatprep.subr.mxu0 0.0
    %6593 = vmatpush1.msra.mxu0 %v6077
    %6594 = vmatprep.subr.mxu0 0.0
    %6595 = vmatpush1.msra.mxu0 %v6082
    %6596 = vmatprep.subr.mxu0 0.0
    %6597 = vmatpush1.msra.mxu0 %v6087
    %6598 = vmatprep.subr.mxu0 0.0
    %6599 = vmatpush1.msra.mxu0 %v6092
    %6600 = vmatprep.subr.mxu0 0.0
    %6601 = vmatpush1.msra.mxu0 %v6097
    %6602 = vmatprep.subr.mxu0 0.0
    %6603 = vmatpush1.msra.mxu0 %v6102
    %6604 = vmatprep.subr.mxu0 0.0
    %6605 = vmatpush1.msra.mxu0 %v6107
    %6606 = vmatprep.subr.mxu0 0.0
    %6607 = vmatpush1.msra.mxu0 %v6112
    %6608 = vmatprep.subr.mxu0 0.0
    %6609 = vmatpush1.msra.mxu0 %v6117
    %6610 = vmatprep.subr.mxu0 0.0
    %6611 = vmatpush1.msra.mxu0 %v6122
    %6612 = vmatprep.subr.mxu0 0.0
    %6613 = vmatpush1.msra.mxu0 %v6127
    %6614 = vmatprep.subr.mxu0 0.0
    %6615 = vmatpush1.msra.mxu0 %v6132
    %6616 = vmatprep.subr.mxu0 0.0
    %6617 = vmatpush1.msra.mxu0 %v6137
    %6618 = vmatprep.subr.mxu0 0.0
    %6619 = vmatpush1.msra.mxu0 %v6142
    %6620 = vmatprep.subr.mxu0 0.0
    %6621 = vmatpush1.msra.mxu0 %v6147
    %6622 = vmatprep.subr.mxu0 0.0
    %6623 = vmatpush1.msra.mxu0 %v6152
    %6624 = vmatprep.subr.mxu0 0.0
    %6625 = vmatpush1.msra.mxu0 %v6157
    %6626 = vmatprep.subr.mxu0 0.0
    %6627 = vmatpush1.msra.mxu0 %v6162
    %6628 = vmatprep.subr.mxu0 0.0
    %6629 = vmatpush1.msra.mxu0 %v6167
    %6630 = vmatprep.subr.mxu0 0.0
    %6631 = vmatpush1.msra.mxu0 %v6172
    %6632 = vmatprep.subr.mxu0 0.0
    %6633 = vmatpush1.msra.mxu0 %v6177
    %6634 = vmatprep.subr.mxu0 0.0
    %6635 = vmatpush1.msra.mxu0 %v6182
    %6636 = vmatprep.subr.mxu0 0.0
    %6637 = vmatpush1.msra.mxu0 %v6187
    %6638 = vmatprep.subr.mxu0 0.0
    %6639 = vmatpush1.msra.mxu0 %v6192
    %6640 = vmatprep.subr.mxu0 0.0
    %6641 = vmatpush1.msra.mxu0 %v6197
    %6642 = vmatprep.mubr.f32.mxu0 %v6286
    %6643 = vmatmul.mubr.f32.gmra.mrb[0].mxu0 %v6282
    %v6644 = vpop.f32.mrb[0].mxu0
    %v6645 = vadd.f32 0.0, %v6644
    %v6646 = vpop.f32.mrb[0].mxu0
    %6647 = vdwg.mxu0
    %6648 = vmatprep.subr.mxu0 0.0
    %6649 = vmatpush1.msra.mxu0 %v6202
    %6650 = vmatprep.subr.mxu0 0.0
    %6651 = vmatpush1.msra.mxu0 %v6207
    %6652 = vmatprep.subr.mxu0 0.0
    %6653 = vmatpush1.msra.mxu0 %v6212
    %6654 = vmatprep.subr.mxu0 0.0
    %6655 = vmatpush1.msra.mxu0 %v6217
    %6656 = vmatprep.subr.mxu0 0.0
    %6657 = vmatpush1.msra.mxu0 %v6222
    %6658 = vmatprep.subr.mxu0 0.0
    %6659 = vmatpush1.msra.mxu0 %v6227
    %6660 = vmatprep.subr.mxu0 0.0
    %6661 = vmatpush1.msra.mxu0 %v6232
    %6662 = vmatprep.subr.mxu0 0.0
    %6663 = vmatpush1.msra.mxu0 %v6237
    %6664 = vmatprep.subr.mxu0 0.0
    %6665 = vmatpush1.msra.mxu0 %v6242
    %6666 = vmatprep.subr.mxu0 0.0
    %6667 = vmatpush1.msra.mxu0 %v6247
    %6668 = vmatprep.subr.mxu0 0.0
    %6669 = vmatpush1.msra.mxu0 %v6252
    %6670 = vmatprep.subr.mxu0 0.0
    %6671 = vmatpush1.msra.mxu0 %v6257
    %6672 = vmatprep.subr.mxu0 0.0
    %6673 = vmatpush1.msra.mxu0 %v6262
    %6674 = vmatprep.subr.mxu0 0.0
    %6675 = vmatpush1.msra.mxu0 %v6267
    %6676 = vmatprep.subr.mxu0 0.0
    %6677 = vmatpush1.msra.mxu0 %v6272
    %6678 = vmatprep.subr.mxu0 0.0
    %6679 = vmatpush1.msra.mxu0 %v6277
    %6680 = vmatprep.subr.mxu0 0.0
    %6681 = vmatpush1.msra.mxu0 0.0
    %6682 = vmatprep.subr.mxu0 0.0
    %6683 = vmatpush1.msra.mxu0 0.0
    %6684 = vmatprep.subr.mxu0 0.0
    %6685 = vmatpush1.msra.mxu0 0.0
    %6686 = vmatprep.subr.mxu0 0.0
    %6687 = vmatpush1.msra.mxu0 0.0
    %6688 = vmatprep.subr.mxu0 0.0
    %6689 = vmatpush1.msra.mxu0 0.0
    %6690 = vmatprep.subr.mxu0 0.0
    %6691 = vmatpush1.msra.mxu0 0.0
    %6692 = vmatprep.subr.mxu0 0.0
    %6693 = vmatpush1.msra.mxu0 0.0
    %6694 = vmatprep.subr.mxu0 0.0
    %6695 = vmatpush1.msra.mxu0 0.0
    %6696 = vmatprep.subr.mxu0 0.0
    %6697 = vmatpush1.msra.mxu0 0.0
    %6698 = vmatprep.subr.mxu0 0.0
    %6699 = vmatpush1.msra.mxu0 0.0
    %6700 = vmatprep.subr.mxu0 0.0
    %6701 = vmatpush1.msra.mxu0 0.0
    %6702 = vmatprep.subr.mxu0 0.0
    %6703 = vmatpush1.msra.mxu0 0.0
    %6704 = vmatprep.subr.mxu0 0.0
    %6705 = vmatpush1.msra.mxu0 0.0
    %6706 = vmatprep.subr.mxu0 0.0
    %6707 = vmatpush1.msra.mxu0 0.0
    %6708 = vmatprep.subr.mxu0 0.0
    %6709 = vmatpush1.msra.mxu0 0.0
    %6710 = vmatprep.subr.mxu0 0.0
    %6711 = vmatpush1.msra.mxu0 0.0
    %6712 = vmatprep.mubr.f32.mxu0 0.0
    %6713 = vmatmul.mubr.f32.gmra.mrb[0].mxu0 %v6290
    %v6714 = vpop.f32.mrb[0].mxu0
    %v6715 = vadd.f32 %v6645, %v6714
    %v6716 = vpop.f32.mrb[0].mxu0
    %6717 = vdwg.mxu0
    %v6723 = vcombine.low %v6432, %v6434
    %v6724 = vcombine.low %v6574, %v6576
    %v6726 = vunpack.c.l.s4 1966171168
    %v6727 = vunpack.c.0.s8 %v6726
    %v6728 = vlaneseq
    %v6729 = vshrl.u32 %v6728, 7
    %v6730 = vsub.s32 %v6727, %v6729
    %v6731 = vrot.slane %v6723, %v6730
    %v6733 = vunpack.c.l.s4 1966171168
    %v6734 = vunpack.c.0.s8 %v6733
    %v6735 = vlaneseq
    %v6736 = vshrl.u32 %v6735, 7
    %v6737 = vsub.s32 %v6734, %v6736
    %v6738 = vrot.slane %v6724, %v6737
    %v6740 = vunpack.c.l.s4 1966171168
    %v6741 = vunpack.c.0.s8 %v6740
    %v6742 = vlaneseq
    %v6743 = vshrl.u32 %v6742, 7
    %v6744 = vsub.s32 %v6741, %v6743
    %v6745 = vrot.slane %v6715, %v6744
    %v6746 = vcombine.low %v6731, %v6738
    %v6748 = vunpack.c.l.s4 1966171168
    %v6749 = vunpack.c.0.s8 %v6748
    %v6750 = vlaneseq
    %v6751 = vshrl.u32 %v6750, 7
    %v6752 = vsub.s32 %v6749, %v6751
    %v6753 = vrot.slane %v6746, %v6752
    %v6755 = vunpack.c.l.s4 1966171168
    %v6756 = vunpack.c.0.s8 %v6755
    %v6757 = vlaneseq
    %v6758 = vshrl.u32 %v6757, 7
    %v6759 = vsub.s32 %v6756, %v6758
    %v6760 = vrot.slane %v6745, %v6759
    %v6761 = vcombine.low %v6753, %v6760
    %v6763 = vadd.f32 %v6037, %v6761
    %v6764 = vld [vmem:[#allocation7] sm:$0xff]
    %v6765 = vld [vmem:[#allocation7 + $0x8] sm:$0xff]
    %v6766 = vld [vmem:[#allocation7 + $0x10] sm:$0xff]
    %v6767 = vld [vmem:[#allocation7 + $0x18] sm:$0xff]
    %v6768 = vld [vmem:[#allocation7 + $0x20] sm:$0xff]
    %v6769 = vld [vmem:[#allocation7 + $0x28] sm:$0xff]
    %v6770 = vld [vmem:[#allocation7 + $0x30] sm:$0xff]
    %v6771 = vld [vmem:[#allocation7 + $0x38] sm:$0xff]
    %v6772 = vld [vmem:[#allocation7 + $0x40] sm:$0xff]
    %v6773 = vld [vmem:[#allocation7 + $0x48] sm:$0xff]
    %v6774 = vld [vmem:[#allocation7 + $0x50] sm:$0xff]
    %v6775 = vld [vmem:[#allocation7 + $0x58] sm:$0xff]
    %v6776 = vld [vmem:[#allocation7 + $0x60] sm:$0xff]
    %v6777 = vld [vmem:[#allocation7 + $0x68] sm:$0xff]
    %v6778 = vld [vmem:[#allocation7 + $0x70] sm:$0xff]
    %v6779 = vld [vmem:[#allocation7 + $0x78] sm:$0xff]
    %v6780 = vld [vmem:[#allocation7 + $0x80] sm:$0xff]
    %v6781 = vld [vmem:[#allocation7 + $0x88] sm:$0xff]
    %v6782 = vld [vmem:[#allocation7 + $0x90] sm:$0xff]
    %v6783 = vld [vmem:[#allocation7 + $0x98] sm:$0xff]
    %v6784 = vld [vmem:[#allocation7 + $0xa0] sm:$0xff]
    %v6785 = vld [vmem:[#allocation7 + $0xa8] sm:$0xff]
    %v6786 = vld [vmem:[#allocation7 + $0xb0] sm:$0xff]
    %v6787 = vld [vmem:[#allocation7 + $0xb8] sm:$0xff]
    %v6788 = vld [vmem:[#allocation7 + $0xc0] sm:$0xff]
    %v6789 = vld [vmem:[#allocation7 + $0xc8] sm:$0xff]
    %v6790 = vld [vmem:[#allocation7 + $0xd0] sm:$0xff]
    %v6791 = vld [vmem:[#allocation7 + $0xd8] sm:$0xff]
    %v6792 = vld [vmem:[#allocation7 + $0xe0] sm:$0xff]
    %v6793 = vld [vmem:[#allocation7 + $0xe8] sm:$0xff]
    %v6794 = vld [vmem:[#allocation7 + $0xf0] sm:$0xff]
    %v6795 = vld [vmem:[#allocation7 + $0xf8] sm:$0xff]
    %v6796 = vld [vmem:[#allocation7 + $0x100] sm:$0xff]
    %v6797 = vld [vmem:[#allocation7 + $0x108] sm:$0xff]
    %v6798 = vld [vmem:[#allocation7 + $0x110] sm:$0xff]
    %v6799 = vld [vmem:[#allocation7 + $0x118] sm:$0xff]
    %v6800 = vld [vmem:[#allocation7 + $0x120] sm:$0xff]
    %v6801 = vld [vmem:[#allocation7 + $0x128] sm:$0xff]
    %v6802 = vld [vmem:[#allocation7 + $0x130] sm:$0xff]
    %v6803 = vld [vmem:[#allocation7 + $0x138] sm:$0xff]
    %v6804 = vld [vmem:[#allocation7 + $0x140] sm:$0xff]
    %v6805 = vld [vmem:[#allocation7 + $0x148] sm:$0xff]
    %v6806 = vld [vmem:[#allocation7 + $0x150] sm:$0xff]
    %v6807 = vld [vmem:[#allocation7 + $0x158] sm:$0xff]
    %v6808 = vld [vmem:[#allocation7 + $0x160] sm:$0xff]
    %v6809 = vld [vmem:[#allocation7 + $0x168] sm:$0xff]
    %v6810 = vld [vmem:[#allocation7 + $0x170] sm:$0xff]
    %v6811 = vld [vmem:[#allocation7 + $0x178] sm:$0xff]
    %v6812 = vld [vmem:[#allocation7 + $0x180] sm:$0xff]
    %v6813 = vld [vmem:[#allocation7 + $0x188] sm:$0xff]
    %v6814 = vld [vmem:[#allocation7 + $0x190] sm:$0xff]
    %v6815 = vld [vmem:[#allocation7 + $0x198] sm:$0xff]
    %v6816 = vld [vmem:[#allocation7 + $0x1a0] sm:$0xff]
    %v6817 = vld [vmem:[#allocation7 + $0x1a8] sm:$0xff]
    %v6818 = vld [vmem:[#allocation7 + $0x1b0] sm:$0xff]
    %v6819 = vld [vmem:[#allocation7 + $0x1b8] sm:$0xff]
    %v6820 = vld [vmem:[#allocation7 + $0x1c0] sm:$0xff]
    %v6821 = vld [vmem:[#allocation7 + $0x1c8] sm:$0xff]
    %v6822 = vld [vmem:[#allocation7 + $0x1d0] sm:$0xff]
    %v6823 = vld [vmem:[#allocation7 + $0x1d8] sm:$0xff]
    %v6824 = vld [vmem:[#allocation7 + $0x1e0] sm:$0xff]
    %v6825 = vld [vmem:[#allocation7 + $0x1e8] sm:$0xff]
    %v6826 = vld [vmem:[#allocation7 + $0x1f0] sm:$0xff]
    %v6827 = vld [vmem:[#allocation7 + $0x1f8] sm:$0xff]
    %v6828 = vld [vmem:[#allocation7 + $0x200] sm:$0xff]
    %v6829 = vld [vmem:[#allocation7 + $0x208] sm:$0xff]
    %v6830 = vld [vmem:[#allocation7 + $0x210] sm:$0xff]
    %v6831 = vld [vmem:[#allocation7 + $0x218] sm:$0xff]
    %v6832 = vld [vmem:[#allocation7 + $0x220] sm:$0xff]
    %v6833 = vld [vmem:[#allocation7 + $0x228] sm:$0xff]
    %v6834 = vld [vmem:[#allocation7 + $0x230] sm:$0xff]
    %v6835 = vld [vmem:[#allocation7 + $0x238] sm:$0xff]
    %v6836 = vld [vmem:[#allocation7 + $0x240] sm:$0xff]
    %v6837 = vld [vmem:[#allocation7 + $0x248] sm:$0xff]
    %v6838 = vld [vmem:[#allocation7 + $0x250] sm:$0xff]
    %v6839 = vld [vmem:[#allocation7 + $0x258] sm:$0xff]
    %v6840 = vld [vmem:[#allocation7 + $0x260] sm:$0xff]
    %v6841 = vld [vmem:[#allocation7 + $0x268] sm:$0xff]
    %v6842 = vld [vmem:[#allocation7 + $0x270] sm:$0xff]
    %v6843 = vld [vmem:[#allocation7 + $0x278] sm:$0xff]
    %v6844 = vld [vmem:[#allocation7 + $0x280] sm:$0xff]
    %v6845 = vld [vmem:[#allocation7 + $0x288] sm:$0xff]
    %v6846 = vld [vmem:[#allocation7 + $0x290] sm:$0xff]
    %v6847 = vld [vmem:[#allocation7 + $0x298] sm:$0xff]
    %v6848 = vld [vmem:[#allocation7 + $0x2a0] sm:$0xff]
    %v6849 = vld [vmem:[#allocation7 + $0x2a8] sm:$0xff]
    %v6850 = vld [vmem:[#allocation7 + $0x2b0] sm:$0xff]
    %v6851 = vld [vmem:[#allocation7 + $0x2b8] sm:$0xff]
    %v6852 = vld [vmem:[#allocation7 + $0x2c0] sm:$0xff]
    %v6853 = vld [vmem:[#allocation7 + $0x2c8] sm:$0xff]
    %v6854 = vld [vmem:[#allocation7 + $0x2d0] sm:$0xff]
    %v6855 = vld [vmem:[#allocation7 + $0x2d8] sm:$0xff]
    %v6856 = vld [vmem:[#allocation7 + $0x2e0] sm:$0xff]
    %v6857 = vld [vmem:[#allocation7 + $0x2e8] sm:$0xff]
    %v6858 = vld [vmem:[#allocation7 + $0x2f0] sm:$0xff]
    %v6859 = vld [vmem:[#allocation7 + $0x2f8] sm:$0xff]
    %v6860 = vld [vmem:[#allocation7 + $0x300] sm:$0xff]
    %v6861 = vld [vmem:[#allocation7 + $0x308] sm:$0xff]
    %v6862 = vld [vmem:[#allocation7 + $0x310] sm:$0xff]
    %v6863 = vld [vmem:[#allocation7 + $0x318] sm:$0xff]
    %v6864 = vld [vmem:[#allocation7 + $0x320] sm:$0xff]
    %v6865 = vld [vmem:[#allocation7 + $0x328] sm:$0xff]
    %v6866 = vld [vmem:[#allocation7 + $0x330] sm:$0xff]
    %v6867 = vld [vmem:[#allocation7 + $0x338] sm:$0xff]
    %v6868 = vld [vmem:[#allocation7 + $0x340] sm:$0xff]
    %v6869 = vld [vmem:[#allocation7 + $0x348] sm:$0xff]
    %v6870 = vld [vmem:[#allocation7 + $0x350] sm:$0xff]
    %v6871 = vld [vmem:[#allocation7 + $0x358] sm:$0xff]
    %v6872 = vld [vmem:[#allocation7 + $0x360] sm:$0xff]
    %v6873 = vld [vmem:[#allocation7 + $0x368] sm:$0xff]
    %v6874 = vld [vmem:[#allocation7 + $0x370] sm:$0xff]
    %v6875 = vld [vmem:[#allocation7 + $0x378] sm:$0xff]
    %v6876 = vld [vmem:[#allocation7 + $0x380] sm:$0xff]
    %v6877 = vld [vmem:[#allocation7 + $0x388] sm:$0xff]
    %v6878 = vld [vmem:[#allocation7 + $0x390] sm:$0xff]
    %v6879 = vld [vmem:[#allocation7 + $0x398] sm:$0xff]
    %v6880 = vld [vmem:[#allocation7 + $0x3a0] sm:$0xff]
    %v6881 = vld [vmem:[#allocation7 + $0x3a8] sm:$0xff]
    %v6882 = vld [vmem:[#allocation7 + $0x3b0] sm:$0xff]
    %v6883 = vld [vmem:[#allocation7 + $0x3b8] sm:$0xff]
    %v6884 = vld [vmem:[#allocation7 + $0x3c0] sm:$0xff]
    %v6885 = vld [vmem:[#allocation7 + $0x3c8] sm:$0xff]
    %v6886 = vld [vmem:[#allocation7 + $0x3d0] sm:$0xff]
    %v6887 = vld [vmem:[#allocation7 + $0x3d8] sm:$0xff]
    %v6888 = vld [vmem:[#allocation7 + $0x3e0] sm:$0xff]
    %v6889 = vld [vmem:[#allocation7 + $0x3e8] sm:$0xff]
    %v6890 = vld [vmem:[#allocation7 + $0x3f0] sm:$0xff]
    %v6891 = vld [vmem:[#allocation7 + $0x3f8] sm:$0xff]
    %v6892 = vld [vmem:[#allocation7 + $0x400] sm:$0xff]
    %v6893 = vld [vmem:[#allocation7 + $0x408] sm:$0xff]
    %v6894 = vld [vmem:[#allocation7 + $0x410] sm:$0xff]
    %v6895 = vld [vmem:[#allocation7 + $0x418] sm:$0xff]
    %v6896 = vld [vmem:[#allocation7 + $0x420] sm:$0xff]
    %v6897 = vld [vmem:[#allocation7 + $0x428] sm:$0xff]
    %v6898 = vld [vmem:[#allocation7 + $0x430] sm:$0xff]
    %v6899 = vld [vmem:[#allocation7 + $0x438] sm:$0xff]
    %v6900 = vld [vmem:[#allocation7 + $0x440] sm:$0xff]
    %v6901 = vld [vmem:[#allocation7 + $0x448] sm:$0xff]
    %v6902 = vld [vmem:[#allocation7 + $0x450] sm:$0xff]
    %v6903 = vld [vmem:[#allocation7 + $0x458] sm:$0xff]
    %v6904 = vld [vmem:[#allocation7 + $0x460] sm:$0xff]
    %v6905 = vld [vmem:[#allocation7 + $0x468] sm:$0xff]
    %v6906 = vld [vmem:[#allocation7 + $0x470] sm:$0xff]
    %v6907 = vld [vmem:[#allocation7 + $0x478] sm:$0xff]
    %v6908 = vld [vmem:[#allocation7 + $0x480] sm:$0xff]
    %v6909 = vld [vmem:[#allocation7 + $0x488] sm:$0xff]
    %v6910 = vld [vmem:[#allocation7 + $0x490] sm:$0xff]
    %v6911 = vld [vmem:[#allocation7 + $0x498] sm:$0xff]
    %v6912 = vld [vmem:[#allocation7 + $0x4a0] sm:$0xff]
    %v6913 = vld [vmem:[#allocation7 + $0x4a8] sm:$0xff]
    %v6914 = vld [vmem:[#allocation7 + $0x4b0] sm:$0xff]
    %v6915 = vld [vmem:[#allocation7 + $0x4b8] sm:$0xff]
    %v6916 = vld [vmem:[#allocation7 + $0x4c0] sm:$0xff]
    %v6917 = vld [vmem:[#allocation7 + $0x4c8] sm:$0xff]
    %v6918 = vld [vmem:[#allocation7 + $0x4d0] sm:$0xff]
    %v6919 = vld [vmem:[#allocation7 + $0x4d8] sm:$0xff]
    %v6920 = vld [vmem:[#allocation7 + $0x4e0] sm:$0xff]
    %v6921 = vld [vmem:[#allocation7 + $0x4e8] sm:$0xff]
    %v6922 = vld [vmem:[#allocation7 + $0x4f0] sm:$0xff]
    %v6923 = vld [vmem:[#allocation7 + $0x4f8] sm:$0xff]
    %v6924 = vld [vmem:[%s4] sm:$0x3]
    %v6926 = vlaneseq
    %v6927 = vshrl.u32 %v6926, 7
    %v6928 = vsub.s32 0, %v6927
    %v6929 = vrot.slane %v6763, %v6928
    %v6930 = vlaneseq
    %v6931 = vshrl.u32 %v6930, 7
    %v6932 = vsub.s32 1, %v6931
    %v6933 = vrot.slane %v6763, %v6932
    %v6934 = vlaneseq
    %v6935 = vshrl.u32 %v6934, 7
    %v6936 = vsub.s32 2, %v6935
    %v6937 = vrot.slane %v6763, %v6936
    %v6938 = vlaneseq
    %v6939 = vshrl.u32 %v6938, 7
    %v6940 = vsub.s32 3, %v6939
    %v6941 = vrot.slane %v6763, %v6940
    %v6942 = vlaneseq
    %v6943 = vshrl.u32 %v6942, 7
    %v6944 = vsub.s32 4, %v6943
    %v6945 = vrot.slane %v6763, %v6944
    %v6952 = vlaneseq
    %v6953 = vshrl.u32 %v6952, 7
    %v6954 = vsub.s32 0, %v6953
    %v6955 = vrot.slane %v6924, %v6954
    %v6956 = vlaneseq
    %v6957 = vshrl.u32 %v6956, 7
    %v6958 = vsub.s32 1, %v6957
    %v6959 = vrot.slane %v6924, %v6958
    %6962 = vmatprep.subr.mxu0 %v6765
    %6963 = vmatpush1.msra.mxu0 %v6764
    %6964 = vmatprep.subr.mxu0 %v6767
    %6965 = vmatpush1.msra.mxu0 %v6766
    %6966 = vmatprep.subr.mxu0 %v6769
    %6967 = vmatpush1.msra.mxu0 %v6768
    %6968 = vmatprep.subr.mxu0 %v6771
    %6969 = vmatpush1.msra.mxu0 %v6770
    %6970 = vmatprep.subr.mxu0 %v6773
    %6971 = vmatpush1.msra.mxu0 %v6772
    %6972 = vmatprep.subr.mxu0 %v6775
    %6973 = vmatpush1.msra.mxu0 %v6774
    %6974 = vmatprep.subr.mxu0 %v6777
    %6975 = vmatpush1.msra.mxu0 %v6776
    %6976 = vmatprep.subr.mxu0 %v6779
    %6977 = vmatpush1.msra.mxu0 %v6778
    %6978 = vmatprep.subr.mxu0 %v6781
    %6979 = vmatpush1.msra.mxu0 %v6780
    %6980 = vmatprep.subr.mxu0 %v6783
    %6981 = vmatpush1.msra.mxu0 %v6782
    %6982 = vmatprep.subr.mxu0 %v6785
    %6983 = vmatpush1.msra.mxu0 %v6784
    %6984 = vmatprep.subr.mxu0 %v6787
    %6985 = vmatpush1.msra.mxu0 %v6786
    %6986 = vmatprep.subr.mxu0 %v6789
    %6987 = vmatpush1.msra.mxu0 %v6788
    %6988 = vmatprep.subr.mxu0 %v6791
    %6989 = vmatpush1.msra.mxu0 %v6790
    %6990 = vmatprep.subr.mxu0 %v6793
    %6991 = vmatpush1.msra.mxu0 %v6792
    %6992 = vmatprep.subr.mxu0 %v6795
    %6993 = vmatpush1.msra.mxu0 %v6794
    %6994 = vmatprep.subr.mxu0 %v6797
    %6995 = vmatpush1.msra.mxu0 %v6796
    %6996 = vmatprep.subr.mxu0 %v6799
    %6997 = vmatpush1.msra.mxu0 %v6798
    %6998 = vmatprep.subr.mxu0 %v6801
    %6999 = vmatpush1.msra.mxu0 %v6800
    %7000 = vmatprep.subr.mxu0 %v6803
    %7001 = vmatpush1.msra.mxu0 %v6802
    %7002 = vmatprep.subr.mxu0 %v6805
    %7003 = vmatpush1.msra.mxu0 %v6804
    %7004 = vmatprep.subr.mxu0 %v6807
    %7005 = vmatpush1.msra.mxu0 %v6806
    %7006 = vmatprep.subr.mxu0 %v6809
    %7007 = vmatpush1.msra.mxu0 %v6808
    %7008 = vmatprep.subr.mxu0 %v6811
    %7009 = vmatpush1.msra.mxu0 %v6810
    %7010 = vmatprep.subr.mxu0 %v6813
    %7011 = vmatpush1.msra.mxu0 %v6812
    %7012 = vmatprep.subr.mxu0 %v6815
    %7013 = vmatpush1.msra.mxu0 %v6814
    %7014 = vmatprep.subr.mxu0 %v6817
    %7015 = vmatpush1.msra.mxu0 %v6816
    %7016 = vmatprep.subr.mxu0 %v6819
    %7017 = vmatpush1.msra.mxu0 %v6818
    %7018 = vmatprep.subr.mxu0 %v6821
    %7019 = vmatpush1.msra.mxu0 %v6820
    %7020 = vmatprep.subr.mxu0 %v6823
    %7021 = vmatpush1.msra.mxu0 %v6822
    %7022 = vmatprep.subr.mxu0 %v6825
    %7023 = vmatpush1.msra.mxu0 %v6824
    %7024 = vmatprep.subr.mxu0 %v6827
    %7025 = vmatpush1.msra.mxu0 %v6826
    %7026 = vmatprep.mubr.f32.mxu0 %v6933
    %7027 = vmatmul.mubr.f32.gmra.mrb[0].mxu0 %v6929
    %v7028 = vpop.f32.mrb[0].mxu0
    %v7029 = vadd.f32 %v6955, %v7028
    %v7030 = vpop.f32.mrb[0].mxu0
    %v7031 = vadd.f32 %v6959, %v7030
    %7032 = vdwg.mxu0
    %7033 = vmatprep.subr.mxu0 %v6829
    %7034 = vmatpush1.msra.mxu0 %v6828
    %7035 = vmatprep.subr.mxu0 %v6831
    %7036 = vmatpush1.msra.mxu0 %v6830
    %7037 = vmatprep.subr.mxu0 %v6833
    %7038 = vmatpush1.msra.mxu0 %v6832
    %7039 = vmatprep.subr.mxu0 %v6835
    %7040 = vmatpush1.msra.mxu0 %v6834
    %7041 = vmatprep.subr.mxu0 %v6837
    %7042 = vmatpush1.msra.mxu0 %v6836
    %7043 = vmatprep.subr.mxu0 %v6839
    %7044 = vmatpush1.msra.mxu0 %v6838
    %7045 = vmatprep.subr.mxu0 %v6841
    %7046 = vmatpush1.msra.mxu0 %v6840
    %7047 = vmatprep.subr.mxu0 %v6843
    %7048 = vmatpush1.msra.mxu0 %v6842
    %7049 = vmatprep.subr.mxu0 %v6845
    %7050 = vmatpush1.msra.mxu0 %v6844
    %7051 = vmatprep.subr.mxu0 %v6847
    %7052 = vmatpush1.msra.mxu0 %v6846
    %7053 = vmatprep.subr.mxu0 %v6849
    %7054 = vmatpush1.msra.mxu0 %v6848
    %7055 = vmatprep.subr.mxu0 %v6851
    %7056 = vmatpush1.msra.mxu0 %v6850
    %7057 = vmatprep.subr.mxu0 %v6853
    %7058 = vmatpush1.msra.mxu0 %v6852
    %7059 = vmatprep.subr.mxu0 %v6855
    %7060 = vmatpush1.msra.mxu0 %v6854
    %7061 = vmatprep.subr.mxu0 %v6857
    %7062 = vmatpush1.msra.mxu0 %v6856
    %7063 = vmatprep.subr.mxu0 %v6859
    %7064 = vmatpush1.msra.mxu0 %v6858
    %7065 = vmatprep.subr.mxu0 %v6861
    %7066 = vmatpush1.msra.mxu0 %v6860
    %7067 = vmatprep.subr.mxu0 %v6863
    %7068 = vmatpush1.msra.mxu0 %v6862
    %7069 = vmatprep.subr.mxu0 %v6865
    %7070 = vmatpush1.msra.mxu0 %v6864
    %7071 = vmatprep.subr.mxu0 %v6867
    %7072 = vmatpush1.msra.mxu0 %v6866
    %7073 = vmatprep.subr.mxu0 %v6869
    %7074 = vmatpush1.msra.mxu0 %v6868
    %7075 = vmatprep.subr.mxu0 %v6871
    %7076 = vmatpush1.msra.mxu0 %v6870
    %7077 = vmatprep.subr.mxu0 %v6873
    %7078 = vmatpush1.msra.mxu0 %v6872
    %7079 = vmatprep.subr.mxu0 %v6875
    %7080 = vmatpush1.msra.mxu0 %v6874
    %7081 = vmatprep.subr.mxu0 %v6877
    %7082 = vmatpush1.msra.mxu0 %v6876
    %7083 = vmatprep.subr.mxu0 %v6879
    %7084 = vmatpush1.msra.mxu0 %v6878
    %7085 = vmatprep.subr.mxu0 %v6881
    %7086 = vmatpush1.msra.mxu0 %v6880
    %7087 = vmatprep.subr.mxu0 %v6883
    %7088 = vmatpush1.msra.mxu0 %v6882
    %7089 = vmatprep.subr.mxu0 %v6885
    %7090 = vmatpush1.msra.mxu0 %v6884
    %7091 = vmatprep.subr.mxu0 %v6887
    %7092 = vmatpush1.msra.mxu0 %v6886
    %7093 = vmatprep.subr.mxu0 %v6889
    %7094 = vmatpush1.msra.mxu0 %v6888
    %7095 = vmatprep.subr.mxu0 %v6891
    %7096 = vmatpush1.msra.mxu0 %v6890
    %7097 = vmatprep.mubr.f32.mxu0 %v6941
    %7098 = vmatmul.mubr.f32.gmra.mrb[0].mxu0 %v6937
    %v7099 = vpop.f32.mrb[0].mxu0
    %v7100 = vadd.f32 %v7029, %v7099
    %v7101 = vpop.f32.mrb[0].mxu0
    %v7102 = vadd.f32 %v7031, %v7101
    %7103 = vdwg.mxu0
    %7104 = vmatprep.subr.mxu0 %v6893
    %7105 = vmatpush1.msra.mxu0 %v6892
    %7106 = vmatprep.subr.mxu0 %v6895
    %7107 = vmatpush1.msra.mxu0 %v6894
    %7108 = vmatprep.subr.mxu0 %v6897
    %7109 = vmatpush1.msra.mxu0 %v6896
    %7110 = vmatprep.subr.mxu0 %v6899
    %7111 = vmatpush1.msra.mxu0 %v6898
    %7112 = vmatprep.subr.mxu0 %v6901
    %7113 = vmatpush1.msra.mxu0 %v6900
    %7114 = vmatprep.subr.mxu0 %v6903
    %7115 = vmatpush1.msra.mxu0 %v6902
    %7116 = vmatprep.subr.mxu0 %v6905
    %7117 = vmatpush1.msra.mxu0 %v6904
    %7118 = vmatprep.subr.mxu0 %v6907
    %7119 = vmatpush1.msra.mxu0 %v6906
    %7120 = vmatprep.subr.mxu0 %v6909
    %7121 = vmatpush1.msra.mxu0 %v6908
    %7122 = vmatprep.subr.mxu0 %v6911
    %7123 = vmatpush1.msra.mxu0 %v6910
    %7124 = vmatprep.subr.mxu0 %v6913
    %7125 = vmatpush1.msra.mxu0 %v6912
    %7126 = vmatprep.subr.mxu0 %v6915
    %7127 = vmatpush1.msra.mxu0 %v6914
    %7128 = vmatprep.subr.mxu0 %v6917
    %7129 = vmatpush1.msra.mxu0 %v6916
    %7130 = vmatprep.subr.mxu0 %v6919
    %7131 = vmatpush1.msra.mxu0 %v6918
    %7132 = vmatprep.subr.mxu0 %v6921
    %7133 = vmatpush1.msra.mxu0 %v6920
    %7134 = vmatprep.subr.mxu0 %v6923
    %7135 = vmatpush1.msra.mxu0 %v6922
    %7136 = vmatprep.subr.mxu0 0.0
    %7137 = vmatpush1.msra.mxu0 0.0
    %7138 = vmatprep.subr.mxu0 0.0
    %7139 = vmatpush1.msra.mxu0 0.0
    %7140 = vmatprep.subr.mxu0 0.0
    %7141 = vmatpush1.msra.mxu0 0.0
    %7142 = vmatprep.subr.mxu0 0.0
    %7143 = vmatpush1.msra.mxu0 0.0
    %7144 = vmatprep.subr.mxu0 0.0
    %7145 = vmatpush1.msra.mxu0 0.0
    %7146 = vmatprep.subr.mxu0 0.0
    %7147 = vmatpush1.msra.mxu0 0.0
    %7148 = vmatprep.subr.mxu0 0.0
    %7149 = vmatpush1.msra.mxu0 0.0
    %7150 = vmatprep.subr.mxu0 0.0
    %7151 = vmatpush1.msra.mxu0 0.0
    %7152 = vmatprep.subr.mxu0 0.0
    %7153 = vmatpush1.msra.mxu0 0.0
    %7154 = vmatprep.subr.mxu0 0.0
    %7155 = vmatpush1.msra.mxu0 0.0
    %7156 = vmatprep.subr.mxu0 0.0
    %7157 = vmatpush1.msra.mxu0 0.0
    %7158 = vmatprep.subr.mxu0 0.0
    %7159 = vmatpush1.msra.mxu0 0.0
    %7160 = vmatprep.subr.mxu0 0.0
    %7161 = vmatpush1.msra.mxu0 0.0
    %7162 = vmatprep.subr.mxu0 0.0
    %7163 = vmatpush1.msra.mxu0 0.0
    %7164 = vmatprep.subr.mxu0 0.0
    %7165 = vmatpush1.msra.mxu0 0.0
    %7166 = vmatprep.subr.mxu0 0.0
    %7167 = vmatpush1.msra.mxu0 0.0
    %7168 = vmatprep.mubr.f32.mxu0 0.0
    %7169 = vmatmul.mubr.f32.gmra.mrb[0].mxu0 %v6945
    %v7170 = vpop.f32.mrb[0].mxu0
    %v7171 = vadd.f32 %v7100, %v7170
    %v7172 = vpop.f32.mrb[0].mxu0
    %v7173 = vadd.f32 %v7102, %v7172
    %7174 = vdwg.mxu0
    %v7175 = vsel %vm1215, %v7171, -inf
    %v7176 = vsel %vm1215, %v7173, -inf
    %v7177 = vmax.f32 %v7175, %v7176
    %7178 = vmax.xlane.f32.xlu0 %v7177
    %v7179 = vpop.xlane.xlu0 %7178
    %v7180 = vsub.f32 %v7171, %v7179
    %v7181 = vsub.f32 %v7173, %v7179
    %v7182 = vmul.f32 %v7180, 1.442695
    %v7183 = vpow.pop %v7182
    %v7184 = vmul.f32 %v7181, 1.442695
    %v7185 = vpow.pop %v7184
    %v7186 = vsel %vm1215, %v7183, 0.0
    %v7187 = vsel %vm1215, %v7185, 0.0
    %v7188 = vadd.f32 %v7186, %v7187
    %7189 = vadd.xlane.f32.xlu0 %v7188
    %v7190 = vpop.xlane.xlu0 %7189
    %v7191 = vlog2.pop %v7190
    %v7192 = vmul.f32 %v7191, 0.6931472
    %v7193 = vadd.f32 %v7179, %v7192
    %v7194 = vsub.f32 %v7171, %v7193
    %v7195 = vsub.f32 %v7173, %v7193
    %v7198 = vcombine.low %v7194, %v7195
    %v7200 = vunpack.c.l.s4 1966171168
    %v7201 = vunpack.c.0.s8 %v7200
    %v7202 = vlaneseq
    %v7203 = vshrl.u32 %v7202, 7
    %v7204 = vsub.s32 %v7201, %v7203
    %v7205 = vrot.slane %v7198, %v7204
    %v7207 = vunpack.c.l.s4 1966171168
    %v7208 = vunpack.c.0.s8 %v7207
    %v7209 = vlaneseq
    %v7210 = vshrl.u32 %v7209, 7
    %v7211 = vsub.s32 %v7208, %v7210
    %v7212 = vrot.slane %v7205, %v7211
    %s7214 = scalar_lea.vmem [#allocation8], 5
    %7215 = vst.msk [vmem:[%s7214] ss:$8 sm:$0x3] %vm1258, %v7212
    %7216 = vst.msk [vmem:[%s7214] ss:$8 sm:$0x0] %vm1258, %v7212
    %s7217 = sadd.s32 %s73, 5
    %p7218 = scmp.lt.s32.totalorder %s7217, 1
    %s7219 = scalar_select %p7218, 1, 0
    %v7220 = vstv %s7219
    %vm7221 = vcmp.eq.s32.totalorder %v7220, 1
    %v7222 = vsel %vm7221, %v6763, %v6033
    %7223 = vst.msk [vmem:[#allocation9] sm:$0x7] %vm1267, %v7222
    %v7224 = vld [vmem:[#allocation9] sm:$0x7]
    %s7225 = scalar_lea.vmem [#allocation2], 6
    %v7226 = vld [vmem:[%s7225] ss:$8 sm:$0xf]
    %v7227 = vld [vmem:[%s7225] ss:$8 sm:$0x10]
    %v7228 = vor.u32 %v7226, %v7227
    %v7229 = vld [vmem:[#allocation5] sm:$0xff]
    %v7230 = vld [vmem:[#allocation5 + $0x8] sm:$0xff]
    %v7231 = vld [vmem:[#allocation5 + $0x10] sm:$0xff]
    %v7232 = vld [vmem:[#allocation5 + $0x18] sm:$0xff]
    %v7233 = vld [vmem:[#allocation5 + $0x20] sm:$0xff]
    %v7234 = vld [vmem:[#allocation5 + $0x28] sm:$0xff]
    %v7235 = vld [vmem:[#allocation5 + $0x30] sm:$0xff]
    %v7236 = vld [vmem:[#allocation5 + $0x38] sm:$0xff]
    %v7237 = vld [vmem:[#allocation5 + $0x40] sm:$0xff]
    %v7238 = vld [vmem:[#allocation5 + $0x48] sm:$0xff]
    %v7239 = vld [vmem:[#allocation5 + $0x50] sm:$0xff]
    %v7240 = vld [vmem:[#allocation5 + $0x58] sm:$0xff]
    %v7241 = vld [vmem:[#allocation5 + $0x60] sm:$0xff]
    %v7242 = vld [vmem:[#allocation5 + $0x68] sm:$0xff]
    %v7243 = vld [vmem:[#allocation5 + $0x70] sm:$0xff]
    %v7244 = vld [vmem:[#allocation5 + $0x78] sm:$0xff]
    %v7245 = vld [vmem:[#allocation5 + $0x80] sm:$0xff]
    %v7246 = vld [vmem:[#allocation5 + $0x88] sm:$0xff]
    %v7247 = vld [vmem:[#allocation5 + $0x90] sm:$0xff]
    %v7248 = vld [vmem:[#allocation5 + $0x98] sm:$0xff]
    %v7249 = vld [vmem:[#allocation5 + $0xa0] sm:$0xff]
    %v7250 = vld [vmem:[#allocation5 + $0xa8] sm:$0xff]
    %v7251 = vld [vmem:[#allocation5 + $0xb0] sm:$0xff]
    %v7252 = vld [vmem:[#allocation5 + $0xb8] sm:$0xff]
    %v7253 = vld [vmem:[#allocation5 + $0xc0] sm:$0xff]
    %v7254 = vld [vmem:[#allocation5 + $0xc8] sm:$0xff]
    %v7255 = vld [vmem:[#allocation5 + $0xd0] sm:$0xff]
    %v7256 = vld [vmem:[#allocation5 + $0xd8] sm:$0xff]
    %v7257 = vld [vmem:[#allocation5 + $0xe0] sm:$0xff]
    %v7258 = vld [vmem:[#allocation5 + $0xe8] sm:$0xff]
    %v7259 = vld [vmem:[#allocation5 + $0xf0] sm:$0xff]
    %v7260 = vld [vmem:[#allocation5 + $0xf8] sm:$0xff]
    %v7261 = vld [vmem:[#allocation5 + $0x100] sm:$0xff]
    %v7262 = vld [vmem:[#allocation5 + $0x108] sm:$0xff]
    %v7263 = vld [vmem:[#allocation5 + $0x110] sm:$0xff]
    %v7264 = vld [vmem:[#allocation5 + $0x118] sm:$0xff]
    %v7265 = vld [vmem:[#allocation5 + $0x120] sm:$0xff]
    %v7266 = vld [vmem:[#allocation5 + $0x128] sm:$0xff]
    %v7267 = vld [vmem:[#allocation5 + $0x130] sm:$0xff]
    %v7268 = vld [vmem:[#allocation5 + $0x138] sm:$0xff]
    %v7269 = vld [vmem:[#allocation5 + $0x140] sm:$0xff]
    %v7270 = vld [vmem:[#allocation5 + $0x148] sm:$0xff]
    %v7271 = vld [vmem:[#allocation5 + $0x150] sm:$0xff]
    %v7272 = vld [vmem:[#allocation5 + $0x158] sm:$0xff]
    %v7273 = vld [vmem:[#allocation5 + $0x160] sm:$0xff]
    %v7274 = vld [vmem:[#allocation5 + $0x168] sm:$0xff]
    %v7275 = vld [vmem:[#allocation5 + $0x170] sm:$0xff]
    %v7276 = vld [vmem:[#allocation5 + $0x178] sm:$0xff]
    %v7277 = vld [vmem:[#allocation5 + $0x180] sm:$0xff]
    %v7278 = vld [vmem:[#allocation5 + $0x188] sm:$0xff]
    %v7279 = vld [vmem:[#allocation5 + $0x190] sm:$0xff]
    %v7280 = vld [vmem:[#allocation5 + $0x198] sm:$0xff]
    %v7281 = vld [vmem:[#allocation5 + $0x1a0] sm:$0xff]
    %v7282 = vld [vmem:[#allocation5 + $0x1a8] sm:$0xff]
    %v7283 = vld [vmem:[#allocation5 + $0x1b0] sm:$0xff]
    %v7284 = vld [vmem:[#allocation5 + $0x1b8] sm:$0xff]
    %v7285 = vld [vmem:[#allocation5 + $0x1c0] sm:$0xff]
    %v7286 = vld [vmem:[#allocation5 + $0x1c8] sm:$0xff]
    %v7287 = vld [vmem:[#allocation5 + $0x1d0] sm:$0xff]
    %v7288 = vld [vmem:[#allocation5 + $0x1d8] sm:$0xff]
    %v7289 = vld [vmem:[#allocation5 + $0x1e0] sm:$0xff]
    %v7290 = vld [vmem:[#allocation5 + $0x1e8] sm:$0xff]
    %v7291 = vld [vmem:[#allocation5 + $0x1f0] sm:$0xff]
    %v7292 = vld [vmem:[#allocation5 + $0x1f8] sm:$0xff]
    %v7293 = vld [vmem:[#allocation5 + $0x200] sm:$0xff]
    %v7294 = vld [vmem:[#allocation5 + $0x208] sm:$0xff]
    %v7295 = vld [vmem:[#allocation5 + $0x210] sm:$0xff]
    %v7296 = vld [vmem:[#allocation5 + $0x218] sm:$0xff]
    %v7297 = vld [vmem:[#allocation5 + $0x220] sm:$0xff]
    %v7298 = vld [vmem:[#allocation5 + $0x228] sm:$0xff]
    %v7299 = vld [vmem:[#allocation5 + $0x230] sm:$0xff]
    %v7300 = vld [vmem:[#allocation5 + $0x238] sm:$0xff]
    %v7301 = vld [vmem:[#allocation5 + $0x240] sm:$0xff]
    %v7302 = vld [vmem:[#allocation5 + $0x248] sm:$0xff]
    %v7303 = vld [vmem:[#allocation5 + $0x250] sm:$0xff]
    %v7304 = vld [vmem:[#allocation5 + $0x258] sm:$0xff]
    %v7305 = vld [vmem:[#allocation5 + $0x260] sm:$0xff]
    %v7306 = vld [vmem:[#allocation5 + $0x268] sm:$0xff]
    %v7307 = vld [vmem:[#allocation5 + $0x270] sm:$0xff]
    %v7308 = vld [vmem:[#allocation5 + $0x278] sm:$0xff]
    %v7309 = vld [vmem:[#allocation5 + $0x280] sm:$0xff]
    %v7310 = vld [vmem:[#allocation5 + $0x288] sm:$0xff]
    %v7311 = vld [vmem:[#allocation5 + $0x290] sm:$0xff]
    %v7312 = vld [vmem:[#allocation5 + $0x298] sm:$0xff]
    %v7313 = vld [vmem:[#allocation5 + $0x2a0] sm:$0xff]
    %v7314 = vld [vmem:[#allocation5 + $0x2a8] sm:$0xff]
    %v7315 = vld [vmem:[#allocation5 + $0x2b0] sm:$0xff]
    %v7316 = vld [vmem:[#allocation5 + $0x2b8] sm:$0xff]
    %v7317 = vld [vmem:[#allocation5 + $0x2c0] sm:$0xff]
    %v7318 = vld [vmem:[#allocation5 + $0x2c8] sm:$0xff]
    %v7319 = vld [vmem:[#allocation5 + $0x2d0] sm:$0xff]
    %v7320 = vld [vmem:[#allocation5 + $0x2d8] sm:$0xff]
    %v7321 = vld [vmem:[#allocation5 + $0x2e0] sm:$0xff]
    %v7322 = vld [vmem:[#allocation5 + $0x2e8] sm:$0xff]
    %v7323 = vld [vmem:[#allocation5 + $0x2f0] sm:$0xff]
    %v7324 = vld [vmem:[#allocation5 + $0x2f8] sm:$0xff]
    %v7325 = vld [vmem:[#allocation5 + $0x300] sm:$0xff]
    %v7326 = vld [vmem:[#allocation5 + $0x308] sm:$0xff]
    %v7327 = vld [vmem:[#allocation5 + $0x310] sm:$0xff]
    %v7328 = vld [vmem:[#allocation5 + $0x318] sm:$0xff]
    %v7329 = vld [vmem:[#allocation5 + $0x320] sm:$0xff]
    %v7330 = vld [vmem:[#allocation5 + $0x328] sm:$0xff]
    %v7331 = vld [vmem:[#allocation5 + $0x330] sm:$0xff]
    %v7332 = vld [vmem:[#allocation5 + $0x338] sm:$0xff]
    %v7333 = vld [vmem:[#allocation5 + $0x340] sm:$0xff]
    %v7334 = vld [vmem:[#allocation5 + $0x348] sm:$0xff]
    %v7335 = vld [vmem:[#allocation5 + $0x350] sm:$0xff]
    %v7336 = vld [vmem:[#allocation5 + $0x358] sm:$0xff]
    %v7337 = vld [vmem:[#allocation5 + $0x360] sm:$0xff]
    %v7338 = vld [vmem:[#allocation5 + $0x368] sm:$0xff]
    %v7339 = vld [vmem:[#allocation5 + $0x370] sm:$0xff]
    %v7340 = vld [vmem:[#allocation5 + $0x378] sm:$0xff]
    %v7341 = vld [vmem:[#allocation5 + $0x380] sm:$0xff]
    %v7342 = vld [vmem:[#allocation5 + $0x388] sm:$0xff]
    %v7343 = vld [vmem:[#allocation5 + $0x390] sm:$0xff]
    %v7344 = vld [vmem:[#allocation5 + $0x398] sm:$0xff]
    %v7345 = vld [vmem:[#allocation5 + $0x3a0] sm:$0xff]
    %v7346 = vld [vmem:[#allocation5 + $0x3a8] sm:$0xff]
    %v7347 = vld [vmem:[#allocation5 + $0x3b0] sm:$0xff]
    %v7348 = vld [vmem:[#allocation5 + $0x3b8] sm:$0xff]
    %v7349 = vld [vmem:[#allocation5 + $0x3c0] sm:$0xff]
    %v7350 = vld [vmem:[#allocation5 + $0x3c8] sm:$0xff]
    %v7351 = vld [vmem:[#allocation5 + $0x3d0] sm:$0xff]
    %v7352 = vld [vmem:[#allocation5 + $0x3d8] sm:$0xff]
    %v7353 = vld [vmem:[#allocation5 + $0x3e0] sm:$0xff]
    %v7354 = vld [vmem:[#allocation5 + $0x3e8] sm:$0xff]
    %v7355 = vld [vmem:[#allocation5 + $0x3f0] sm:$0xff]
    %v7356 = vld [vmem:[#allocation5 + $0x3f8] sm:$0xff]
    %v7357 = vld [vmem:[#allocation5 + $0x400] sm:$0xff]
    %v7358 = vld [vmem:[#allocation5 + $0x408] sm:$0xff]
    %v7359 = vld [vmem:[#allocation5 + $0x410] sm:$0xff]
    %v7360 = vld [vmem:[#allocation5 + $0x418] sm:$0xff]
    %v7361 = vld [vmem:[#allocation5 + $0x420] sm:$0xff]
    %v7362 = vld [vmem:[#allocation5 + $0x428] sm:$0xff]
    %v7363 = vld [vmem:[#allocation5 + $0x430] sm:$0xff]
    %v7364 = vld [vmem:[#allocation5 + $0x438] sm:$0xff]
    %v7365 = vld [vmem:[#allocation5 + $0x440] sm:$0xff]
    %v7366 = vld [vmem:[#allocation5 + $0x448] sm:$0xff]
    %v7367 = vld [vmem:[#allocation5 + $0x450] sm:$0xff]
    %v7368 = vld [vmem:[#allocation5 + $0x458] sm:$0xff]
    %v7369 = vld [vmem:[#allocation5 + $0x460] sm:$0xff]
    %v7370 = vld [vmem:[#allocation5 + $0x468] sm:$0xff]
    %v7371 = vld [vmem:[#allocation5 + $0x470] sm:$0xff]
    %v7372 = vld [vmem:[#allocation5 + $0x478] sm:$0xff]
    %v7373 = vld [vmem:[#allocation5 + $0x480] sm:$0xff]
    %v7374 = vld [vmem:[#allocation5 + $0x488] sm:$0xff]
    %v7375 = vld [vmem:[#allocation5 + $0x490] sm:$0xff]
    %v7376 = vld [vmem:[#allocation5 + $0x498] sm:$0xff]
    %v7377 = vld [vmem:[#allocation5 + $0x4a0] sm:$0xff]
    %v7378 = vld [vmem:[#allocation5 + $0x4a8] sm:$0xff]
    %v7379 = vld [vmem:[#allocation5 + $0x4b0] sm:$0xff]
    %v7380 = vld [vmem:[#allocation5 + $0x4b8] sm:$0xff]
    %v7381 = vld [vmem:[#allocation5 + $0x4c0] sm:$0xff]
    %v7382 = vld [vmem:[#allocation5 + $0x4c8] sm:$0xff]
    %v7383 = vld [vmem:[#allocation5 + $0x4d0] sm:$0xff]
    %v7384 = vld [vmem:[#allocation5 + $0x4d8] sm:$0xff]
    %v7385 = vld [vmem:[#allocation5 + $0x4e0] sm:$0xff]
    %v7386 = vld [vmem:[#allocation5 + $0x4e8] sm:$0xff]
    %v7387 = vld [vmem:[#allocation5 + $0x4f0] sm:$0xff]
    %v7388 = vld [vmem:[#allocation5 + $0x4f8] sm:$0xff]
    %v7389 = vld [vmem:[#allocation5 + $0x500] sm:$0xff]
    %v7390 = vld [vmem:[#allocation5 + $0x508] sm:$0xff]
    %v7391 = vld [vmem:[#allocation5 + $0x510] sm:$0xff]
    %v7392 = vld [vmem:[#allocation5 + $0x518] sm:$0xff]
    %v7393 = vld [vmem:[#allocation5 + $0x520] sm:$0xff]
    %v7394 = vld [vmem:[#allocation5 + $0x528] sm:$0xff]
    %v7395 = vld [vmem:[#allocation5 + $0x530] sm:$0xff]
    %v7396 = vld [vmem:[#allocation5 + $0x538] sm:$0xff]
    %v7397 = vld [vmem:[#allocation5 + $0x540] sm:$0xff]
    %v7398 = vld [vmem:[#allocation5 + $0x548] sm:$0xff]
    %v7399 = vld [vmem:[#allocation5 + $0x550] sm:$0xff]
    %v7400 = vld [vmem:[#allocation5 + $0x558] sm:$0xff]
    %v7401 = vld [vmem:[#allocation5 + $0x560] sm:$0xff]
    %v7402 = vld [vmem:[#allocation5 + $0x568] sm:$0xff]
    %v7403 = vld [vmem:[#allocation5 + $0x570] sm:$0xff]
    %v7404 = vld [vmem:[#allocation5 + $0x578] sm:$0xff]
    %v7405 = vld [vmem:[#allocation5 + $0x580] sm:$0xff]
    %v7406 = vld [vmem:[#allocation5 + $0x588] sm:$0xff]
    %v7407 = vld [vmem:[#allocation5 + $0x590] sm:$0xff]
    %v7408 = vld [vmem:[#allocation5 + $0x598] sm:$0xff]
    %v7409 = vld [vmem:[#allocation5 + $0x5a0] sm:$0xff]
    %v7410 = vld [vmem:[#allocation5 + $0x5a8] sm:$0xff]
    %v7411 = vld [vmem:[#allocation5 + $0x5b0] sm:$0xff]
    %v7412 = vld [vmem:[#allocation5 + $0x5b8] sm:$0xff]
    %v7413 = vld [vmem:[#allocation5 + $0x5c0] sm:$0xff]
    %v7414 = vld [vmem:[#allocation5 + $0x5c8] sm:$0xff]
    %v7415 = vld [vmem:[#allocation5 + $0x5d0] sm:$0xff]
    %v7416 = vld [vmem:[#allocation5 + $0x5d8] sm:$0xff]
    %v7417 = vld [vmem:[#allocation5 + $0x5e0] sm:$0xff]
    %v7418 = vld [vmem:[#allocation5 + $0x5e8] sm:$0xff]
    %v7419 = vld [vmem:[#allocation5 + $0x5f0] sm:$0xff]
    %v7420 = vld [vmem:[#allocation5 + $0x5f8] sm:$0xff]
    %v7421 = vld [vmem:[#allocation5 + $0x600] sm:$0xff]
    %v7422 = vld [vmem:[#allocation5 + $0x608] sm:$0xff]
    %v7423 = vld [vmem:[#allocation5 + $0x610] sm:$0xff]
    %v7424 = vld [vmem:[#allocation5 + $0x618] sm:$0xff]
    %v7425 = vld [vmem:[#allocation5 + $0x620] sm:$0xff]
    %v7426 = vld [vmem:[#allocation5 + $0x628] sm:$0xff]
    %v7427 = vld [vmem:[#allocation5 + $0x630] sm:$0xff]
    %v7428 = vld [vmem:[#allocation5 + $0x638] sm:$0xff]
    %v7429 = vld [vmem:[#allocation5 + $0x640] sm:$0xff]
    %v7430 = vld [vmem:[#allocation5 + $0x648] sm:$0xff]
    %v7431 = vld [vmem:[#allocation5 + $0x650] sm:$0xff]
    %v7432 = vld [vmem:[#allocation5 + $0x658] sm:$0xff]
    %v7433 = vld [vmem:[#allocation5 + $0x660] sm:$0xff]
    %v7434 = vld [vmem:[#allocation5 + $0x668] sm:$0xff]
    %v7435 = vld [vmem:[#allocation5 + $0x670] sm:$0xff]
    %v7436 = vld [vmem:[#allocation5 + $0x678] sm:$0xff]
    %v7437 = vld [vmem:[#allocation5 + $0x680] sm:$0xff]
    %v7438 = vld [vmem:[#allocation5 + $0x688] sm:$0xff]
    %v7439 = vld [vmem:[#allocation5 + $0x690] sm:$0xff]
    %v7440 = vld [vmem:[#allocation5 + $0x698] sm:$0xff]
    %v7441 = vld [vmem:[#allocation5 + $0x6a0] sm:$0xff]
    %v7442 = vld [vmem:[#allocation5 + $0x6a8] sm:$0xff]
    %v7443 = vld [vmem:[#allocation5 + $0x6b0] sm:$0xff]
    %v7444 = vld [vmem:[#allocation5 + $0x6b8] sm:$0xff]
    %v7445 = vld [vmem:[#allocation5 + $0x6c0] sm:$0xff]
    %v7446 = vld [vmem:[#allocation5 + $0x6c8] sm:$0xff]
    %v7447 = vld [vmem:[#allocation5 + $0x6d0] sm:$0xff]
    %v7448 = vld [vmem:[#allocation5 + $0x6d8] sm:$0xff]
    %v7449 = vld [vmem:[#allocation5 + $0x6e0] sm:$0xff]
    %v7450 = vld [vmem:[#allocation5 + $0x6e8] sm:$0xff]
    %v7451 = vld [vmem:[#allocation5 + $0x6f0] sm:$0xff]
    %v7452 = vld [vmem:[#allocation5 + $0x6f8] sm:$0xff]
    %v7453 = vld [vmem:[#allocation5 + $0x700] sm:$0xff]
    %v7454 = vld [vmem:[#allocation5 + $0x708] sm:$0xff]
    %v7455 = vld [vmem:[#allocation5 + $0x710] sm:$0xff]
    %v7456 = vld [vmem:[#allocation5 + $0x718] sm:$0xff]
    %v7457 = vld [vmem:[#allocation5 + $0x720] sm:$0xff]
    %v7458 = vld [vmem:[#allocation5 + $0x728] sm:$0xff]
    %v7459 = vld [vmem:[#allocation5 + $0x730] sm:$0xff]
    %v7460 = vld [vmem:[#allocation5 + $0x738] sm:$0xff]
    %v7461 = vld [vmem:[#allocation5 + $0x740] sm:$0xff]
    %v7462 = vld [vmem:[#allocation5 + $0x748] sm:$0xff]
    %v7463 = vld [vmem:[#allocation5 + $0x750] sm:$0xff]
    %v7464 = vld [vmem:[#allocation5 + $0x758] sm:$0xff]
    %v7465 = vld [vmem:[#allocation5 + $0x760] sm:$0xff]
    %v7466 = vld [vmem:[#allocation5 + $0x768] sm:$0xff]
    %v7467 = vld [vmem:[#allocation5 + $0x770] sm:$0xff]
    %v7468 = vld [vmem:[#allocation5 + $0x778] sm:$0xff]
    %v7470 = vlaneseq
    %v7471 = vshrl.u32 %v7470, 7
    %v7472 = vsub.s32 0, %v7471
    %v7473 = vrot.slane %v7224, %v7472
    %v7474 = vlaneseq
    %v7475 = vshrl.u32 %v7474, 7
    %v7476 = vsub.s32 1, %v7475
    %v7477 = vrot.slane %v7224, %v7476
    %v7478 = vlaneseq
    %v7479 = vshrl.u32 %v7478, 7
    %v7480 = vsub.s32 2, %v7479
    %v7481 = vrot.slane %v7224, %v7480
    %7485 = vmatprep.subr.mxu0 %v7230
    %7486 = vmatpush1.msra.mxu0 %v7229
    %7487 = vmatprep.subr.mxu0 %v7235
    %7488 = vmatpush1.msra.mxu0 %v7234
    %7489 = vmatprep.subr.mxu0 %v7240
    %7490 = vmatpush1.msra.mxu0 %v7239
    %7491 = vmatprep.subr.mxu0 %v7245
    %7492 = vmatpush1.msra.mxu0 %v7244
    %7493 = vmatprep.subr.mxu0 %v7250
    %7494 = vmatpush1.msra.mxu0 %v7249
    %7495 = vmatprep.subr.mxu0 %v7255
    %7496 = vmatpush1.msra.mxu0 %v7254
    %7497 = vmatprep.subr.mxu0 %v7260
    %7498 = vmatpush1.msra.mxu0 %v7259
    %7499 = vmatprep.subr.mxu0 %v7265
    %7500 = vmatpush1.msra.mxu0 %v7264
    %7501 = vmatprep.subr.mxu0 %v7270
    %7502 = vmatpush1.msra.mxu0 %v7269
    %7503 = vmatprep.subr.mxu0 %v7275
    %7504 = vmatpush1.msra.mxu0 %v7274
    %7505 = vmatprep.subr.mxu0 %v7280
    %7506 = vmatpush1.msra.mxu0 %v7279
    %7507 = vmatprep.subr.mxu0 %v7285
    %7508 = vmatpush1.msra.mxu0 %v7284
    %7509 = vmatprep.subr.mxu0 %v7290
    %7510 = vmatpush1.msra.mxu0 %v7289
    %7511 = vmatprep.subr.mxu0 %v7295
    %7512 = vmatpush1.msra.mxu0 %v7294
    %7513 = vmatprep.subr.mxu0 %v7300
    %7514 = vmatpush1.msra.mxu0 %v7299
    %7515 = vmatprep.subr.mxu0 %v7305
    %7516 = vmatpush1.msra.mxu0 %v7304
    %7517 = vmatprep.subr.mxu0 %v7310
    %7518 = vmatpush1.msra.mxu0 %v7309
    %7519 = vmatprep.subr.mxu0 %v7315
    %7520 = vmatpush1.msra.mxu0 %v7314
    %7521 = vmatprep.subr.mxu0 %v7320
    %7522 = vmatpush1.msra.mxu0 %v7319
    %7523 = vmatprep.subr.mxu0 %v7325
    %7524 = vmatpush1.msra.mxu0 %v7324
    %7525 = vmatprep.subr.mxu0 %v7330
    %7526 = vmatpush1.msra.mxu0 %v7329
    %7527 = vmatprep.subr.mxu0 %v7335
    %7528 = vmatpush1.msra.mxu0 %v7334
    %7529 = vmatprep.subr.mxu0 %v7340
    %7530 = vmatpush1.msra.mxu0 %v7339
    %7531 = vmatprep.subr.mxu0 %v7345
    %7532 = vmatpush1.msra.mxu0 %v7344
    %7533 = vmatprep.subr.mxu0 %v7350
    %7534 = vmatpush1.msra.mxu0 %v7349
    %7535 = vmatprep.subr.mxu0 %v7355
    %7536 = vmatpush1.msra.mxu0 %v7354
    %7537 = vmatprep.subr.mxu0 %v7360
    %7538 = vmatpush1.msra.mxu0 %v7359
    %7539 = vmatprep.subr.mxu0 %v7365
    %7540 = vmatpush1.msra.mxu0 %v7364
    %7541 = vmatprep.subr.mxu0 %v7370
    %7542 = vmatpush1.msra.mxu0 %v7369
    %7543 = vmatprep.subr.mxu0 %v7375
    %7544 = vmatpush1.msra.mxu0 %v7374
    %7545 = vmatprep.subr.mxu0 %v7380
    %7546 = vmatpush1.msra.mxu0 %v7379
    %7547 = vmatprep.subr.mxu0 %v7385
    %7548 = vmatpush1.msra.mxu0 %v7384
    %7549 = vmatprep.mubr.f32.mxu0 %v7477
    %7550 = vmatmul.mubr.f32.gmra.mrb[0].mxu0 %v7473
    %v7551 = vpop.f32.mrb[0].mxu0
    %v7552 = vadd.f32 0.0, %v7551
    %v7553 = vpop.f32.mrb[0].mxu0
    %v7554 = vadd.f32 0.0, %v7553
    %7555 = vdwg.mxu0
    %7556 = vmatprep.subr.mxu0 %v7390
    %7557 = vmatpush1.msra.mxu0 %v7389
    %7558 = vmatprep.subr.mxu0 %v7395
    %7559 = vmatpush1.msra.mxu0 %v7394
    %7560 = vmatprep.subr.mxu0 %v7400
    %7561 = vmatpush1.msra.mxu0 %v7399
    %7562 = vmatprep.subr.mxu0 %v7405
    %7563 = vmatpush1.msra.mxu0 %v7404
    %7564 = vmatprep.subr.mxu0 %v7410
    %7565 = vmatpush1.msra.mxu0 %v7409
    %7566 = vmatprep.subr.mxu0 %v7415
    %7567 = vmatpush1.msra.mxu0 %v7414
    %7568 = vmatprep.subr.mxu0 %v7420
    %7569 = vmatpush1.msra.mxu0 %v7419
    %7570 = vmatprep.subr.mxu0 %v7425
    %7571 = vmatpush1.msra.mxu0 %v7424
    %7572 = vmatprep.subr.mxu0 %v7430
    %7573 = vmatpush1.msra.mxu0 %v7429
    %7574 = vmatprep.subr.mxu0 %v7435
    %7575 = vmatpush1.msra.mxu0 %v7434
    %7576 = vmatprep.subr.mxu0 %v7440
    %7577 = vmatpush1.msra.mxu0 %v7439
    %7578 = vmatprep.subr.mxu0 %v7445
    %7579 = vmatpush1.msra.mxu0 %v7444
    %7580 = vmatprep.subr.mxu0 %v7450
    %7581 = vmatpush1.msra.mxu0 %v7449
    %7582 = vmatprep.subr.mxu0 %v7455
    %7583 = vmatpush1.msra.mxu0 %v7454
    %7584 = vmatprep.subr.mxu0 %v7460
    %7585 = vmatpush1.msra.mxu0 %v7459
    %7586 = vmatprep.subr.mxu0 %v7465
    %7587 = vmatpush1.msra.mxu0 %v7464
    %7588 = vmatprep.subr.mxu0 0.0
    %7589 = vmatpush1.msra.mxu0 0.0
    %7590 = vmatprep.subr.mxu0 0.0
    %7591 = vmatpush1.msra.mxu0 0.0
    %7592 = vmatprep.subr.mxu0 0.0
    %7593 = vmatpush1.msra.mxu0 0.0
    %7594 = vmatprep.subr.mxu0 0.0
    %7595 = vmatpush1.msra.mxu0 0.0
    %7596 = vmatprep.subr.mxu0 0.0
    %7597 = vmatpush1.msra.mxu0 0.0
    %7598 = vmatprep.subr.mxu0 0.0
    %7599 = vmatpush1.msra.mxu0 0.0
    %7600 = vmatprep.subr.mxu0 0.0
    %7601 = vmatpush1.msra.mxu0 0.0
    %7602 = vmatprep.subr.mxu0 0.0
    %7603 = vmatpush1.msra.mxu0 0.0
    %7604 = vmatprep.subr.mxu0 0.0
    %7605 = vmatpush1.msra.mxu0 0.0
    %7606 = vmatprep.subr.mxu0 0.0
    %7607 = vmatpush1.msra.mxu0 0.0
    %7608 = vmatprep.subr.mxu0 0.0
    %7609 = vmatpush1.msra.mxu0 0.0
    %7610 = vmatprep.subr.mxu0 0.0
    %7611 = vmatpush1.msra.mxu0 0.0
    %7612 = vmatprep.subr.mxu0 0.0
    %7613 = vmatpush1.msra.mxu0 0.0
    %7614 = vmatprep.subr.mxu0 0.0
    %7615 = vmatpush1.msra.mxu0 0.0
    %7616 = vmatprep.subr.mxu0 0.0
    %7617 = vmatpush1.msra.mxu0 0.0
    %7618 = vmatprep.subr.mxu0 0.0
    %7619 = vmatpush1.msra.mxu0 0.0
    %7620 = vmatprep.mubr.f32.mxu0 0.0
    %7621 = vmatmul.mubr.f32.gmra.mrb[0].mxu0 %v7481
    %v7622 = vpop.f32.mrb[0].mxu0
    %v7623 = vadd.f32 %v7552, %v7622
    %v7624 = vpop.f32.mrb[0].mxu0
    %v7625 = vadd.f32 %v7554, %v7624
    %7626 = vdwg.mxu0
    %7627 = vmatprep.subr.mxu0 %v7232
    %7628 = vmatpush1.msra.mxu0 %v7231
    %7629 = vmatprep.subr.mxu0 %v7237
    %7630 = vmatpush1.msra.mxu0 %v7236
    %7631 = vmatprep.subr.mxu0 %v7242
    %7632 = vmatpush1.msra.mxu0 %v7241
    %7633 = vmatprep.subr.mxu0 %v7247
    %7634 = vmatpush1.msra.mxu0 %v7246
    %7635 = vmatprep.subr.mxu0 %v7252
    %7636 = vmatpush1.msra.mxu0 %v7251
    %7637 = vmatprep.subr.mxu0 %v7257
    %7638 = vmatpush1.msra.mxu0 %v7256
    %7639 = vmatprep.subr.mxu0 %v7262
    %7640 = vmatpush1.msra.mxu0 %v7261
    %7641 = vmatprep.subr.mxu0 %v7267
    %7642 = vmatpush1.msra.mxu0 %v7266
    %7643 = vmatprep.subr.mxu0 %v7272
    %7644 = vmatpush1.msra.mxu0 %v7271
    %7645 = vmatprep.subr.mxu0 %v7277
    %7646 = vmatpush1.msra.mxu0 %v7276
    %7647 = vmatprep.subr.mxu0 %v7282
    %7648 = vmatpush1.msra.mxu0 %v7281
    %7649 = vmatprep.subr.mxu0 %v7287
    %7650 = vmatpush1.msra.mxu0 %v7286
    %7651 = vmatprep.subr.mxu0 %v7292
    %7652 = vmatpush1.msra.mxu0 %v7291
    %7653 = vmatprep.subr.mxu0 %v7297
    %7654 = vmatpush1.msra.mxu0 %v7296
    %7655 = vmatprep.subr.mxu0 %v7302
    %7656 = vmatpush1.msra.mxu0 %v7301
    %7657 = vmatprep.subr.mxu0 %v7307
    %7658 = vmatpush1.msra.mxu0 %v7306
    %7659 = vmatprep.subr.mxu0 %v7312
    %7660 = vmatpush1.msra.mxu0 %v7311
    %7661 = vmatprep.subr.mxu0 %v7317
    %7662 = vmatpush1.msra.mxu0 %v7316
    %7663 = vmatprep.subr.mxu0 %v7322
    %7664 = vmatpush1.msra.mxu0 %v7321
    %7665 = vmatprep.subr.mxu0 %v7327
    %7666 = vmatpush1.msra.mxu0 %v7326
    %7667 = vmatprep.subr.mxu0 %v7332
    %7668 = vmatpush1.msra.mxu0 %v7331
    %7669 = vmatprep.subr.mxu0 %v7337
    %7670 = vmatpush1.msra.mxu0 %v7336
    %7671 = vmatprep.subr.mxu0 %v7342
    %7672 = vmatpush1.msra.mxu0 %v7341
    %7673 = vmatprep.subr.mxu0 %v7347
    %7674 = vmatpush1.msra.mxu0 %v7346
    %7675 = vmatprep.subr.mxu0 %v7352
    %7676 = vmatpush1.msra.mxu0 %v7351
    %7677 = vmatprep.subr.mxu0 %v7357
    %7678 = vmatpush1.msra.mxu0 %v7356
    %7679 = vmatprep.subr.mxu0 %v7362
    %7680 = vmatpush1.msra.mxu0 %v7361
    %7681 = vmatprep.subr.mxu0 %v7367
    %7682 = vmatpush1.msra.mxu0 %v7366
    %7683 = vmatprep.subr.mxu0 %v7372
    %7684 = vmatpush1.msra.mxu0 %v7371
    %7685 = vmatprep.subr.mxu0 %v7377
    %7686 = vmatpush1.msra.mxu0 %v7376
    %7687 = vmatprep.subr.mxu0 %v7382
    %7688 = vmatpush1.msra.mxu0 %v7381
    %7689 = vmatprep.subr.mxu0 %v7387
    %7690 = vmatpush1.msra.mxu0 %v7386
    %7691 = vmatprep.mubr.f32.mxu0 %v7477
    %7692 = vmatmul.mubr.f32.gmra.mrb[0].mxu0 %v7473
    %v7693 = vpop.f32.mrb[0].mxu0
    %v7694 = vadd.f32 0.0, %v7693
    %v7695 = vpop.f32.mrb[0].mxu0
    %v7696 = vadd.f32 0.0, %v7695
    %7697 = vdwg.mxu0
    %7698 = vmatprep.subr.mxu0 %v7392
    %7699 = vmatpush1.msra.mxu0 %v7391
    %7700 = vmatprep.subr.mxu0 %v7397
    %7701 = vmatpush1.msra.mxu0 %v7396
    %7702 = vmatprep.subr.mxu0 %v7402
    %7703 = vmatpush1.msra.mxu0 %v7401
    %7704 = vmatprep.subr.mxu0 %v7407
    %7705 = vmatpush1.msra.mxu0 %v7406
    %7706 = vmatprep.subr.mxu0 %v7412
    %7707 = vmatpush1.msra.mxu0 %v7411
    %7708 = vmatprep.subr.mxu0 %v7417
    %7709 = vmatpush1.msra.mxu0 %v7416
    %7710 = vmatprep.subr.mxu0 %v7422
    %7711 = vmatpush1.msra.mxu0 %v7421
    %7712 = vmatprep.subr.mxu0 %v7427
    %7713 = vmatpush1.msra.mxu0 %v7426
    %7714 = vmatprep.subr.mxu0 %v7432
    %7715 = vmatpush1.msra.mxu0 %v7431
    %7716 = vmatprep.subr.mxu0 %v7437
    %7717 = vmatpush1.msra.mxu0 %v7436
    %7718 = vmatprep.subr.mxu0 %v7442
    %7719 = vmatpush1.msra.mxu0 %v7441
    %7720 = vmatprep.subr.mxu0 %v7447
    %7721 = vmatpush1.msra.mxu0 %v7446
    %7722 = vmatprep.subr.mxu0 %v7452
    %7723 = vmatpush1.msra.mxu0 %v7451
    %7724 = vmatprep.subr.mxu0 %v7457
    %7725 = vmatpush1.msra.mxu0 %v7456
    %7726 = vmatprep.subr.mxu0 %v7462
    %7727 = vmatpush1.msra.mxu0 %v7461
    %7728 = vmatprep.subr.mxu0 %v7467
    %7729 = vmatpush1.msra.mxu0 %v7466
    %7730 = vmatprep.subr.mxu0 0.0
    %7731 = vmatpush1.msra.mxu0 0.0
    %7732 = vmatprep.subr.mxu0 0.0
    %7733 = vmatpush1.msra.mxu0 0.0
    %7734 = vmatprep.subr.mxu0 0.0
    %7735 = vmatpush1.msra.mxu0 0.0
    %7736 = vmatprep.subr.mxu0 0.0
    %7737 = vmatpush1.msra.mxu0 0.0
    %7738 = vmatprep.subr.mxu0 0.0
    %7739 = vmatpush1.msra.mxu0 0.0
    %7740 = vmatprep.subr.mxu0 0.0
    %7741 = vmatpush1.msra.mxu0 0.0
    %7742 = vmatprep.subr.mxu0 0.0
    %7743 = vmatpush1.msra.mxu0 0.0
    %7744 = vmatprep.subr.mxu0 0.0
    %7745 = vmatpush1.msra.mxu0 0.0
    %7746 = vmatprep.subr.mxu0 0.0
    %7747 = vmatpush1.msra.mxu0 0.0
    %7748 = vmatprep.subr.mxu0 0.0
    %7749 = vmatpush1.msra.mxu0 0.0
    %7750 = vmatprep.subr.mxu0 0.0
    %7751 = vmatpush1.msra.mxu0 0.0
    %7752 = vmatprep.subr.mxu0 0.0
    %7753 = vmatpush1.msra.mxu0 0.0
    %7754 = vmatprep.subr.mxu0 0.0
    %7755 = vmatpush1.msra.mxu0 0.0
    %7756 = vmatprep.subr.mxu0 0.0
    %7757 = vmatpush1.msra.mxu0 0.0
    %7758 = vmatprep.subr.mxu0 0.0
    %7759 = vmatpush1.msra.mxu0 0.0
    %7760 = vmatprep.subr.mxu0 0.0
    %7761 = vmatpush1.msra.mxu0 0.0
    %7762 = vmatprep.mubr.f32.mxu0 0.0
    %7763 = vmatmul.mubr.f32.gmra.mrb[0].mxu0 %v7481
    %v7764 = vpop.f32.mrb[0].mxu0
    %v7765 = vadd.f32 %v7694, %v7764
    %v7766 = vpop.f32.mrb[0].mxu0
    %v7767 = vadd.f32 %v7696, %v7766
    %7768 = vdwg.mxu0
    %7769 = vmatprep.subr.mxu0 0.0
    %7770 = vmatpush1.msra.mxu0 %v7233
    %7771 = vmatprep.subr.mxu0 0.0
    %7772 = vmatpush1.msra.mxu0 %v7238
    %7773 = vmatprep.subr.mxu0 0.0
    %7774 = vmatpush1.msra.mxu0 %v7243
    %7775 = vmatprep.subr.mxu0 0.0
    %7776 = vmatpush1.msra.mxu0 %v7248
    %7777 = vmatprep.subr.mxu0 0.0
    %7778 = vmatpush1.msra.mxu0 %v7253
    %7779 = vmatprep.subr.mxu0 0.0
    %7780 = vmatpush1.msra.mxu0 %v7258
    %7781 = vmatprep.subr.mxu0 0.0
    %7782 = vmatpush1.msra.mxu0 %v7263
    %7783 = vmatprep.subr.mxu0 0.0
    %7784 = vmatpush1.msra.mxu0 %v7268
    %7785 = vmatprep.subr.mxu0 0.0
    %7786 = vmatpush1.msra.mxu0 %v7273
    %7787 = vmatprep.subr.mxu0 0.0
    %7788 = vmatpush1.msra.mxu0 %v7278
    %7789 = vmatprep.subr.mxu0 0.0
    %7790 = vmatpush1.msra.mxu0 %v7283
    %7791 = vmatprep.subr.mxu0 0.0
    %7792 = vmatpush1.msra.mxu0 %v7288
    %7793 = vmatprep.subr.mxu0 0.0
    %7794 = vmatpush1.msra.mxu0 %v7293
    %7795 = vmatprep.subr.mxu0 0.0
    %7796 = vmatpush1.msra.mxu0 %v7298
    %7797 = vmatprep.subr.mxu0 0.0
    %7798 = vmatpush1.msra.mxu0 %v7303
    %7799 = vmatprep.subr.mxu0 0.0
    %7800 = vmatpush1.msra.mxu0 %v7308
    %7801 = vmatprep.subr.mxu0 0.0
    %7802 = vmatpush1.msra.mxu0 %v7313
    %7803 = vmatprep.subr.mxu0 0.0
    %7804 = vmatpush1.msra.mxu0 %v7318
    %7805 = vmatprep.subr.mxu0 0.0
    %7806 = vmatpush1.msra.mxu0 %v7323
    %7807 = vmatprep.subr.mxu0 0.0
    %7808 = vmatpush1.msra.mxu0 %v7328
    %7809 = vmatprep.subr.mxu0 0.0
    %7810 = vmatpush1.msra.mxu0 %v7333
    %7811 = vmatprep.subr.mxu0 0.0
    %7812 = vmatpush1.msra.mxu0 %v7338
    %7813 = vmatprep.subr.mxu0 0.0
    %7814 = vmatpush1.msra.mxu0 %v7343
    %7815 = vmatprep.subr.mxu0 0.0
    %7816 = vmatpush1.msra.mxu0 %v7348
    %7817 = vmatprep.subr.mxu0 0.0
    %7818 = vmatpush1.msra.mxu0 %v7353
    %7819 = vmatprep.subr.mxu0 0.0
    %7820 = vmatpush1.msra.mxu0 %v7358
    %7821 = vmatprep.subr.mxu0 0.0
    %7822 = vmatpush1.msra.mxu0 %v7363
    %7823 = vmatprep.subr.mxu0 0.0
    %7824 = vmatpush1.msra.mxu0 %v7368
    %7825 = vmatprep.subr.mxu0 0.0
    %7826 = vmatpush1.msra.mxu0 %v7373
    %7827 = vmatprep.subr.mxu0 0.0
    %7828 = vmatpush1.msra.mxu0 %v7378
    %7829 = vmatprep.subr.mxu0 0.0
    %7830 = vmatpush1.msra.mxu0 %v7383
    %7831 = vmatprep.subr.mxu0 0.0
    %7832 = vmatpush1.msra.mxu0 %v7388
    %7833 = vmatprep.mubr.f32.mxu0 %v7477
    %7834 = vmatmul.mubr.f32.gmra.mrb[0].mxu0 %v7473
    %v7835 = vpop.f32.mrb[0].mxu0
    %v7836 = vadd.f32 0.0, %v7835
    %v7837 = vpop.f32.mrb[0].mxu0
    %7838 = vdwg.mxu0
    %7839 = vmatprep.subr.mxu0 0.0
    %7840 = vmatpush1.msra.mxu0 %v7393
    %7841 = vmatprep.subr.mxu0 0.0
    %7842 = vmatpush1.msra.mxu0 %v7398
    %7843 = vmatprep.subr.mxu0 0.0
    %7844 = vmatpush1.msra.mxu0 %v7403
    %7845 = vmatprep.subr.mxu0 0.0
    %7846 = vmatpush1.msra.mxu0 %v7408
    %7847 = vmatprep.subr.mxu0 0.0
    %7848 = vmatpush1.msra.mxu0 %v7413
    %7849 = vmatprep.subr.mxu0 0.0
    %7850 = vmatpush1.msra.mxu0 %v7418
    %7851 = vmatprep.subr.mxu0 0.0
    %7852 = vmatpush1.msra.mxu0 %v7423
    %7853 = vmatprep.subr.mxu0 0.0
    %7854 = vmatpush1.msra.mxu0 %v7428
    %7855 = vmatprep.subr.mxu0 0.0
    %7856 = vmatpush1.msra.mxu0 %v7433
    %7857 = vmatprep.subr.mxu0 0.0
    %7858 = vmatpush1.msra.mxu0 %v7438
    %7859 = vmatprep.subr.mxu0 0.0
    %7860 = vmatpush1.msra.mxu0 %v7443
    %7861 = vmatprep.subr.mxu0 0.0
    %7862 = vmatpush1.msra.mxu0 %v7448
    %7863 = vmatprep.subr.mxu0 0.0
    %7864 = vmatpush1.msra.mxu0 %v7453
    %7865 = vmatprep.subr.mxu0 0.0
    %7866 = vmatpush1.msra.mxu0 %v7458
    %7867 = vmatprep.subr.mxu0 0.0
    %7868 = vmatpush1.msra.mxu0 %v7463
    %7869 = vmatprep.subr.mxu0 0.0
    %7870 = vmatpush1.msra.mxu0 %v7468
    %7871 = vmatprep.subr.mxu0 0.0
    %7872 = vmatpush1.msra.mxu0 0.0
    %7873 = vmatprep.subr.mxu0 0.0
    %7874 = vmatpush1.msra.mxu0 0.0
    %7875 = vmatprep.subr.mxu0 0.0
    %7876 = vmatpush1.msra.mxu0 0.0
    %7877 = vmatprep.subr.mxu0 0.0
    %7878 = vmatpush1.msra.mxu0 0.0
    %7879 = vmatprep.subr.mxu0 0.0
    %7880 = vmatpush1.msra.mxu0 0.0
    %7881 = vmatprep.subr.mxu0 0.0
    %7882 = vmatpush1.msra.mxu0 0.0
    %7883 = vmatprep.subr.mxu0 0.0
    %7884 = vmatpush1.msra.mxu0 0.0
    %7885 = vmatprep.subr.mxu0 0.0
    %7886 = vmatpush1.msra.mxu0 0.0
    %7887 = vmatprep.subr.mxu0 0.0
    %7888 = vmatpush1.msra.mxu0 0.0
    %7889 = vmatprep.subr.mxu0 0.0
    %7890 = vmatpush1.msra.mxu0 0.0
    %7891 = vmatprep.subr.mxu0 0.0
    %7892 = vmatpush1.msra.mxu0 0.0
    %7893 = vmatprep.subr.mxu0 0.0
    %7894 = vmatpush1.msra.mxu0 0.0
    %7895 = vmatprep.subr.mxu0 0.0
    %7896 = vmatpush1.msra.mxu0 0.0
    %7897 = vmatprep.subr.mxu0 0.0
    %7898 = vmatpush1.msra.mxu0 0.0
    %7899 = vmatprep.subr.mxu0 0.0
    %7900 = vmatpush1.msra.mxu0 0.0
    %7901 = vmatprep.subr.mxu0 0.0
    %7902 = vmatpush1.msra.mxu0 0.0
    %7903 = vmatprep.mubr.f32.mxu0 0.0
    %7904 = vmatmul.mubr.f32.gmra.mrb[0].mxu0 %v7481
    %v7905 = vpop.f32.mrb[0].mxu0
    %v7906 = vadd.f32 %v7836, %v7905
    %v7907 = vpop.f32.mrb[0].mxu0
    %7908 = vdwg.mxu0
    %v7914 = vcombine.low %v7623, %v7625
    %v7915 = vcombine.low %v7765, %v7767
    %v7917 = vunpack.c.l.s4 1966171168
    %v7918 = vunpack.c.0.s8 %v7917
    %v7919 = vlaneseq
    %v7920 = vshrl.u32 %v7919, 7
    %v7921 = vsub.s32 %v7918, %v7920
    %v7922 = vrot.slane %v7914, %v7921
    %v7924 = vunpack.c.l.s4 1966171168
    %v7925 = vunpack.c.0.s8 %v7924
    %v7926 = vlaneseq
    %v7927 = vshrl.u32 %v7926, 7
    %v7928 = vsub.s32 %v7925, %v7927
    %v7929 = vrot.slane %v7915, %v7928
    %v7931 = vunpack.c.l.s4 1966171168
    %v7932 = vunpack.c.0.s8 %v7931
    %v7933 = vlaneseq
    %v7934 = vshrl.u32 %v7933, 7
    %v7935 = vsub.s32 %v7932, %v7934
    %v7936 = vrot.slane %v7906, %v7935
    %v7937 = vcombine.low %v7922, %v7929
    %v7939 = vunpack.c.l.s4 1966171168
    %v7940 = vunpack.c.0.s8 %v7939
    %v7941 = vlaneseq
    %v7942 = vshrl.u32 %v7941, 7
    %v7943 = vsub.s32 %v7940, %v7942
    %v7944 = vrot.slane %v7937, %v7943
    %v7946 = vunpack.c.l.s4 1966171168
    %v7947 = vunpack.c.0.s8 %v7946
    %v7948 = vlaneseq
    %v7949 = vshrl.u32 %v7948, 7
    %v7950 = vsub.s32 %v7947, %v7949
    %v7951 = vrot.slane %v7936, %v7950
    %v7952 = vcombine.low %v7944, %v7951
    %v7954 = vadd.f32 %v7228, %v7952
    %v7955 = vld [vmem:[#allocation7] sm:$0xff]
    %v7956 = vld [vmem:[#allocation7 + $0x8] sm:$0xff]
    %v7957 = vld [vmem:[#allocation7 + $0x10] sm:$0xff]
    %v7958 = vld [vmem:[#allocation7 + $0x18] sm:$0xff]
    %v7959 = vld [vmem:[#allocation7 + $0x20] sm:$0xff]
    %v7960 = vld [vmem:[#allocation7 + $0x28] sm:$0xff]
    %v7961 = vld [vmem:[#allocation7 + $0x30] sm:$0xff]
    %v7962 = vld [vmem:[#allocation7 + $0x38] sm:$0xff]
    %v7963 = vld [vmem:[#allocation7 + $0x40] sm:$0xff]
    %v7964 = vld [vmem:[#allocation7 + $0x48] sm:$0xff]
    %v7965 = vld [vmem:[#allocation7 + $0x50] sm:$0xff]
    %v7966 = vld [vmem:[#allocation7 + $0x58] sm:$0xff]
    %v7967 = vld [vmem:[#allocation7 + $0x60] sm:$0xff]
    %v7968 = vld [vmem:[#allocation7 + $0x68] sm:$0xff]
    %v7969 = vld [vmem:[#allocation7 + $0x70] sm:$0xff]
    %v7970 = vld [vmem:[#allocation7 + $0x78] sm:$0xff]
    %v7971 = vld [vmem:[#allocation7 + $0x80] sm:$0xff]
    %v7972 = vld [vmem:[#allocation7 + $0x88] sm:$0xff]
    %v7973 = vld [vmem:[#allocation7 + $0x90] sm:$0xff]
    %v7974 = vld [vmem:[#allocation7 + $0x98] sm:$0xff]
    %v7975 = vld [vmem:[#allocation7 + $0xa0] sm:$0xff]
    %v7976 = vld [vmem:[#allocation7 + $0xa8] sm:$0xff]
    %v7977 = vld [vmem:[#allocation7 + $0xb0] sm:$0xff]
    %v7978 = vld [vmem:[#allocation7 + $0xb8] sm:$0xff]
    %v7979 = vld [vmem:[#allocation7 + $0xc0] sm:$0xff]
    %v7980 = vld [vmem:[#allocation7 + $0xc8] sm:$0xff]
    %v7981 = vld [vmem:[#allocation7 + $0xd0] sm:$0xff]
    %v7982 = vld [vmem:[#allocation7 + $0xd8] sm:$0xff]
    %v7983 = vld [vmem:[#allocation7 + $0xe0] sm:$0xff]
    %v7984 = vld [vmem:[#allocation7 + $0xe8] sm:$0xff]
    %v7985 = vld [vmem:[#allocation7 + $0xf0] sm:$0xff]
    %v7986 = vld [vmem:[#allocation7 + $0xf8] sm:$0xff]
    %v7987 = vld [vmem:[#allocation7 + $0x100] sm:$0xff]
    %v7988 = vld [vmem:[#allocation7 + $0x108] sm:$0xff]
    %v7989 = vld [vmem:[#allocation7 + $0x110] sm:$0xff]
    %v7990 = vld [vmem:[#allocation7 + $0x118] sm:$0xff]
    %v7991 = vld [vmem:[#allocation7 + $0x120] sm:$0xff]
    %v7992 = vld [vmem:[#allocation7 + $0x128] sm:$0xff]
    %v7993 = vld [vmem:[#allocation7 + $0x130] sm:$0xff]
    %v7994 = vld [vmem:[#allocation7 + $0x138] sm:$0xff]
    %v7995 = vld [vmem:[#allocation7 + $0x140] sm:$0xff]
    %v7996 = vld [vmem:[#allocation7 + $0x148] sm:$0xff]
    %v7997 = vld [vmem:[#allocation7 + $0x150] sm:$0xff]
    %v7998 = vld [vmem:[#allocation7 + $0x158] sm:$0xff]
    %v7999 = vld [vmem:[#allocation7 + $0x160] sm:$0xff]
    %v8000 = vld [vmem:[#allocation7 + $0x168] sm:$0xff]
    %v8001 = vld [vmem:[#allocation7 + $0x170] sm:$0xff]
    %v8002 = vld [vmem:[#allocation7 + $0x178] sm:$0xff]
    %v8003 = vld [vmem:[#allocation7 + $0x180] sm:$0xff]
    %v8004 = vld [vmem:[#allocation7 + $0x188] sm:$0xff]
    %v8005 = vld [vmem:[#allocation7 + $0x190] sm:$0xff]
    %v8006 = vld [vmem:[#allocation7 + $0x198] sm:$0xff]
    %v8007 = vld [vmem:[#allocation7 + $0x1a0] sm:$0xff]
    %v8008 = vld [vmem:[#allocation7 + $0x1a8] sm:$0xff]
    %v8009 = vld [vmem:[#allocation7 + $0x1b0] sm:$0xff]
    %v8010 = vld [vmem:[#allocation7 + $0x1b8] sm:$0xff]
    %v8011 = vld [vmem:[#allocation7 + $0x1c0] sm:$0xff]
    %v8012 = vld [vmem:[#allocation7 + $0x1c8] sm:$0xff]
    %v8013 = vld [vmem:[#allocation7 + $0x1d0] sm:$0xff]
    %v8014 = vld [vmem:[#allocation7 + $0x1d8] sm:$0xff]
    %v8015 = vld [vmem:[#allocation7 + $0x1e0] sm:$0xff]
    %v8016 = vld [vmem:[#allocation7 + $0x1e8] sm:$0xff]
    %v8017 = vld [vmem:[#allocation7 + $0x1f0] sm:$0xff]
    %v8018 = vld [vmem:[#allocation7 + $0x1f8] sm:$0xff]
    %v8019 = vld [vmem:[#allocation7 + $0x200] sm:$0xff]
    %v8020 = vld [vmem:[#allocation7 + $0x208] sm:$0xff]
    %v8021 = vld [vmem:[#allocation7 + $0x210] sm:$0xff]
    %v8022 = vld [vmem:[#allocation7 + $0x218] sm:$0xff]
    %v8023 = vld [vmem:[#allocation7 + $0x220] sm:$0xff]
    %v8024 = vld [vmem:[#allocation7 + $0x228] sm:$0xff]
    %v8025 = vld [vmem:[#allocation7 + $0x230] sm:$0xff]
    %v8026 = vld [vmem:[#allocation7 + $0x238] sm:$0xff]
    %v8027 = vld [vmem:[#allocation7 + $0x240] sm:$0xff]
    %v8028 = vld [vmem:[#allocation7 + $0x248] sm:$0xff]
    %v8029 = vld [vmem:[#allocation7 + $0x250] sm:$0xff]
    %v8030 = vld [vmem:[#allocation7 + $0x258] sm:$0xff]
    %v8031 = vld [vmem:[#allocation7 + $0x260] sm:$0xff]
    %v8032 = vld [vmem:[#allocation7 + $0x268] sm:$0xff]
    %v8033 = vld [vmem:[#allocation7 + $0x270] sm:$0xff]
    %v8034 = vld [vmem:[#allocation7 + $0x278] sm:$0xff]
    %v8035 = vld [vmem:[#allocation7 + $0x280] sm:$0xff]
    %v8036 = vld [vmem:[#allocation7 + $0x288] sm:$0xff]
    %v8037 = vld [vmem:[#allocation7 + $0x290] sm:$0xff]
    %v8038 = vld [vmem:[#allocation7 + $0x298] sm:$0xff]
    %v8039 = vld [vmem:[#allocation7 + $0x2a0] sm:$0xff]
    %v8040 = vld [vmem:[#allocation7 + $0x2a8] sm:$0xff]
    %v8041 = vld [vmem:[#allocation7 + $0x2b0] sm:$0xff]
    %v8042 = vld [vmem:[#allocation7 + $0x2b8] sm:$0xff]
    %v8043 = vld [vmem:[#allocation7 + $0x2c0] sm:$0xff]
    %v8044 = vld [vmem:[#allocation7 + $0x2c8] sm:$0xff]
    %v8045 = vld [vmem:[#allocation7 + $0x2d0] sm:$0xff]
    %v8046 = vld [vmem:[#allocation7 + $0x2d8] sm:$0xff]
    %v8047 = vld [vmem:[#allocation7 + $0x2e0] sm:$0xff]
    %v8048 = vld [vmem:[#allocation7 + $0x2e8] sm:$0xff]
    %v8049 = vld [vmem:[#allocation7 + $0x2f0] sm:$0xff]
    %v8050 = vld [vmem:[#allocation7 + $0x2f8] sm:$0xff]
    %v8051 = vld [vmem:[#allocation7 + $0x300] sm:$0xff]
    %v8052 = vld [vmem:[#allocation7 + $0x308] sm:$0xff]
    %v8053 = vld [vmem:[#allocation7 + $0x310] sm:$0xff]
    %v8054 = vld [vmem:[#allocation7 + $0x318] sm:$0xff]
    %v8055 = vld [vmem:[#allocation7 + $0x320] sm:$0xff]
    %v8056 = vld [vmem:[#allocation7 + $0x328] sm:$0xff]
    %v8057 = vld [vmem:[#allocation7 + $0x330] sm:$0xff]
    %v8058 = vld [vmem:[#allocation7 + $0x338] sm:$0xff]
    %v8059 = vld [vmem:[#allocation7 + $0x340] sm:$0xff]
    %v8060 = vld [vmem:[#allocation7 + $0x348] sm:$0xff]
    %v8061 = vld [vmem:[#allocation7 + $0x350] sm:$0xff]
    %v8062 = vld [vmem:[#allocation7 + $0x358] sm:$0xff]
    %v8063 = vld [vmem:[#allocation7 + $0x360] sm:$0xff]
    %v8064 = vld [vmem:[#allocation7 + $0x368] sm:$0xff]
    %v8065 = vld [vmem:[#allocation7 + $0x370] sm:$0xff]
    %v8066 = vld [vmem:[#allocation7 + $0x378] sm:$0xff]
    %v8067 = vld [vmem:[#allocation7 + $0x380] sm:$0xff]
    %v8068 = vld [vmem:[#allocation7 + $0x388] sm:$0xff]
    %v8069 = vld [vmem:[#allocation7 + $0x390] sm:$0xff]
    %v8070 = vld [vmem:[#allocation7 + $0x398] sm:$0xff]
    %v8071 = vld [vmem:[#allocation7 + $0x3a0] sm:$0xff]
    %v8072 = vld [vmem:[#allocation7 + $0x3a8] sm:$0xff]
    %v8073 = vld [vmem:[#allocation7 + $0x3b0] sm:$0xff]
    %v8074 = vld [vmem:[#allocation7 + $0x3b8] sm:$0xff]
    %v8075 = vld [vmem:[#allocation7 + $0x3c0] sm:$0xff]
    %v8076 = vld [vmem:[#allocation7 + $0x3c8] sm:$0xff]
    %v8077 = vld [vmem:[#allocation7 + $0x3d0] sm:$0xff]
    %v8078 = vld [vmem:[#allocation7 + $0x3d8] sm:$0xff]
    %v8079 = vld [vmem:[#allocation7 + $0x3e0] sm:$0xff]
    %v8080 = vld [vmem:[#allocation7 + $0x3e8] sm:$0xff]
    %v8081 = vld [vmem:[#allocation7 + $0x3f0] sm:$0xff]
    %v8082 = vld [vmem:[#allocation7 + $0x3f8] sm:$0xff]
    %v8083 = vld [vmem:[#allocation7 + $0x400] sm:$0xff]
    %v8084 = vld [vmem:[#allocation7 + $0x408] sm:$0xff]
    %v8085 = vld [vmem:[#allocation7 + $0x410] sm:$0xff]
    %v8086 = vld [vmem:[#allocation7 + $0x418] sm:$0xff]
    %v8087 = vld [vmem:[#allocation7 + $0x420] sm:$0xff]
    %v8088 = vld [vmem:[#allocation7 + $0x428] sm:$0xff]
    %v8089 = vld [vmem:[#allocation7 + $0x430] sm:$0xff]
    %v8090 = vld [vmem:[#allocation7 + $0x438] sm:$0xff]
    %v8091 = vld [vmem:[#allocation7 + $0x440] sm:$0xff]
    %v8092 = vld [vmem:[#allocation7 + $0x448] sm:$0xff]
    %v8093 = vld [vmem:[#allocation7 + $0x450] sm:$0xff]
    %v8094 = vld [vmem:[#allocation7 + $0x458] sm:$0xff]
    %v8095 = vld [vmem:[#allocation7 + $0x460] sm:$0xff]
    %v8096 = vld [vmem:[#allocation7 + $0x468] sm:$0xff]
    %v8097 = vld [vmem:[#allocation7 + $0x470] sm:$0xff]
    %v8098 = vld [vmem:[#allocation7 + $0x478] sm:$0xff]
    %v8099 = vld [vmem:[#allocation7 + $0x480] sm:$0xff]
    %v8100 = vld [vmem:[#allocation7 + $0x488] sm:$0xff]
    %v8101 = vld [vmem:[#allocation7 + $0x490] sm:$0xff]
    %v8102 = vld [vmem:[#allocation7 + $0x498] sm:$0xff]
    %v8103 = vld [vmem:[#allocation7 + $0x4a0] sm:$0xff]
    %v8104 = vld [vmem:[#allocation7 + $0x4a8] sm:$0xff]
    %v8105 = vld [vmem:[#allocation7 + $0x4b0] sm:$0xff]
    %v8106 = vld [vmem:[#allocation7 + $0x4b8] sm:$0xff]
    %v8107 = vld [vmem:[#allocation7 + $0x4c0] sm:$0xff]
    %v8108 = vld [vmem:[#allocation7 + $0x4c8] sm:$0xff]
    %v8109 = vld [vmem:[#allocation7 + $0x4d0] sm:$0xff]
    %v8110 = vld [vmem:[#allocation7 + $0x4d8] sm:$0xff]
    %v8111 = vld [vmem:[#allocation7 + $0x4e0] sm:$0xff]
    %v8112 = vld [vmem:[#allocation7 + $0x4e8] sm:$0xff]
    %v8113 = vld [vmem:[#allocation7 + $0x4f0] sm:$0xff]
    %v8114 = vld [vmem:[#allocation7 + $0x4f8] sm:$0xff]
    %v8115 = vld [vmem:[%s4] sm:$0x3]
    %v8117 = vlaneseq
    %v8118 = vshrl.u32 %v8117, 7
    %v8119 = vsub.s32 0, %v8118
    %v8120 = vrot.slane %v7954, %v8119
    %v8121 = vlaneseq
    %v8122 = vshrl.u32 %v8121, 7
    %v8123 = vsub.s32 1, %v8122
    %v8124 = vrot.slane %v7954, %v8123
    %v8125 = vlaneseq
    %v8126 = vshrl.u32 %v8125, 7
    %v8127 = vsub.s32 2, %v8126
    %v8128 = vrot.slane %v7954, %v8127
    %v8129 = vlaneseq
    %v8130 = vshrl.u32 %v8129, 7
    %v8131 = vsub.s32 3, %v8130
    %v8132 = vrot.slane %v7954, %v8131
    %v8133 = vlaneseq
    %v8134 = vshrl.u32 %v8133, 7
    %v8135 = vsub.s32 4, %v8134
    %v8136 = vrot.slane %v7954, %v8135
    %v8143 = vlaneseq
    %v8144 = vshrl.u32 %v8143, 7
    %v8145 = vsub.s32 0, %v8144
    %v8146 = vrot.slane %v8115, %v8145
    %v8147 = vlaneseq
    %v8148 = vshrl.u32 %v8147, 7
    %v8149 = vsub.s32 1, %v8148
    %v8150 = vrot.slane %v8115, %v8149
    %8153 = vmatprep.subr.mxu0 %v7956
    %8154 = vmatpush1.msra.mxu0 %v7955
    %8155 = vmatprep.subr.mxu0 %v7958
    %8156 = vmatpush1.msra.mxu0 %v7957
    %8157 = vmatprep.subr.mxu0 %v7960
    %8158 = vmatpush1.msra.mxu0 %v7959
    %8159 = vmatprep.subr.mxu0 %v7962
    %8160 = vmatpush1.msra.mxu0 %v7961
    %8161 = vmatprep.subr.mxu0 %v7964
    %8162 = vmatpush1.msra.mxu0 %v7963
    %8163 = vmatprep.subr.mxu0 %v7966
    %8164 = vmatpush1.msra.mxu0 %v7965
    %8165 = vmatprep.subr.mxu0 %v7968
    %8166 = vmatpush1.msra.mxu0 %v7967
    %8167 = vmatprep.subr.mxu0 %v7970
    %8168 = vmatpush1.msra.mxu0 %v7969
    %8169 = vmatprep.subr.mxu0 %v7972
    %8170 = vmatpush1.msra.mxu0 %v7971
    %8171 = vmatprep.subr.mxu0 %v7974
    %8172 = vmatpush1.msra.mxu0 %v7973
    %8173 = vmatprep.subr.mxu0 %v7976
    %8174 = vmatpush1.msra.mxu0 %v7975
    %8175 = vmatprep.subr.mxu0 %v7978
    %8176 = vmatpush1.msra.mxu0 %v7977
    %8177 = vmatprep.subr.mxu0 %v7980
    %8178 = vmatpush1.msra.mxu0 %v7979
    %8179 = vmatprep.subr.mxu0 %v7982
    %8180 = vmatpush1.msra.mxu0 %v7981
    %8181 = vmatprep.subr.mxu0 %v7984
    %8182 = vmatpush1.msra.mxu0 %v7983
    %8183 = vmatprep.subr.mxu0 %v7986
    %8184 = vmatpush1.msra.mxu0 %v7985
    %8185 = vmatprep.subr.mxu0 %v7988
    %8186 = vmatpush1.msra.mxu0 %v7987
    %8187 = vmatprep.subr.mxu0 %v7990
    %8188 = vmatpush1.msra.mxu0 %v7989
    %8189 = vmatprep.subr.mxu0 %v7992
    %8190 = vmatpush1.msra.mxu0 %v7991
    %8191 = vmatprep.subr.mxu0 %v7994
    %8192 = vmatpush1.msra.mxu0 %v7993
    %8193 = vmatprep.subr.mxu0 %v7996
    %8194 = vmatpush1.msra.mxu0 %v7995
    %8195 = vmatprep.subr.mxu0 %v7998
    %8196 = vmatpush1.msra.mxu0 %v7997
    %8197 = vmatprep.subr.mxu0 %v8000
    %8198 = vmatpush1.msra.mxu0 %v7999
    %8199 = vmatprep.subr.mxu0 %v8002
    %8200 = vmatpush1.msra.mxu0 %v8001
    %8201 = vmatprep.subr.mxu0 %v8004
    %8202 = vmatpush1.msra.mxu0 %v8003
    %8203 = vmatprep.subr.mxu0 %v8006
    %8204 = vmatpush1.msra.mxu0 %v8005
    %8205 = vmatprep.subr.mxu0 %v8008
    %8206 = vmatpush1.msra.mxu0 %v8007
    %8207 = vmatprep.subr.mxu0 %v8010
    %8208 = vmatpush1.msra.mxu0 %v8009
    %8209 = vmatprep.subr.mxu0 %v8012
    %8210 = vmatpush1.msra.mxu0 %v8011
    %8211 = vmatprep.subr.mxu0 %v8014
    %8212 = vmatpush1.msra.mxu0 %v8013
    %8213 = vmatprep.subr.mxu0 %v8016
    %8214 = vmatpush1.msra.mxu0 %v8015
    %8215 = vmatprep.subr.mxu0 %v8018
    %8216 = vmatpush1.msra.mxu0 %v8017
    %8217 = vmatprep.mubr.f32.mxu0 %v8124
    %8218 = vmatmul.mubr.f32.gmra.mrb[0].mxu0 %v8120
    %v8219 = vpop.f32.mrb[0].mxu0
    %v8220 = vadd.f32 %v8146, %v8219
    %v8221 = vpop.f32.mrb[0].mxu0
    %v8222 = vadd.f32 %v8150, %v8221
    %8223 = vdwg.mxu0
    %8224 = vmatprep.subr.mxu0 %v8020
    %8225 = vmatpush1.msra.mxu0 %v8019
    %8226 = vmatprep.subr.mxu0 %v8022
    %8227 = vmatpush1.msra.mxu0 %v8021
    %8228 = vmatprep.subr.mxu0 %v8024
    %8229 = vmatpush1.msra.mxu0 %v8023
    %8230 = vmatprep.subr.mxu0 %v8026
    %8231 = vmatpush1.msra.mxu0 %v8025
    %8232 = vmatprep.subr.mxu0 %v8028
    %8233 = vmatpush1.msra.mxu0 %v8027
    %8234 = vmatprep.subr.mxu0 %v8030
    %8235 = vmatpush1.msra.mxu0 %v8029
    %8236 = vmatprep.subr.mxu0 %v8032
    %8237 = vmatpush1.msra.mxu0 %v8031
    %8238 = vmatprep.subr.mxu0 %v8034
    %8239 = vmatpush1.msra.mxu0 %v8033
    %8240 = vmatprep.subr.mxu0 %v8036
    %8241 = vmatpush1.msra.mxu0 %v8035
    %8242 = vmatprep.subr.mxu0 %v8038
    %8243 = vmatpush1.msra.mxu0 %v8037
    %8244 = vmatprep.subr.mxu0 %v8040
    %8245 = vmatpush1.msra.mxu0 %v8039
    %8246 = vmatprep.subr.mxu0 %v8042
    %8247 = vmatpush1.msra.mxu0 %v8041
    %8248 = vmatprep.subr.mxu0 %v8044
    %8249 = vmatpush1.msra.mxu0 %v8043
    %8250 = vmatprep.subr.mxu0 %v8046
    %8251 = vmatpush1.msra.mxu0 %v8045
    %8252 = vmatprep.subr.mxu0 %v8048
    %8253 = vmatpush1.msra.mxu0 %v8047
    %8254 = vmatprep.subr.mxu0 %v8050
    %8255 = vmatpush1.msra.mxu0 %v8049
    %8256 = vmatprep.subr.mxu0 %v8052
    %8257 = vmatpush1.msra.mxu0 %v8051
    %8258 = vmatprep.subr.mxu0 %v8054
    %8259 = vmatpush1.msra.mxu0 %v8053
    %8260 = vmatprep.subr.mxu0 %v8056
    %8261 = vmatpush1.msra.mxu0 %v8055
    %8262 = vmatprep.subr.mxu0 %v8058
    %8263 = vmatpush1.msra.mxu0 %v8057
    %8264 = vmatprep.subr.mxu0 %v8060
    %8265 = vmatpush1.msra.mxu0 %v8059
    %8266 = vmatprep.subr.mxu0 %v8062
    %8267 = vmatpush1.msra.mxu0 %v8061
    %8268 = vmatprep.subr.mxu0 %v8064
    %8269 = vmatpush1.msra.mxu0 %v8063
    %8270 = vmatprep.subr.mxu0 %v8066
    %8271 = vmatpush1.msra.mxu0 %v8065
    %8272 = vmatprep.subr.mxu0 %v8068
    %8273 = vmatpush1.msra.mxu0 %v8067
    %8274 = vmatprep.subr.mxu0 %v8070
    %8275 = vmatpush1.msra.mxu0 %v8069
    %8276 = vmatprep.subr.mxu0 %v8072
    %8277 = vmatpush1.msra.mxu0 %v8071
    %8278 = vmatprep.subr.mxu0 %v8074
    %8279 = vmatpush1.msra.mxu0 %v8073
    %8280 = vmatprep.subr.mxu0 %v8076
    %8281 = vmatpush1.msra.mxu0 %v8075
    %8282 = vmatprep.subr.mxu0 %v8078
    %8283 = vmatpush1.msra.mxu0 %v8077
    %8284 = vmatprep.subr.mxu0 %v8080
    %8285 = vmatpush1.msra.mxu0 %v8079
    %8286 = vmatprep.subr.mxu0 %v8082
    %8287 = vmatpush1.msra.mxu0 %v8081
    %8288 = vmatprep.mubr.f32.mxu0 %v8132
    %8289 = vmatmul.mubr.f32.gmra.mrb[0].mxu0 %v8128
    %v8290 = vpop.f32.mrb[0].mxu0
    %v8291 = vadd.f32 %v8220, %v8290
    %v8292 = vpop.f32.mrb[0].mxu0
    %v8293 = vadd.f32 %v8222, %v8292
    %8294 = vdwg.mxu0
    %8295 = vmatprep.subr.mxu0 %v8084
    %8296 = vmatpush1.msra.mxu0 %v8083
    %8297 = vmatprep.subr.mxu0 %v8086
    %8298 = vmatpush1.msra.mxu0 %v8085
    %8299 = vmatprep.subr.mxu0 %v8088
    %8300 = vmatpush1.msra.mxu0 %v8087
    %8301 = vmatprep.subr.mxu0 %v8090
    %8302 = vmatpush1.msra.mxu0 %v8089
    %8303 = vmatprep.subr.mxu0 %v8092
    %8304 = vmatpush1.msra.mxu0 %v8091
    %8305 = vmatprep.subr.mxu0 %v8094
    %8306 = vmatpush1.msra.mxu0 %v8093
    %8307 = vmatprep.subr.mxu0 %v8096
    %8308 = vmatpush1.msra.mxu0 %v8095
    %8309 = vmatprep.subr.mxu0 %v8098
    %8310 = vmatpush1.msra.mxu0 %v8097
    %8311 = vmatprep.subr.mxu0 %v8100
    %8312 = vmatpush1.msra.mxu0 %v8099
    %8313 = vmatprep.subr.mxu0 %v8102
    %8314 = vmatpush1.msra.mxu0 %v8101
    %8315 = vmatprep.subr.mxu0 %v8104
    %8316 = vmatpush1.msra.mxu0 %v8103
    %8317 = vmatprep.subr.mxu0 %v8106
    %8318 = vmatpush1.msra.mxu0 %v8105
    %8319 = vmatprep.subr.mxu0 %v8108
    %8320 = vmatpush1.msra.mxu0 %v8107
    %8321 = vmatprep.subr.mxu0 %v8110
    %8322 = vmatpush1.msra.mxu0 %v8109
    %8323 = vmatprep.subr.mxu0 %v8112
    %8324 = vmatpush1.msra.mxu0 %v8111
    %8325 = vmatprep.subr.mxu0 %v8114
    %8326 = vmatpush1.msra.mxu0 %v8113
    %8327 = vmatprep.subr.mxu0 0.0
    %8328 = vmatpush1.msra.mxu0 0.0
    %8329 = vmatprep.subr.mxu0 0.0
    %8330 = vmatpush1.msra.mxu0 0.0
    %8331 = vmatprep.subr.mxu0 0.0
    %8332 = vmatpush1.msra.mxu0 0.0
    %8333 = vmatprep.subr.mxu0 0.0
    %8334 = vmatpush1.msra.mxu0 0.0
    %8335 = vmatprep.subr.mxu0 0.0
    %8336 = vmatpush1.msra.mxu0 0.0
    %8337 = vmatprep.subr.mxu0 0.0
    %8338 = vmatpush1.msra.mxu0 0.0
    %8339 = vmatprep.subr.mxu0 0.0
    %8340 = vmatpush1.msra.mxu0 0.0
    %8341 = vmatprep.subr.mxu0 0.0
    %8342 = vmatpush1.msra.mxu0 0.0
    %8343 = vmatprep.subr.mxu0 0.0
    %8344 = vmatpush1.msra.mxu0 0.0
    %8345 = vmatprep.subr.mxu0 0.0
    %8346 = vmatpush1.msra.mxu0 0.0
    %8347 = vmatprep.subr.mxu0 0.0
    %8348 = vmatpush1.msra.mxu0 0.0
    %8349 = vmatprep.subr.mxu0 0.0
    %8350 = vmatpush1.msra.mxu0 0.0
    %8351 = vmatprep.subr.mxu0 0.0
    %8352 = vmatpush1.msra.mxu0 0.0
    %8353 = vmatprep.subr.mxu0 0.0
    %8354 = vmatpush1.msra.mxu0 0.0
    %8355 = vmatprep.subr.mxu0 0.0
    %8356 = vmatpush1.msra.mxu0 0.0
    %8357 = vmatprep.subr.mxu0 0.0
    %8358 = vmatpush1.msra.mxu0 0.0
    %8359 = vmatprep.mubr.f32.mxu0 0.0
    %8360 = vmatmul.mubr.f32.gmra.mrb[0].mxu0 %v8136
    %v8361 = vpop.f32.mrb[0].mxu0
    %v8362 = vadd.f32 %v8291, %v8361
    %v8363 = vpop.f32.mrb[0].mxu0
    %v8364 = vadd.f32 %v8293, %v8363
    %8365 = vdwg.mxu0
    %v8366 = vsel %vm1215, %v8362, -inf
    %v8367 = vsel %vm1215, %v8364, -inf
    %v8368 = vmax.f32 %v8366, %v8367
    %8369 = vmax.xlane.f32.xlu0 %v8368
    %v8370 = vpop.xlane.xlu0 %8369
    %v8371 = vsub.f32 %v8362, %v8370
    %v8372 = vsub.f32 %v8364, %v8370
    %v8373 = vmul.f32 %v8371, 1.442695
    %v8374 = vpow.pop %v8373
    %v8375 = vmul.f32 %v8372, 1.442695
    %v8376 = vpow.pop %v8375
    %v8377 = vsel %vm1215, %v8374, 0.0
    %v8378 = vsel %vm1215, %v8376, 0.0
    %v8379 = vadd.f32 %v8377, %v8378
    %8380 = vadd.xlane.f32.xlu0 %v8379
    %v8381 = vpop.xlane.xlu0 %8380
    %v8382 = vlog2.pop %v8381
    %v8383 = vmul.f32 %v8382, 0.6931472
    %v8384 = vadd.f32 %v8370, %v8383
    %v8385 = vsub.f32 %v8362, %v8384
    %v8386 = vsub.f32 %v8364, %v8384
    %v8389 = vcombine.low %v8385, %v8386
    %v8391 = vunpack.c.l.s4 1966171168
    %v8392 = vunpack.c.0.s8 %v8391
    %v8393 = vlaneseq
    %v8394 = vshrl.u32 %v8393, 7
    %v8395 = vsub.s32 %v8392, %v8394
    %v8396 = vrot.slane %v8389, %v8395
    %v8398 = vunpack.c.l.s4 1966171168
    %v8399 = vunpack.c.0.s8 %v8398
    %v8400 = vlaneseq
    %v8401 = vshrl.u32 %v8400, 7
    %v8402 = vsub.s32 %v8399, %v8401
    %v8403 = vrot.slane %v8396, %v8402
    %s8405 = scalar_lea.vmem [#allocation8], 6
    %8406 = vst.msk [vmem:[%s8405] ss:$8 sm:$0x3] %vm1258, %v8403
    %8407 = vst.msk [vmem:[%s8405] ss:$8 sm:$0x0] %vm1258, %v8403
    %s8408 = sadd.s32 %s73, 6
    %p8409 = scmp.lt.s32.totalorder %s8408, 1
    %s8410 = scalar_select %p8409, 1, 0
    %v8411 = vstv %s8410
    %vm8412 = vcmp.eq.s32.totalorder %v8411, 1
    %v8413 = vsel %vm8412, %v7954, %v7224
    %8414 = vst.msk [vmem:[#allocation9] sm:$0x7] %vm1267, %v8413
    %v8415 = vld [vmem:[#allocation9] sm:$0x7]
    %s8416 = scalar_lea.vmem [#allocation2], 7
    %v8417 = vld [vmem:[%s8416] ss:$8 sm:$0xf]
    %v8418 = vld [vmem:[%s8416] ss:$8 sm:$0x10]
    %v8419 = vor.u32 %v8417, %v8418
    %v8420 = vld [vmem:[#allocation5] sm:$0xff]
    %v8421 = vld [vmem:[#allocation5 + $0x8] sm:$0xff]
    %v8422 = vld [vmem:[#allocation5 + $0x10] sm:$0xff]
    %v8423 = vld [vmem:[#allocation5 + $0x18] sm:$0xff]
    %v8424 = vld [vmem:[#allocation5 + $0x20] sm:$0xff]
    %v8425 = vld [vmem:[#allocation5 + $0x28] sm:$0xff]
    %v8426 = vld [vmem:[#allocation5 + $0x30] sm:$0xff]
    %v8427 = vld [vmem:[#allocation5 + $0x38] sm:$0xff]
    %v8428 = vld [vmem:[#allocation5 + $0x40] sm:$0xff]
    %v8429 = vld [vmem:[#allocation5 + $0x48] sm:$0xff]
    %v8430 = vld [vmem:[#allocation5 + $0x50] sm:$0xff]
    %v8431 = vld [vmem:[#allocation5 + $0x58] sm:$0xff]
    %v8432 = vld [vmem:[#allocation5 + $0x60] sm:$0xff]
    %v8433 = vld [vmem:[#allocation5 + $0x68] sm:$0xff]
    %v8434 = vld [vmem:[#allocation5 + $0x70] sm:$0xff]
    %v8435 = vld [vmem:[#allocation5 + $0x78] sm:$0xff]
    %v8436 = vld [vmem:[#allocation5 + $0x80] sm:$0xff]
    %v8437 = vld [vmem:[#allocation5 + $0x88] sm:$0xff]
    %v8438 = vld [vmem:[#allocation5 + $0x90] sm:$0xff]
    %v8439 = vld [vmem:[#allocation5 + $0x98] sm:$0xff]
    %v8440 = vld [vmem:[#allocation5 + $0xa0] sm:$0xff]
    %v8441 = vld [vmem:[#allocation5 + $0xa8] sm:$0xff]
    %v8442 = vld [vmem:[#allocation5 + $0xb0] sm:$0xff]
    %v8443 = vld [vmem:[#allocation5 + $0xb8] sm:$0xff]
    %v8444 = vld [vmem:[#allocation5 + $0xc0] sm:$0xff]
    %v8445 = vld [vmem:[#allocation5 + $0xc8] sm:$0xff]
    %v8446 = vld [vmem:[#allocation5 + $0xd0] sm:$0xff]
    %v8447 = vld [vmem:[#allocation5 + $0xd8] sm:$0xff]
    %v8448 = vld [vmem:[#allocation5 + $0xe0] sm:$0xff]
    %v8449 = vld [vmem:[#allocation5 + $0xe8] sm:$0xff]
    %v8450 = vld [vmem:[#allocation5 + $0xf0] sm:$0xff]
    %v8451 = vld [vmem:[#allocation5 + $0xf8] sm:$0xff]
    %v8452 = vld [vmem:[#allocation5 + $0x100] sm:$0xff]
    %v8453 = vld [vmem:[#allocation5 + $0x108] sm:$0xff]
    %v8454 = vld [vmem:[#allocation5 + $0x110] sm:$0xff]
    %v8455 = vld [vmem:[#allocation5 + $0x118] sm:$0xff]
    %v8456 = vld [vmem:[#allocation5 + $0x120] sm:$0xff]
    %v8457 = vld [vmem:[#allocation5 + $0x128] sm:$0xff]
    %v8458 = vld [vmem:[#allocation5 + $0x130] sm:$0xff]
    %v8459 = vld [vmem:[#allocation5 + $0x138] sm:$0xff]
    %v8460 = vld [vmem:[#allocation5 + $0x140] sm:$0xff]
    %v8461 = vld [vmem:[#allocation5 + $0x148] sm:$0xff]
    %v8462 = vld [vmem:[#allocation5 + $0x150] sm:$0xff]
    %v8463 = vld [vmem:[#allocation5 + $0x158] sm:$0xff]
    %v8464 = vld [vmem:[#allocation5 + $0x160] sm:$0xff]
    %v8465 = vld [vmem:[#allocation5 + $0x168] sm:$0xff]
    %v8466 = vld [vmem:[#allocation5 + $0x170] sm:$0xff]
    %v8467 = vld [vmem:[#allocation5 + $0x178] sm:$0xff]
    %v8468 = vld [vmem:[#allocation5 + $0x180] sm:$0xff]
    %v8469 = vld [vmem:[#allocation5 + $0x188] sm:$0xff]
    %v8470 = vld [vmem:[#allocation5 + $0x190] sm:$0xff]
    %v8471 = vld [vmem:[#allocation5 + $0x198] sm:$0xff]
    %v8472 = vld [vmem:[#allocation5 + $0x1a0] sm:$0xff]
    %v8473 = vld [vmem:[#allocation5 + $0x1a8] sm:$0xff]
    %v8474 = vld [vmem:[#allocation5 + $0x1b0] sm:$0xff]
    %v8475 = vld [vmem:[#allocation5 + $0x1b8] sm:$0xff]
    %v8476 = vld [vmem:[#allocation5 + $0x1c0] sm:$0xff]
    %v8477 = vld [vmem:[#allocation5 + $0x1c8] sm:$0xff]
    %v8478 = vld [vmem:[#allocation5 + $0x1d0] sm:$0xff]
    %v8479 = vld [vmem:[#allocation5 + $0x1d8] sm:$0xff]
    %v8480 = vld [vmem:[#allocation5 + $0x1e0] sm:$0xff]
    %v8481 = vld [vmem:[#allocation5 + $0x1e8] sm:$0xff]
    %v8482 = vld [vmem:[#allocation5 + $0x1f0] sm:$0xff]
    %v8483 = vld [vmem:[#allocation5 + $0x1f8] sm:$0xff]
    %v8484 = vld [vmem:[#allocation5 + $0x200] sm:$0xff]
    %v8485 = vld [vmem:[#allocation5 + $0x208] sm:$0xff]
    %v8486 = vld [vmem:[#allocation5 + $0x210] sm:$0xff]
    %v8487 = vld [vmem:[#allocation5 + $0x218] sm:$0xff]
    %v8488 = vld [vmem:[#allocation5 + $0x220] sm:$0xff]
    %v8489 = vld [vmem:[#allocation5 + $0x228] sm:$0xff]
    %v8490 = vld [vmem:[#allocation5 + $0x230] sm:$0xff]
    %v8491 = vld [vmem:[#allocation5 + $0x238] sm:$0xff]
    %v8492 = vld [vmem:[#allocation5 + $0x240] sm:$0xff]
    %v8493 = vld [vmem:[#allocation5 + $0x248] sm:$0xff]
    %v8494 = vld [vmem:[#allocation5 + $0x250] sm:$0xff]
    %v8495 = vld [vmem:[#allocation5 + $0x258] sm:$0xff]
    %v8496 = vld [vmem:[#allocation5 + $0x260] sm:$0xff]
    %v8497 = vld [vmem:[#allocation5 + $0x268] sm:$0xff]
    %v8498 = vld [vmem:[#allocation5 + $0x270] sm:$0xff]
    %v8499 = vld [vmem:[#allocation5 + $0x278] sm:$0xff]
    %v8500 = vld [vmem:[#allocation5 + $0x280] sm:$0xff]
    %v8501 = vld [vmem:[#allocation5 + $0x288] sm:$0xff]
    %v8502 = vld [vmem:[#allocation5 + $0x290] sm:$0xff]
    %v8503 = vld [vmem:[#allocation5 + $0x298] sm:$0xff]
    %v8504 = vld [vmem:[#allocation5 + $0x2a0] sm:$0xff]
    %v8505 = vld [vmem:[#allocation5 + $0x2a8] sm:$0xff]
    %v8506 = vld [vmem:[#allocation5 + $0x2b0] sm:$0xff]
    %v8507 = vld [vmem:[#allocation5 + $0x2b8] sm:$0xff]
    %v8508 = vld [vmem:[#allocation5 + $0x2c0] sm:$0xff]
    %v8509 = vld [vmem:[#allocation5 + $0x2c8] sm:$0xff]
    %v8510 = vld [vmem:[#allocation5 + $0x2d0] sm:$0xff]
    %v8511 = vld [vmem:[#allocation5 + $0x2d8] sm:$0xff]
    %v8512 = vld [vmem:[#allocation5 + $0x2e0] sm:$0xff]
    %v8513 = vld [vmem:[#allocation5 + $0x2e8] sm:$0xff]
    %v8514 = vld [vmem:[#allocation5 + $0x2f0] sm:$0xff]
    %v8515 = vld [vmem:[#allocation5 + $0x2f8] sm:$0xff]
    %v8516 = vld [vmem:[#allocation5 + $0x300] sm:$0xff]
    %v8517 = vld [vmem:[#allocation5 + $0x308] sm:$0xff]
    %v8518 = vld [vmem:[#allocation5 + $0x310] sm:$0xff]
    %v8519 = vld [vmem:[#allocation5 + $0x318] sm:$0xff]
    %v8520 = vld [vmem:[#allocation5 + $0x320] sm:$0xff]
    %v8521 = vld [vmem:[#allocation5 + $0x328] sm:$0xff]
    %v8522 = vld [vmem:[#allocation5 + $0x330] sm:$0xff]
    %v8523 = vld [vmem:[#allocation5 + $0x338] sm:$0xff]
    %v8524 = vld [vmem:[#allocation5 + $0x340] sm:$0xff]
    %v8525 = vld [vmem:[#allocation5 + $0x348] sm:$0xff]
    %v8526 = vld [vmem:[#allocation5 + $0x350] sm:$0xff]
    %v8527 = vld [vmem:[#allocation5 + $0x358] sm:$0xff]
    %v8528 = vld [vmem:[#allocation5 + $0x360] sm:$0xff]
    %v8529 = vld [vmem:[#allocation5 + $0x368] sm:$0xff]
    %v8530 = vld [vmem:[#allocation5 + $0x370] sm:$0xff]
    %v8531 = vld [vmem:[#allocation5 + $0x378] sm:$0xff]
    %v8532 = vld [vmem:[#allocation5 + $0x380] sm:$0xff]
    %v8533 = vld [vmem:[#allocation5 + $0x388] sm:$0xff]
    %v8534 = vld [vmem:[#allocation5 + $0x390] sm:$0xff]
    %v8535 = vld [vmem:[#allocation5 + $0x398] sm:$0xff]
    %v8536 = vld [vmem:[#allocation5 + $0x3a0] sm:$0xff]
    %v8537 = vld [vmem:[#allocation5 + $0x3a8] sm:$0xff]
    %v8538 = vld [vmem:[#allocation5 + $0x3b0] sm:$0xff]
    %v8539 = vld [vmem:[#allocation5 + $0x3b8] sm:$0xff]
    %v8540 = vld [vmem:[#allocation5 + $0x3c0] sm:$0xff]
    %v8541 = vld [vmem:[#allocation5 + $0x3c8] sm:$0xff]
    %v8542 = vld [vmem:[#allocation5 + $0x3d0] sm:$0xff]
    %v8543 = vld [vmem:[#allocation5 + $0x3d8] sm:$0xff]
    %v8544 = vld [vmem:[#allocation5 + $0x3e0] sm:$0xff]
    %v8545 = vld [vmem:[#allocation5 + $0x3e8] sm:$0xff]
    %v8546 = vld [vmem:[#allocation5 + $0x3f0] sm:$0xff]
    %v8547 = vld [vmem:[#allocation5 + $0x3f8] sm:$0xff]
    %v8548 = vld [vmem:[#allocation5 + $0x400] sm:$0xff]
    %v8549 = vld [vmem:[#allocation5 + $0x408] sm:$0xff]
    %v8550 = vld [vmem:[#allocation5 + $0x410] sm:$0xff]
    %v8551 = vld [vmem:[#allocation5 + $0x418] sm:$0xff]
    %v8552 = vld [vmem:[#allocation5 + $0x420] sm:$0xff]
    %v8553 = vld [vmem:[#allocation5 + $0x428] sm:$0xff]
    %v8554 = vld [vmem:[#allocation5 + $0x430] sm:$0xff]
    %v8555 = vld [vmem:[#allocation5 + $0x438] sm:$0xff]
    %v8556 = vld [vmem:[#allocation5 + $0x440] sm:$0xff]
    %v8557 = vld [vmem:[#allocation5 + $0x448] sm:$0xff]
    %v8558 = vld [vmem:[#allocation5 + $0x450] sm:$0xff]
    %v8559 = vld [vmem:[#allocation5 + $0x458] sm:$0xff]
    %v8560 = vld [vmem:[#allocation5 + $0x460] sm:$0xff]
    %v8561 = vld [vmem:[#allocation5 + $0x468] sm:$0xff]
    %v8562 = vld [vmem:[#allocation5 + $0x470] sm:$0xff]
    %v8563 = vld [vmem:[#allocation5 + $0x478] sm:$0xff]
    %v8564 = vld [vmem:[#allocation5 + $0x480] sm:$0xff]
    %v8565 = vld [vmem:[#allocation5 + $0x488] sm:$0xff]
    %v8566 = vld [vmem:[#allocation5 + $0x490] sm:$0xff]
    %v8567 = vld [vmem:[#allocation5 + $0x498] sm:$0xff]
    %v8568 = vld [vmem:[#allocation5 + $0x4a0] sm:$0xff]
    %v8569 = vld [vmem:[#allocation5 + $0x4a8] sm:$0xff]
    %v8570 = vld [vmem:[#allocation5 + $0x4b0] sm:$0xff]
    %v8571 = vld [vmem:[#allocation5 + $0x4b8] sm:$0xff]
    %v8572 = vld [vmem:[#allocation5 + $0x4c0] sm:$0xff]
    %v8573 = vld [vmem:[#allocation5 + $0x4c8] sm:$0xff]
    %v8574 = vld [vmem:[#allocation5 + $0x4d0] sm:$0xff]
    %v8575 = vld [vmem:[#allocation5 + $0x4d8] sm:$0xff]
    %v8576 = vld [vmem:[#allocation5 + $0x4e0] sm:$0xff]
    %v8577 = vld [vmem:[#allocation5 + $0x4e8] sm:$0xff]
    %v8578 = vld [vmem:[#allocation5 + $0x4f0] sm:$0xff]
    %v8579 = vld [vmem:[#allocation5 + $0x4f8] sm:$0xff]
    %v8580 = vld [vmem:[#allocation5 + $0x500] sm:$0xff]
    %v8581 = vld [vmem:[#allocation5 + $0x508] sm:$0xff]
    %v8582 = vld [vmem:[#allocation5 + $0x510] sm:$0xff]
    %v8583 = vld [vmem:[#allocation5 + $0x518] sm:$0xff]
    %v8584 = vld [vmem:[#allocation5 + $0x520] sm:$0xff]
    %v8585 = vld [vmem:[#allocation5 + $0x528] sm:$0xff]
    %v8586 = vld [vmem:[#allocation5 + $0x530] sm:$0xff]
    %v8587 = vld [vmem:[#allocation5 + $0x538] sm:$0xff]
    %v8588 = vld [vmem:[#allocation5 + $0x540] sm:$0xff]
    %v8589 = vld [vmem:[#allocation5 + $0x548] sm:$0xff]
    %v8590 = vld [vmem:[#allocation5 + $0x550] sm:$0xff]
    %v8591 = vld [vmem:[#allocation5 + $0x558] sm:$0xff]
    %v8592 = vld [vmem:[#allocation5 + $0x560] sm:$0xff]
    %v8593 = vld [vmem:[#allocation5 + $0x568] sm:$0xff]
    %v8594 = vld [vmem:[#allocation5 + $0x570] sm:$0xff]
    %v8595 = vld [vmem:[#allocation5 + $0x578] sm:$0xff]
    %v8596 = vld [vmem:[#allocation5 + $0x580] sm:$0xff]
    %v8597 = vld [vmem:[#allocation5 + $0x588] sm:$0xff]
    %v8598 = vld [vmem:[#allocation5 + $0x590] sm:$0xff]
    %v8599 = vld [vmem:[#allocation5 + $0x598] sm:$0xff]
    %v8600 = vld [vmem:[#allocation5 + $0x5a0] sm:$0xff]
    %v8601 = vld [vmem:[#allocation5 + $0x5a8] sm:$0xff]
    %v8602 = vld [vmem:[#allocation5 + $0x5b0] sm:$0xff]
    %v8603 = vld [vmem:[#allocation5 + $0x5b8] sm:$0xff]
    %v8604 = vld [vmem:[#allocation5 + $0x5c0] sm:$0xff]
    %v8605 = vld [vmem:[#allocation5 + $0x5c8] sm:$0xff]
    %v8606 = vld [vmem:[#allocation5 + $0x5d0] sm:$0xff]
    %v8607 = vld [vmem:[#allocation5 + $0x5d8] sm:$0xff]
    %v8608 = vld [vmem:[#allocation5 + $0x5e0] sm:$0xff]
    %v8609 = vld [vmem:[#allocation5 + $0x5e8] sm:$0xff]
    %v8610 = vld [vmem:[#allocation5 + $0x5f0] sm:$0xff]
    %v8611 = vld [vmem:[#allocation5 + $0x5f8] sm:$0xff]
    %v8612 = vld [vmem:[#allocation5 + $0x600] sm:$0xff]
    %v8613 = vld [vmem:[#allocation5 + $0x608] sm:$0xff]
    %v8614 = vld [vmem:[#allocation5 + $0x610] sm:$0xff]
    %v8615 = vld [vmem:[#allocation5 + $0x618] sm:$0xff]
    %v8616 = vld [vmem:[#allocation5 + $0x620] sm:$0xff]
    %v8617 = vld [vmem:[#allocation5 + $0x628] sm:$0xff]
    %v8618 = vld [vmem:[#allocation5 + $0x630] sm:$0xff]
    %v8619 = vld [vmem:[#allocation5 + $0x638] sm:$0xff]
    %v8620 = vld [vmem:[#allocation5 + $0x640] sm:$0xff]
    %v8621 = vld [vmem:[#allocation5 + $0x648] sm:$0xff]
    %v8622 = vld [vmem:[#allocation5 + $0x650] sm:$0xff]
    %v8623 = vld [vmem:[#allocation5 + $0x658] sm:$0xff]
    %v8624 = vld [vmem:[#allocation5 + $0x660] sm:$0xff]
    %v8625 = vld [vmem:[#allocation5 + $0x668] sm:$0xff]
    %v8626 = vld [vmem:[#allocation5 + $0x670] sm:$0xff]
    %v8627 = vld [vmem:[#allocation5 + $0x678] sm:$0xff]
    %v8628 = vld [vmem:[#allocation5 + $0x680] sm:$0xff]
    %v8629 = vld [vmem:[#allocation5 + $0x688] sm:$0xff]
    %v8630 = vld [vmem:[#allocation5 + $0x690] sm:$0xff]
    %v8631 = vld [vmem:[#allocation5 + $0x698] sm:$0xff]
    %v8632 = vld [vmem:[#allocation5 + $0x6a0] sm:$0xff]
    %v8633 = vld [vmem:[#allocation5 + $0x6a8] sm:$0xff]
    %v8634 = vld [vmem:[#allocation5 + $0x6b0] sm:$0xff]
    %v8635 = vld [vmem:[#allocation5 + $0x6b8] sm:$0xff]
    %v8636 = vld [vmem:[#allocation5 + $0x6c0] sm:$0xff]
    %v8637 = vld [vmem:[#allocation5 + $0x6c8] sm:$0xff]
    %v8638 = vld [vmem:[#allocation5 + $0x6d0] sm:$0xff]
    %v8639 = vld [vmem:[#allocation5 + $0x6d8] sm:$0xff]
    %v8640 = vld [vmem:[#allocation5 + $0x6e0] sm:$0xff]
    %v8641 = vld [vmem:[#allocation5 + $0x6e8] sm:$0xff]
    %v8642 = vld [vmem:[#allocation5 + $0x6f0] sm:$0xff]
    %v8643 = vld [vmem:[#allocation5 + $0x6f8] sm:$0xff]
    %v8644 = vld [vmem:[#allocation5 + $0x700] sm:$0xff]
    %v8645 = vld [vmem:[#allocation5 + $0x708] sm:$0xff]
    %v8646 = vld [vmem:[#allocation5 + $0x710] sm:$0xff]
    %v8647 = vld [vmem:[#allocation5 + $0x718] sm:$0xff]
    %v8648 = vld [vmem:[#allocation5 + $0x720] sm:$0xff]
    %v8649 = vld [vmem:[#allocation5 + $0x728] sm:$0xff]
    %v8650 = vld [vmem:[#allocation5 + $0x730] sm:$0xff]
    %v8651 = vld [vmem:[#allocation5 + $0x738] sm:$0xff]
    %v8652 = vld [vmem:[#allocation5 + $0x740] sm:$0xff]
    %v8653 = vld [vmem:[#allocation5 + $0x748] sm:$0xff]
    %v8654 = vld [vmem:[#allocation5 + $0x750] sm:$0xff]
    %v8655 = vld [vmem:[#allocation5 + $0x758] sm:$0xff]
    %v8656 = vld [vmem:[#allocation5 + $0x760] sm:$0xff]
    %v8657 = vld [vmem:[#allocation5 + $0x768] sm:$0xff]
    %v8658 = vld [vmem:[#allocation5 + $0x770] sm:$0xff]
    %v8659 = vld [vmem:[#allocation5 + $0x778] sm:$0xff]
    %v8661 = vlaneseq
    %v8662 = vshrl.u32 %v8661, 7
    %v8663 = vsub.s32 0, %v8662
    %v8664 = vrot.slane %v8415, %v8663
    %v8665 = vlaneseq
    %v8666 = vshrl.u32 %v8665, 7
    %v8667 = vsub.s32 1, %v8666
    %v8668 = vrot.slane %v8415, %v8667
    %v8669 = vlaneseq
    %v8670 = vshrl.u32 %v8669, 7
    %v8671 = vsub.s32 2, %v8670
    %v8672 = vrot.slane %v8415, %v8671
    %8676 = vmatprep.subr.mxu0 %v8421
    %8677 = vmatpush1.msra.mxu0 %v8420
    %8678 = vmatprep.subr.mxu0 %v8426
    %8679 = vmatpush1.msra.mxu0 %v8425
    %8680 = vmatprep.subr.mxu0 %v8431
    %8681 = vmatpush1.msra.mxu0 %v8430
    %8682 = vmatprep.subr.mxu0 %v8436
    %8683 = vmatpush1.msra.mxu0 %v8435
    %8684 = vmatprep.subr.mxu0 %v8441
    %8685 = vmatpush1.msra.mxu0 %v8440
    %8686 = vmatprep.subr.mxu0 %v8446
    %8687 = vmatpush1.msra.mxu0 %v8445
    %8688 = vmatprep.subr.mxu0 %v8451
    %8689 = vmatpush1.msra.mxu0 %v8450
    %8690 = vmatprep.subr.mxu0 %v8456
    %8691 = vmatpush1.msra.mxu0 %v8455
    %8692 = vmatprep.subr.mxu0 %v8461
    %8693 = vmatpush1.msra.mxu0 %v8460
    %8694 = vmatprep.subr.mxu0 %v8466
    %8695 = vmatpush1.msra.mxu0 %v8465
    %8696 = vmatprep.subr.mxu0 %v8471
    %8697 = vmatpush1.msra.mxu0 %v8470
    %8698 = vmatprep.subr.mxu0 %v8476
    %8699 = vmatpush1.msra.mxu0 %v8475
    %8700 = vmatprep.subr.mxu0 %v8481
    %8701 = vmatpush1.msra.mxu0 %v8480
    %8702 = vmatprep.subr.mxu0 %v8486
    %8703 = vmatpush1.msra.mxu0 %v8485
    %8704 = vmatprep.subr.mxu0 %v8491
    %8705 = vmatpush1.msra.mxu0 %v8490
    %8706 = vmatprep.subr.mxu0 %v8496
    %8707 = vmatpush1.msra.mxu0 %v8495
    %8708 = vmatprep.subr.mxu0 %v8501
    %8709 = vmatpush1.msra.mxu0 %v8500
    %8710 = vmatprep.subr.mxu0 %v8506
    %8711 = vmatpush1.msra.mxu0 %v8505
    %8712 = vmatprep.subr.mxu0 %v8511
    %8713 = vmatpush1.msra.mxu0 %v8510
    %8714 = vmatprep.subr.mxu0 %v8516
    %8715 = vmatpush1.msra.mxu0 %v8515
    %8716 = vmatprep.subr.mxu0 %v8521
    %8717 = vmatpush1.msra.mxu0 %v8520
    %8718 = vmatprep.subr.mxu0 %v8526
    %8719 = vmatpush1.msra.mxu0 %v8525
    %8720 = vmatprep.subr.mxu0 %v8531
    %8721 = vmatpush1.msra.mxu0 %v8530
    %8722 = vmatprep.subr.mxu0 %v8536
    %8723 = vmatpush1.msra.mxu0 %v8535
    %8724 = vmatprep.subr.mxu0 %v8541
    %8725 = vmatpush1.msra.mxu0 %v8540
    %8726 = vmatprep.subr.mxu0 %v8546
    %8727 = vmatpush1.msra.mxu0 %v8545
    %8728 = vmatprep.subr.mxu0 %v8551
    %8729 = vmatpush1.msra.mxu0 %v8550
    %8730 = vmatprep.subr.mxu0 %v8556
    %8731 = vmatpush1.msra.mxu0 %v8555
    %8732 = vmatprep.subr.mxu0 %v8561
    %8733 = vmatpush1.msra.mxu0 %v8560
    %8734 = vmatprep.subr.mxu0 %v8566
    %8735 = vmatpush1.msra.mxu0 %v8565
    %8736 = vmatprep.subr.mxu0 %v8571
    %8737 = vmatpush1.msra.mxu0 %v8570
    %8738 = vmatprep.subr.mxu0 %v8576
    %8739 = vmatpush1.msra.mxu0 %v8575
    %8740 = vmatprep.mubr.f32.mxu0 %v8668
    %8741 = vmatmul.mubr.f32.gmra.mrb[0].mxu0 %v8664
    %v8742 = vpop.f32.mrb[0].mxu0
    %v8743 = vadd.f32 0.0, %v8742
    %v8744 = vpop.f32.mrb[0].mxu0
    %v8745 = vadd.f32 0.0, %v8744
    %8746 = vdwg.mxu0
    %8747 = vmatprep.subr.mxu0 %v8581
    %8748 = vmatpush1.msra.mxu0 %v8580
    %8749 = vmatprep.subr.mxu0 %v8586
    %8750 = vmatpush1.msra.mxu0 %v8585
    %8751 = vmatprep.subr.mxu0 %v8591
    %8752 = vmatpush1.msra.mxu0 %v8590
    %8753 = vmatprep.subr.mxu0 %v8596
    %8754 = vmatpush1.msra.mxu0 %v8595
    %8755 = vmatprep.subr.mxu0 %v8601
    %8756 = vmatpush1.msra.mxu0 %v8600
    %8757 = vmatprep.subr.mxu0 %v8606
    %8758 = vmatpush1.msra.mxu0 %v8605
    %8759 = vmatprep.subr.mxu0 %v8611
    %8760 = vmatpush1.msra.mxu0 %v8610
    %8761 = vmatprep.subr.mxu0 %v8616
    %8762 = vmatpush1.msra.mxu0 %v8615
    %8763 = vmatprep.subr.mxu0 %v8621
    %8764 = vmatpush1.msra.mxu0 %v8620
    %8765 = vmatprep.subr.mxu0 %v8626
    %8766 = vmatpush1.msra.mxu0 %v8625
    %8767 = vmatprep.subr.mxu0 %v8631
    %8768 = vmatpush1.msra.mxu0 %v8630
    %8769 = vmatprep.subr.mxu0 %v8636
    %8770 = vmatpush1.msra.mxu0 %v8635
    %8771 = vmatprep.subr.mxu0 %v8641
    %8772 = vmatpush1.msra.mxu0 %v8640
    %8773 = vmatprep.subr.mxu0 %v8646
    %8774 = vmatpush1.msra.mxu0 %v8645
    %8775 = vmatprep.subr.mxu0 %v8651
    %8776 = vmatpush1.msra.mxu0 %v8650
    %8777 = vmatprep.subr.mxu0 %v8656
    %8778 = vmatpush1.msra.mxu0 %v8655
    %8779 = vmatprep.subr.mxu0 0.0
    %8780 = vmatpush1.msra.mxu0 0.0
    %8781 = vmatprep.subr.mxu0 0.0
    %8782 = vmatpush1.msra.mxu0 0.0
    %8783 = vmatprep.subr.mxu0 0.0
    %8784 = vmatpush1.msra.mxu0 0.0
    %8785 = vmatprep.subr.mxu0 0.0
    %8786 = vmatpush1.msra.mxu0 0.0
    %8787 = vmatprep.subr.mxu0 0.0
    %8788 = vmatpush1.msra.mxu0 0.0
    %8789 = vmatprep.subr.mxu0 0.0
    %8790 = vmatpush1.msra.mxu0 0.0
    %8791 = vmatprep.subr.mxu0 0.0
    %8792 = vmatpush1.msra.mxu0 0.0
    %8793 = vmatprep.subr.mxu0 0.0
    %8794 = vmatpush1.msra.mxu0 0.0
    %8795 = vmatprep.subr.mxu0 0.0
    %8796 = vmatpush1.msra.mxu0 0.0
    %8797 = vmatprep.subr.mxu0 0.0
    %8798 = vmatpush1.msra.mxu0 0.0
    %8799 = vmatprep.subr.mxu0 0.0
    %8800 = vmatpush1.msra.mxu0 0.0
    %8801 = vmatprep.subr.mxu0 0.0
    %8802 = vmatpush1.msra.mxu0 0.0
    %8803 = vmatprep.subr.mxu0 0.0
    %8804 = vmatpush1.msra.mxu0 0.0
    %8805 = vmatprep.subr.mxu0 0.0
    %8806 = vmatpush1.msra.mxu0 0.0
    %8807 = vmatprep.subr.mxu0 0.0
    %8808 = vmatpush1.msra.mxu0 0.0
    %8809 = vmatprep.subr.mxu0 0.0
    %8810 = vmatpush1.msra.mxu0 0.0
    %8811 = vmatprep.mubr.f32.mxu0 0.0
    %8812 = vmatmul.mubr.f32.gmra.mrb[0].mxu0 %v8672
    %v8813 = vpop.f32.mrb[0].mxu0
    %v8814 = vadd.f32 %v8743, %v8813
    %v8815 = vpop.f32.mrb[0].mxu0
    %v8816 = vadd.f32 %v8745, %v8815
    %8817 = vdwg.mxu0
    %8818 = vmatprep.subr.mxu0 %v8423
    %8819 = vmatpush1.msra.mxu0 %v8422
    %8820 = vmatprep.subr.mxu0 %v8428
    %8821 = vmatpush1.msra.mxu0 %v8427
    %8822 = vmatprep.subr.mxu0 %v8433
    %8823 = vmatpush1.msra.mxu0 %v8432
    %8824 = vmatprep.subr.mxu0 %v8438
    %8825 = vmatpush1.msra.mxu0 %v8437
    %8826 = vmatprep.subr.mxu0 %v8443
    %8827 = vmatpush1.msra.mxu0 %v8442
    %8828 = vmatprep.subr.mxu0 %v8448
    %8829 = vmatpush1.msra.mxu0 %v8447
    %8830 = vmatprep.subr.mxu0 %v8453
    %8831 = vmatpush1.msra.mxu0 %v8452
    %8832 = vmatprep.subr.mxu0 %v8458
    %8833 = vmatpush1.msra.mxu0 %v8457
    %8834 = vmatprep.subr.mxu0 %v8463
    %8835 = vmatpush1.msra.mxu0 %v8462
    %8836 = vmatprep.subr.mxu0 %v8468
    %8837 = vmatpush1.msra.mxu0 %v8467
    %8838 = vmatprep.subr.mxu0 %v8473
    %8839 = vmatpush1.msra.mxu0 %v8472
    %8840 = vmatprep.subr.mxu0 %v8478
    %8841 = vmatpush1.msra.mxu0 %v8477
    %8842 = vmatprep.subr.mxu0 %v8483
    %8843 = vmatpush1.msra.mxu0 %v8482
    %8844 = vmatprep.subr.mxu0 %v8488
    %8845 = vmatpush1.msra.mxu0 %v8487
    %8846 = vmatprep.subr.mxu0 %v8493
    %8847 = vmatpush1.msra.mxu0 %v8492
    %8848 = vmatprep.subr.mxu0 %v8498
    %8849 = vmatpush1.msra.mxu0 %v8497
    %8850 = vmatprep.subr.mxu0 %v8503
    %8851 = vmatpush1.msra.mxu0 %v8502
    %8852 = vmatprep.subr.mxu0 %v8508
    %8853 = vmatpush1.msra.mxu0 %v8507
    %8854 = vmatprep.subr.mxu0 %v8513
    %8855 = vmatpush1.msra.mxu0 %v8512
    %8856 = vmatprep.subr.mxu0 %v8518
    %8857 = vmatpush1.msra.mxu0 %v8517
    %8858 = vmatprep.subr.mxu0 %v8523
    %8859 = vmatpush1.msra.mxu0 %v8522
    %8860 = vmatprep.subr.mxu0 %v8528
    %8861 = vmatpush1.msra.mxu0 %v8527
    %8862 = vmatprep.subr.mxu0 %v8533
    %8863 = vmatpush1.msra.mxu0 %v8532
    %8864 = vmatprep.subr.mxu0 %v8538
    %8865 = vmatpush1.msra.mxu0 %v8537
    %8866 = vmatprep.subr.mxu0 %v8543
    %8867 = vmatpush1.msra.mxu0 %v8542
    %8868 = vmatprep.subr.mxu0 %v8548
    %8869 = vmatpush1.msra.mxu0 %v8547
    %8870 = vmatprep.subr.mxu0 %v8553
    %8871 = vmatpush1.msra.mxu0 %v8552
    %8872 = vmatprep.subr.mxu0 %v8558
    %8873 = vmatpush1.msra.mxu0 %v8557
    %8874 = vmatprep.subr.mxu0 %v8563
    %8875 = vmatpush1.msra.mxu0 %v8562
    %8876 = vmatprep.subr.mxu0 %v8568
    %8877 = vmatpush1.msra.mxu0 %v8567
    %8878 = vmatprep.subr.mxu0 %v8573
    %8879 = vmatpush1.msra.mxu0 %v8572
    %8880 = vmatprep.subr.mxu0 %v8578
    %8881 = vmatpush1.msra.mxu0 %v8577
    %8882 = vmatprep.mubr.f32.mxu0 %v8668
    %8883 = vmatmul.mubr.f32.gmra.mrb[0].mxu0 %v8664
    %v8884 = vpop.f32.mrb[0].mxu0
    %v8885 = vadd.f32 0.0, %v8884
    %v8886 = vpop.f32.mrb[0].mxu0
    %v8887 = vadd.f32 0.0, %v8886
    %8888 = vdwg.mxu0
    %8889 = vmatprep.subr.mxu0 %v8583
    %8890 = vmatpush1.msra.mxu0 %v8582
    %8891 = vmatprep.subr.mxu0 %v8588
    %8892 = vmatpush1.msra.mxu0 %v8587
    %8893 = vmatprep.subr.mxu0 %v8593
    %8894 = vmatpush1.msra.mxu0 %v8592
    %8895 = vmatprep.subr.mxu0 %v8598
    %8896 = vmatpush1.msra.mxu0 %v8597
    %8897 = vmatprep.subr.mxu0 %v8603
    %8898 = vmatpush1.msra.mxu0 %v8602
    %8899 = vmatprep.subr.mxu0 %v8608
    %8900 = vmatpush1.msra.mxu0 %v8607
    %8901 = vmatprep.subr.mxu0 %v8613
    %8902 = vmatpush1.msra.mxu0 %v8612
    %8903 = vmatprep.subr.mxu0 %v8618
    %8904 = vmatpush1.msra.mxu0 %v8617
    %8905 = vmatprep.subr.mxu0 %v8623
    %8906 = vmatpush1.msra.mxu0 %v8622
    %8907 = vmatprep.subr.mxu0 %v8628
    %8908 = vmatpush1.msra.mxu0 %v8627
    %8909 = vmatprep.subr.mxu0 %v8633
    %8910 = vmatpush1.msra.mxu0 %v8632
    %8911 = vmatprep.subr.mxu0 %v8638
    %8912 = vmatpush1.msra.mxu0 %v8637
    %8913 = vmatprep.subr.mxu0 %v8643
    %8914 = vmatpush1.msra.mxu0 %v8642
    %8915 = vmatprep.subr.mxu0 %v8648
    %8916 = vmatpush1.msra.mxu0 %v8647
    %8917 = vmatprep.subr.mxu0 %v8653
    %8918 = vmatpush1.msra.mxu0 %v8652
    %8919 = vmatprep.subr.mxu0 %v8658
    %8920 = vmatpush1.msra.mxu0 %v8657
    %8921 = vmatprep.subr.mxu0 0.0
    %8922 = vmatpush1.msra.mxu0 0.0
    %8923 = vmatprep.subr.mxu0 0.0
    %8924 = vmatpush1.msra.mxu0 0.0
    %8925 = vmatprep.subr.mxu0 0.0
    %8926 = vmatpush1.msra.mxu0 0.0
    %8927 = vmatprep.subr.mxu0 0.0
    %8928 = vmatpush1.msra.mxu0 0.0
    %8929 = vmatprep.subr.mxu0 0.0
    %8930 = vmatpush1.msra.mxu0 0.0
    %8931 = vmatprep.subr.mxu0 0.0
    %8932 = vmatpush1.msra.mxu0 0.0
    %8933 = vmatprep.subr.mxu0 0.0
    %8934 = vmatpush1.msra.mxu0 0.0
    %8935 = vmatprep.subr.mxu0 0.0
    %8936 = vmatpush1.msra.mxu0 0.0
    %8937 = vmatprep.subr.mxu0 0.0
    %8938 = vmatpush1.msra.mxu0 0.0
    %8939 = vmatprep.subr.mxu0 0.0
    %8940 = vmatpush1.msra.mxu0 0.0
    %8941 = vmatprep.subr.mxu0 0.0
    %8942 = vmatpush1.msra.mxu0 0.0
    %8943 = vmatprep.subr.mxu0 0.0
    %8944 = vmatpush1.msra.mxu0 0.0
    %8945 = vmatprep.subr.mxu0 0.0
    %8946 = vmatpush1.msra.mxu0 0.0
    %8947 = vmatprep.subr.mxu0 0.0
    %8948 = vmatpush1.msra.mxu0 0.0
    %8949 = vmatprep.subr.mxu0 0.0
    %8950 = vmatpush1.msra.mxu0 0.0
    %8951 = vmatprep.subr.mxu0 0.0
    %8952 = vmatpush1.msra.mxu0 0.0
    %8953 = vmatprep.mubr.f32.mxu0 0.0
    %8954 = vmatmul.mubr.f32.gmra.mrb[0].mxu0 %v8672
    %v8955 = vpop.f32.mrb[0].mxu0
    %v8956 = vadd.f32 %v8885, %v8955
    %v8957 = vpop.f32.mrb[0].mxu0
    %v8958 = vadd.f32 %v8887, %v8957
    %8959 = vdwg.mxu0
    %8960 = vmatprep.subr.mxu0 0.0
    %8961 = vmatpush1.msra.mxu0 %v8424
    %8962 = vmatprep.subr.mxu0 0.0
    %8963 = vmatpush1.msra.mxu0 %v8429
    %8964 = vmatprep.subr.mxu0 0.0
    %8965 = vmatpush1.msra.mxu0 %v8434
    %8966 = vmatprep.subr.mxu0 0.0
    %8967 = vmatpush1.msra.mxu0 %v8439
    %8968 = vmatprep.subr.mxu0 0.0
    %8969 = vmatpush1.msra.mxu0 %v8444
    %8970 = vmatprep.subr.mxu0 0.0
    %8971 = vmatpush1.msra.mxu0 %v8449
    %8972 = vmatprep.subr.mxu0 0.0
    %8973 = vmatpush1.msra.mxu0 %v8454
    %8974 = vmatprep.subr.mxu0 0.0
    %8975 = vmatpush1.msra.mxu0 %v8459
    %8976 = vmatprep.subr.mxu0 0.0
    %8977 = vmatpush1.msra.mxu0 %v8464
    %8978 = vmatprep.subr.mxu0 0.0
    %8979 = vmatpush1.msra.mxu0 %v8469
    %8980 = vmatprep.subr.mxu0 0.0
    %8981 = vmatpush1.msra.mxu0 %v8474
    %8982 = vmatprep.subr.mxu0 0.0
    %8983 = vmatpush1.msra.mxu0 %v8479
    %8984 = vmatprep.subr.mxu0 0.0
    %8985 = vmatpush1.msra.mxu0 %v8484
    %8986 = vmatprep.subr.mxu0 0.0
    %8987 = vmatpush1.msra.mxu0 %v8489
    %8988 = vmatprep.subr.mxu0 0.0
    %8989 = vmatpush1.msra.mxu0 %v8494
    %8990 = vmatprep.subr.mxu0 0.0
    %8991 = vmatpush1.msra.mxu0 %v8499
    %8992 = vmatprep.subr.mxu0 0.0
    %8993 = vmatpush1.msra.mxu0 %v8504
    %8994 = vmatprep.subr.mxu0 0.0
    %8995 = vmatpush1.msra.mxu0 %v8509
    %8996 = vmatprep.subr.mxu0 0.0
    %8997 = vmatpush1.msra.mxu0 %v8514
    %8998 = vmatprep.subr.mxu0 0.0
    %8999 = vmatpush1.msra.mxu0 %v8519
    %9000 = vmatprep.subr.mxu0 0.0
    %9001 = vmatpush1.msra.mxu0 %v8524
    %9002 = vmatprep.subr.mxu0 0.0
    %9003 = vmatpush1.msra.mxu0 %v8529
    %9004 = vmatprep.subr.mxu0 0.0
    %9005 = vmatpush1.msra.mxu0 %v8534
    %9006 = vmatprep.subr.mxu0 0.0
    %9007 = vmatpush1.msra.mxu0 %v8539
    %9008 = vmatprep.subr.mxu0 0.0
    %9009 = vmatpush1.msra.mxu0 %v8544
    %9010 = vmatprep.subr.mxu0 0.0
    %9011 = vmatpush1.msra.mxu0 %v8549
    %9012 = vmatprep.subr.mxu0 0.0
    %9013 = vmatpush1.msra.mxu0 %v8554
    %9014 = vmatprep.subr.mxu0 0.0
    %9015 = vmatpush1.msra.mxu0 %v8559
    %9016 = vmatprep.subr.mxu0 0.0
    %9017 = vmatpush1.msra.mxu0 %v8564
    %9018 = vmatprep.subr.mxu0 0.0
    %9019 = vmatpush1.msra.mxu0 %v8569
    %9020 = vmatprep.subr.mxu0 0.0
    %9021 = vmatpush1.msra.mxu0 %v8574
    %9022 = vmatprep.subr.mxu0 0.0
    %9023 = vmatpush1.msra.mxu0 %v8579
    %9024 = vmatprep.mubr.f32.mxu0 %v8668
    %9025 = vmatmul.mubr.f32.gmra.mrb[0].mxu0 %v8664
    %v9026 = vpop.f32.mrb[0].mxu0
    %v9027 = vadd.f32 0.0, %v9026
    %v9028 = vpop.f32.mrb[0].mxu0
    %9029 = vdwg.mxu0
    %9030 = vmatprep.subr.mxu0 0.0
    %9031 = vmatpush1.msra.mxu0 %v8584
    %9032 = vmatprep.subr.mxu0 0.0
    %9033 = vmatpush1.msra.mxu0 %v8589
    %9034 = vmatprep.subr.mxu0 0.0
    %9035 = vmatpush1.msra.mxu0 %v8594
    %9036 = vmatprep.subr.mxu0 0.0
    %9037 = vmatpush1.msra.mxu0 %v8599
    %9038 = vmatprep.subr.mxu0 0.0
    %9039 = vmatpush1.msra.mxu0 %v8604
    %9040 = vmatprep.subr.mxu0 0.0
    %9041 = vmatpush1.msra.mxu0 %v8609
    %9042 = vmatprep.subr.mxu0 0.0
    %9043 = vmatpush1.msra.mxu0 %v8614
    %9044 = vmatprep.subr.mxu0 0.0
    %9045 = vmatpush1.msra.mxu0 %v8619
    %9046 = vmatprep.subr.mxu0 0.0
    %9047 = vmatpush1.msra.mxu0 %v8624
    %9048 = vmatprep.subr.mxu0 0.0
    %9049 = vmatpush1.msra.mxu0 %v8629
    %9050 = vmatprep.subr.mxu0 0.0
    %9051 = vmatpush1.msra.mxu0 %v8634
    %9052 = vmatprep.subr.mxu0 0.0
    %9053 = vmatpush1.msra.mxu0 %v8639
    %9054 = vmatprep.subr.mxu0 0.0
    %9055 = vmatpush1.msra.mxu0 %v8644
    %9056 = vmatprep.subr.mxu0 0.0
    %9057 = vmatpush1.msra.mxu0 %v8649
    %9058 = vmatprep.subr.mxu0 0.0
    %9059 = vmatpush1.msra.mxu0 %v8654
    %9060 = vmatprep.subr.mxu0 0.0
    %9061 = vmatpush1.msra.mxu0 %v8659
    %9062 = vmatprep.subr.mxu0 0.0
    %9063 = vmatpush1.msra.mxu0 0.0
    %9064 = vmatprep.subr.mxu0 0.0
    %9065 = vmatpush1.msra.mxu0 0.0
    %9066 = vmatprep.subr.mxu0 0.0
    %9067 = vmatpush1.msra.mxu0 0.0
    %9068 = vmatprep.subr.mxu0 0.0
    %9069 = vmatpush1.msra.mxu0 0.0
    %9070 = vmatprep.subr.mxu0 0.0
    %9071 = vmatpush1.msra.mxu0 0.0
    %9072 = vmatprep.subr.mxu0 0.0
    %9073 = vmatpush1.msra.mxu0 0.0
    %9074 = vmatprep.subr.mxu0 0.0
    %9075 = vmatpush1.msra.mxu0 0.0
    %9076 = vmatprep.subr.mxu0 0.0
    %9077 = vmatpush1.msra.mxu0 0.0
    %9078 = vmatprep.subr.mxu0 0.0
    %9079 = vmatpush1.msra.mxu0 0.0
    %9080 = vmatprep.subr.mxu0 0.0
    %9081 = vmatpush1.msra.mxu0 0.0
    %9082 = vmatprep.subr.mxu0 0.0
    %9083 = vmatpush1.msra.mxu0 0.0
    %9084 = vmatprep.subr.mxu0 0.0
    %9085 = vmatpush1.msra.mxu0 0.0
    %9086 = vmatprep.subr.mxu0 0.0
    %9087 = vmatpush1.msra.mxu0 0.0
    %9088 = vmatprep.subr.mxu0 0.0
    %9089 = vmatpush1.msra.mxu0 0.0
    %9090 = vmatprep.subr.mxu0 0.0
    %9091 = vmatpush1.msra.mxu0 0.0
    %9092 = vmatprep.subr.mxu0 0.0
    %9093 = vmatpush1.msra.mxu0 0.0
    %9094 = vmatprep.mubr.f32.mxu0 0.0
    %9095 = vmatmul.mubr.f32.gmra.mrb[0].mxu0 %v8672
    %v9096 = vpop.f32.mrb[0].mxu0
    %v9097 = vadd.f32 %v9027, %v9096
    %v9098 = vpop.f32.mrb[0].mxu0
    %9099 = vdwg.mxu0
    %v9105 = vcombine.low %v8814, %v8816
    %v9106 = vcombine.low %v8956, %v8958
    %v9108 = vunpack.c.l.s4 1966171168
    %v9109 = vunpack.c.0.s8 %v9108
    %v9110 = vlaneseq
    %v9111 = vshrl.u32 %v9110, 7
    %v9112 = vsub.s32 %v9109, %v9111
    %v9113 = vrot.slane %v9105, %v9112
    %v9115 = vunpack.c.l.s4 1966171168
    %v9116 = vunpack.c.0.s8 %v9115
    %v9117 = vlaneseq
    %v9118 = vshrl.u32 %v9117, 7
    %v9119 = vsub.s32 %v9116, %v9118
    %v9120 = vrot.slane %v9106, %v9119
    %v9122 = vunpack.c.l.s4 1966171168
    %v9123 = vunpack.c.0.s8 %v9122
    %v9124 = vlaneseq
    %v9125 = vshrl.u32 %v9124, 7
    %v9126 = vsub.s32 %v9123, %v9125
    %v9127 = vrot.slane %v9097, %v9126
    %v9128 = vcombine.low %v9113, %v9120
    %v9130 = vunpack.c.l.s4 1966171168
    %v9131 = vunpack.c.0.s8 %v9130
    %v9132 = vlaneseq
    %v9133 = vshrl.u32 %v9132, 7
    %v9134 = vsub.s32 %v9131, %v9133
    %v9135 = vrot.slane %v9128, %v9134
    %v9137 = vunpack.c.l.s4 1966171168
    %v9138 = vunpack.c.0.s8 %v9137
    %v9139 = vlaneseq
    %v9140 = vshrl.u32 %v9139, 7
    %v9141 = vsub.s32 %v9138, %v9140
    %v9142 = vrot.slane %v9127, %v9141
    %v9143 = vcombine.low %v9135, %v9142
    %v9145 = vadd.f32 %v8419, %v9143
    %v9146 = vld [vmem:[#allocation7] sm:$0xff]
    %v9147 = vld [vmem:[#allocation7 + $0x8] sm:$0xff]
    %v9148 = vld [vmem:[#allocation7 + $0x10] sm:$0xff]
    %v9149 = vld [vmem:[#allocation7 + $0x18] sm:$0xff]
    %v9150 = vld [vmem:[#allocation7 + $0x20] sm:$0xff]
    %v9151 = vld [vmem:[#allocation7 + $0x28] sm:$0xff]
    %v9152 = vld [vmem:[#allocation7 + $0x30] sm:$0xff]
    %v9153 = vld [vmem:[#allocation7 + $0x38] sm:$0xff]
    %v9154 = vld [vmem:[#allocation7 + $0x40] sm:$0xff]
    %v9155 = vld [vmem:[#allocation7 + $0x48] sm:$0xff]
    %v9156 = vld [vmem:[#allocation7 + $0x50] sm:$0xff]
    %v9157 = vld [vmem:[#allocation7 + $0x58] sm:$0xff]
    %v9158 = vld [vmem:[#allocation7 + $0x60] sm:$0xff]
    %v9159 = vld [vmem:[#allocation7 + $0x68] sm:$0xff]
    %v9160 = vld [vmem:[#allocation7 + $0x70] sm:$0xff]
    %v9161 = vld [vmem:[#allocation7 + $0x78] sm:$0xff]
    %v9162 = vld [vmem:[#allocation7 + $0x80] sm:$0xff]
    %v9163 = vld [vmem:[#allocation7 + $0x88] sm:$0xff]
    %v9164 = vld [vmem:[#allocation7 + $0x90] sm:$0xff]
    %v9165 = vld [vmem:[#allocation7 + $0x98] sm:$0xff]
    %v9166 = vld [vmem:[#allocation7 + $0xa0] sm:$0xff]
    %v9167 = vld [vmem:[#allocation7 + $0xa8] sm:$0xff]
    %v9168 = vld [vmem:[#allocation7 + $0xb0] sm:$0xff]
    %v9169 = vld [vmem:[#allocation7 + $0xb8] sm:$0xff]
    %v9170 = vld [vmem:[#allocation7 + $0xc0] sm:$0xff]
    %v9171 = vld [vmem:[#allocation7 + $0xc8] sm:$0xff]
    %v9172 = vld [vmem:[#allocation7 + $0xd0] sm:$0xff]
    %v9173 = vld [vmem:[#allocation7 + $0xd8] sm:$0xff]
    %v9174 = vld [vmem:[#allocation7 + $0xe0] sm:$0xff]
    %v9175 = vld [vmem:[#allocation7 + $0xe8] sm:$0xff]
    %v9176 = vld [vmem:[#allocation7 + $0xf0] sm:$0xff]
    %v9177 = vld [vmem:[#allocation7 + $0xf8] sm:$0xff]
    %v9178 = vld [vmem:[#allocation7 + $0x100] sm:$0xff]
    %v9179 = vld [vmem:[#allocation7 + $0x108] sm:$0xff]
    %v9180 = vld [vmem:[#allocation7 + $0x110] sm:$0xff]
    %v9181 = vld [vmem:[#allocation7 + $0x118] sm:$0xff]
    %v9182 = vld [vmem:[#allocation7 + $0x120] sm:$0xff]
    %v9183 = vld [vmem:[#allocation7 + $0x128] sm:$0xff]
    %v9184 = vld [vmem:[#allocation7 + $0x130] sm:$0xff]
    %v9185 = vld [vmem:[#allocation7 + $0x138] sm:$0xff]
    %v9186 = vld [vmem:[#allocation7 + $0x140] sm:$0xff]
    %v9187 = vld [vmem:[#allocation7 + $0x148] sm:$0xff]
    %v9188 = vld [vmem:[#allocation7 + $0x150] sm:$0xff]
    %v9189 = vld [vmem:[#allocation7 + $0x158] sm:$0xff]
    %v9190 = vld [vmem:[#allocation7 + $0x160] sm:$0xff]
    %v9191 = vld [vmem:[#allocation7 + $0x168] sm:$0xff]
    %v9192 = vld [vmem:[#allocation7 + $0x170] sm:$0xff]
    %v9193 = vld [vmem:[#allocation7 + $0x178] sm:$0xff]
    %v9194 = vld [vmem:[#allocation7 + $0x180] sm:$0xff]
    %v9195 = vld [vmem:[#allocation7 + $0x188] sm:$0xff]
    %v9196 = vld [vmem:[#allocation7 + $0x190] sm:$0xff]
    %v9197 = vld [vmem:[#allocation7 + $0x198] sm:$0xff]
    %v9198 = vld [vmem:[#allocation7 + $0x1a0] sm:$0xff]
    %v9199 = vld [vmem:[#allocation7 + $0x1a8] sm:$0xff]
    %v9200 = vld [vmem:[#allocation7 + $0x1b0] sm:$0xff]
    %v9201 = vld [vmem:[#allocation7 + $0x1b8] sm:$0xff]
    %v9202 = vld [vmem:[#allocation7 + $0x1c0] sm:$0xff]
    %v9203 = vld [vmem:[#allocation7 + $0x1c8] sm:$0xff]
    %v9204 = vld [vmem:[#allocation7 + $0x1d0] sm:$0xff]
    %v9205 = vld [vmem:[#allocation7 + $0x1d8] sm:$0xff]
    %v9206 = vld [vmem:[#allocation7 + $0x1e0] sm:$0xff]
    %v9207 = vld [vmem:[#allocation7 + $0x1e8] sm:$0xff]
    %v9208 = vld [vmem:[#allocation7 + $0x1f0] sm:$0xff]
    %v9209 = vld [vmem:[#allocation7 + $0x1f8] sm:$0xff]
    %v9210 = vld [vmem:[#allocation7 + $0x200] sm:$0xff]
    %v9211 = vld [vmem:[#allocation7 + $0x208] sm:$0xff]
    %v9212 = vld [vmem:[#allocation7 + $0x210] sm:$0xff]
    %v9213 = vld [vmem:[#allocation7 + $0x218] sm:$0xff]
    %v9214 = vld [vmem:[#allocation7 + $0x220] sm:$0xff]
    %v9215 = vld [vmem:[#allocation7 + $0x228] sm:$0xff]
    %v9216 = vld [vmem:[#allocation7 + $0x230] sm:$0xff]
    %v9217 = vld [vmem:[#allocation7 + $0x238] sm:$0xff]
    %v9218 = vld [vmem:[#allocation7 + $0x240] sm:$0xff]
    %v9219 = vld [vmem:[#allocation7 + $0x248] sm:$0xff]
    %v9220 = vld [vmem:[#allocation7 + $0x250] sm:$0xff]
    %v9221 = vld [vmem:[#allocation7 + $0x258] sm:$0xff]
    %v9222 = vld [vmem:[#allocation7 + $0x260] sm:$0xff]
    %v9223 = vld [vmem:[#allocation7 + $0x268] sm:$0xff]
    %v9224 = vld [vmem:[#allocation7 + $0x270] sm:$0xff]
    %v9225 = vld [vmem:[#allocation7 + $0x278] sm:$0xff]
    %v9226 = vld [vmem:[#allocation7 + $0x280] sm:$0xff]
    %v9227 = vld [vmem:[#allocation7 + $0x288] sm:$0xff]
    %v9228 = vld [vmem:[#allocation7 + $0x290] sm:$0xff]
    %v9229 = vld [vmem:[#allocation7 + $0x298] sm:$0xff]
    %v9230 = vld [vmem:[#allocation7 + $0x2a0] sm:$0xff]
    %v9231 = vld [vmem:[#allocation7 + $0x2a8] sm:$0xff]
    %v9232 = vld [vmem:[#allocation7 + $0x2b0] sm:$0xff]
    %v9233 = vld [vmem:[#allocation7 + $0x2b8] sm:$0xff]
    %v9234 = vld [vmem:[#allocation7 + $0x2c0] sm:$0xff]
    %v9235 = vld [vmem:[#allocation7 + $0x2c8] sm:$0xff]
    %v9236 = vld [vmem:[#allocation7 + $0x2d0] sm:$0xff]
    %v9237 = vld [vmem:[#allocation7 + $0x2d8] sm:$0xff]
    %v9238 = vld [vmem:[#allocation7 + $0x2e0] sm:$0xff]
    %v9239 = vld [vmem:[#allocation7 + $0x2e8] sm:$0xff]
    %v9240 = vld [vmem:[#allocation7 + $0x2f0] sm:$0xff]
    %v9241 = vld [vmem:[#allocation7 + $0x2f8] sm:$0xff]
    %v9242 = vld [vmem:[#allocation7 + $0x300] sm:$0xff]
    %v9243 = vld [vmem:[#allocation7 + $0x308] sm:$0xff]
    %v9244 = vld [vmem:[#allocation7 + $0x310] sm:$0xff]
    %v9245 = vld [vmem:[#allocation7 + $0x318] sm:$0xff]
    %v9246 = vld [vmem:[#allocation7 + $0x320] sm:$0xff]
    %v9247 = vld [vmem:[#allocation7 + $0x328] sm:$0xff]
    %v9248 = vld [vmem:[#allocation7 + $0x330] sm:$0xff]
    %v9249 = vld [vmem:[#allocation7 + $0x338] sm:$0xff]
    %v9250 = vld [vmem:[#allocation7 + $0x340] sm:$0xff]
    %v9251 = vld [vmem:[#allocation7 + $0x348] sm:$0xff]
    %v9252 = vld [vmem:[#allocation7 + $0x350] sm:$0xff]
    %v9253 = vld [vmem:[#allocation7 + $0x358] sm:$0xff]
    %v9254 = vld [vmem:[#allocation7 + $0x360] sm:$0xff]
    %v9255 = vld [vmem:[#allocation7 + $0x368] sm:$0xff]
    %v9256 = vld [vmem:[#allocation7 + $0x370] sm:$0xff]
    %v9257 = vld [vmem:[#allocation7 + $0x378] sm:$0xff]
    %v9258 = vld [vmem:[#allocation7 + $0x380] sm:$0xff]
    %v9259 = vld [vmem:[#allocation7 + $0x388] sm:$0xff]
    %v9260 = vld [vmem:[#allocation7 + $0x390] sm:$0xff]
    %v9261 = vld [vmem:[#allocation7 + $0x398] sm:$0xff]
    %v9262 = vld [vmem:[#allocation7 + $0x3a0] sm:$0xff]
    %v9263 = vld [vmem:[#allocation7 + $0x3a8] sm:$0xff]
    %v9264 = vld [vmem:[#allocation7 + $0x3b0] sm:$0xff]
    %v9265 = vld [vmem:[#allocation7 + $0x3b8] sm:$0xff]
    %v9266 = vld [vmem:[#allocation7 + $0x3c0] sm:$0xff]
    %v9267 = vld [vmem:[#allocation7 + $0x3c8] sm:$0xff]
    %v9268 = vld [vmem:[#allocation7 + $0x3d0] sm:$0xff]
    %v9269 = vld [vmem:[#allocation7 + $0x3d8] sm:$0xff]
    %v9270 = vld [vmem:[#allocation7 + $0x3e0] sm:$0xff]
    %v9271 = vld [vmem:[#allocation7 + $0x3e8] sm:$0xff]
    %v9272 = vld [vmem:[#allocation7 + $0x3f0] sm:$0xff]
    %v9273 = vld [vmem:[#allocation7 + $0x3f8] sm:$0xff]
    %v9274 = vld [vmem:[#allocation7 + $0x400] sm:$0xff]
    %v9275 = vld [vmem:[#allocation7 + $0x408] sm:$0xff]
    %v9276 = vld [vmem:[#allocation7 + $0x410] sm:$0xff]
    %v9277 = vld [vmem:[#allocation7 + $0x418] sm:$0xff]
    %v9278 = vld [vmem:[#allocation7 + $0x420] sm:$0xff]
    %v9279 = vld [vmem:[#allocation7 + $0x428] sm:$0xff]
    %v9280 = vld [vmem:[#allocation7 + $0x430] sm:$0xff]
    %v9281 = vld [vmem:[#allocation7 + $0x438] sm:$0xff]
    %v9282 = vld [vmem:[#allocation7 + $0x440] sm:$0xff]
    %v9283 = vld [vmem:[#allocation7 + $0x448] sm:$0xff]
    %v9284 = vld [vmem:[#allocation7 + $0x450] sm:$0xff]
    %v9285 = vld [vmem:[#allocation7 + $0x458] sm:$0xff]
    %v9286 = vld [vmem:[#allocation7 + $0x460] sm:$0xff]
    %v9287 = vld [vmem:[#allocation7 + $0x468] sm:$0xff]
    %v9288 = vld [vmem:[#allocation7 + $0x470] sm:$0xff]
    %v9289 = vld [vmem:[#allocation7 + $0x478] sm:$0xff]
    %v9290 = vld [vmem:[#allocation7 + $0x480] sm:$0xff]
    %v9291 = vld [vmem:[#allocation7 + $0x488] sm:$0xff]
    %v9292 = vld [vmem:[#allocation7 + $0x490] sm:$0xff]
    %v9293 = vld [vmem:[#allocation7 + $0x498] sm:$0xff]
    %v9294 = vld [vmem:[#allocation7 + $0x4a0] sm:$0xff]
    %v9295 = vld [vmem:[#allocation7 + $0x4a8] sm:$0xff]
    %v9296 = vld [vmem:[#allocation7 + $0x4b0] sm:$0xff]
    %v9297 = vld [vmem:[#allocation7 + $0x4b8] sm:$0xff]
    %v9298 = vld [vmem:[#allocation7 + $0x4c0] sm:$0xff]
    %v9299 = vld [vmem:[#allocation7 + $0x4c8] sm:$0xff]
    %v9300 = vld [vmem:[#allocation7 + $0x4d0] sm:$0xff]
    %v9301 = vld [vmem:[#allocation7 + $0x4d8] sm:$0xff]
    %v9302 = vld [vmem:[#allocation7 + $0x4e0] sm:$0xff]
    %v9303 = vld [vmem:[#allocation7 + $0x4e8] sm:$0xff]
    %v9304 = vld [vmem:[#allocation7 + $0x4f0] sm:$0xff]
    %v9305 = vld [vmem:[#allocation7 + $0x4f8] sm:$0xff]
    %v9306 = vld [vmem:[%s4] sm:$0x3]
    %v9308 = vlaneseq
    %v9309 = vshrl.u32 %v9308, 7
    %v9310 = vsub.s32 0, %v9309
    %v9311 = vrot.slane %v9145, %v9310
    %v9312 = vlaneseq
    %v9313 = vshrl.u32 %v9312, 7
    %v9314 = vsub.s32 1, %v9313
    %v9315 = vrot.slane %v9145, %v9314
    %v9316 = vlaneseq
    %v9317 = vshrl.u32 %v9316, 7
    %v9318 = vsub.s32 2, %v9317
    %v9319 = vrot.slane %v9145, %v9318
    %v9320 = vlaneseq
    %v9321 = vshrl.u32 %v9320, 7
    %v9322 = vsub.s32 3, %v9321
    %v9323 = vrot.slane %v9145, %v9322
    %v9324 = vlaneseq
    %v9325 = vshrl.u32 %v9324, 7
    %v9326 = vsub.s32 4, %v9325
    %v9327 = vrot.slane %v9145, %v9326
    %v9334 = vlaneseq
    %v9335 = vshrl.u32 %v9334, 7
    %v9336 = vsub.s32 0, %v9335
    %v9337 = vrot.slane %v9306, %v9336
    %v9338 = vlaneseq
    %v9339 = vshrl.u32 %v9338, 7
    %v9340 = vsub.s32 1, %v9339
    %v9341 = vrot.slane %v9306, %v9340
    %9344 = vmatprep.subr.mxu0 %v9147
    %9345 = vmatpush1.msra.mxu0 %v9146
    %9346 = vmatprep.subr.mxu0 %v9149
    %9347 = vmatpush1.msra.mxu0 %v9148
    %9348 = vmatprep.subr.mxu0 %v9151
    %9349 = vmatpush1.msra.mxu0 %v9150
    %9350 = vmatprep.subr.mxu0 %v9153
    %9351 = vmatpush1.msra.mxu0 %v9152
    %9352 = vmatprep.subr.mxu0 %v9155
    %9353 = vmatpush1.msra.mxu0 %v9154
    %9354 = vmatprep.subr.mxu0 %v9157
    %9355 = vmatpush1.msra.mxu0 %v9156
    %9356 = vmatprep.subr.mxu0 %v9159
    %9357 = vmatpush1.msra.mxu0 %v9158
    %9358 = vmatprep.subr.mxu0 %v9161
    %9359 = vmatpush1.msra.mxu0 %v9160
    %9360 = vmatprep.subr.mxu0 %v9163
    %9361 = vmatpush1.msra.mxu0 %v9162
    %9362 = vmatprep.subr.mxu0 %v9165
    %9363 = vmatpush1.msra.mxu0 %v9164
    %9364 = vmatprep.subr.mxu0 %v9167
    %9365 = vmatpush1.msra.mxu0 %v9166
    %9366 = vmatprep.subr.mxu0 %v9169
    %9367 = vmatpush1.msra.mxu0 %v9168
    %9368 = vmatprep.subr.mxu0 %v9171
    %9369 = vmatpush1.msra.mxu0 %v9170
    %9370 = vmatprep.subr.mxu0 %v9173
    %9371 = vmatpush1.msra.mxu0 %v9172
    %9372 = vmatprep.subr.mxu0 %v9175
    %9373 = vmatpush1.msra.mxu0 %v9174
    %9374 = vmatprep.subr.mxu0 %v9177
    %9375 = vmatpush1.msra.mxu0 %v9176
    %9376 = vmatprep.subr.mxu0 %v9179
    %9377 = vmatpush1.msra.mxu0 %v9178
    %9378 = vmatprep.subr.mxu0 %v9181
    %9379 = vmatpush1.msra.mxu0 %v9180
    %9380 = vmatprep.subr.mxu0 %v9183
    %9381 = vmatpush1.msra.mxu0 %v9182
    %9382 = vmatprep.subr.mxu0 %v9185
    %9383 = vmatpush1.msra.mxu0 %v9184
    %9384 = vmatprep.subr.mxu0 %v9187
    %9385 = vmatpush1.msra.mxu0 %v9186
    %9386 = vmatprep.subr.mxu0 %v9189
    %9387 = vmatpush1.msra.mxu0 %v9188
    %9388 = vmatprep.subr.mxu0 %v9191
    %9389 = vmatpush1.msra.mxu0 %v9190
    %9390 = vmatprep.subr.mxu0 %v9193
    %9391 = vmatpush1.msra.mxu0 %v9192
    %9392 = vmatprep.subr.mxu0 %v9195
    %9393 = vmatpush1.msra.mxu0 %v9194
    %9394 = vmatprep.subr.mxu0 %v9197
    %9395 = vmatpush1.msra.mxu0 %v9196
    %9396 = vmatprep.subr.mxu0 %v9199
    %9397 = vmatpush1.msra.mxu0 %v9198
    %9398 = vmatprep.subr.mxu0 %v9201
    %9399 = vmatpush1.msra.mxu0 %v9200
    %9400 = vmatprep.subr.mxu0 %v9203
    %9401 = vmatpush1.msra.mxu0 %v9202
    %9402 = vmatprep.subr.mxu0 %v9205
    %9403 = vmatpush1.msra.mxu0 %v9204
    %9404 = vmatprep.subr.mxu0 %v9207
    %9405 = vmatpush1.msra.mxu0 %v9206
    %9406 = vmatprep.subr.mxu0 %v9209
    %9407 = vmatpush1.msra.mxu0 %v9208
    %9408 = vmatprep.mubr.f32.mxu0 %v9315
    %9409 = vmatmul.mubr.f32.gmra.mrb[0].mxu0 %v9311
    %v9410 = vpop.f32.mrb[0].mxu0
    %v9411 = vadd.f32 %v9337, %v9410
    %v9412 = vpop.f32.mrb[0].mxu0
    %v9413 = vadd.f32 %v9341, %v9412
    %9414 = vdwg.mxu0
    %9415 = vmatprep.subr.mxu0 %v9211
    %9416 = vmatpush1.msra.mxu0 %v9210
    %9417 = vmatprep.subr.mxu0 %v9213
    %9418 = vmatpush1.msra.mxu0 %v9212
    %9419 = vmatprep.subr.mxu0 %v9215
    %9420 = vmatpush1.msra.mxu0 %v9214
    %9421 = vmatprep.subr.mxu0 %v9217
    %9422 = vmatpush1.msra.mxu0 %v9216
    %9423 = vmatprep.subr.mxu0 %v9219
    %9424 = vmatpush1.msra.mxu0 %v9218
    %9425 = vmatprep.subr.mxu0 %v9221
    %9426 = vmatpush1.msra.mxu0 %v9220
    %9427 = vmatprep.subr.mxu0 %v9223
    %9428 = vmatpush1.msra.mxu0 %v9222
    %9429 = vmatprep.subr.mxu0 %v9225
    %9430 = vmatpush1.msra.mxu0 %v9224
    %9431 = vmatprep.subr.mxu0 %v9227
    %9432 = vmatpush1.msra.mxu0 %v9226
    %9433 = vmatprep.subr.mxu0 %v9229
    %9434 = vmatpush1.msra.mxu0 %v9228
    %9435 = vmatprep.subr.mxu0 %v9231
    %9436 = vmatpush1.msra.mxu0 %v9230
    %9437 = vmatprep.subr.mxu0 %v9233
    %9438 = vmatpush1.msra.mxu0 %v9232
    %9439 = vmatprep.subr.mxu0 %v9235
    %9440 = vmatpush1.msra.mxu0 %v9234
    %9441 = vmatprep.subr.mxu0 %v9237
    %9442 = vmatpush1.msra.mxu0 %v9236
    %9443 = vmatprep.subr.mxu0 %v9239
    %9444 = vmatpush1.msra.mxu0 %v9238
    %9445 = vmatprep.subr.mxu0 %v9241
    %9446 = vmatpush1.msra.mxu0 %v9240
    %9447 = vmatprep.subr.mxu0 %v9243
    %9448 = vmatpush1.msra.mxu0 %v9242
    %9449 = vmatprep.subr.mxu0 %v9245
    %9450 = vmatpush1.msra.mxu0 %v9244
    %9451 = vmatprep.subr.mxu0 %v9247
    %9452 = vmatpush1.msra.mxu0 %v9246
    %9453 = vmatprep.subr.mxu0 %v9249
    %9454 = vmatpush1.msra.mxu0 %v9248
    %9455 = vmatprep.subr.mxu0 %v9251
    %9456 = vmatpush1.msra.mxu0 %v9250
    %9457 = vmatprep.subr.mxu0 %v9253
    %9458 = vmatpush1.msra.mxu0 %v9252
    %9459 = vmatprep.subr.mxu0 %v9255
    %9460 = vmatpush1.msra.mxu0 %v9254
    %9461 = vmatprep.subr.mxu0 %v9257
    %9462 = vmatpush1.msra.mxu0 %v9256
    %9463 = vmatprep.subr.mxu0 %v9259
    %9464 = vmatpush1.msra.mxu0 %v9258
    %9465 = vmatprep.subr.mxu0 %v9261
    %9466 = vmatpush1.msra.mxu0 %v9260
    %9467 = vmatprep.subr.mxu0 %v9263
    %9468 = vmatpush1.msra.mxu0 %v9262
    %9469 = vmatprep.subr.mxu0 %v9265
    %9470 = vmatpush1.msra.mxu0 %v9264
    %9471 = vmatprep.subr.mxu0 %v9267
    %9472 = vmatpush1.msra.mxu0 %v9266
    %9473 = vmatprep.subr.mxu0 %v9269
    %9474 = vmatpush1.msra.mxu0 %v9268
    %9475 = vmatprep.subr.mxu0 %v9271
    %9476 = vmatpush1.msra.mxu0 %v9270
    %9477 = vmatprep.subr.mxu0 %v9273
    %9478 = vmatpush1.msra.mxu0 %v9272
    %9479 = vmatprep.mubr.f32.mxu0 %v9323
    %9480 = vmatmul.mubr.f32.gmra.mrb[0].mxu0 %v9319
    %v9481 = vpop.f32.mrb[0].mxu0
    %v9482 = vadd.f32 %v9411, %v9481
    %v9483 = vpop.f32.mrb[0].mxu0
    %v9484 = vadd.f32 %v9413, %v9483
    %9485 = vdwg.mxu0
    %9486 = vmatprep.subr.mxu0 %v9275
    %9487 = vmatpush1.msra.mxu0 %v9274
    %9488 = vmatprep.subr.mxu0 %v9277
    %9489 = vmatpush1.msra.mxu0 %v9276
    %9490 = vmatprep.subr.mxu0 %v9279
    %9491 = vmatpush1.msra.mxu0 %v9278
    %9492 = vmatprep.subr.mxu0 %v9281
    %9493 = vmatpush1.msra.mxu0 %v9280
    %9494 = vmatprep.subr.mxu0 %v9283
    %9495 = vmatpush1.msra.mxu0 %v9282
    %9496 = vmatprep.subr.mxu0 %v9285
    %9497 = vmatpush1.msra.mxu0 %v9284
    %9498 = vmatprep.subr.mxu0 %v9287
    %9499 = vmatpush1.msra.mxu0 %v9286
    %9500 = vmatprep.subr.mxu0 %v9289
    %9501 = vmatpush1.msra.mxu0 %v9288
    %9502 = vmatprep.subr.mxu0 %v9291
    %9503 = vmatpush1.msra.mxu0 %v9290
    %9504 = vmatprep.subr.mxu0 %v9293
    %9505 = vmatpush1.msra.mxu0 %v9292
    %9506 = vmatprep.subr.mxu0 %v9295
    %9507 = vmatpush1.msra.mxu0 %v9294
    %9508 = vmatprep.subr.mxu0 %v9297
    %9509 = vmatpush1.msra.mxu0 %v9296
    %9510 = vmatprep.subr.mxu0 %v9299
    %9511 = vmatpush1.msra.mxu0 %v9298
    %9512 = vmatprep.subr.mxu0 %v9301
    %9513 = vmatpush1.msra.mxu0 %v9300
    %9514 = vmatprep.subr.mxu0 %v9303
    %9515 = vmatpush1.msra.mxu0 %v9302
    %9516 = vmatprep.subr.mxu0 %v9305
    %9517 = vmatpush1.msra.mxu0 %v9304
    %9518 = vmatprep.subr.mxu0 0.0
    %9519 = vmatpush1.msra.mxu0 0.0
    %9520 = vmatprep.subr.mxu0 0.0
    %9521 = vmatpush1.msra.mxu0 0.0
    %9522 = vmatprep.subr.mxu0 0.0
    %9523 = vmatpush1.msra.mxu0 0.0
    %9524 = vmatprep.subr.mxu0 0.0
    %9525 = vmatpush1.msra.mxu0 0.0
    %9526 = vmatprep.subr.mxu0 0.0
    %9527 = vmatpush1.msra.mxu0 0.0
    %9528 = vmatprep.subr.mxu0 0.0
    %9529 = vmatpush1.msra.mxu0 0.0
    %9530 = vmatprep.subr.mxu0 0.0
    %9531 = vmatpush1.msra.mxu0 0.0
    %9532 = vmatprep.subr.mxu0 0.0
    %9533 = vmatpush1.msra.mxu0 0.0
    %9534 = vmatprep.subr.mxu0 0.0
    %9535 = vmatpush1.msra.mxu0 0.0
    %9536 = vmatprep.subr.mxu0 0.0
    %9537 = vmatpush1.msra.mxu0 0.0
    %9538 = vmatprep.subr.mxu0 0.0
    %9539 = vmatpush1.msra.mxu0 0.0
    %9540 = vmatprep.subr.mxu0 0.0
    %9541 = vmatpush1.msra.mxu0 0.0
    %9542 = vmatprep.subr.mxu0 0.0
    %9543 = vmatpush1.msra.mxu0 0.0
    %9544 = vmatprep.subr.mxu0 0.0
    %9545 = vmatpush1.msra.mxu0 0.0
    %9546 = vmatprep.subr.mxu0 0.0
    %9547 = vmatpush1.msra.mxu0 0.0
    %9548 = vmatprep.subr.mxu0 0.0
    %9549 = vmatpush1.msra.mxu0 0.0
    %9550 = vmatprep.mubr.f32.mxu0 0.0
    %9551 = vmatmul.mubr.f32.gmra.mrb[0].mxu0 %v9327
    %v9552 = vpop.f32.mrb[0].mxu0
    %v9553 = vadd.f32 %v9482, %v9552
    %v9554 = vpop.f32.mrb[0].mxu0
    %v9555 = vadd.f32 %v9484, %v9554
    %9556 = vdwg.mxu0
    %v9557 = vsel %vm1215, %v9553, -inf
    %v9558 = vsel %vm1215, %v9555, -inf
    %v9559 = vmax.f32 %v9557, %v9558
    %9560 = vmax.xlane.f32.xlu0 %v9559
    %v9561 = vpop.xlane.xlu0 %9560
    %v9562 = vsub.f32 %v9553, %v9561
    %v9563 = vsub.f32 %v9555, %v9561
    %v9564 = vmul.f32 %v9562, 1.442695
    %v9565 = vpow.pop %v9564
    %v9566 = vmul.f32 %v9563, 1.442695
    %v9567 = vpow.pop %v9566
    %v9568 = vsel %vm1215, %v9565, 0.0
    %v9569 = vsel %vm1215, %v9567, 0.0
    %v9570 = vadd.f32 %v9568, %v9569
    %9571 = vadd.xlane.f32.xlu0 %v9570
    %v9572 = vpop.xlane.xlu0 %9571
    %v9573 = vlog2.pop %v9572
    %v9574 = vmul.f32 %v9573, 0.6931472
    %v9575 = vadd.f32 %v9561, %v9574
    %v9576 = vsub.f32 %v9553, %v9575
    %v9577 = vsub.f32 %v9555, %v9575
    %v9580 = vcombine.low %v9576, %v9577
    %v9582 = vunpack.c.l.s4 1966171168
    %v9583 = vunpack.c.0.s8 %v9582
    %v9584 = vlaneseq
    %v9585 = vshrl.u32 %v9584, 7
    %v9586 = vsub.s32 %v9583, %v9585
    %v9587 = vrot.slane %v9580, %v9586
    %v9589 = vunpack.c.l.s4 1966171168
    %v9590 = vunpack.c.0.s8 %v9589
    %v9591 = vlaneseq
    %v9592 = vshrl.u32 %v9591, 7
    %v9593 = vsub.s32 %v9590, %v9592
    %v9594 = vrot.slane %v9587, %v9593
    %s9596 = scalar_lea.vmem [#allocation8], 7
    %9597 = vst.msk [vmem:[%s9596] ss:$8 sm:$0x3] %vm1258, %v9594
    %9598 = vst.msk [vmem:[%s9596] ss:$8 sm:$0x0] %vm1258, %v9594
    %s9599 = sadd.s32 %s73, 7
    %p9600 = scmp.lt.s32.totalorder %s9599, 1
    %s9601 = scalar_select %p9600, 1, 0
    %v9602 = vstv %s9601
    %vm9603 = vcmp.eq.s32.totalorder %v9602, 1
    %v9604 = vsel %vm9603, %v9145, %v8415
    %9605 = vst.msk [vmem:[#allocation9] sm:$0x7] %vm1267, %v9604
    // Predicated region
    $region38: #{tpu_custom_call.1} parent=1 // pred_check
      _
    $region39: #{tpu_custom_call.1} parent=1 // pred_check_branch
      %9607 = sbr.rel (0) target = $region41
    $region40: #{tpu_custom_call.1} parent=1 // pred_region
      %s9609 = ssub.s32 256, 256
      %9610 = vsyncadd [#allocation4], %s9609
      %s9612 = sshll.u32 [#allocation8], 4
      %s9613 = int_to_ptr.vmem [resolvable:$true] %s9612
      %9615 = dma.vmem_to_hbm [thread:$0]  %s9613, 256, %s5, [#allocation4]
    $region41: #{tpu_custom_call.1} parent=1 // pred_fallthru
      _
    // Predicated region
    $region42: #{tpu_custom_call.1} parent=1 // pred_check
      _
    $region43: #{tpu_custom_call.1} parent=1 // pred_check_branch
      %9617 = sbr.rel (0) target = $region45
    $region44: #{tpu_custom_call.1} parent=1 // pred_region
      %s9619 = ssub.s32 48, 48
      %9620 = vsyncadd [#allocation10], %s9619
      %s9622 = sshll.u32 [#allocation9], 4
      %s9623 = int_to_ptr.vmem [resolvable:$true] %s9622
      %9625 = dma.vmem_to_hbm [thread:$0]  %s9623, 48, %s6, [#allocation10]
    $region45: #{tpu_custom_call.1} parent=1 // pred_fallthru
      _
    // Predicated region
    $region46: #{tpu_custom_call.1} parent=1 // pred_check
      _
    $region47: #{tpu_custom_call.1} parent=1 // pred_check_branch
      %9627 = sbr.rel (0) target = $region49
    $region48: #{tpu_custom_call.1} parent=1 // pred_region
      %9628 = dma.done [#allocation4], 256
    $region49: #{tpu_custom_call.1} parent=1 // pred_fallthru
      _
    // Predicated region
    $region50: #{tpu_custom_call.1} parent=1 // pred_check
      _
    $region51: #{tpu_custom_call.1} parent=1 // pred_check_branch
      %9630 = sbr.rel (0) target = $region53
    $region52: #{tpu_custom_call.1} parent=1 // pred_region
      %9631 = dma.done [#allocation10], 48
    $region53: #{tpu_custom_call.1} parent=1 // pred_fallthru
      _
    %9632 = vsyncpa [#allocation3], 1
    %9633 = vsyncpa [#allocation6], 1
    %9634 = vsyncpa [#allocation4], 1
    %9635 = vsyncpa [#allocation10], 1

</llo_original>
